<compile_context>
chip_gen: v6e
topology: v6e:2x2x1
jax: 0.10.0
libtpu: 0.0.40
codegen_flags: <defaults>
</compile_context>

<pallas_src>
import jax
import jax.numpy as jnp
from jax import lax
from jax.experimental import pallas as pl
from jax.experimental.pallas import tpu as pltpu

# ---------------------------------------------------------------------------
# Geometry fixed by the module (fc expects 32*7*7 -> 28x28 MNIST input).
# ---------------------------------------------------------------------------
C1F, C2F = 16, 32          # conv1 / conv2 filters
KS, PAD = 5, 2             # 5x5 kernels, padding=2
H1 = W1 = 28               # conv1 output spatial (== input)
H2 = W2 = 14               # after pool1
H3 = W3 = 7                # after pool2
NCLS, NPAD = 10, 128       # FC classes, padded to a full lane width

WP1 = 128                  # conv1 per-tap lane block (28 real lanes, padded)
L1P = 512                  # conv1 output lanes (448 real = 16*28)
L2P = 256                  # pool1 output lanes (224 real = 16*14)
L3P = 512                  # conv2 output lanes (448 real = 32*14)
L4P = 256                  # pool2 output lanes (224 real = 32*7)


# ---------------------------------------------------------------------------
# The single fused kernel (batch folded into M; one matmul per conv / FC).
# ---------------------------------------------------------------------------
def _mnist_fused_kernel(x_ref, m1_ref, b1_ref, m2_ref, b2_ref, wfc_ref, bfc_ref,
                        s1e_ref, s1o_ref, e1_ref, s2e_ref, s2o_ref, e2_ref,
                        out_ref, x1p, x1s, x2p, x2s, fcs):
    f32, bf16 = jnp.float32, jnp.bfloat16
    B = x_ref.shape[0]

    def mm(a, b):
        return jnp.dot(a, b, preferred_element_type=f32)

    # ---- conv1: im2col staging (lane-dense 128-wide tap blocks) --------------
    x1p[...] = jnp.zeros(x1p.shape, f32)
    for b in range(B):
        x1p[b, PAD:PAD + H1, 0:W1] = x_ref[b]
    for b in range(B):
        for kh in range(KS):
            x1s[b * H1:(b + 1) * H1, kh * WP1:(kh + 1) * WP1] = (
                x1p[b, kh:kh + H1, :].astype(bf16))
    # one (B*28, 640) x (640, 512) MXU matmul, +bias, +ReLU
    c1 = jnp.maximum(mm(x1s[...], m1_ref[...]) + b1_ref[...], 0.0)

    # ---- pool1: row max via even/odd selection, lane max via [even|odd] ------
    c1b = c1.astype(bf16)
    rm1 = jnp.maximum(mm(s1e_ref[...], c1b), mm(s1o_ref[...], c1b))     # (B*14, 512)
    hp1 = mm(rm1.astype(bf16), e1_ref[...])                             # (B*14, 512)
    p1 = jnp.maximum(hp1[:, :L2P], hp1[:, L2P:])                        # (B*14, 256)

    # ---- conv2: im2col staging (lane-dense 256-wide tap blocks) --------------
    x2p[...] = jnp.zeros(x2p.shape, f32)
    for b in range(B):
        x2p[b, PAD:PAD + H2, :] = p1[b * H2:(b + 1) * H2, :]
    for b in range(B):
        for kh in range(KS):
            x2s[b * H2:(b + 1) * H2, kh * L2P:(kh + 1) * L2P] = (
                x2p[b, kh:kh + H2, :].astype(bf16))
    # one (B*14, 1280) x (1280, 512) MXU matmul, +bias, +ReLU
    c2 = jnp.maximum(mm(x2s[...], m2_ref[...]) + b2_ref[...], 0.0)

    # ---- pool2 (output rows come out (h, b)-major for the FC flatten) --------
    c2b = c2.astype(bf16)
    rm2 = jnp.maximum(mm(s2e_ref[...], c2b), mm(s2o_ref[...], c2b))     # (7*B, 512)
    hp2 = mm(rm2.astype(bf16), e2_ref[...])                             # (7*B, 512)
    p2 = jnp.maximum(hp2[:, :L4P], hp2[:, L4P:])                        # (7*B, 256)

    # ---- FC: flatten via 7 contiguous 256-lane block stores + one matmul -----
    for h in range(H3):
        fcs[:, h * L4P:(h + 1) * L4P] = p2[h * B:(h + 1) * B, :].astype(bf16)
    logits = mm(fcs[...], wfc_ref[...]) + bfc_ref[...]                  # (B, 128)

    # ---- log_softmax over dim=0 (the batch axis), as in the PyTorch module ---
    z = logits - jnp.max(logits, axis=0, keepdims=True)
    out_ref[...] = z - jnp.log(jnp.sum(jnp.exp(z), axis=0, keepdims=True))


# ---------------------------------------------------------------------------
# Wrapper: one pallas_call, everything resident in VMEM.
# ---------------------------------------------------------------------------
def _full_spec(shape):
    return pl.BlockSpec(shape, lambda *_: (0,) * len(shape))


def mnist30k_forward(x_nchw, kp):
    B = x_nchw.shape[0]
    x3 = x_nchw.reshape(B, H1, W1)                 # drop the size-1 channel dim
    out_pad = pl.pallas_call(
        _mnist_fused_kernel,
        out_shape=jax.ShapeDtypeStruct((B, NPAD), jnp.float32),
        grid=(1,),
        in_specs=[
            _full_spec((B, H1, W1)),               # x
            _full_spec((KS * WP1, L1P)),           # m1   (640, 512)  bf16
            _full_spec((1, L1P)),                  # b1r
            _full_spec((KS * L2P, L3P)),           # m2   (1280, 512) bf16
            _full_spec((1, L3P)),                  # b2r
            _full_spec((H3 * L4P, NPAD)),          # wfc  (1792, 128) bf16
            _full_spec((1, NPAD)),                 # bfc
            _full_spec((B * H2, B * H1)),          # s1e
            _full_spec((B * H2, B * H1)),          # s1o
            _full_spec((L1P, 2 * L2P)),            # e1   (512, 512)  bf16
            _full_spec((H3 * B, B * H2)),          # s2e
            _full_spec((H3 * B, B * H2)),          # s2o
            _full_spec((L3P, 2 * L4P)),            # e2   (512, 512)  bf16
        ],
        out_specs=pl.BlockSpec((B, NPAD), lambda i: (0, 0)),
        scratch_shapes=[
            pltpu.VMEM((B, H1 + 2 * PAD, WP1), jnp.float32),     # H/lane-padded conv1 input
            pltpu.VMEM((B * H1, KS * WP1), jnp.bfloat16),        # conv1 im2col LHS (56, 640)
            pltpu.VMEM((B, H2 + 2 * PAD, L2P), jnp.float32),     # H-padded conv2 input
            pltpu.VMEM((B * H2, KS * L2P), jnp.bfloat16),        # conv2 im2col LHS (28, 1280)
            pltpu.VMEM((B, H3 * L4P), jnp.bfloat16),             # flattened FC input (B, 1792)
        ],
        compiler_params=pltpu.CompilerParams(
            dimension_semantics=("arbitrary",)),
    )(x3, kp["m1"], kp["b1r"], kp["m2"], kp["b2r"], kp["wfc"], kp["bfcr"],
      kp["s1e"], kp["s1o"], kp["e1"], kp["s2e"], kp["s2o"], kp["e2"])
    return out_pad[:, :NCLS]


# ---------------------------------------------------------------------------
# Parameter init (torch layout) and host-side weight transforms (free, once).
# ---------------------------------------------------------------------------
def init_torch_params(key):
    ks = jax.random.split(key, 6)
    return dict(
        w1=jax.random.normal(ks[0], (C1F, 1, KS, KS), jnp.float32) * 0.20,
        b1=jax.random.normal(ks[1], (C1F,), jnp.float32) * 0.10,
        w2=jax.random.normal(ks[2], (C2F, C1F, KS, KS), jnp.float32) * 0.05,
        b2=jax.random.normal(ks[3], (C2F,), jnp.float32) * 0.10,
        wfc=jax.random.normal(ks[4], (NCLS, C2F * H3 * W3), jnp.float32) * 0.02,
        bfc=jax.random.normal(ks[5], (NCLS,), jnp.float32) * 0.10,
    )


def _banded_conv_matrix(w_oihw, w_sp, kpad, npad):
    """Expand an OIHW 5x5 'same' conv weight into KS stacked banded blocks.

    M[kh*kpad + ci*w_sp + wi, co*w_sp + wo] = w[co, ci, kh, wi - wo + PAD]
    (zero outside the band / padded rows / padded cols).  Per-tap input rows
    live at 128/256-aligned offsets so the whole conv is one im2col matmul.
    """
    cout, cin, khn, kwn = w_oihw.shape
    K = khn * kpad
    r = jnp.arange(K)
    kh = r // kpad
    lane_in = r % kpad
    ci = jnp.clip(lane_in // w_sp, 0, cin - 1)
    wi = lane_in % w_sp
    row_valid = lane_in < cin * w_sp
    s = jnp.arange(npad)
    co = jnp.clip(s // w_sp, 0, cout - 1)
    wo = s % w_sp
    col_valid = s < cout * w_sp
    kw = wi[:, None] - wo[None, :] + PAD
    band = (kw >= 0) & (kw < kwn)
    kwc = jnp.clip(kw, 0, kwn - 1)
    vals = w_oihw[co[None, :], ci[:, None], kh[:, None], kwc]
    m = jnp.where(band & row_valid[:, None] & col_valid[None, :], vals, 0.0)
    return m.astype(jnp.bfloat16)


def _pool_row_matrix(n_out, n_in, parity):
    # out row r picks input row 2r+parity (valid because H1, H2 are even).
    r = jnp.arange(n_out)[:, None]
    c = jnp.arange(n_in)[None, :]
    return (c == 2 * r + parity).astype(jnp.bfloat16)


def _pool2_row_matrix(batch, parity):
    # out row r = h*B + b picks conv2 row b*H2 + 2h + parity -> (h, b)-major rows.
    r = jnp.arange(H3 * batch)[:, None]
    c = jnp.arange(batch * H2)[None, :]
    h = r // batch
    b = r % batch
    return (c == b * H2 + 2 * h + parity).astype(jnp.bfloat16)


def _pool_lane_matrix(n_ch, w_in, in_pad, out_pad):
    # (in_pad, 2*out_pad): cols [0,out_pad) pick even lanes, [out_pad,2*out_pad) odd.
    w_out = w_in // 2
    rows = jnp.arange(in_pad)[:, None]
    cols = jnp.arange(2 * out_pad)[None, :]
    parity = cols // out_pad
    j = cols % out_pad
    c = j // w_out
    w = j % w_out
    valid = j < n_ch * w_out
    src = c * w_in + 2 * w + parity
    return ((rows == src) & valid).astype(jnp.bfloat16)


def prepare_kernel_params(tp, batch):
    # conv weights -> banded im2col slabs on lane-padded layouts (bf16 MXU operands)
    m1 = _banded_conv_matrix(tp["w1"], W1, WP1, L1P)        # (640, 512)
    m2 = _banded_conv_matrix(tp["w2"], W2, L2P, L3P)        # (1280, 512)
    b1r = jnp.zeros((1, L1P), jnp.float32).at[0, :C1F * W1].set(jnp.repeat(tp["b1"], W1))
    b2r = jnp.zeros((1, L3P), jnp.float32).at[0, :C2F * W2].set(jnp.repeat(tp["b2"], W2))

    # FC weight: rows permuted to the kernel's (h, c, w) pooled layout with
    # 256-wide per-h blocks (folds torch's NCHW flatten); 10 outputs padded to 128.
    r = jnp.arange(H3 * L4P)
    h = r // L4P
    lane = r % L4P
    c = lane // W3
    w = lane % W3
    valid = lane < C2F * W3
    src = jnp.clip(c, 0, C2F - 1) * (H3 * W3) + h * W3 + w
    wrows = jnp.where(valid[:, None], tp["wfc"][:, src].T, 0.0)         # (1792, 10)
    wfc = (jnp.zeros((H3 * L4P, NPAD), jnp.float32)
           .at[:, :NCLS].set(wrows).astype(jnp.bfloat16))
    bfcr = jnp.zeros((1, NPAD), jnp.float32).at[0, :NCLS].set(tp["bfc"])

    return dict(
        m1=m1, b1r=b1r, m2=m2, b2r=b2r, wfc=wfc, bfcr=bfcr,
        s1e=_pool_row_matrix(batch * H2, batch * H1, 0),     # (28, 56)
        s1o=_pool_row_matrix(batch * H2, batch * H1, 1),
        e1=_pool_lane_matrix(C1F, W1, L1P, L2P),             # (512, 512)
        s2e=_pool2_row_matrix(batch, 0),                     # (14, 28)
        s2o=_pool2_row_matrix(batch, 1),
        e2=_pool_lane_matrix(C2F, W2, L3P, L4P),             # (512, 512)
    )


# ---------------------------------------------------------------------------
# Pure-JAX reference (same math as the PyTorch module) for the sanity check.
# ---------------------------------------------------------------------------
def _ref_forward(x_nchw, tp):
    dn = ("NCHW", "OIHW", "NCHW")

    def conv(x, w, b):
        y = lax.conv_general_dilated(x, w, (1, 1), [(PAD, PAD), (PAD, PAD)],
                                     dimension_numbers=dn)
        return y + b[None, :, None, None]

    def pool(x):
        return lax.reduce_window(x, -jnp.inf, lax.max,
                                 (1, 1, 2, 2), (1, 1, 2, 2), "VALID")

    h = pool(jnp.maximum(conv(x_nchw, tp["w1"], tp["b1"]), 0.0))
    h = pool(jnp.maximum(conv(h, tp["w2"], tp["b2"]), 0.0))
    feat = h.reshape(h.shape[0], -1)                       # torch x.view(-1, 32*7*7)
    logits = feat @ tp["wfc"].T + tp["bfc"][None, :]
    z = logits - jnp.max(logits, axis=0, keepdims=True)
    return z - jnp.log(jnp.sum(jnp.exp(z), axis=0, keepdims=True))


if __name__ == "__main__":
    # Spatial size 28 is forced by the FC layer (32*7*7); small batch = 2.
    x = jax.random.normal(jax.random.PRNGKey(0), (2, 1, H1, W1), jnp.float32)
    tp = init_torch_params(jax.random.PRNGKey(42))
    kp = prepare_kernel_params(tp, x.shape[0])

    fwd = jax.jit(lambda xx: mnist30k_forward(xx, kp))
    out = jax.block_until_ready(fwd(x))

    assert out.shape == (x.shape[0], NCLS), out.shape
    # log_softmax over dim=0 -> probabilities sum to 1 across the batch axis.
    col_sums = jnp.exp(out).sum(axis=0)
    assert bool(jnp.allclose(col_sums, 1.0, atol=1e-3)), col_sums
    # Compare against the pure-JAX f32 reference.  Tolerance covers bf16 MXU
    # operands (per perf review) with f32 accumulation across 3 matmul layers.
    ref = jax.block_until_ready(_ref_forward(x, tp))
    assert bool(jnp.allclose(out, ref, atol=5e-2, rtol=5e-2)), \
        float(jnp.max(jnp.abs(out - ref)))

    print("KERNEL_OK")
</pallas_src>

<mosaic_0001>
module attributes {stable_mosaic.version = 11 : i64} {
  func.func @_mnist_fused_kernel(%arg0: i32, %arg1: memref<2x28x28xf32, #tpu.memory_space<vmem>>, %arg2: memref<640x512xbf16, #tpu.memory_space<vmem>>, %arg3: memref<1x512xf32, #tpu.memory_space<vmem>>, %arg4: memref<1280x512xbf16, #tpu.memory_space<vmem>>, %arg5: memref<1x512xf32, #tpu.memory_space<vmem>>, %arg6: memref<1792x128xbf16, #tpu.memory_space<vmem>>, %arg7: memref<1x128xf32, #tpu.memory_space<vmem>>, %arg8: memref<28x56xbf16, #tpu.memory_space<vmem>>, %arg9: memref<28x56xbf16, #tpu.memory_space<vmem>>, %arg10: memref<512x512xbf16, #tpu.memory_space<vmem>>, %arg11: memref<14x28xbf16, #tpu.memory_space<vmem>>, %arg12: memref<14x28xbf16, #tpu.memory_space<vmem>>, %arg13: memref<512x512xbf16, #tpu.memory_space<vmem>>, %arg14: memref<2x128xf32, #tpu.memory_space<vmem>>, %arg15: memref<2x32x128xf32, #tpu.memory_space<vmem>>, %arg16: memref<56x640xbf16, #tpu.memory_space<vmem>>, %arg17: memref<2x18x256xf32, #tpu.memory_space<vmem>>, %arg18: memref<28x1280xbf16, #tpu.memory_space<vmem>>, %arg19: memref<2x1792xbf16, #tpu.memory_space<vmem>>) attributes {dimension_semantics = [#tpu.dimension_semantics<arbitrary>], iteration_bounds = array<i64: 1>, scalar_prefetch = 0 : i64, scratch_operands = 5 : i64, tpu.core_type = #tpu.core_type<tc>, window_params = [{pipeline_mode = #tpu.pipeline_mode<synchronous>, transform_indices = @transform_0, window_bounds = array<i64: 2, 28, 28>}, {pipeline_mode = #tpu.pipeline_mode<synchronous>, transform_indices = @transform_1, window_bounds = array<i64: 640, 512>}, {pipeline_mode = #tpu.pipeline_mode<synchronous>, transform_indices = @transform_2, window_bounds = array<i64: 1, 512>}, {pipeline_mode = #tpu.pipeline_mode<synchronous>, transform_indices = @transform_3, window_bounds = array<i64: 1280, 512>}, {pipeline_mode = #tpu.pipeline_mode<synchronous>, transform_indices = @transform_4, window_bounds = array<i64: 1, 512>}, {pipeline_mode = #tpu.pipeline_mode<synchronous>, transform_indices = @transform_5, window_bounds = array<i64: 1792, 128>}, {pipeline_mode = #tpu.pipeline_mode<synchronous>, transform_indices = @transform_6, window_bounds = array<i64: 1, 128>}, {pipeline_mode = #tpu.pipeline_mode<synchronous>, transform_indices = @transform_7, window_bounds = array<i64: 28, 56>}, {pipeline_mode = #tpu.pipeline_mode<synchronous>, transform_indices = @transform_8, window_bounds = array<i64: 28, 56>}, {pipeline_mode = #tpu.pipeline_mode<synchronous>, transform_indices = @transform_9, window_bounds = array<i64: 512, 512>}, {pipeline_mode = #tpu.pipeline_mode<synchronous>, transform_indices = @transform_10, window_bounds = array<i64: 14, 28>}, {pipeline_mode = #tpu.pipeline_mode<synchronous>, transform_indices = @transform_11, window_bounds = array<i64: 14, 28>}, {pipeline_mode = #tpu.pipeline_mode<synchronous>, transform_indices = @transform_12, window_bounds = array<i64: 512, 512>}, {pipeline_mode = #tpu.pipeline_mode<synchronous>, transform_indices = @transform_13, window_bounds = array<i64: 2, 128>}]} {
    %cst = arith.constant 0.000000e+00 : f32
    %0 = vector.broadcast %cst : f32 to vector<2x32x128xf32>
    %c0 = arith.constant 0 : index
    %c0_0 = arith.constant 0 : index
    %c0_1 = arith.constant 0 : index
    %1 = vector.load %arg15[%c0, %c0_0, %c0_1] : memref<2x32x128xf32, #tpu.memory_space<vmem>>, vector<2x32x128xf32>
    tpu.vector_store %arg15[%c0, %c0_0, %c0_1], %0 {strides = array<i32>} : memref<2x32x128xf32, #tpu.memory_space<vmem>>, vector<2x32x128xf32>,
    %c0_2 = arith.constant 0 : index
    %c0_3 = arith.constant 0 : index
    %c0_4 = arith.constant 0 : index
    %2 = vector.load %arg1[%c0_2, %c0_3, %c0_4] : memref<2x28x28xf32, #tpu.memory_space<vmem>>, vector<1x28x28xf32>
    %3 = vector.shape_cast %2 : vector<1x28x28xf32> to vector<28x28xf32>
    %c0_5 = arith.constant 0 : index
    %c2 = arith.constant 2 : index
    %c0_6 = arith.constant 0 : index
    %4 = vector.load %arg15[%c0_5, %c2, %c0_6] : memref<2x32x128xf32, #tpu.memory_space<vmem>>, vector<1x28x28xf32>
    %5 = vector.shape_cast %4 : vector<1x28x28xf32> to vector<28x28xf32>
    %6 = vector.shape_cast %3 : vector<28x28xf32> to vector<1x28x28xf32>
    tpu.vector_store %arg15[%c0_5, %c2, %c0_6], %6 {strides = array<i32>} : memref<2x32x128xf32, #tpu.memory_space<vmem>>, vector<1x28x28xf32>,
    %c1 = arith.constant 1 : index
    %c0_7 = arith.constant 0 : index
    %c0_8 = arith.constant 0 : index
    %7 = vector.load %arg1[%c1, %c0_7, %c0_8] : memref<2x28x28xf32, #tpu.memory_space<vmem>>, vector<1x28x28xf32>
    %8 = vector.shape_cast %7 : vector<1x28x28xf32> to vector<28x28xf32>
    %c1_9 = arith.constant 1 : index
    %c2_10 = arith.constant 2 : index
    %c0_11 = arith.constant 0 : index
    %9 = vector.load %arg15[%c1_9, %c2_10, %c0_11] : memref<2x32x128xf32, #tpu.memory_space<vmem>>, vector<1x28x28xf32>
    %10 = vector.shape_cast %9 : vector<1x28x28xf32> to vector<28x28xf32>
    %11 = vector.shape_cast %8 : vector<28x28xf32> to vector<1x28x28xf32>
    tpu.vector_store %arg15[%c1_9, %c2_10, %c0_11], %11 {strides = array<i32>} : memref<2x32x128xf32, #tpu.memory_space<vmem>>, vector<1x28x28xf32>,
    %c0_12 = arith.constant 0 : index
    %c0_13 = arith.constant 0 : index
    %c0_14 = arith.constant 0 : index
    %12 = vector.load %arg15[%c0_12, %c0_13, %c0_14] : memref<2x32x128xf32, #tpu.memory_space<vmem>>, vector<1x28x128xf32>
    %13 = vector.shape_cast %12 : vector<1x28x128xf32> to vector<28x128xf32>
    %14 = arith.truncf %13 : vector<28x128xf32> to vector<28x128xbf16>
    %c0_15 = arith.constant 0 : index
    %c0_16 = arith.constant 0 : index
    %15 = vector.load %arg16[%c0_15, %c0_16] : memref<56x640xbf16, #tpu.memory_space<vmem>>, vector<28x128xbf16>
    tpu.vector_store %arg16[%c0_15, %c0_16], %14 {strides = array<i32>} : memref<56x640xbf16, #tpu.memory_space<vmem>>, vector<28x128xbf16>,
    %c0_17 = arith.constant 0 : index
    %c1_18 = arith.constant 1 : index
    %c0_19 = arith.constant 0 : index
    %16 = vector.load %arg15[%c0_17, %c1_18, %c0_19] : memref<2x32x128xf32, #tpu.memory_space<vmem>>, vector<1x28x128xf32>
    %17 = vector.shape_cast %16 : vector<1x28x128xf32> to vector<28x128xf32>
    %18 = arith.truncf %17 : vector<28x128xf32> to vector<28x128xbf16>
    %c0_20 = arith.constant 0 : index
    %c128 = arith.constant 128 : index
    %19 = vector.load %arg16[%c0_20, %c128] : memref<56x640xbf16, #tpu.memory_space<vmem>>, vector<28x128xbf16>
    tpu.vector_store %arg16[%c0_20, %c128], %18 {strides = array<i32>} : memref<56x640xbf16, #tpu.memory_space<vmem>>, vector<28x128xbf16>,
    %c0_21 = arith.constant 0 : index
    %c2_22 = arith.constant 2 : index
    %c0_23 = arith.constant 0 : index
    %20 = vector.load %arg15[%c0_21, %c2_22, %c0_23] : memref<2x32x128xf32, #tpu.memory_space<vmem>>, vector<1x28x128xf32>
    %21 = vector.shape_cast %20 : vector<1x28x128xf32> to vector<28x128xf32>
    %22 = arith.truncf %21 : vector<28x128xf32> to vector<28x128xbf16>
    %c0_24 = arith.constant 0 : index
    %c256 = arith.constant 256 : index
    %23 = vector.load %arg16[%c0_24, %c256] : memref<56x640xbf16, #tpu.memory_space<vmem>>, vector<28x128xbf16>
    tpu.vector_store %arg16[%c0_24, %c256], %22 {strides = array<i32>} : memref<56x640xbf16, #tpu.memory_space<vmem>>, vector<28x128xbf16>,
    %c0_25 = arith.constant 0 : index
    %c3 = arith.constant 3 : index
    %c0_26 = arith.constant 0 : index
    %24 = vector.load %arg15[%c0_25, %c3, %c0_26] : memref<2x32x128xf32, #tpu.memory_space<vmem>>, vector<1x28x128xf32>
    %25 = vector.shape_cast %24 : vector<1x28x128xf32> to vector<28x128xf32>
    %26 = arith.truncf %25 : vector<28x128xf32> to vector<28x128xbf16>
    %c0_27 = arith.constant 0 : index
    %c384 = arith.constant 384 : index
    %27 = vector.load %arg16[%c0_27, %c384] : memref<56x640xbf16, #tpu.memory_space<vmem>>, vector<28x128xbf16>
    tpu.vector_store %arg16[%c0_27, %c384], %26 {strides = array<i32>} : memref<56x640xbf16, #tpu.memory_space<vmem>>, vector<28x128xbf16>,
    %c0_28 = arith.constant 0 : index
    %c4 = arith.constant 4 : index
    %c0_29 = arith.constant 0 : index
    %28 = vector.load %arg15[%c0_28, %c4, %c0_29] : memref<2x32x128xf32, #tpu.memory_space<vmem>>, vector<1x28x128xf32>
    %29 = vector.shape_cast %28 : vector<1x28x128xf32> to vector<28x128xf32>
    %30 = arith.truncf %29 : vector<28x128xf32> to vector<28x128xbf16>
    %c0_30 = arith.constant 0 : index
    %c512 = arith.constant 512 : index
    %31 = vector.load %arg16[%c0_30, %c512] : memref<56x640xbf16, #tpu.memory_space<vmem>>, vector<28x128xbf16>
    tpu.vector_store %arg16[%c0_30, %c512], %30 {strides = array<i32>} : memref<56x640xbf16, #tpu.memory_space<vmem>>, vector<28x128xbf16>,
    %c1_31 = arith.constant 1 : index
    %c0_32 = arith.constant 0 : index
    %c0_33 = arith.constant 0 : index
    %32 = vector.load %arg15[%c1_31, %c0_32, %c0_33] : memref<2x32x128xf32, #tpu.memory_space<vmem>>, vector<1x28x128xf32>
    %33 = vector.shape_cast %32 : vector<1x28x128xf32> to vector<28x128xf32>
    %34 = arith.truncf %33 : vector<28x128xf32> to vector<28x128xbf16>
    %c28 = arith.constant 28 : index
    %c0_34 = arith.constant 0 : index
    %35 = vector.load %arg16[%c28, %c0_34] : memref<56x640xbf16, #tpu.memory_space<vmem>>, vector<28x128xbf16>
    tpu.vector_store %arg16[%c28, %c0_34], %34 {strides = array<i32>} : memref<56x640xbf16, #tpu.memory_space<vmem>>, vector<28x128xbf16>,
    %c1_35 = arith.constant 1 : index
    %c1_36 = arith.constant 1 : index
    %c0_37 = arith.constant 0 : index
    %36 = vector.load %arg15[%c1_35, %c1_36, %c0_37] : memref<2x32x128xf32, #tpu.memory_space<vmem>>, vector<1x28x128xf32>
    %37 = vector.shape_cast %36 : vector<1x28x128xf32> to vector<28x128xf32>
    %38 = arith.truncf %37 : vector<28x128xf32> to vector<28x128xbf16>
    %c28_38 = arith.constant 28 : index
    %c128_39 = arith.constant 128 : index
    %39 = vector.load %arg16[%c28_38, %c128_39] : memref<56x640xbf16, #tpu.memory_space<vmem>>, vector<28x128xbf16>
    tpu.vector_store %arg16[%c28_38, %c128_39], %38 {strides = array<i32>} : memref<56x640xbf16, #tpu.memory_space<vmem>>, vector<28x128xbf16>,
    %c1_40 = arith.constant 1 : index
    %c2_41 = arith.constant 2 : index
    %c0_42 = arith.constant 0 : index
    %40 = vector.load %arg15[%c1_40, %c2_41, %c0_42] : memref<2x32x128xf32, #tpu.memory_space<vmem>>, vector<1x28x128xf32>
    %41 = vector.shape_cast %40 : vector<1x28x128xf32> to vector<28x128xf32>
    %42 = arith.truncf %41 : vector<28x128xf32> to vector<28x128xbf16>
    %c28_43 = arith.constant 28 : index
    %c256_44 = arith.constant 256 : index
    %43 = vector.load %arg16[%c28_43, %c256_44] : memref<56x640xbf16, #tpu.memory_space<vmem>>, vector<28x128xbf16>
    tpu.vector_store %arg16[%c28_43, %c256_44], %42 {strides = array<i32>} : memref<56x640xbf16, #tpu.memory_space<vmem>>, vector<28x128xbf16>,
    %c1_45 = arith.constant 1 : index
    %c3_46 = arith.constant 3 : index
    %c0_47 = arith.constant 0 : index
    %44 = vector.load %arg15[%c1_45, %c3_46, %c0_47] : memref<2x32x128xf32, #tpu.memory_space<vmem>>, vector<1x28x128xf32>
    %45 = vector.shape_cast %44 : vector<1x28x128xf32> to vector<28x128xf32>
    %46 = arith.truncf %45 : vector<28x128xf32> to vector<28x128xbf16>
    %c28_48 = arith.constant 28 : index
    %c384_49 = arith.constant 384 : index
    %47 = vector.load %arg16[%c28_48, %c384_49] : memref<56x640xbf16, #tpu.memory_space<vmem>>, vector<28x128xbf16>
    tpu.vector_store %arg16[%c28_48, %c384_49], %46 {strides = array<i32>} : memref<56x640xbf16, #tpu.memory_space<vmem>>, vector<28x128xbf16>,
    %c1_50 = arith.constant 1 : index
    %c4_51 = arith.constant 4 : index
    %c0_52 = arith.constant 0 : index
    %48 = vector.load %arg15[%c1_50, %c4_51, %c0_52] : memref<2x32x128xf32, #tpu.memory_space<vmem>>, vector<1x28x128xf32>
    %49 = vector.shape_cast %48 : vector<1x28x128xf32> to vector<28x128xf32>
    %50 = arith.truncf %49 : vector<28x128xf32> to vector<28x128xbf16>
    %c28_53 = arith.constant 28 : index
    %c512_54 = arith.constant 512 : index
    %51 = vector.load %arg16[%c28_53, %c512_54] : memref<56x640xbf16, #tpu.memory_space<vmem>>, vector<28x128xbf16>
    tpu.vector_store %arg16[%c28_53, %c512_54], %50 {strides = array<i32>} : memref<56x640xbf16, #tpu.memory_space<vmem>>, vector<28x128xbf16>,
    %c0_55 = arith.constant 0 : index
    %c0_56 = arith.constant 0 : index
    %52 = vector.load %arg16[%c0_55, %c0_56] : memref<56x640xbf16, #tpu.memory_space<vmem>>, vector<56x640xbf16>
    %c0_57 = arith.constant 0 : index
    %c0_58 = arith.constant 0 : index
    %53 = vector.load %arg2[%c0_57, %c0_58] : memref<640x512xbf16, #tpu.memory_space<vmem>>, vector<640x512xbf16>
    %cst_59 = arith.constant dense<0.000000e+00> : vector<56x512xf32>
    %54 = tpu.matmul %52, %53, %cst_59 {dimension_numbers = #tpu.dot_dimension_numbers<[1], [0], [0], [1], [0, 0, 1, 1], [], []>} : vector<56x640xbf16>, vector<640x512xbf16>, vector<56x512xf32> -> vector<56x512xf32>
    %c0_60 = arith.constant 0 : index
    %c0_61 = arith.constant 0 : index
    %55 = vector.load %arg3[%c0_60, %c0_61] : memref<1x512xf32, #tpu.memory_space<vmem>>, vector<1x512xf32>
    %56 = vector.broadcast %55 : vector<1x512xf32> to vector<56x512xf32>
    %57 = arith.addf %54, %56 : vector<56x512xf32>
    %cst_62 = arith.constant 0.000000e+00 : f32
    %58 = vector.broadcast %cst_62 : f32 to vector<56x512xf32>
    %59 = arith.maximumf %57, %58 : vector<56x512xf32>
    %60 = arith.truncf %59 : vector<56x512xf32> to vector<56x512xbf16>
    %c0_63 = arith.constant 0 : index
    %c0_64 = arith.constant 0 : index
    %61 = vector.load %arg8[%c0_63, %c0_64] : memref<28x56xbf16, #tpu.memory_space<vmem>>, vector<28x56xbf16>
    %cst_65 = arith.constant dense<0.000000e+00> : vector<28x512xf32>
    %62 = tpu.matmul %61, %60, %cst_65 {dimension_numbers = #tpu.dot_dimension_numbers<[1], [0], [0], [1], [0, 0, 1, 1], [], []>} : vector<28x56xbf16>, vector<56x512xbf16>, vector<28x512xf32> -> vector<28x512xf32>
    %c0_66 = arith.constant 0 : index
    %c0_67 = arith.constant 0 : index
    %63 = vector.load %arg9[%c0_66, %c0_67] : memref<28x56xbf16, #tpu.memory_space<vmem>>, vector<28x56xbf16>
    %cst_68 = arith.constant dense<0.000000e+00> : vector<28x512xf32>
    %64 = tpu.matmul %63, %60, %cst_68 {dimension_numbers = #tpu.dot_dimension_numbers<[1], [0], [0], [1], [0, 0, 1, 1], [], []>} : vector<28x56xbf16>, vector<56x512xbf16>, vector<28x512xf32> -> vector<28x512xf32>
    %65 = arith.maximumf %62, %64 : vector<28x512xf32>
    %66 = arith.truncf %65 : vector<28x512xf32> to vector<28x512xbf16>
    %c0_69 = arith.constant 0 : index
    %c0_70 = arith.constant 0 : index
    %67 = vector.load %arg10[%c0_69, %c0_70] : memref<512x512xbf16, #tpu.memory_space<vmem>>, vector<512x512xbf16>
    %cst_71 = arith.constant dense<0.000000e+00> : vector<28x512xf32>
    %68 = tpu.matmul %66, %67, %cst_71 {dimension_numbers = #tpu.dot_dimension_numbers<[1], [0], [0], [1], [0, 0, 1, 1], [], []>} : vector<28x512xbf16>, vector<512x512xbf16>, vector<28x512xf32> -> vector<28x512xf32>
    %69 = vector.extract_strided_slice %68 {offsets = [0, 0], sizes = [28, 256], strides = [1, 1]} : vector<28x512xf32> to vector<28x256xf32>
    %70 = vector.extract_strided_slice %68 {offsets = [0, 256], sizes = [28, 256], strides = [1, 1]} : vector<28x512xf32> to vector<28x256xf32>
    %71 = arith.maximumf %69, %70 : vector<28x256xf32>
    %cst_72 = arith.constant 0.000000e+00 : f32
    %72 = vector.broadcast %cst_72 : f32 to vector<2x18x256xf32>
    %c0_73 = arith.constant 0 : index
    %c0_74 = arith.constant 0 : index
    %c0_75 = arith.constant 0 : index
    %73 = vector.load %arg17[%c0_73, %c0_74, %c0_75] : memref<2x18x256xf32, #tpu.memory_space<vmem>>, vector<2x18x256xf32>
    tpu.vector_store %arg17[%c0_73, %c0_74, %c0_75], %72 {strides = array<i32>} : memref<2x18x256xf32, #tpu.memory_space<vmem>>, vector<2x18x256xf32>,
    %74 = vector.extract_strided_slice %71 {offsets = [0, 0], sizes = [14, 256], strides = [1, 1]} : vector<28x256xf32> to vector<14x256xf32>
    %c0_76 = arith.constant 0 : index
    %c2_77 = arith.constant 2 : index
    %c0_78 = arith.constant 0 : index
    %75 = vector.load %arg17[%c0_76, %c2_77, %c0_78] : memref<2x18x256xf32, #tpu.memory_space<vmem>>, vector<1x14x256xf32>
    %76 = vector.shape_cast %75 : vector<1x14x256xf32> to vector<14x256xf32>
    %77 = vector.shape_cast %74 : vector<14x256xf32> to vector<1x14x256xf32>
    tpu.vector_store %arg17[%c0_76, %c2_77, %c0_78], %77 {strides = array<i32>} : memref<2x18x256xf32, #tpu.memory_space<vmem>>, vector<1x14x256xf32>,
    %78 = vector.extract_strided_slice %71 {offsets = [14, 0], sizes = [14, 256], strides = [1, 1]} : vector<28x256xf32> to vector<14x256xf32>
    %c1_79 = arith.constant 1 : index
    %c2_80 = arith.constant 2 : index
    %c0_81 = arith.constant 0 : index
    %79 = vector.load %arg17[%c1_79, %c2_80, %c0_81] : memref<2x18x256xf32, #tpu.memory_space<vmem>>, vector<1x14x256xf32>
    %80 = vector.shape_cast %79 : vector<1x14x256xf32> to vector<14x256xf32>
    %81 = vector.shape_cast %78 : vector<14x256xf32> to vector<1x14x256xf32>
    tpu.vector_store %arg17[%c1_79, %c2_80, %c0_81], %81 {strides = array<i32>} : memref<2x18x256xf32, #tpu.memory_space<vmem>>, vector<1x14x256xf32>,
    %c0_82 = arith.constant 0 : index
    %c0_83 = arith.constant 0 : index
    %c0_84 = arith.constant 0 : index
    %82 = vector.load %arg17[%c0_82, %c0_83, %c0_84] : memref<2x18x256xf32, #tpu.memory_space<vmem>>, vector<1x14x256xf32>
    %83 = vector.shape_cast %82 : vector<1x14x256xf32> to vector<14x256xf32>
    %84 = arith.truncf %83 : vector<14x256xf32> to vector<14x256xbf16>
    %c0_85 = arith.constant 0 : index
    %c0_86 = arith.constant 0 : index
    %85 = vector.load %arg18[%c0_85, %c0_86] : memref<28x1280xbf16, #tpu.memory_space<vmem>>, vector<14x256xbf16>
    tpu.vector_store %arg18[%c0_85, %c0_86], %84 {strides = array<i32>} : memref<28x1280xbf16, #tpu.memory_space<vmem>>, vector<14x256xbf16>,
    %c0_87 = arith.constant 0 : index
    %c1_88 = arith.constant 1 : index
    %c0_89 = arith.constant 0 : index
    %86 = vector.load %arg17[%c0_87, %c1_88, %c0_89] : memref<2x18x256xf32, #tpu.memory_space<vmem>>, vector<1x14x256xf32>
    %87 = vector.shape_cast %86 : vector<1x14x256xf32> to vector<14x256xf32>
    %88 = arith.truncf %87 : vector<14x256xf32> to vector<14x256xbf16>
    %c0_90 = arith.constant 0 : index
    %c256_91 = arith.constant 256 : index
    %89 = vector.load %arg18[%c0_90, %c256_91] : memref<28x1280xbf16, #tpu.memory_space<vmem>>, vector<14x256xbf16>
    tpu.vector_store %arg18[%c0_90, %c256_91], %88 {strides = array<i32>} : memref<28x1280xbf16, #tpu.memory_space<vmem>>, vector<14x256xbf16>,
    %c0_92 = arith.constant 0 : index
    %c2_93 = arith.constant 2 : index
    %c0_94 = arith.constant 0 : index
    %90 = vector.load %arg17[%c0_92, %c2_93, %c0_94] : memref<2x18x256xf32, #tpu.memory_space<vmem>>, vector<1x14x256xf32>
    %91 = vector.shape_cast %90 : vector<1x14x256xf32> to vector<14x256xf32>
    %92 = arith.truncf %91 : vector<14x256xf32> to vector<14x256xbf16>
    %c0_95 = arith.constant 0 : index
    %c512_96 = arith.constant 512 : index
    %93 = vector.load %arg18[%c0_95, %c512_96] : memref<28x1280xbf16, #tpu.memory_space<vmem>>, vector<14x256xbf16>
    tpu.vector_store %arg18[%c0_95, %c512_96], %92 {strides = array<i32>} : memref<28x1280xbf16, #tpu.memory_space<vmem>>, vector<14x256xbf16>,
    %c0_97 = arith.constant 0 : index
    %c3_98 = arith.constant 3 : index
    %c0_99 = arith.constant 0 : index
    %94 = vector.load %arg17[%c0_97, %c3_98, %c0_99] : memref<2x18x256xf32, #tpu.memory_space<vmem>>, vector<1x14x256xf32>
    %95 = vector.shape_cast %94 : vector<1x14x256xf32> to vector<14x256xf32>
    %96 = arith.truncf %95 : vector<14x256xf32> to vector<14x256xbf16>
    %c0_100 = arith.constant 0 : index
    %c768 = arith.constant 768 : index
    %97 = vector.load %arg18[%c0_100, %c768] : memref<28x1280xbf16, #tpu.memory_space<vmem>>, vector<14x256xbf16>
    tpu.vector_store %arg18[%c0_100, %c768], %96 {strides = array<i32>} : memref<28x1280xbf16, #tpu.memory_space<vmem>>, vector<14x256xbf16>,
    %c0_101 = arith.constant 0 : index
    %c4_102 = arith.constant 4 : index
    %c0_103 = arith.constant 0 : index
    %98 = vector.load %arg17[%c0_101, %c4_102, %c0_103] : memref<2x18x256xf32, #tpu.memory_space<vmem>>, vector<1x14x256xf32>
    %99 = vector.shape_cast %98 : vector<1x14x256xf32> to vector<14x256xf32>
    %100 = arith.truncf %99 : vector<14x256xf32> to vector<14x256xbf16>
    %c0_104 = arith.constant 0 : index
    %c1024 = arith.constant 1024 : index
    %101 = vector.load %arg18[%c0_104, %c1024] : memref<28x1280xbf16, #tpu.memory_space<vmem>>, vector<14x256xbf16>
    tpu.vector_store %arg18[%c0_104, %c1024], %100 {strides = array<i32>} : memref<28x1280xbf16, #tpu.memory_space<vmem>>, vector<14x256xbf16>,
    %c1_105 = arith.constant 1 : index
    %c0_106 = arith.constant 0 : index
    %c0_107 = arith.constant 0 : index
    %102 = vector.load %arg17[%c1_105, %c0_106, %c0_107] : memref<2x18x256xf32, #tpu.memory_space<vmem>>, vector<1x14x256xf32>
    %103 = vector.shape_cast %102 : vector<1x14x256xf32> to vector<14x256xf32>
    %104 = arith.truncf %103 : vector<14x256xf32> to vector<14x256xbf16>
    %c14 = arith.constant 14 : index
    %c0_108 = arith.constant 0 : index
    %105 = vector.load %arg18[%c14, %c0_108] : memref<28x1280xbf16, #tpu.memory_space<vmem>>, vector<14x256xbf16>
    tpu.vector_store %arg18[%c14, %c0_108], %104 {strides = array<i32>} : memref<28x1280xbf16, #tpu.memory_space<vmem>>, vector<14x256xbf16>,
    %c1_109 = arith.constant 1 : index
    %c1_110 = arith.constant 1 : index
    %c0_111 = arith.constant 0 : index
    %106 = vector.load %arg17[%c1_109, %c1_110, %c0_111] : memref<2x18x256xf32, #tpu.memory_space<vmem>>, vector<1x14x256xf32>
    %107 = vector.shape_cast %106 : vector<1x14x256xf32> to vector<14x256xf32>
    %108 = arith.truncf %107 : vector<14x256xf32> to vector<14x256xbf16>
    %c14_112 = arith.constant 14 : index
    %c256_113 = arith.constant 256 : index
    %109 = vector.load %arg18[%c14_112, %c256_113] : memref<28x1280xbf16, #tpu.memory_space<vmem>>, vector<14x256xbf16>
    tpu.vector_store %arg18[%c14_112, %c256_113], %108 {strides = array<i32>} : memref<28x1280xbf16, #tpu.memory_space<vmem>>, vector<14x256xbf16>,
    %c1_114 = arith.constant 1 : index
    %c2_115 = arith.constant 2 : index
    %c0_116 = arith.constant 0 : index
    %110 = vector.load %arg17[%c1_114, %c2_115, %c0_116] : memref<2x18x256xf32, #tpu.memory_space<vmem>>, vector<1x14x256xf32>
    %111 = vector.shape_cast %110 : vector<1x14x256xf32> to vector<14x256xf32>
    %112 = arith.truncf %111 : vector<14x256xf32> to vector<14x256xbf16>
    %c14_117 = arith.constant 14 : index
    %c512_118 = arith.constant 512 : index
    %113 = vector.load %arg18[%c14_117, %c512_118] : memref<28x1280xbf16, #tpu.memory_space<vmem>>, vector<14x256xbf16>
    tpu.vector_store %arg18[%c14_117, %c512_118], %112 {strides = array<i32>} : memref<28x1280xbf16, #tpu.memory_space<vmem>>, vector<14x256xbf16>,
    %c1_119 = arith.constant 1 : index
    %c3_120 = arith.constant 3 : index
    %c0_121 = arith.constant 0 : index
    %114 = vector.load %arg17[%c1_119, %c3_120, %c0_121] : memref<2x18x256xf32, #tpu.memory_space<vmem>>, vector<1x14x256xf32>
    %115 = vector.shape_cast %114 : vector<1x14x256xf32> to vector<14x256xf32>
    %116 = arith.truncf %115 : vector<14x256xf32> to vector<14x256xbf16>
    %c14_122 = arith.constant 14 : index
    %c768_123 = arith.constant 768 : index
    %117 = vector.load %arg18[%c14_122, %c768_123] : memref<28x1280xbf16, #tpu.memory_space<vmem>>, vector<14x256xbf16>
    tpu.vector_store %arg18[%c14_122, %c768_123], %116 {strides = array<i32>} : memref<28x1280xbf16, #tpu.memory_space<vmem>>, vector<14x256xbf16>,
    %c1_124 = arith.constant 1 : index
    %c4_125 = arith.constant 4 : index
    %c0_126 = arith.constant 0 : index
    %118 = vector.load %arg17[%c1_124, %c4_125, %c0_126] : memref<2x18x256xf32, #tpu.memory_space<vmem>>, vector<1x14x256xf32>
    %119 = vector.shape_cast %118 : vector<1x14x256xf32> to vector<14x256xf32>
    %120 = arith.truncf %119 : vector<14x256xf32> to vector<14x256xbf16>
    %c14_127 = arith.constant 14 : index
    %c1024_128 = arith.constant 1024 : index
    %121 = vector.load %arg18[%c14_127, %c1024_128] : memref<28x1280xbf16, #tpu.memory_space<vmem>>, vector<14x256xbf16>
    tpu.vector_store %arg18[%c14_127, %c1024_128], %120 {strides = array<i32>} : memref<28x1280xbf16, #tpu.memory_space<vmem>>, vector<14x256xbf16>,
    %c0_129 = arith.constant 0 : index
    %c0_130 = arith.constant 0 : index
    %122 = vector.load %arg18[%c0_129, %c0_130] : memref<28x1280xbf16, #tpu.memory_space<vmem>>, vector<28x1280xbf16>
    %c0_131 = arith.constant 0 : index
    %c0_132 = arith.constant 0 : index
    %123 = vector.load %arg4[%c0_131, %c0_132] : memref<1280x512xbf16, #tpu.memory_space<vmem>>, vector<1280x512xbf16>
    %cst_133 = arith.constant dense<0.000000e+00> : vector<28x512xf32>
    %124 = tpu.matmul %122, %123, %cst_133 {dimension_numbers = #tpu.dot_dimension_numbers<[1], [0], [0], [1], [0, 0, 1, 1], [], []>} : vector<28x1280xbf16>, vector<1280x512xbf16>, vector<28x512xf32> -> vector<28x512xf32>
    %c0_134 = arith.constant 0 : index
    %c0_135 = arith.constant 0 : index
    %125 = vector.load %arg5[%c0_134, %c0_135] : memref<1x512xf32, #tpu.memory_space<vmem>>, vector<1x512xf32>
    %126 = vector.broadcast %125 : vector<1x512xf32> to vector<28x512xf32>
    %127 = arith.addf %124, %126 : vector<28x512xf32>
    %cst_136 = arith.constant 0.000000e+00 : f32
    %128 = vector.broadcast %cst_136 : f32 to vector<28x512xf32>
    %129 = arith.maximumf %127, %128 : vector<28x512xf32>
    %130 = arith.truncf %129 : vector<28x512xf32> to vector<28x512xbf16>
    %c0_137 = arith.constant 0 : index
    %c0_138 = arith.constant 0 : index
    %131 = vector.load %arg11[%c0_137, %c0_138] : memref<14x28xbf16, #tpu.memory_space<vmem>>, vector<14x28xbf16>
    %cst_139 = arith.constant dense<0.000000e+00> : vector<14x512xf32>
    %132 = tpu.matmul %131, %130, %cst_139 {dimension_numbers = #tpu.dot_dimension_numbers<[1], [0], [0], [1], [0, 0, 1, 1], [], []>} : vector<14x28xbf16>, vector<28x512xbf16>, vector<14x512xf32> -> vector<14x512xf32>
    %c0_140 = arith.constant 0 : index
    %c0_141 = arith.constant 0 : index
    %133 = vector.load %arg12[%c0_140, %c0_141] : memref<14x28xbf16, #tpu.memory_space<vmem>>, vector<14x28xbf16>
    %cst_142 = arith.constant dense<0.000000e+00> : vector<14x512xf32>
    %134 = tpu.matmul %133, %130, %cst_142 {dimension_numbers = #tpu.dot_dimension_numbers<[1], [0], [0], [1], [0, 0, 1, 1], [], []>} : vector<14x28xbf16>, vector<28x512xbf16>, vector<14x512xf32> -> vector<14x512xf32>
    %135 = arith.maximumf %132, %134 : vector<14x512xf32>
    %136 = arith.truncf %135 : vector<14x512xf32> to vector<14x512xbf16>
    %c0_143 = arith.constant 0 : index
    %c0_144 = arith.constant 0 : index
    %137 = vector.load %arg13[%c0_143, %c0_144] : memref<512x512xbf16, #tpu.memory_space<vmem>>, vector<512x512xbf16>
    %cst_145 = arith.constant dense<0.000000e+00> : vector<14x512xf32>
    %138 = tpu.matmul %136, %137, %cst_145 {dimension_numbers = #tpu.dot_dimension_numbers<[1], [0], [0], [1], [0, 0, 1, 1], [], []>} : vector<14x512xbf16>, vector<512x512xbf16>, vector<14x512xf32> -> vector<14x512xf32>
    %139 = vector.extract_strided_slice %138 {offsets = [0, 0], sizes = [14, 256], strides = [1, 1]} : vector<14x512xf32> to vector<14x256xf32>
    %140 = vector.extract_strided_slice %138 {offsets = [0, 256], sizes = [14, 256], strides = [1, 1]} : vector<14x512xf32> to vector<14x256xf32>
    %141 = arith.maximumf %139, %140 : vector<14x256xf32>
    %142 = vector.extract_strided_slice %141 {offsets = [0, 0], sizes = [2, 256], strides = [1, 1]} : vector<14x256xf32> to vector<2x256xf32>
    %143 = arith.truncf %142 : vector<2x256xf32> to vector<2x256xbf16>
    %c0_146 = arith.constant 0 : index
    %c0_147 = arith.constant 0 : index
    %144 = vector.load %arg19[%c0_146, %c0_147] : memref<2x1792xbf16, #tpu.memory_space<vmem>>, vector<2x256xbf16>
    tpu.vector_store %arg19[%c0_146, %c0_147], %143 {strides = array<i32>} : memref<2x1792xbf16, #tpu.memory_space<vmem>>, vector<2x256xbf16>,
    %145 = vector.extract_strided_slice %141 {offsets = [2, 0], sizes = [2, 256], strides = [1, 1]} : vector<14x256xf32> to vector<2x256xf32>
    %146 = arith.truncf %145 : vector<2x256xf32> to vector<2x256xbf16>
    %c0_148 = arith.constant 0 : index
    %c256_149 = arith.constant 256 : index
    %147 = vector.load %arg19[%c0_148, %c256_149] : memref<2x1792xbf16, #tpu.memory_space<vmem>>, vector<2x256xbf16>
    tpu.vector_store %arg19[%c0_148, %c256_149], %146 {strides = array<i32>} : memref<2x1792xbf16, #tpu.memory_space<vmem>>, vector<2x256xbf16>,
    %148 = vector.extract_strided_slice %141 {offsets = [4, 0], sizes = [2, 256], strides = [1, 1]} : vector<14x256xf32> to vector<2x256xf32>
    %149 = arith.truncf %148 : vector<2x256xf32> to vector<2x256xbf16>
    %c0_150 = arith.constant 0 : index
    %c512_151 = arith.constant 512 : index
    %150 = vector.load %arg19[%c0_150, %c512_151] : memref<2x1792xbf16, #tpu.memory_space<vmem>>, vector<2x256xbf16>
    tpu.vector_store %arg19[%c0_150, %c512_151], %149 {strides = array<i32>} : memref<2x1792xbf16, #tpu.memory_space<vmem>>, vector<2x256xbf16>,
    %151 = vector.extract_strided_slice %141 {offsets = [6, 0], sizes = [2, 256], strides = [1, 1]} : vector<14x256xf32> to vector<2x256xf32>
    %152 = arith.truncf %151 : vector<2x256xf32> to vector<2x256xbf16>
    %c0_152 = arith.constant 0 : index
    %c768_153 = arith.constant 768 : index
    %153 = vector.load %arg19[%c0_152, %c768_153] : memref<2x1792xbf16, #tpu.memory_space<vmem>>, vector<2x256xbf16>
    tpu.vector_store %arg19[%c0_152, %c768_153], %152 {strides = array<i32>} : memref<2x1792xbf16, #tpu.memory_space<vmem>>, vector<2x256xbf16>,
    %154 = vector.extract_strided_slice %141 {offsets = [8, 0], sizes = [2, 256], strides = [1, 1]} : vector<14x256xf32> to vector<2x256xf32>
    %155 = arith.truncf %154 : vector<2x256xf32> to vector<2x256xbf16>
    %c0_154 = arith.constant 0 : index
    %c1024_155 = arith.constant 1024 : index
    %156 = vector.load %arg19[%c0_154, %c1024_155] : memref<2x1792xbf16, #tpu.memory_space<vmem>>, vector<2x256xbf16>
    tpu.vector_store %arg19[%c0_154, %c1024_155], %155 {strides = array<i32>} : memref<2x1792xbf16, #tpu.memory_space<vmem>>, vector<2x256xbf16>,
    %157 = vector.extract_strided_slice %141 {offsets = [10, 0], sizes = [2, 256], strides = [1, 1]} : vector<14x256xf32> to vector<2x256xf32>
    %158 = arith.truncf %157 : vector<2x256xf32> to vector<2x256xbf16>
    %c0_156 = arith.constant 0 : index
    %c1280 = arith.constant 1280 : index
    %159 = vector.load %arg19[%c0_156, %c1280] : memref<2x1792xbf16, #tpu.memory_space<vmem>>, vector<2x256xbf16>
    tpu.vector_store %arg19[%c0_156, %c1280], %158 {strides = array<i32>} : memref<2x1792xbf16, #tpu.memory_space<vmem>>, vector<2x256xbf16>,
    %160 = vector.extract_strided_slice %141 {offsets = [12, 0], sizes = [2, 256], strides = [1, 1]} : vector<14x256xf32> to vector<2x256xf32>
    %161 = arith.truncf %160 : vector<2x256xf32> to vector<2x256xbf16>
    %c0_157 = arith.constant 0 : index
    %c1536 = arith.constant 1536 : index
    %162 = vector.load %arg19[%c0_157, %c1536] : memref<2x1792xbf16, #tpu.memory_space<vmem>>, vector<2x256xbf16>
    tpu.vector_store %arg19[%c0_157, %c1536], %161 {strides = array<i32>} : memref<2x1792xbf16, #tpu.memory_space<vmem>>, vector<2x256xbf16>,
    %c0_158 = arith.constant 0 : index
    %c0_159 = arith.constant 0 : index
    %163 = vector.load %arg19[%c0_158, %c0_159] : memref<2x1792xbf16, #tpu.memory_space<vmem>>, vector<2x1792xbf16>
    %c0_160 = arith.constant 0 : index
    %c0_161 = arith.constant 0 : index
    %164 = vector.load %arg6[%c0_160, %c0_161] : memref<1792x128xbf16, #tpu.memory_space<vmem>>, vector<1792x128xbf16>
    %cst_162 = arith.constant dense<0.000000e+00> : vector<2x128xf32>
    %165 = tpu.matmul %163, %164, %cst_162 {dimension_numbers = #tpu.dot_dimension_numbers<[1], [0], [0], [1], [0, 0, 1, 1], [], []>} : vector<2x1792xbf16>, vector<1792x128xbf16>, vector<2x128xf32> -> vector<2x128xf32>
    %c0_163 = arith.constant 0 : index
    %c0_164 = arith.constant 0 : index
    %166 = vector.load %arg7[%c0_163, %c0_164] : memref<1x128xf32, #tpu.memory_space<vmem>>, vector<1x128xf32>
    %167 = vector.broadcast %166 : vector<1x128xf32> to vector<2x128xf32>
    %168 = arith.addf %165, %167 : vector<2x128xf32>
    %cst_165 = arith.constant dense<0xFF800000> : vector<128xf32>
    %169 = vector.multi_reduction <maximumf>, %168, %cst_165 [0] : vector<2x128xf32> to vector<128xf32>
    %170 = vector.shape_cast %169 : vector<128xf32> to vector<1x128xf32>
    %171 = vector.broadcast %170 : vector<1x128xf32> to vector<2x128xf32>
    %172 = arith.subf %168, %171 : vector<2x128xf32>
    %173 = math.exp %172 : vector<2x128xf32>
    %cst_166 = arith.constant dense<0.000000e+00> : vector<128xf32>
    %174 = vector.multi_reduction <add>, %173, %cst_166 [0] : vector<2x128xf32> to vector<128xf32>
    %175 = vector.shape_cast %174 : vector<128xf32> to vector<1x128xf32>
    %176 = math.log %175 : vector<1x128xf32>
    %177 = vector.broadcast %176 : vector<1x128xf32> to vector<2x128xf32>
    %178 = arith.subf %172, %177 : vector<2x128xf32>
    %c0_167 = arith.constant 0 : index
    %c0_168 = arith.constant 0 : index
    %179 = vector.load %arg14[%c0_167, %c0_168] : memref<2x128xf32, #tpu.memory_space<vmem>>, vector<2x128xf32>
    tpu.vector_store %arg14[%c0_167, %c0_168], %178 {strides = array<i32>} : memref<2x128xf32, #tpu.memory_space<vmem>>, vector<2x128xf32>,
    return
  }
  func.func @transform_0(%arg0: i32) -> (i32, i32, i32) {
    %c0_i32 = arith.constant 0 : i32
    %c0_i32_0 = arith.constant 0 : i32
    %c0_i32_1 = arith.constant 0 : i32
    %c0_i32_2 = arith.constant 0 : i32
    return %c0_i32, %c0_i32_0, %c0_i32_1 : i32, i32, i32
  }
  func.func @transform_1(%arg0: i32) -> (i32, i32) {
    %c0_i32 = arith.constant 0 : i32
    %c0_i32_0 = arith.constant 0 : i32
    %c0_i32_1 = arith.constant 0 : i32
    return %c0_i32, %c0_i32_0 : i32, i32
  }
  func.func @transform_2(%arg0: i32) -> (i32, i32) {
    %c0_i32 = arith.constant 0 : i32
    %c0_i32_0 = arith.constant 0 : i32
    %c0_i32_1 = arith.constant 0 : i32
    return %c0_i32, %c0_i32_0 : i32, i32
  }
  func.func @transform_3(%arg0: i32) -> (i32, i32) {
    %c0_i32 = arith.constant 0 : i32
    %c0_i32_0 = arith.constant 0 : i32
    %c0_i32_1 = arith.constant 0 : i32
    return %c0_i32, %c0_i32_0 : i32, i32
  }
  func.func @transform_4(%arg0: i32) -> (i32, i32) {
    %c0_i32 = arith.constant 0 : i32
    %c0_i32_0 = arith.constant 0 : i32
    %c0_i32_1 = arith.constant 0 : i32
    return %c0_i32, %c0_i32_0 : i32, i32
  }
  func.func @transform_5(%arg0: i32) -> (i32, i32) {
    %c0_i32 = arith.constant 0 : i32
    %c0_i32_0 = arith.constant 0 : i32
    %c0_i32_1 = arith.constant 0 : i32
    return %c0_i32, %c0_i32_0 : i32, i32
  }
  func.func @transform_6(%arg0: i32) -> (i32, i32) {
    %c0_i32 = arith.constant 0 : i32
    %c0_i32_0 = arith.constant 0 : i32
    %c0_i32_1 = arith.constant 0 : i32
    return %c0_i32, %c0_i32_0 : i32, i32
  }
  func.func @transform_7(%arg0: i32) -> (i32, i32) {
    %c0_i32 = arith.constant 0 : i32
    %c0_i32_0 = arith.constant 0 : i32
    %c0_i32_1 = arith.constant 0 : i32
    return %c0_i32, %c0_i32_0 : i32, i32
  }
  func.func @transform_8(%arg0: i32) -> (i32, i32) {
    %c0_i32 = arith.constant 0 : i32
    %c0_i32_0 = arith.constant 0 : i32
    %c0_i32_1 = arith.constant 0 : i32
    return %c0_i32, %c0_i32_0 : i32, i32
  }
  func.func @transform_9(%arg0: i32) -> (i32, i32) {
    %c0_i32 = arith.constant 0 : i32
    %c0_i32_0 = arith.constant 0 : i32
    %c0_i32_1 = arith.constant 0 : i32
    return %c0_i32, %c0_i32_0 : i32, i32
  }
  func.func @transform_10(%arg0: i32) -> (i32, i32) {
    %c0_i32 = arith.constant 0 : i32
    %c0_i32_0 = arith.constant 0 : i32
    %c0_i32_1 = arith.constant 0 : i32
    return %c0_i32, %c0_i32_0 : i32, i32
  }
  func.func @transform_11(%arg0: i32) -> (i32, i32) {
    %c0_i32 = arith.constant 0 : i32
    %c0_i32_0 = arith.constant 0 : i32
    %c0_i32_1 = arith.constant 0 : i32
    return %c0_i32, %c0_i32_0 : i32, i32
  }
  func.func @transform_12(%arg0: i32) -> (i32, i32) {
    %c0_i32 = arith.constant 0 : i32
    %c0_i32_0 = arith.constant 0 : i32
    %c0_i32_1 = arith.constant 0 : i32
    return %c0_i32, %c0_i32_0 : i32, i32
  }
  func.func @transform_13(%arg0: i32) -> (i32, i32) {
    %c0_i32 = arith.constant 0 : i32
    %c0_i32_0 = arith.constant 0 : i32
    %c0_i32_1 = arith.constant 0 : i32
    return %c0_i32, %c0_i32_0 : i32, i32
  }
}

</mosaic_0001>

<llo_original>
// kernel: _lambda_.1
$region0: #{_lambda_.1}
  #allocation0 [shape = 'u32[]', space=smem, size = 0x4, offset = 0x4, fixed_abs, tag = 'smem constant byte address 0x4 - core index']
  #allocation1 [shape = 'u32[144,128]{1,0:T(1,128)}', space=vmem, size = 0x12000, scoped, tag = 'internal scratch']
  #allocation2 [shape = 'f32[2,32,128]{2,1,0:T(8,128)}', space=vmem, size = 0x8000, scoped, tag = 'scratch operand']
  #allocation3 [shape = 'bf16[56,640]{1,0:T(8,128)(2,1)}', space=vmem, size = 0x11800, scoped, tag = 'scratch operand']
  #allocation4 [shape = 'f32[2,18,256]{2,1,0:T(8,128)}', space=vmem, size = 0xc000, scoped, tag = 'scratch operand']
  #allocation5 [shape = 'bf16[28,1280]{1,0:T(8,128)(2,1)}', space=vmem, size = 0x14000, scoped, tag = 'scratch operand']
  #allocation6 [shape = 'bf16[2,1792]{1,0:T(2,128)(2,1)}', space=vmem, size = 0x1c00, scoped, tag = 'scratch operand']
  %s0 = inlined_call_operand.vmem [shape: f32[2,28,28], index: 0, kind: input, shape index: {}]
  %s1 = inlined_call_operand.hbm [shape: bf16[640,512], index: 1, kind: input, shape index: {}]
  %s2 = inlined_call_operand.hbm [shape: f32[1,512], index: 2, kind: input, shape index: {}]
  %s3 = inlined_call_operand.hbm [shape: bf16[1280,512], index: 3, kind: input, shape index: {}]
  %s4 = inlined_call_operand.hbm [shape: f32[1,512], index: 4, kind: input, shape index: {}]
  %s5 = inlined_call_operand.hbm [shape: bf16[1792,128], index: 5, kind: input, shape index: {}]
  %s6 = inlined_call_operand.hbm [shape: f32[1,128], index: 6, kind: input, shape index: {}]
  %s7 = inlined_call_operand.hbm [shape: bf16[28,56], index: 7, kind: input, shape index: {}]
  %s8 = inlined_call_operand.hbm [shape: bf16[28,56], index: 8, kind: input, shape index: {}]
  %s9 = inlined_call_operand.hbm [shape: bf16[512,512], index: 9, kind: input, shape index: {}, may-alias: {9,12}]
  %s10 = inlined_call_operand.hbm [shape: bf16[14,28], index: 10, kind: input, shape index: {}]
  %s11 = inlined_call_operand.hbm [shape: bf16[14,28], index: 11, kind: input, shape index: {}]
  %s12 = inlined_call_operand.hbm [shape: bf16[512,512], index: 12, kind: input, shape index: {}, may-alias: {9,12}]
  %s13 = inlined_call_operand.hbm [shape: f32[2,128], index: 13, kind: output, shape index: {}]
  %s14 = sld [smem:[#allocation0]]
  $region110: #{_lambda_.1} parent=0
    _
  %s16 = ssub.s32 1, %s14
  %s17 = scalar_select 0, %s16, %s14
  $region1: #{_lambda_.1} parent=0
    #allocation7 [shape = 'u8[655360]{0}', space=vmem, size = 0xa0000, scoped, tag = 'input window, operand 1, single buffered']
    #allocation8 [shape = 's32[1]{0}', space=sflag, size = 0x4, scoped, tag = 'scoped memory for _lambda_.1']
    #allocation9 [shape = 's32[1]{0}', space=sflag, size = 0x4, scoped, tag = 'scoped memory for _lambda_.1']
    #allocation10 [shape = 'u8[2048]{0}', space=vmem, size = 0x800, scoped, tag = 'input window, operand 2, single buffered']
    #allocation11 [shape = 's32[1]{0}', space=sflag, size = 0x4, scoped, tag = 'scoped memory for _lambda_.1']
    #allocation12 [shape = 'u8[1310720]{0}', space=vmem, size = 0x140000, scoped, tag = 'input window, operand 3, single buffered']
    #allocation13 [shape = 'u8[2048]{0}', space=vmem, size = 0x800, scoped, tag = 'input window, operand 4, single buffered']
    #allocation14 [shape = 's32[1]{0}', space=sflag, size = 0x4, scoped, tag = 'scoped memory for _lambda_.1']
    #allocation15 [shape = 'u8[458752]{0}', space=vmem, size = 0x70000, scoped, tag = 'input window, operand 5, single buffered']
    #allocation16 [shape = 'u8[512]{0}', space=vmem, size = 0x400, scoped, tag = 'input window, operand 6, single buffered']
    #allocation17 [shape = 's32[1]{0}', space=sflag, size = 0x4, scoped, tag = 'scoped memory for _lambda_.1']
    #allocation18 [shape = 'u8[8192]{0}', space=vmem, size = 0x2000, scoped, tag = 'input window, operand 7, single buffered']
    #allocation19 [shape = 'u8[8192]{0}', space=vmem, size = 0x2000, scoped, tag = 'input window, operand 8, single buffered']
    #allocation20 [shape = 's32[1]{0}', space=sflag, size = 0x4, scoped, tag = 'scoped memory for _lambda_.1']
    #allocation21 [shape = 'u8[524288]{0}', space=vmem, size = 0x80000, scoped, tag = 'input window, operand 9, single buffered']
    #allocation22 [shape = 'u8[4096]{0}', space=vmem, size = 0x1000, scoped, tag = 'input window, operand 10, single buffered']
    #allocation23 [shape = 's32[1]{0}', space=sflag, size = 0x4, scoped, tag = 'scoped memory for _lambda_.1']
    #allocation24 [shape = 'u8[4096]{0}', space=vmem, size = 0x1000, scoped, tag = 'input window, operand 11, single buffered']
    #allocation25 [shape = 'u8[524288]{0}', space=vmem, size = 0x80000, scoped, tag = 'input window, operand 12, single buffered']
    #allocation26 [shape = 's32[1]{0}', space=sflag, size = 0x4, scoped, tag = 'scoped memory for _lambda_.1']
    #allocation27 [shape = 'u8[1024]{0}', space=vmem, size = 0x400, scoped, tag = 'output window, operand 0, single buffered']
    %18 = vsyncpa [#allocation8], 0
    %19 = vsyncpa [#allocation11], 0
    %20 = vsyncpa [#allocation14], 0
    %21 = vsyncpa [#allocation17], 0
    %22 = vsyncpa [#allocation20], 0
    %23 = vsyncpa [#allocation23], 0
    %24 = vsyncpa [#allocation26], 0
    %25 = vsyncpa [#allocation9], 0
    // Predicated region
    $region2: #{_lambda_.1} parent=1 // pred_check
      _
    $region3: #{_lambda_.1} parent=1 // pred_check_branch
      %27 = sbr.rel (0) target = $region5
    $region4: #{_lambda_.1} parent=1 // pred_region
      _
    $region5: #{_lambda_.1} parent=1 // pred_fallthru
      _
    // Predicated region
    $region6: #{_lambda_.1} parent=1 // pred_check
      _
    $region7: #{_lambda_.1} parent=1 // pred_check_branch
      %29 = sbr.rel (0) target = $region9
    $region8: #{_lambda_.1} parent=1 // pred_region
      %s31 = ssub.s32 20480, 20480
      %32 = vsyncadd [#allocation8], %s31
      %s33 = sshll.u32 [#allocation7], 4
      %s34 = int_to_ptr.vmem [resolvable:$true] %s33
      %39 = dma.hbm_to_vmem [thread:$0]  %s1, 20480, %s34, [#allocation8], 256, 256, 16
    $region9: #{_lambda_.1} parent=1 // pred_fallthru
      _
    // Predicated region
    $region10: #{_lambda_.1} parent=1 // pred_check
      _
    $region11: #{_lambda_.1} parent=1 // pred_check_branch
      %41 = sbr.rel (0) target = $region13
    $region12: #{_lambda_.1} parent=1 // pred_region
      %s43 = ssub.s32 64, 64
      %44 = vsyncadd [#allocation11], %s43
      %s46 = sshll.u32 [#allocation10], 4
      %s47 = int_to_ptr.vmem [resolvable:$true] %s46
      %49 = dma.hbm_to_vmem [thread:$0]  %s2, 64, %s47, [#allocation11]
    $region13: #{_lambda_.1} parent=1 // pred_fallthru
      _
    // Predicated region
    $region14: #{_lambda_.1} parent=1 // pred_check
      _
    $region15: #{_lambda_.1} parent=1 // pred_check_branch
      %51 = sbr.rel (0) target = $region17
    $region16: #{_lambda_.1} parent=1 // pred_region
      %s53 = ssub.s32 40960, 40960
      %54 = vsyncadd [#allocation11], %s53
      %s55 = sshll.u32 [#allocation12], 4
      %s56 = int_to_ptr.vmem [resolvable:$true] %s55
      %61 = dma.hbm_to_vmem [thread:$0]  %s3, 40960, %s56, [#allocation11], 256, 256, 16
    $region17: #{_lambda_.1} parent=1 // pred_fallthru
      _
    // Predicated region
    $region18: #{_lambda_.1} parent=1 // pred_check
      _
    $region19: #{_lambda_.1} parent=1 // pred_check_branch
      %63 = sbr.rel (0) target = $region21
    $region20: #{_lambda_.1} parent=1 // pred_region
      %s65 = ssub.s32 64, 64
      %66 = vsyncadd [#allocation14], %s65
      %s68 = sshll.u32 [#allocation13], 4
      %s69 = int_to_ptr.vmem [resolvable:$true] %s68
      %71 = dma.hbm_to_vmem [thread:$0]  %s4, 64, %s69, [#allocation14]
    $region21: #{_lambda_.1} parent=1 // pred_fallthru
      _
    // Predicated region
    $region22: #{_lambda_.1} parent=1 // pred_check
      _
    $region23: #{_lambda_.1} parent=1 // pred_check_branch
      %73 = sbr.rel (0) target = $region25
    $region24: #{_lambda_.1} parent=1 // pred_region
      %s75 = ssub.s32 14336, 14336
      %76 = vsyncadd [#allocation14], %s75
      %s77 = sshll.u32 [#allocation15], 4
      %s78 = int_to_ptr.vmem [resolvable:$true] %s77
      %83 = dma.hbm_to_vmem [thread:$0]  %s5, 14336, %s78, [#allocation14], 64, 64, 4
    $region25: #{_lambda_.1} parent=1 // pred_fallthru
      _
    // Predicated region
    $region26: #{_lambda_.1} parent=1 // pred_check
      _
    $region27: #{_lambda_.1} parent=1 // pred_check_branch
      %85 = sbr.rel (0) target = $region29
    $region28: #{_lambda_.1} parent=1 // pred_region
      %s87 = ssub.s32 16, 16
      %88 = vsyncadd [#allocation17], %s87
      %s90 = sshll.u32 [#allocation16], 4
      %s91 = int_to_ptr.vmem [resolvable:$true] %s90
      %93 = dma.hbm_to_vmem [thread:$0]  %s6, 16, %s91, [#allocation17]
    $region29: #{_lambda_.1} parent=1 // pred_fallthru
      _
    // Predicated region
    $region30: #{_lambda_.1} parent=1 // pred_check
      _
    $region31: #{_lambda_.1} parent=1 // pred_check_branch
      %95 = sbr.rel (0) target = $region33
    $region32: #{_lambda_.1} parent=1 // pred_region
      %s97 = ssub.s32 256, 256
      %98 = vsyncadd [#allocation17], %s97
      %s99 = sshll.u32 [#allocation18], 4
      %s100 = int_to_ptr.vmem [resolvable:$true] %s99
      %105 = dma.hbm_to_vmem [thread:$0]  %s7, 256, %s100, [#allocation17], 64, 64, 4
    $region33: #{_lambda_.1} parent=1 // pred_fallthru
      _
    // Predicated region
    $region34: #{_lambda_.1} parent=1 // pred_check
      _
    $region35: #{_lambda_.1} parent=1 // pred_check_branch
      %107 = sbr.rel (0) target = $region37
    $region36: #{_lambda_.1} parent=1 // pred_region
      %s109 = ssub.s32 256, 256
      %110 = vsyncadd [#allocation20], %s109
      %s111 = sshll.u32 [#allocation19], 4
      %s112 = int_to_ptr.vmem [resolvable:$true] %s111
      %117 = dma.hbm_to_vmem [thread:$0]  %s8, 256, %s112, [#allocation20], 64, 64, 4
    $region37: #{_lambda_.1} parent=1 // pred_fallthru
      _
    // Predicated region
    $region38: #{_lambda_.1} parent=1 // pred_check
      _
    $region39: #{_lambda_.1} parent=1 // pred_check_branch
      %119 = sbr.rel (0) target = $region41
    $region40: #{_lambda_.1} parent=1 // pred_region
      %s121 = ssub.s32 16384, 16384
      %122 = vsyncadd [#allocation20], %s121
      %s123 = sshll.u32 [#allocation21], 4
      %s124 = int_to_ptr.vmem [resolvable:$true] %s123
      %129 = dma.hbm_to_vmem [thread:$0]  %s9, 16384, %s124, [#allocation20], 256, 256, 16
    $region41: #{_lambda_.1} parent=1 // pred_fallthru
      _
    // Predicated region
    $region42: #{_lambda_.1} parent=1 // pred_check
      _
    $region43: #{_lambda_.1} parent=1 // pred_check_branch
      %131 = sbr.rel (0) target = $region45
    $region44: #{_lambda_.1} parent=1 // pred_region
      %s133 = ssub.s32 128, 128
      %134 = vsyncadd [#allocation23], %s133
      %s135 = sshll.u32 [#allocation22], 4
      %s136 = int_to_ptr.vmem [resolvable:$true] %s135
      %141 = dma.hbm_to_vmem [thread:$0]  %s10, 128, %s136, [#allocation23], 64, 64, 4
    $region45: #{_lambda_.1} parent=1 // pred_fallthru
      _
    // Predicated region
    $region46: #{_lambda_.1} parent=1 // pred_check
      _
    $region47: #{_lambda_.1} parent=1 // pred_check_branch
      %143 = sbr.rel (0) target = $region49
    $region48: #{_lambda_.1} parent=1 // pred_region
      %s145 = ssub.s32 128, 128
      %146 = vsyncadd [#allocation23], %s145
      %s147 = sshll.u32 [#allocation24], 4
      %s148 = int_to_ptr.vmem [resolvable:$true] %s147
      %153 = dma.hbm_to_vmem [thread:$0]  %s11, 128, %s148, [#allocation23], 64, 64, 4
    $region49: #{_lambda_.1} parent=1 // pred_fallthru
      _
    // Predicated region
    $region50: #{_lambda_.1} parent=1 // pred_check
      _
    $region51: #{_lambda_.1} parent=1 // pred_check_branch
      %155 = sbr.rel (0) target = $region53
    $region52: #{_lambda_.1} parent=1 // pred_region
      %s157 = ssub.s32 16384, 16384
      %158 = vsyncadd [#allocation26], %s157
      %s159 = sshll.u32 [#allocation25], 4
      %s160 = int_to_ptr.vmem [resolvable:$true] %s159
      %165 = dma.hbm_to_vmem [thread:$0]  %s12, 16384, %s160, [#allocation26], 256, 256, 16
    $region53: #{_lambda_.1} parent=1 // pred_fallthru
      _
    // Predicated region
    $region54: #{_lambda_.1} parent=1 // pred_check
      _
    $region55: #{_lambda_.1} parent=1 // pred_check_branch
      %167 = sbr.rel (0) target = $region57
    $region56: #{_lambda_.1} parent=1 // pred_region
      %168 = dma.done [#allocation8], 20480
    $region57: #{_lambda_.1} parent=1 // pred_fallthru
      _
    // Predicated region
    $region58: #{_lambda_.1} parent=1 // pred_check
      _
    $region59: #{_lambda_.1} parent=1 // pred_check_branch
      %170 = sbr.rel (0) target = $region61
    $region60: #{_lambda_.1} parent=1 // pred_region
      %171 = dma.done [#allocation11], 64
    $region61: #{_lambda_.1} parent=1 // pred_fallthru
      _
    // Predicated region
    $region62: #{_lambda_.1} parent=1 // pred_check
      _
    $region63: #{_lambda_.1} parent=1 // pred_check_branch
      %173 = sbr.rel (0) target = $region65
    $region64: #{_lambda_.1} parent=1 // pred_region
      %174 = dma.done [#allocation11], 40960
    $region65: #{_lambda_.1} parent=1 // pred_fallthru
      _
    // Predicated region
    $region66: #{_lambda_.1} parent=1 // pred_check
      _
    $region67: #{_lambda_.1} parent=1 // pred_check_branch
      %176 = sbr.rel (0) target = $region69
    $region68: #{_lambda_.1} parent=1 // pred_region
      %177 = dma.done [#allocation14], 64
    $region69: #{_lambda_.1} parent=1 // pred_fallthru
      _
    // Predicated region
    $region70: #{_lambda_.1} parent=1 // pred_check
      _
    $region71: #{_lambda_.1} parent=1 // pred_check_branch
      %179 = sbr.rel (0) target = $region73
    $region72: #{_lambda_.1} parent=1 // pred_region
      %180 = dma.done [#allocation14], 14336
    $region73: #{_lambda_.1} parent=1 // pred_fallthru
      _
    // Predicated region
    $region74: #{_lambda_.1} parent=1 // pred_check
      _
    $region75: #{_lambda_.1} parent=1 // pred_check_branch
      %182 = sbr.rel (0) target = $region77
    $region76: #{_lambda_.1} parent=1 // pred_region
      %183 = dma.done [#allocation17], 16
    $region77: #{_lambda_.1} parent=1 // pred_fallthru
      _
    // Predicated region
    $region78: #{_lambda_.1} parent=1 // pred_check
      _
    $region79: #{_lambda_.1} parent=1 // pred_check_branch
      %185 = sbr.rel (0) target = $region81
    $region80: #{_lambda_.1} parent=1 // pred_region
      %186 = dma.done [#allocation17], 256
    $region81: #{_lambda_.1} parent=1 // pred_fallthru
      _
    // Predicated region
    $region82: #{_lambda_.1} parent=1 // pred_check
      _
    $region83: #{_lambda_.1} parent=1 // pred_check_branch
      %188 = sbr.rel (0) target = $region85
    $region84: #{_lambda_.1} parent=1 // pred_region
      %189 = dma.done [#allocation20], 256
    $region85: #{_lambda_.1} parent=1 // pred_fallthru
      _
    // Predicated region
    $region86: #{_lambda_.1} parent=1 // pred_check
      _
    $region87: #{_lambda_.1} parent=1 // pred_check_branch
      %191 = sbr.rel (0) target = $region89
    $region88: #{_lambda_.1} parent=1 // pred_region
      %192 = dma.done [#allocation20], 16384
    $region89: #{_lambda_.1} parent=1 // pred_fallthru
      _
    // Predicated region
    $region90: #{_lambda_.1} parent=1 // pred_check
      _
    $region91: #{_lambda_.1} parent=1 // pred_check_branch
      %194 = sbr.rel (0) target = $region93
    $region92: #{_lambda_.1} parent=1 // pred_region
      %195 = dma.done [#allocation23], 128
    $region93: #{_lambda_.1} parent=1 // pred_fallthru
      _
    // Predicated region
    $region94: #{_lambda_.1} parent=1 // pred_check
      _
    $region95: #{_lambda_.1} parent=1 // pred_check_branch
      %197 = sbr.rel (0) target = $region97
    $region96: #{_lambda_.1} parent=1 // pred_region
      %198 = dma.done [#allocation23], 128
    $region97: #{_lambda_.1} parent=1 // pred_fallthru
      _
    // Predicated region
    $region98: #{_lambda_.1} parent=1 // pred_check
      _
    $region99: #{_lambda_.1} parent=1 // pred_check_branch
      %200 = sbr.rel (0) target = $region101
    $region100: #{_lambda_.1} parent=1 // pred_region
      %201 = dma.done [#allocation26], 16384
    $region101: #{_lambda_.1} parent=1 // pred_fallthru
      _
    %203 = vst [vmem:[#allocation2] sm:$0xff] 0.0
    %204 = vst [vmem:[#allocation2 + $0x8] sm:$0xff] 0.0
    %205 = vst [vmem:[#allocation2 + $0x10] sm:$0xff] 0.0
    %206 = vst [vmem:[#allocation2 + $0x18] sm:$0xff] 0.0
    %207 = vst [vmem:[#allocation2 + $0x20] sm:$0xff] 0.0
    %208 = vst [vmem:[#allocation2 + $0x28] sm:$0xff] 0.0
    %209 = vst [vmem:[#allocation2 + $0x30] sm:$0xff] 0.0
    %210 = vst [vmem:[#allocation2 + $0x38] sm:$0xff] 0.0
    %v211 = vld [vmem:[%s0] sm:$0xff]
    %v212 = vld [vmem:[%s0 + $0x8] sm:$0xff]
    %v213 = vld [vmem:[%s0 + $0x10] sm:$0xff]
    %v214 = vld [vmem:[%s0 + $0x18] sm:$0xf]
    %vm215 = vcmask 228352
    %216 = vst.msk [vmem:[#allocation2 + $0x2] sm:$0xff] %vm215, %v211
    %217 = vst.msk [vmem:[#allocation2 + $0xa] sm:$0xff] %vm215, %v212
    %218 = vst.msk [vmem:[#allocation2 + $0x12] sm:$0xff] %vm215, %v213
    %vm219 = vcmask 224256
    %220 = vst.msk [vmem:[#allocation2 + $0x1a] sm:$0xf] %vm219, %v214
    %s221 = scalar_lea.vmem %s0, 32
    %v222 = vld [vmem:[%s221] sm:$0xff]
    %v223 = vld [vmem:[%s221 + $0x8] sm:$0xff]
    %v224 = vld [vmem:[%s221 + $0x10] sm:$0xff]
    %v225 = vld [vmem:[%s221 + $0x18] sm:$0xf]
    %s226 = scalar_lea.vmem [#allocation2], 32
    %227 = vst.msk [vmem:[%s226 + $0x2] sm:$0xff] %vm215, %v222
    %228 = vst.msk [vmem:[%s226 + $0xa] sm:$0xff] %vm215, %v223
    %229 = vst.msk [vmem:[%s226 + $0x12] sm:$0xff] %vm215, %v224
    %230 = vst.msk [vmem:[%s226 + $0x1a] sm:$0xf] %vm219, %v225
    %v231 = vld [vmem:[#allocation2] sm:$0xff]
    %v232 = vld [vmem:[#allocation2 + $0x8] sm:$0xff]
    %v233 = vld [vmem:[#allocation2 + $0x10] sm:$0xff]
    %v234 = vld [vmem:[#allocation2 + $0x18] sm:$0xf]
    %v235 = vpack.c.bf16 %v232, %v231
    %v236 = vpack.c.bf16 %v234, %v233
    %v239 = vunpack.c.l.b16 %v235
    %v240 = vunpack.c.h.b16 %v235
    %v241 = vunpack.c.l.b16 %v236
    %v242 = vunpack.c.h.b16 %v236
    %v243 = vpack.c.b16 %v239, %v239
    %v244 = vpack.c.b16 %v240, %v240
    %v245 = vpack.c.b16 %v241, %v241
    %v246 = vpack.c.b16 %v242, %v242
    %251 = vst [vmem:[#allocation3] sm:$0xf] %v243
    %252 = vst [vmem:[#allocation3 + $0x14] sm:$0xf] %v244
    %253 = vst [vmem:[#allocation3 + $0x28] sm:$0xf] %v245
    %254 = vst [vmem:[#allocation3 + $0x3c] sm:$0x3] %v246
    %v255 = vld [vmem:[#allocation2 + $0x1] sm:$0xff]
    %v256 = vld [vmem:[#allocation2 + $0x9] sm:$0xff]
    %v257 = vld [vmem:[#allocation2 + $0x11] sm:$0xff]
    %v258 = vld [vmem:[#allocation2 + $0x19] sm:$0xf]
    %v259 = vpack.c.bf16 %v256, %v255
    %v260 = vpack.c.bf16 %v258, %v257
    %v263 = vunpack.c.l.b16 %v259
    %v264 = vunpack.c.h.b16 %v259
    %v265 = vunpack.c.l.b16 %v260
    %v266 = vunpack.c.h.b16 %v260
    %v267 = vpack.c.b16 %v263, %v263
    %v268 = vpack.c.b16 %v264, %v264
    %v269 = vpack.c.b16 %v265, %v265
    %v270 = vpack.c.b16 %v266, %v266
    %275 = vst [vmem:[#allocation3 + $0x4] sm:$0xf] %v267
    %276 = vst [vmem:[#allocation3 + $0x18] sm:$0xf] %v268
    %277 = vst [vmem:[#allocation3 + $0x2c] sm:$0xf] %v269
    %278 = vst [vmem:[#allocation3 + $0x40] sm:$0x3] %v270
    %v279 = vld [vmem:[#allocation2 + $0x2] sm:$0xff]
    %v280 = vld [vmem:[#allocation2 + $0xa] sm:$0xff]
    %v281 = vld [vmem:[#allocation2 + $0x12] sm:$0xff]
    %v282 = vld [vmem:[#allocation2 + $0x1a] sm:$0xf]
    %v283 = vpack.c.bf16 %v280, %v279
    %v284 = vpack.c.bf16 %v282, %v281
    %v287 = vunpack.c.l.b16 %v283
    %v288 = vunpack.c.h.b16 %v283
    %v289 = vunpack.c.l.b16 %v284
    %v290 = vunpack.c.h.b16 %v284
    %v291 = vpack.c.b16 %v287, %v287
    %v292 = vpack.c.b16 %v288, %v288
    %v293 = vpack.c.b16 %v289, %v289
    %v294 = vpack.c.b16 %v290, %v290
    %299 = vst [vmem:[#allocation3 + $0x8] sm:$0xf] %v291
    %300 = vst [vmem:[#allocation3 + $0x1c] sm:$0xf] %v292
    %301 = vst [vmem:[#allocation3 + $0x30] sm:$0xf] %v293
    %302 = vst [vmem:[#allocation3 + $0x44] sm:$0x3] %v294
    %v303 = vld [vmem:[#allocation2 + $0x3] sm:$0xff]
    %v304 = vld [vmem:[#allocation2 + $0xb] sm:$0xff]
    %v305 = vld [vmem:[#allocation2 + $0x13] sm:$0xff]
    %v306 = vld [vmem:[#allocation2 + $0x1b] sm:$0xf]
    %v307 = vpack.c.bf16 %v304, %v303
    %v308 = vpack.c.bf16 %v306, %v305
    %v311 = vunpack.c.l.b16 %v307
    %v312 = vunpack.c.h.b16 %v307
    %v313 = vunpack.c.l.b16 %v308
    %v314 = vunpack.c.h.b16 %v308
    %v315 = vpack.c.b16 %v311, %v311
    %v316 = vpack.c.b16 %v312, %v312
    %v317 = vpack.c.b16 %v313, %v313
    %v318 = vpack.c.b16 %v314, %v314
    %323 = vst [vmem:[#allocation3 + $0xc] sm:$0xf] %v315
    %324 = vst [vmem:[#allocation3 + $0x20] sm:$0xf] %v316
    %325 = vst [vmem:[#allocation3 + $0x34] sm:$0xf] %v317
    %326 = vst [vmem:[#allocation3 + $0x48] sm:$0x3] %v318
    %v327 = vld [vmem:[#allocation2 + $0x4] sm:$0xff]
    %v328 = vld [vmem:[#allocation2 + $0xc] sm:$0xff]
    %v329 = vld [vmem:[#allocation2 + $0x14] sm:$0xff]
    %v330 = vld [vmem:[#allocation2 + $0x1c] sm:$0xf]
    %v331 = vpack.c.bf16 %v328, %v327
    %v332 = vpack.c.bf16 %v330, %v329
    %v335 = vunpack.c.l.b16 %v331
    %v336 = vunpack.c.h.b16 %v331
    %v337 = vunpack.c.l.b16 %v332
    %v338 = vunpack.c.h.b16 %v332
    %v339 = vpack.c.b16 %v335, %v335
    %v340 = vpack.c.b16 %v336, %v336
    %v341 = vpack.c.b16 %v337, %v337
    %v342 = vpack.c.b16 %v338, %v338
    %347 = vst [vmem:[#allocation3 + $0x10] sm:$0xf] %v339
    %348 = vst [vmem:[#allocation3 + $0x24] sm:$0xf] %v340
    %349 = vst [vmem:[#allocation3 + $0x38] sm:$0xf] %v341
    %350 = vst [vmem:[#allocation3 + $0x4c] sm:$0x3] %v342
    %v351 = vld [vmem:[%s226] sm:$0xff]
    %v352 = vld [vmem:[%s226 + $0x8] sm:$0xff]
    %v353 = vld [vmem:[%s226 + $0x10] sm:$0xff]
    %v354 = vld [vmem:[%s226 + $0x18] sm:$0xf]
    %v355 = vpack.c.bf16 %v352, %v351
    %v356 = vpack.c.bf16 %v354, %v353
    %v359 = vunpack.c.l.b16 %v355
    %v360 = vunpack.c.h.b16 %v355
    %v361 = vunpack.c.l.b16 %v356
    %v362 = vunpack.c.h.b16 %v356
    %v363 = vpack.c.b16 %v359, %v359
    %v364 = vpack.c.b16 %v360, %v360
    %v365 = vpack.c.b16 %v361, %v361
    %v366 = vpack.c.b16 %v362, %v362
    %vm367 = vcmask 1041408
    %vm368 = vcmask 1045508
    %vm369 = vmor %vm367, %vm368
    %v370 = vrot.slane %v363, 6
    %v371 = vrot.slane %v370, 4
    %v372 = vrot.slane %v364, 6
    %v373 = vsel %vm369, %v371, %v372
    %v374 = vrot.slane %v372, 4
    %v375 = vrot.slane %v365, 6
    %v376 = vsel %vm369, %v374, %v375
    %v377 = vrot.slane %v375, 4
    %v378 = vrot.slane %v366, 6
    %v379 = vsel %vm369, %v377, %v378
    %384 = vst [vmem:[#allocation3 + $0x3c] sm:$0xc] %v370
    %385 = vst [vmem:[#allocation3 + $0x50] sm:$0xf] %v373
    %386 = vst [vmem:[#allocation3 + $0x64] sm:$0xf] %v376
    %387 = vst [vmem:[#allocation3 + $0x78] sm:$0xf] %v379
    %v388 = vld [vmem:[%s226 + $0x1] sm:$0xff]
    %v389 = vld [vmem:[%s226 + $0x9] sm:$0xff]
    %v390 = vld [vmem:[%s226 + $0x11] sm:$0xff]
    %v391 = vld [vmem:[%s226 + $0x19] sm:$0xf]
    %v392 = vpack.c.bf16 %v389, %v388
    %v393 = vpack.c.bf16 %v391, %v390
    %v396 = vunpack.c.l.b16 %v392
    %v397 = vunpack.c.h.b16 %v392
    %v398 = vunpack.c.l.b16 %v393
    %v399 = vunpack.c.h.b16 %v393
    %v400 = vpack.c.b16 %v396, %v396
    %v401 = vpack.c.b16 %v397, %v397
    %v402 = vpack.c.b16 %v398, %v398
    %v403 = vpack.c.b16 %v399, %v399
    %v404 = vrot.slane %v400, 6
    %v405 = vrot.slane %v404, 4
    %v406 = vrot.slane %v401, 6
    %v407 = vsel %vm369, %v405, %v406
    %v408 = vrot.slane %v406, 4
    %v409 = vrot.slane %v402, 6
    %v410 = vsel %vm369, %v408, %v409
    %v411 = vrot.slane %v409, 4
    %v412 = vrot.slane %v403, 6
    %v413 = vsel %vm369, %v411, %v412
    %418 = vst [vmem:[#allocation3 + $0x40] sm:$0xc] %v404
    %419 = vst [vmem:[#allocation3 + $0x54] sm:$0xf] %v407
    %420 = vst [vmem:[#allocation3 + $0x68] sm:$0xf] %v410
    %421 = vst [vmem:[#allocation3 + $0x7c] sm:$0xf] %v413
    %v422 = vld [vmem:[%s226 + $0x2] sm:$0xff]
    %v423 = vld [vmem:[%s226 + $0xa] sm:$0xff]
    %v424 = vld [vmem:[%s226 + $0x12] sm:$0xff]
    %v425 = vld [vmem:[%s226 + $0x1a] sm:$0xf]
    %v426 = vpack.c.bf16 %v423, %v422
    %v427 = vpack.c.bf16 %v425, %v424
    %v430 = vunpack.c.l.b16 %v426
    %v431 = vunpack.c.h.b16 %v426
    %v432 = vunpack.c.l.b16 %v427
    %v433 = vunpack.c.h.b16 %v427
    %v434 = vpack.c.b16 %v430, %v430
    %v435 = vpack.c.b16 %v431, %v431
    %v436 = vpack.c.b16 %v432, %v432
    %v437 = vpack.c.b16 %v433, %v433
    %v438 = vrot.slane %v434, 6
    %v439 = vrot.slane %v438, 4
    %v440 = vrot.slane %v435, 6
    %v441 = vsel %vm369, %v439, %v440
    %v442 = vrot.slane %v440, 4
    %v443 = vrot.slane %v436, 6
    %v444 = vsel %vm369, %v442, %v443
    %v445 = vrot.slane %v443, 4
    %v446 = vrot.slane %v437, 6
    %v447 = vsel %vm369, %v445, %v446
    %452 = vst [vmem:[#allocation3 + $0x44] sm:$0xc] %v438
    %453 = vst [vmem:[#allocation3 + $0x58] sm:$0xf] %v441
    %454 = vst [vmem:[#allocation3 + $0x6c] sm:$0xf] %v444
    %455 = vst [vmem:[#allocation3 + $0x80] sm:$0xf] %v447
    %v456 = vld [vmem:[%s226 + $0x3] sm:$0xff]
    %v457 = vld [vmem:[%s226 + $0xb] sm:$0xff]
    %v458 = vld [vmem:[%s226 + $0x13] sm:$0xff]
    %v459 = vld [vmem:[%s226 + $0x1b] sm:$0xf]
    %v460 = vpack.c.bf16 %v457, %v456
    %v461 = vpack.c.bf16 %v459, %v458
    %v464 = vunpack.c.l.b16 %v460
    %v465 = vunpack.c.h.b16 %v460
    %v466 = vunpack.c.l.b16 %v461
    %v467 = vunpack.c.h.b16 %v461
    %v468 = vpack.c.b16 %v464, %v464
    %v469 = vpack.c.b16 %v465, %v465
    %v470 = vpack.c.b16 %v466, %v466
    %v471 = vpack.c.b16 %v467, %v467
    %v472 = vrot.slane %v468, 6
    %v473 = vrot.slane %v472, 4
    %v474 = vrot.slane %v469, 6
    %v475 = vsel %vm369, %v473, %v474
    %v476 = vrot.slane %v474, 4
    %v477 = vrot.slane %v470, 6
    %v478 = vsel %vm369, %v476, %v477
    %v479 = vrot.slane %v477, 4
    %v480 = vrot.slane %v471, 6
    %v481 = vsel %vm369, %v479, %v480
    %486 = vst [vmem:[#allocation3 + $0x48] sm:$0xc] %v472
    %487 = vst [vmem:[#allocation3 + $0x5c] sm:$0xf] %v475
    %488 = vst [vmem:[#allocation3 + $0x70] sm:$0xf] %v478
    %489 = vst [vmem:[#allocation3 + $0x84] sm:$0xf] %v481
    %v490 = vld [vmem:[%s226 + $0x4] sm:$0xff]
    %v491 = vld [vmem:[%s226 + $0xc] sm:$0xff]
    %v492 = vld [vmem:[%s226 + $0x14] sm:$0xff]
    %v493 = vld [vmem:[%s226 + $0x1c] sm:$0xf]
    %v494 = vpack.c.bf16 %v491, %v490
    %v495 = vpack.c.bf16 %v493, %v492
    %v498 = vunpack.c.l.b16 %v494
    %v499 = vunpack.c.h.b16 %v494
    %v500 = vunpack.c.l.b16 %v495
    %v501 = vunpack.c.h.b16 %v495
    %v502 = vpack.c.b16 %v498, %v498
    %v503 = vpack.c.b16 %v499, %v499
    %v504 = vpack.c.b16 %v500, %v500
    %v505 = vpack.c.b16 %v501, %v501
    %v506 = vrot.slane %v502, 6
    %v507 = vrot.slane %v506, 4
    %v508 = vrot.slane %v503, 6
    %v509 = vsel %vm369, %v507, %v508
    %v510 = vrot.slane %v508, 4
    %v511 = vrot.slane %v504, 6
    %v512 = vsel %vm369, %v510, %v511
    %v513 = vrot.slane %v511, 4
    %v514 = vrot.slane %v505, 6
    %v515 = vsel %vm369, %v513, %v514
    %520 = vst [vmem:[#allocation3 + $0x4c] sm:$0xc] %v506
    %521 = vst [vmem:[#allocation3 + $0x60] sm:$0xf] %v509
    %522 = vst [vmem:[#allocation3 + $0x74] sm:$0xf] %v512
    %523 = vst [vmem:[#allocation3 + $0x88] sm:$0xf] %v515
    %v524 = vld [vmem:[#allocation3] sm:$0xff]
    %v525 = vld [vmem:[#allocation3 + $0x8] sm:$0xff]
    %v526 = vld [vmem:[#allocation3 + $0x10] sm:$0xf]
    %v527 = vld [vmem:[#allocation3 + $0x14] sm:$0xff]
    %v528 = vld [vmem:[#allocation3 + $0x1c] sm:$0xff]
    %v529 = vld [vmem:[#allocation3 + $0x24] sm:$0xf]
    %v530 = vld [vmem:[#allocation3 + $0x28] sm:$0xff]
    %v531 = vld [vmem:[#allocation3 + $0x30] sm:$0xff]
    %v532 = vld [vmem:[#allocation3 + $0x38] sm:$0xf]
    %v533 = vld [vmem:[#allocation3 + $0x3c] sm:$0xff]
    %v534 = vld [vmem:[#allocation3 + $0x44] sm:$0xff]
    %v535 = vld [vmem:[#allocation3 + $0x4c] sm:$0xf]
    %v536 = vld [vmem:[#allocation3 + $0x50] sm:$0xff]
    %v537 = vld [vmem:[#allocation3 + $0x58] sm:$0xff]
    %v538 = vld [vmem:[#allocation3 + $0x60] sm:$0xf]
    %v539 = vld [vmem:[#allocation3 + $0x64] sm:$0xff]
    %v540 = vld [vmem:[#allocation3 + $0x6c] sm:$0xff]
    %v541 = vld [vmem:[#allocation3 + $0x74] sm:$0xf]
    %v542 = vld [vmem:[#allocation3 + $0x78] sm:$0xff]
    %v543 = vld [vmem:[#allocation3 + $0x80] sm:$0xff]
    %v544 = vld [vmem:[#allocation3 + $0x88] sm:$0xf]
    %v545 = vld [vmem:[#allocation7] sm:$0xff]
    %v546 = vld [vmem:[#allocation7 + $0x8] sm:$0xff]
    %v547 = vld [vmem:[#allocation7 + $0x10] sm:$0xff]
    %v548 = vld [vmem:[#allocation7 + $0x18] sm:$0xff]
    %v549 = vld [vmem:[#allocation7 + $0x20] sm:$0xff]
    %v550 = vld [vmem:[#allocation7 + $0x28] sm:$0xff]
    %v551 = vld [vmem:[#allocation7 + $0x30] sm:$0xff]
    %v552 = vld [vmem:[#allocation7 + $0x38] sm:$0xff]
    %v553 = vld [vmem:[#allocation7 + $0x40] sm:$0xff]
    %v554 = vld [vmem:[#allocation7 + $0x48] sm:$0xff]
    %v555 = vld [vmem:[#allocation7 + $0x50] sm:$0xff]
    %v556 = vld [vmem:[#allocation7 + $0x58] sm:$0xff]
    %v557 = vld [vmem:[#allocation7 + $0x60] sm:$0xff]
    %v558 = vld [vmem:[#allocation7 + $0x68] sm:$0xff]
    %v559 = vld [vmem:[#allocation7 + $0x70] sm:$0xff]
    %v560 = vld [vmem:[#allocation7 + $0x78] sm:$0xff]
    %v561 = vld [vmem:[#allocation7 + $0x80] sm:$0xff]
    %v562 = vld [vmem:[#allocation7 + $0x88] sm:$0xff]
    %v563 = vld [vmem:[#allocation7 + $0x90] sm:$0xff]
    %v564 = vld [vmem:[#allocation7 + $0x98] sm:$0xff]
    %v565 = vld [vmem:[#allocation7 + $0xa0] sm:$0xff]
    %v566 = vld [vmem:[#allocation7 + $0xa8] sm:$0xff]
    %v567 = vld [vmem:[#allocation7 + $0xb0] sm:$0xff]
    %v568 = vld [vmem:[#allocation7 + $0xb8] sm:$0xff]
    %v569 = vld [vmem:[#allocation7 + $0xc0] sm:$0xff]
    %v570 = vld [vmem:[#allocation7 + $0xc8] sm:$0xff]
    %v571 = vld [vmem:[#allocation7 + $0xd0] sm:$0xff]
    %v572 = vld [vmem:[#allocation7 + $0xd8] sm:$0xff]
    %v573 = vld [vmem:[#allocation7 + $0xe0] sm:$0xff]
    %v574 = vld [vmem:[#allocation7 + $0xe8] sm:$0xff]
    %v575 = vld [vmem:[#allocation7 + $0xf0] sm:$0xff]
    %v576 = vld [vmem:[#allocation7 + $0xf8] sm:$0xff]
    %v577 = vld [vmem:[#allocation7 + $0x100] sm:$0xff]
    %v578 = vld [vmem:[#allocation7 + $0x108] sm:$0xff]
    %v579 = vld [vmem:[#allocation7 + $0x110] sm:$0xff]
    %v580 = vld [vmem:[#allocation7 + $0x118] sm:$0xff]
    %v581 = vld [vmem:[#allocation7 + $0x120] sm:$0xff]
    %v582 = vld [vmem:[#allocation7 + $0x128] sm:$0xff]
    %v583 = vld [vmem:[#allocation7 + $0x130] sm:$0xff]
    %v584 = vld [vmem:[#allocation7 + $0x138] sm:$0xff]
    %v585 = vld [vmem:[#allocation7 + $0x140] sm:$0xff]
    %v586 = vld [vmem:[#allocation7 + $0x148] sm:$0xff]
    %v587 = vld [vmem:[#allocation7 + $0x150] sm:$0xff]
    %v588 = vld [vmem:[#allocation7 + $0x158] sm:$0xff]
    %v589 = vld [vmem:[#allocation7 + $0x160] sm:$0xff]
    %v590 = vld [vmem:[#allocation7 + $0x168] sm:$0xff]
    %v591 = vld [vmem:[#allocation7 + $0x170] sm:$0xff]
    %v592 = vld [vmem:[#allocation7 + $0x178] sm:$0xff]
    %v593 = vld [vmem:[#allocation7 + $0x180] sm:$0xff]
    %v594 = vld [vmem:[#allocation7 + $0x188] sm:$0xff]
    %v595 = vld [vmem:[#allocation7 + $0x190] sm:$0xff]
    %v596 = vld [vmem:[#allocation7 + $0x198] sm:$0xff]
    %v597 = vld [vmem:[#allocation7 + $0x1a0] sm:$0xff]
    %v598 = vld [vmem:[#allocation7 + $0x1a8] sm:$0xff]
    %v599 = vld [vmem:[#allocation7 + $0x1b0] sm:$0xff]
    %v600 = vld [vmem:[#allocation7 + $0x1b8] sm:$0xff]
    %v601 = vld [vmem:[#allocation7 + $0x1c0] sm:$0xff]
    %v602 = vld [vmem:[#allocation7 + $0x1c8] sm:$0xff]
    %v603 = vld [vmem:[#allocation7 + $0x1d0] sm:$0xff]
    %v604 = vld [vmem:[#allocation7 + $0x1d8] sm:$0xff]
    %v605 = vld [vmem:[#allocation7 + $0x1e0] sm:$0xff]
    %v606 = vld [vmem:[#allocation7 + $0x1e8] sm:$0xff]
    %v607 = vld [vmem:[#allocation7 + $0x1f0] sm:$0xff]
    %v608 = vld [vmem:[#allocation7 + $0x1f8] sm:$0xff]
    %v609 = vld [vmem:[#allocation7 + $0x200] sm:$0xff]
    %v610 = vld [vmem:[#allocation7 + $0x208] sm:$0xff]
    %v611 = vld [vmem:[#allocation7 + $0x210] sm:$0xff]
    %v612 = vld [vmem:[#allocation7 + $0x218] sm:$0xff]
    %v613 = vld [vmem:[#allocation7 + $0x220] sm:$0xff]
    %v614 = vld [vmem:[#allocation7 + $0x228] sm:$0xff]
    %v615 = vld [vmem:[#allocation7 + $0x230] sm:$0xff]
    %v616 = vld [vmem:[#allocation7 + $0x238] sm:$0xff]
    %v617 = vld [vmem:[#allocation7 + $0x240] sm:$0xff]
    %v618 = vld [vmem:[#allocation7 + $0x248] sm:$0xff]
    %v619 = vld [vmem:[#allocation7 + $0x250] sm:$0xff]
    %v620 = vld [vmem:[#allocation7 + $0x258] sm:$0xff]
    %v621 = vld [vmem:[#allocation7 + $0x260] sm:$0xff]
    %v622 = vld [vmem:[#allocation7 + $0x268] sm:$0xff]
    %v623 = vld [vmem:[#allocation7 + $0x270] sm:$0xff]
    %v624 = vld [vmem:[#allocation7 + $0x278] sm:$0xff]
    %v625 = vld [vmem:[#allocation7 + $0x280] sm:$0xff]
    %v626 = vld [vmem:[#allocation7 + $0x288] sm:$0xff]
    %v627 = vld [vmem:[#allocation7 + $0x290] sm:$0xff]
    %v628 = vld [vmem:[#allocation7 + $0x298] sm:$0xff]
    %v629 = vld [vmem:[#allocation7 + $0x2a0] sm:$0xff]
    %v630 = vld [vmem:[#allocation7 + $0x2a8] sm:$0xff]
    %v631 = vld [vmem:[#allocation7 + $0x2b0] sm:$0xff]
    %v632 = vld [vmem:[#allocation7 + $0x2b8] sm:$0xff]
    %v633 = vld [vmem:[#allocation7 + $0x2c0] sm:$0xff]
    %v634 = vld [vmem:[#allocation7 + $0x2c8] sm:$0xff]
    %v635 = vld [vmem:[#allocation7 + $0x2d0] sm:$0xff]
    %v636 = vld [vmem:[#allocation7 + $0x2d8] sm:$0xff]
    %v637 = vld [vmem:[#allocation7 + $0x2e0] sm:$0xff]
    %v638 = vld [vmem:[#allocation7 + $0x2e8] sm:$0xff]
    %v639 = vld [vmem:[#allocation7 + $0x2f0] sm:$0xff]
    %v640 = vld [vmem:[#allocation7 + $0x2f8] sm:$0xff]
    %v641 = vld [vmem:[#allocation7 + $0x300] sm:$0xff]
    %v642 = vld [vmem:[#allocation7 + $0x308] sm:$0xff]
    %v643 = vld [vmem:[#allocation7 + $0x310] sm:$0xff]
    %v644 = vld [vmem:[#allocation7 + $0x318] sm:$0xff]
    %v645 = vld [vmem:[#allocation7 + $0x320] sm:$0xff]
    %v646 = vld [vmem:[#allocation7 + $0x328] sm:$0xff]
    %v647 = vld [vmem:[#allocation7 + $0x330] sm:$0xff]
    %v648 = vld [vmem:[#allocation7 + $0x338] sm:$0xff]
    %v649 = vld [vmem:[#allocation7 + $0x340] sm:$0xff]
    %v650 = vld [vmem:[#allocation7 + $0x348] sm:$0xff]
    %v651 = vld [vmem:[#allocation7 + $0x350] sm:$0xff]
    %v652 = vld [vmem:[#allocation7 + $0x358] sm:$0xff]
    %v653 = vld [vmem:[#allocation7 + $0x360] sm:$0xff]
    %v654 = vld [vmem:[#allocation7 + $0x368] sm:$0xff]
    %v655 = vld [vmem:[#allocation7 + $0x370] sm:$0xff]
    %v656 = vld [vmem:[#allocation7 + $0x378] sm:$0xff]
    %v657 = vld [vmem:[#allocation7 + $0x380] sm:$0xff]
    %v658 = vld [vmem:[#allocation7 + $0x388] sm:$0xff]
    %v659 = vld [vmem:[#allocation7 + $0x390] sm:$0xff]
    %v660 = vld [vmem:[#allocation7 + $0x398] sm:$0xff]
    %v661 = vld [vmem:[#allocation7 + $0x3a0] sm:$0xff]
    %v662 = vld [vmem:[#allocation7 + $0x3a8] sm:$0xff]
    %v663 = vld [vmem:[#allocation7 + $0x3b0] sm:$0xff]
    %v664 = vld [vmem:[#allocation7 + $0x3b8] sm:$0xff]
    %v665 = vld [vmem:[#allocation7 + $0x3c0] sm:$0xff]
    %v666 = vld [vmem:[#allocation7 + $0x3c8] sm:$0xff]
    %v667 = vld [vmem:[#allocation7 + $0x3d0] sm:$0xff]
    %v668 = vld [vmem:[#allocation7 + $0x3d8] sm:$0xff]
    %v669 = vld [vmem:[#allocation7 + $0x3e0] sm:$0xff]
    %v670 = vld [vmem:[#allocation7 + $0x3e8] sm:$0xff]
    %v671 = vld [vmem:[#allocation7 + $0x3f0] sm:$0xff]
    %v672 = vld [vmem:[#allocation7 + $0x3f8] sm:$0xff]
    %v673 = vld [vmem:[#allocation7 + $0x400] sm:$0xff]
    %v674 = vld [vmem:[#allocation7 + $0x408] sm:$0xff]
    %v675 = vld [vmem:[#allocation7 + $0x410] sm:$0xff]
    %v676 = vld [vmem:[#allocation7 + $0x418] sm:$0xff]
    %v677 = vld [vmem:[#allocation7 + $0x420] sm:$0xff]
    %v678 = vld [vmem:[#allocation7 + $0x428] sm:$0xff]
    %v679 = vld [vmem:[#allocation7 + $0x430] sm:$0xff]
    %v680 = vld [vmem:[#allocation7 + $0x438] sm:$0xff]
    %v681 = vld [vmem:[#allocation7 + $0x440] sm:$0xff]
    %v682 = vld [vmem:[#allocation7 + $0x448] sm:$0xff]
    %v683 = vld [vmem:[#allocation7 + $0x450] sm:$0xff]
    %v684 = vld [vmem:[#allocation7 + $0x458] sm:$0xff]
    %v685 = vld [vmem:[#allocation7 + $0x460] sm:$0xff]
    %v686 = vld [vmem:[#allocation7 + $0x468] sm:$0xff]
    %v687 = vld [vmem:[#allocation7 + $0x470] sm:$0xff]
    %v688 = vld [vmem:[#allocation7 + $0x478] sm:$0xff]
    %v689 = vld [vmem:[#allocation7 + $0x480] sm:$0xff]
    %v690 = vld [vmem:[#allocation7 + $0x488] sm:$0xff]
    %v691 = vld [vmem:[#allocation7 + $0x490] sm:$0xff]
    %v692 = vld [vmem:[#allocation7 + $0x498] sm:$0xff]
    %v693 = vld [vmem:[#allocation7 + $0x4a0] sm:$0xff]
    %v694 = vld [vmem:[#allocation7 + $0x4a8] sm:$0xff]
    %v695 = vld [vmem:[#allocation7 + $0x4b0] sm:$0xff]
    %v696 = vld [vmem:[#allocation7 + $0x4b8] sm:$0xff]
    %v697 = vld [vmem:[#allocation7 + $0x4c0] sm:$0xff]
    %v698 = vld [vmem:[#allocation7 + $0x4c8] sm:$0xff]
    %v699 = vld [vmem:[#allocation7 + $0x4d0] sm:$0xff]
    %v700 = vld [vmem:[#allocation7 + $0x4d8] sm:$0xff]
    %v701 = vld [vmem:[#allocation7 + $0x4e0] sm:$0xff]
    %v702 = vld [vmem:[#allocation7 + $0x4e8] sm:$0xff]
    %v703 = vld [vmem:[#allocation7 + $0x4f0] sm:$0xff]
    %v704 = vld [vmem:[#allocation7 + $0x4f8] sm:$0xff]
    %v705 = vld [vmem:[#allocation10] sm:$0xf]
    %v707 = vlaneseq
    %v708 = vshrl.u32 %v707, 7
    %v709 = vsub.s32 0, %v708
    %v710 = vrot.slane %v705, %v709
    %v711 = vlaneseq
    %v712 = vshrl.u32 %v711, 7
    %v713 = vsub.s32 1, %v712
    %v714 = vrot.slane %v705, %v713
    %v715 = vlaneseq
    %v716 = vshrl.u32 %v715, 7
    %v717 = vsub.s32 2, %v716
    %v718 = vrot.slane %v705, %v717
    %v719 = vlaneseq
    %v720 = vshrl.u32 %v719, 7
    %v721 = vsub.s32 3, %v720
    %v722 = vrot.slane %v705, %v721
    %v748 = vunpack.c.l.b16 %v524
    %v749 = vunpack.c.h.b16 %v524
    %v750 = vunpack.c.l.b16 %v525
    %v751 = vunpack.c.h.b16 %v525
    %v752 = vunpack.c.l.b16 %v526
    %v753 = vunpack.c.l.b16 %v527
    %v754 = vunpack.c.h.b16 %v527
    %v755 = vunpack.c.l.b16 %v528
    %v756 = vunpack.c.h.b16 %v528
    %v757 = vunpack.c.l.b16 %v529
    %v758 = vunpack.c.l.b16 %v530
    %v759 = vunpack.c.h.b16 %v530
    %v760 = vunpack.c.l.b16 %v531
    %v761 = vunpack.c.h.b16 %v531
    %v762 = vunpack.c.l.b16 %v532
    %v763 = vunpack.c.l.b16 %v533
    %v764 = vunpack.c.h.b16 %v533
    %v765 = vunpack.c.l.b16 %v534
    %v766 = vunpack.c.h.b16 %v534
    %v767 = vunpack.c.l.b16 %v535
    %v768 = vunpack.c.l.b16 %v536
    %v769 = vunpack.c.h.b16 %v536
    %v770 = vunpack.c.l.b16 %v537
    %v771 = vunpack.c.h.b16 %v537
    %v772 = vunpack.c.l.b16 %v538
    %v773 = vunpack.c.l.b16 %v539
    %v774 = vunpack.c.h.b16 %v539
    %v775 = vunpack.c.l.b16 %v540
    %v776 = vunpack.c.h.b16 %v540
    %v777 = vunpack.c.l.b16 %v541
    %v778 = vunpack.c.l.b16 %v542
    %v779 = vunpack.c.h.b16 %v542
    %v780 = vunpack.c.l.b16 %v543
    %v781 = vunpack.c.h.b16 %v543
    %v782 = vunpack.c.l.b16 %v544
    %v783 = vpack.c.b16 %v753, %v748
    %v784 = vpack.c.b16 %v754, %v749
    %v785 = vpack.c.b16 %v755, %v750
    %v786 = vpack.c.b16 %v756, %v751
    %v787 = vpack.c.b16 %v757, %v752
    %v788 = vpack.c.b16 %v763, %v758
    %v789 = vpack.c.b16 %v764, %v759
    %v790 = vpack.c.b16 %v765, %v760
    %v791 = vpack.c.b16 %v766, %v761
    %v792 = vpack.c.b16 %v767, %v762
    %v793 = vpack.c.b16 %v773, %v768
    %v794 = vpack.c.b16 %v774, %v769
    %v795 = vpack.c.b16 %v775, %v770
    %v796 = vpack.c.b16 %v776, %v771
    %v797 = vpack.c.b16 %v777, %v772
    %v798 = vpack.c.b16 %v778, %v778
    %v799 = vpack.c.b16 %v779, %v779
    %v800 = vpack.c.b16 %v780, %v780
    %v801 = vpack.c.b16 %v781, %v781
    %v802 = vpack.c.b16 %v782, %v782
    %v983 = vunpack.c.l.b16 %v545
    %v984 = vunpack.c.h.b16 %v545
    %v985 = vunpack.c.l.b16 %v546
    %v986 = vunpack.c.h.b16 %v546
    %v987 = vunpack.c.l.b16 %v547
    %v988 = vunpack.c.h.b16 %v547
    %v989 = vunpack.c.l.b16 %v548
    %v990 = vunpack.c.h.b16 %v548
    %v991 = vunpack.c.l.b16 %v549
    %v992 = vunpack.c.h.b16 %v549
    %v993 = vunpack.c.l.b16 %v550
    %v994 = vunpack.c.h.b16 %v550
    %v995 = vunpack.c.l.b16 %v551
    %v996 = vunpack.c.h.b16 %v551
    %v997 = vunpack.c.l.b16 %v552
    %v998 = vunpack.c.h.b16 %v552
    %v999 = vunpack.c.l.b16 %v553
    %v1000 = vunpack.c.h.b16 %v553
    %v1001 = vunpack.c.l.b16 %v554
    %v1002 = vunpack.c.h.b16 %v554
    %v1003 = vunpack.c.l.b16 %v555
    %v1004 = vunpack.c.h.b16 %v555
    %v1005 = vunpack.c.l.b16 %v556
    %v1006 = vunpack.c.h.b16 %v556
    %v1007 = vunpack.c.l.b16 %v557
    %v1008 = vunpack.c.h.b16 %v557
    %v1009 = vunpack.c.l.b16 %v558
    %v1010 = vunpack.c.h.b16 %v558
    %v1011 = vunpack.c.l.b16 %v559
    %v1012 = vunpack.c.h.b16 %v559
    %v1013 = vunpack.c.l.b16 %v560
    %v1014 = vunpack.c.h.b16 %v560
    %v1015 = vunpack.c.l.b16 %v561
    %v1016 = vunpack.c.h.b16 %v561
    %v1017 = vunpack.c.l.b16 %v562
    %v1018 = vunpack.c.h.b16 %v562
    %v1019 = vunpack.c.l.b16 %v563
    %v1020 = vunpack.c.h.b16 %v563
    %v1021 = vunpack.c.l.b16 %v564
    %v1022 = vunpack.c.h.b16 %v564
    %v1023 = vunpack.c.l.b16 %v565
    %v1024 = vunpack.c.h.b16 %v565
    %v1025 = vunpack.c.l.b16 %v566
    %v1026 = vunpack.c.h.b16 %v566
    %v1027 = vunpack.c.l.b16 %v567
    %v1028 = vunpack.c.h.b16 %v567
    %v1029 = vunpack.c.l.b16 %v568
    %v1030 = vunpack.c.h.b16 %v568
    %v1031 = vunpack.c.l.b16 %v569
    %v1032 = vunpack.c.h.b16 %v569
    %v1033 = vunpack.c.l.b16 %v570
    %v1034 = vunpack.c.h.b16 %v570
    %v1035 = vunpack.c.l.b16 %v571
    %v1036 = vunpack.c.h.b16 %v571
    %v1037 = vunpack.c.l.b16 %v572
    %v1038 = vunpack.c.h.b16 %v572
    %v1039 = vunpack.c.l.b16 %v573
    %v1040 = vunpack.c.h.b16 %v573
    %v1041 = vunpack.c.l.b16 %v574
    %v1042 = vunpack.c.h.b16 %v574
    %v1043 = vunpack.c.l.b16 %v575
    %v1044 = vunpack.c.h.b16 %v575
    %v1045 = vunpack.c.l.b16 %v576
    %v1046 = vunpack.c.h.b16 %v576
    %v1047 = vunpack.c.l.b16 %v577
    %v1048 = vunpack.c.h.b16 %v577
    %v1049 = vunpack.c.l.b16 %v578
    %v1050 = vunpack.c.h.b16 %v578
    %v1051 = vunpack.c.l.b16 %v579
    %v1052 = vunpack.c.h.b16 %v579
    %v1053 = vunpack.c.l.b16 %v580
    %v1054 = vunpack.c.h.b16 %v580
    %v1055 = vunpack.c.l.b16 %v581
    %v1056 = vunpack.c.h.b16 %v581
    %v1057 = vunpack.c.l.b16 %v582
    %v1058 = vunpack.c.h.b16 %v582
    %v1059 = vunpack.c.l.b16 %v583
    %v1060 = vunpack.c.h.b16 %v583
    %v1061 = vunpack.c.l.b16 %v584
    %v1062 = vunpack.c.h.b16 %v584
    %v1063 = vunpack.c.l.b16 %v585
    %v1064 = vunpack.c.h.b16 %v585
    %v1065 = vunpack.c.l.b16 %v586
    %v1066 = vunpack.c.h.b16 %v586
    %v1067 = vunpack.c.l.b16 %v587
    %v1068 = vunpack.c.h.b16 %v587
    %v1069 = vunpack.c.l.b16 %v588
    %v1070 = vunpack.c.h.b16 %v588
    %v1071 = vunpack.c.l.b16 %v589
    %v1072 = vunpack.c.h.b16 %v589
    %v1073 = vunpack.c.l.b16 %v590
    %v1074 = vunpack.c.h.b16 %v590
    %v1075 = vunpack.c.l.b16 %v591
    %v1076 = vunpack.c.h.b16 %v591
    %v1077 = vunpack.c.l.b16 %v592
    %v1078 = vunpack.c.h.b16 %v592
    %v1079 = vunpack.c.l.b16 %v593
    %v1080 = vunpack.c.h.b16 %v593
    %v1081 = vunpack.c.l.b16 %v594
    %v1082 = vunpack.c.h.b16 %v594
    %v1083 = vunpack.c.l.b16 %v595
    %v1084 = vunpack.c.h.b16 %v595
    %v1085 = vunpack.c.l.b16 %v596
    %v1086 = vunpack.c.h.b16 %v596
    %v1087 = vunpack.c.l.b16 %v597
    %v1088 = vunpack.c.h.b16 %v597
    %v1089 = vunpack.c.l.b16 %v598
    %v1090 = vunpack.c.h.b16 %v598
    %v1091 = vunpack.c.l.b16 %v599
    %v1092 = vunpack.c.h.b16 %v599
    %v1093 = vunpack.c.l.b16 %v600
    %v1094 = vunpack.c.h.b16 %v600
    %v1095 = vunpack.c.l.b16 %v601
    %v1096 = vunpack.c.h.b16 %v601
    %v1097 = vunpack.c.l.b16 %v602
    %v1098 = vunpack.c.h.b16 %v602
    %v1099 = vunpack.c.l.b16 %v603
    %v1100 = vunpack.c.h.b16 %v603
    %v1101 = vunpack.c.l.b16 %v604
    %v1102 = vunpack.c.h.b16 %v604
    %v1103 = vunpack.c.l.b16 %v605
    %v1104 = vunpack.c.h.b16 %v605
    %v1105 = vunpack.c.l.b16 %v606
    %v1106 = vunpack.c.h.b16 %v606
    %v1107 = vunpack.c.l.b16 %v607
    %v1108 = vunpack.c.h.b16 %v607
    %v1109 = vunpack.c.l.b16 %v608
    %v1110 = vunpack.c.h.b16 %v608
    %v1111 = vunpack.c.l.b16 %v609
    %v1112 = vunpack.c.h.b16 %v609
    %v1113 = vunpack.c.l.b16 %v610
    %v1114 = vunpack.c.h.b16 %v610
    %v1115 = vunpack.c.l.b16 %v611
    %v1116 = vunpack.c.h.b16 %v611
    %v1117 = vunpack.c.l.b16 %v612
    %v1118 = vunpack.c.h.b16 %v612
    %v1119 = vunpack.c.l.b16 %v613
    %v1120 = vunpack.c.h.b16 %v613
    %v1121 = vunpack.c.l.b16 %v614
    %v1122 = vunpack.c.h.b16 %v614
    %v1123 = vunpack.c.l.b16 %v615
    %v1124 = vunpack.c.h.b16 %v615
    %v1125 = vunpack.c.l.b16 %v616
    %v1126 = vunpack.c.h.b16 %v616
    %v1127 = vunpack.c.l.b16 %v617
    %v1128 = vunpack.c.h.b16 %v617
    %v1129 = vunpack.c.l.b16 %v618
    %v1130 = vunpack.c.h.b16 %v618
    %v1131 = vunpack.c.l.b16 %v619
    %v1132 = vunpack.c.h.b16 %v619
    %v1133 = vunpack.c.l.b16 %v620
    %v1134 = vunpack.c.h.b16 %v620
    %v1135 = vunpack.c.l.b16 %v621
    %v1136 = vunpack.c.h.b16 %v621
    %v1137 = vunpack.c.l.b16 %v622
    %v1138 = vunpack.c.h.b16 %v622
    %v1139 = vunpack.c.l.b16 %v623
    %v1140 = vunpack.c.h.b16 %v623
    %v1141 = vunpack.c.l.b16 %v624
    %v1142 = vunpack.c.h.b16 %v624
    %v1143 = vunpack.c.l.b16 %v625
    %v1144 = vunpack.c.h.b16 %v625
    %v1145 = vunpack.c.l.b16 %v626
    %v1146 = vunpack.c.h.b16 %v626
    %v1147 = vunpack.c.l.b16 %v627
    %v1148 = vunpack.c.h.b16 %v627
    %v1149 = vunpack.c.l.b16 %v628
    %v1150 = vunpack.c.h.b16 %v628
    %v1151 = vunpack.c.l.b16 %v629
    %v1152 = vunpack.c.h.b16 %v629
    %v1153 = vunpack.c.l.b16 %v630
    %v1154 = vunpack.c.h.b16 %v630
    %v1155 = vunpack.c.l.b16 %v631
    %v1156 = vunpack.c.h.b16 %v631
    %v1157 = vunpack.c.l.b16 %v632
    %v1158 = vunpack.c.h.b16 %v632
    %v1159 = vunpack.c.l.b16 %v633
    %v1160 = vunpack.c.h.b16 %v633
    %v1161 = vunpack.c.l.b16 %v634
    %v1162 = vunpack.c.h.b16 %v634
    %v1163 = vunpack.c.l.b16 %v635
    %v1164 = vunpack.c.h.b16 %v635
    %v1165 = vunpack.c.l.b16 %v636
    %v1166 = vunpack.c.h.b16 %v636
    %v1167 = vunpack.c.l.b16 %v637
    %v1168 = vunpack.c.h.b16 %v637
    %v1169 = vunpack.c.l.b16 %v638
    %v1170 = vunpack.c.h.b16 %v638
    %v1171 = vunpack.c.l.b16 %v639
    %v1172 = vunpack.c.h.b16 %v639
    %v1173 = vunpack.c.l.b16 %v640
    %v1174 = vunpack.c.h.b16 %v640
    %v1175 = vunpack.c.l.b16 %v641
    %v1176 = vunpack.c.h.b16 %v641
    %v1177 = vunpack.c.l.b16 %v642
    %v1178 = vunpack.c.h.b16 %v642
    %v1179 = vunpack.c.l.b16 %v643
    %v1180 = vunpack.c.h.b16 %v643
    %v1181 = vunpack.c.l.b16 %v644
    %v1182 = vunpack.c.h.b16 %v644
    %v1183 = vunpack.c.l.b16 %v645
    %v1184 = vunpack.c.h.b16 %v645
    %v1185 = vunpack.c.l.b16 %v646
    %v1186 = vunpack.c.h.b16 %v646
    %v1187 = vunpack.c.l.b16 %v647
    %v1188 = vunpack.c.h.b16 %v647
    %v1189 = vunpack.c.l.b16 %v648
    %v1190 = vunpack.c.h.b16 %v648
    %v1191 = vunpack.c.l.b16 %v649
    %v1192 = vunpack.c.h.b16 %v649
    %v1193 = vunpack.c.l.b16 %v650
    %v1194 = vunpack.c.h.b16 %v650
    %v1195 = vunpack.c.l.b16 %v651
    %v1196 = vunpack.c.h.b16 %v651
    %v1197 = vunpack.c.l.b16 %v652
    %v1198 = vunpack.c.h.b16 %v652
    %v1199 = vunpack.c.l.b16 %v653
    %v1200 = vunpack.c.h.b16 %v653
    %v1201 = vunpack.c.l.b16 %v654
    %v1202 = vunpack.c.h.b16 %v654
    %v1203 = vunpack.c.l.b16 %v655
    %v1204 = vunpack.c.h.b16 %v655
    %v1205 = vunpack.c.l.b16 %v656
    %v1206 = vunpack.c.h.b16 %v656
    %v1207 = vunpack.c.l.b16 %v657
    %v1208 = vunpack.c.h.b16 %v657
    %v1209 = vunpack.c.l.b16 %v658
    %v1210 = vunpack.c.h.b16 %v658
    %v1211 = vunpack.c.l.b16 %v659
    %v1212 = vunpack.c.h.b16 %v659
    %v1213 = vunpack.c.l.b16 %v660
    %v1214 = vunpack.c.h.b16 %v660
    %v1215 = vunpack.c.l.b16 %v661
    %v1216 = vunpack.c.h.b16 %v661
    %v1217 = vunpack.c.l.b16 %v662
    %v1218 = vunpack.c.h.b16 %v662
    %v1219 = vunpack.c.l.b16 %v663
    %v1220 = vunpack.c.h.b16 %v663
    %v1221 = vunpack.c.l.b16 %v664
    %v1222 = vunpack.c.h.b16 %v664
    %v1223 = vunpack.c.l.b16 %v665
    %v1224 = vunpack.c.h.b16 %v665
    %v1225 = vunpack.c.l.b16 %v666
    %v1226 = vunpack.c.h.b16 %v666
    %v1227 = vunpack.c.l.b16 %v667
    %v1228 = vunpack.c.h.b16 %v667
    %v1229 = vunpack.c.l.b16 %v668
    %v1230 = vunpack.c.h.b16 %v668
    %v1231 = vunpack.c.l.b16 %v669
    %v1232 = vunpack.c.h.b16 %v669
    %v1233 = vunpack.c.l.b16 %v670
    %v1234 = vunpack.c.h.b16 %v670
    %v1235 = vunpack.c.l.b16 %v671
    %v1236 = vunpack.c.h.b16 %v671
    %v1237 = vunpack.c.l.b16 %v672
    %v1238 = vunpack.c.h.b16 %v672
    %v1239 = vunpack.c.l.b16 %v673
    %v1240 = vunpack.c.h.b16 %v673
    %v1241 = vunpack.c.l.b16 %v674
    %v1242 = vunpack.c.h.b16 %v674
    %v1243 = vunpack.c.l.b16 %v675
    %v1244 = vunpack.c.h.b16 %v675
    %v1245 = vunpack.c.l.b16 %v676
    %v1246 = vunpack.c.h.b16 %v676
    %v1247 = vunpack.c.l.b16 %v677
    %v1248 = vunpack.c.h.b16 %v677
    %v1249 = vunpack.c.l.b16 %v678
    %v1250 = vunpack.c.h.b16 %v678
    %v1251 = vunpack.c.l.b16 %v679
    %v1252 = vunpack.c.h.b16 %v679
    %v1253 = vunpack.c.l.b16 %v680
    %v1254 = vunpack.c.h.b16 %v680
    %v1255 = vunpack.c.l.b16 %v681
    %v1256 = vunpack.c.h.b16 %v681
    %v1257 = vunpack.c.l.b16 %v682
    %v1258 = vunpack.c.h.b16 %v682
    %v1259 = vunpack.c.l.b16 %v683
    %v1260 = vunpack.c.h.b16 %v683
    %v1261 = vunpack.c.l.b16 %v684
    %v1262 = vunpack.c.h.b16 %v684
    %v1263 = vunpack.c.l.b16 %v685
    %v1264 = vunpack.c.h.b16 %v685
    %v1265 = vunpack.c.l.b16 %v686
    %v1266 = vunpack.c.h.b16 %v686
    %v1267 = vunpack.c.l.b16 %v687
    %v1268 = vunpack.c.h.b16 %v687
    %v1269 = vunpack.c.l.b16 %v688
    %v1270 = vunpack.c.h.b16 %v688
    %v1271 = vunpack.c.l.b16 %v689
    %v1272 = vunpack.c.h.b16 %v689
    %v1273 = vunpack.c.l.b16 %v690
    %v1274 = vunpack.c.h.b16 %v690
    %v1275 = vunpack.c.l.b16 %v691
    %v1276 = vunpack.c.h.b16 %v691
    %v1277 = vunpack.c.l.b16 %v692
    %v1278 = vunpack.c.h.b16 %v692
    %v1279 = vunpack.c.l.b16 %v693
    %v1280 = vunpack.c.h.b16 %v693
    %v1281 = vunpack.c.l.b16 %v694
    %v1282 = vunpack.c.h.b16 %v694
    %v1283 = vunpack.c.l.b16 %v695
    %v1284 = vunpack.c.h.b16 %v695
    %v1285 = vunpack.c.l.b16 %v696
    %v1286 = vunpack.c.h.b16 %v696
    %v1287 = vunpack.c.l.b16 %v697
    %v1288 = vunpack.c.h.b16 %v697
    %v1289 = vunpack.c.l.b16 %v698
    %v1290 = vunpack.c.h.b16 %v698
    %v1291 = vunpack.c.l.b16 %v699
    %v1292 = vunpack.c.h.b16 %v699
    %v1293 = vunpack.c.l.b16 %v700
    %v1294 = vunpack.c.h.b16 %v700
    %v1295 = vunpack.c.l.b16 %v701
    %v1296 = vunpack.c.h.b16 %v701
    %v1297 = vunpack.c.l.b16 %v702
    %v1298 = vunpack.c.h.b16 %v702
    %v1299 = vunpack.c.l.b16 %v703
    %v1300 = vunpack.c.h.b16 %v703
    %v1301 = vunpack.c.l.b16 %v704
    %v1302 = vunpack.c.h.b16 %v704
    %v1303 = vpack.c.b16 %v987, %v983
    %v1304 = vpack.c.b16 %v988, %v984
    %v1305 = vpack.c.b16 %v989, %v985
    %v1306 = vpack.c.b16 %v990, %v986
    %v1307 = vpack.c.b16 %v995, %v991
    %v1308 = vpack.c.b16 %v996, %v992
    %v1309 = vpack.c.b16 %v997, %v993
    %v1310 = vpack.c.b16 %v998, %v994
    %v1311 = vpack.c.b16 %v1003, %v999
    %v1312 = vpack.c.b16 %v1004, %v1000
    %v1313 = vpack.c.b16 %v1005, %v1001
    %v1314 = vpack.c.b16 %v1006, %v1002
    %v1315 = vpack.c.b16 %v1011, %v1007
    %v1316 = vpack.c.b16 %v1012, %v1008
    %v1317 = vpack.c.b16 %v1013, %v1009
    %v1318 = vpack.c.b16 %v1014, %v1010
    %v1319 = vpack.c.b16 %v1019, %v1015
    %v1320 = vpack.c.b16 %v1020, %v1016
    %v1321 = vpack.c.b16 %v1021, %v1017
    %v1322 = vpack.c.b16 %v1022, %v1018
    %v1323 = vpack.c.b16 %v1027, %v1023
    %v1324 = vpack.c.b16 %v1028, %v1024
    %v1325 = vpack.c.b16 %v1029, %v1025
    %v1326 = vpack.c.b16 %v1030, %v1026
    %v1327 = vpack.c.b16 %v1035, %v1031
    %v1328 = vpack.c.b16 %v1036, %v1032
    %v1329 = vpack.c.b16 %v1037, %v1033
    %v1330 = vpack.c.b16 %v1038, %v1034
    %v1331 = vpack.c.b16 %v1043, %v1039
    %v1332 = vpack.c.b16 %v1044, %v1040
    %v1333 = vpack.c.b16 %v1045, %v1041
    %v1334 = vpack.c.b16 %v1046, %v1042
    %v1335 = vpack.c.b16 %v1051, %v1047
    %v1336 = vpack.c.b16 %v1052, %v1048
    %v1337 = vpack.c.b16 %v1053, %v1049
    %v1338 = vpack.c.b16 %v1054, %v1050
    %v1339 = vpack.c.b16 %v1059, %v1055
    %v1340 = vpack.c.b16 %v1060, %v1056
    %v1341 = vpack.c.b16 %v1061, %v1057
    %v1342 = vpack.c.b16 %v1062, %v1058
    %v1343 = vpack.c.b16 %v1067, %v1063
    %v1344 = vpack.c.b16 %v1068, %v1064
    %v1345 = vpack.c.b16 %v1069, %v1065
    %v1346 = vpack.c.b16 %v1070, %v1066
    %v1347 = vpack.c.b16 %v1075, %v1071
    %v1348 = vpack.c.b16 %v1076, %v1072
    %v1349 = vpack.c.b16 %v1077, %v1073
    %v1350 = vpack.c.b16 %v1078, %v1074
    %v1351 = vpack.c.b16 %v1083, %v1079
    %v1352 = vpack.c.b16 %v1084, %v1080
    %v1353 = vpack.c.b16 %v1085, %v1081
    %v1354 = vpack.c.b16 %v1086, %v1082
    %v1355 = vpack.c.b16 %v1091, %v1087
    %v1356 = vpack.c.b16 %v1092, %v1088
    %v1357 = vpack.c.b16 %v1093, %v1089
    %v1358 = vpack.c.b16 %v1094, %v1090
    %v1359 = vpack.c.b16 %v1099, %v1095
    %v1360 = vpack.c.b16 %v1100, %v1096
    %v1361 = vpack.c.b16 %v1101, %v1097
    %v1362 = vpack.c.b16 %v1102, %v1098
    %v1363 = vpack.c.b16 %v1107, %v1103
    %v1364 = vpack.c.b16 %v1108, %v1104
    %v1365 = vpack.c.b16 %v1109, %v1105
    %v1366 = vpack.c.b16 %v1110, %v1106
    %v1367 = vpack.c.b16 %v1115, %v1111
    %v1368 = vpack.c.b16 %v1116, %v1112
    %v1369 = vpack.c.b16 %v1117, %v1113
    %v1370 = vpack.c.b16 %v1118, %v1114
    %v1371 = vpack.c.b16 %v1123, %v1119
    %v1372 = vpack.c.b16 %v1124, %v1120
    %v1373 = vpack.c.b16 %v1125, %v1121
    %v1374 = vpack.c.b16 %v1126, %v1122
    %v1375 = vpack.c.b16 %v1131, %v1127
    %v1376 = vpack.c.b16 %v1132, %v1128
    %v1377 = vpack.c.b16 %v1133, %v1129
    %v1378 = vpack.c.b16 %v1134, %v1130
    %v1379 = vpack.c.b16 %v1139, %v1135
    %v1380 = vpack.c.b16 %v1140, %v1136
    %v1381 = vpack.c.b16 %v1141, %v1137
    %v1382 = vpack.c.b16 %v1142, %v1138
    %v1383 = vpack.c.b16 %v1147, %v1143
    %v1384 = vpack.c.b16 %v1148, %v1144
    %v1385 = vpack.c.b16 %v1149, %v1145
    %v1386 = vpack.c.b16 %v1150, %v1146
    %v1387 = vpack.c.b16 %v1155, %v1151
    %v1388 = vpack.c.b16 %v1156, %v1152
    %v1389 = vpack.c.b16 %v1157, %v1153
    %v1390 = vpack.c.b16 %v1158, %v1154
    %v1391 = vpack.c.b16 %v1163, %v1159
    %v1392 = vpack.c.b16 %v1164, %v1160
    %v1393 = vpack.c.b16 %v1165, %v1161
    %v1394 = vpack.c.b16 %v1166, %v1162
    %v1395 = vpack.c.b16 %v1171, %v1167
    %v1396 = vpack.c.b16 %v1172, %v1168
    %v1397 = vpack.c.b16 %v1173, %v1169
    %v1398 = vpack.c.b16 %v1174, %v1170
    %v1399 = vpack.c.b16 %v1179, %v1175
    %v1400 = vpack.c.b16 %v1180, %v1176
    %v1401 = vpack.c.b16 %v1181, %v1177
    %v1402 = vpack.c.b16 %v1182, %v1178
    %v1403 = vpack.c.b16 %v1187, %v1183
    %v1404 = vpack.c.b16 %v1188, %v1184
    %v1405 = vpack.c.b16 %v1189, %v1185
    %v1406 = vpack.c.b16 %v1190, %v1186
    %v1407 = vpack.c.b16 %v1195, %v1191
    %v1408 = vpack.c.b16 %v1196, %v1192
    %v1409 = vpack.c.b16 %v1197, %v1193
    %v1410 = vpack.c.b16 %v1198, %v1194
    %v1411 = vpack.c.b16 %v1203, %v1199
    %v1412 = vpack.c.b16 %v1204, %v1200
    %v1413 = vpack.c.b16 %v1205, %v1201
    %v1414 = vpack.c.b16 %v1206, %v1202
    %v1415 = vpack.c.b16 %v1211, %v1207
    %v1416 = vpack.c.b16 %v1212, %v1208
    %v1417 = vpack.c.b16 %v1213, %v1209
    %v1418 = vpack.c.b16 %v1214, %v1210
    %v1419 = vpack.c.b16 %v1219, %v1215
    %v1420 = vpack.c.b16 %v1220, %v1216
    %v1421 = vpack.c.b16 %v1221, %v1217
    %v1422 = vpack.c.b16 %v1222, %v1218
    %v1423 = vpack.c.b16 %v1227, %v1223
    %v1424 = vpack.c.b16 %v1228, %v1224
    %v1425 = vpack.c.b16 %v1229, %v1225
    %v1426 = vpack.c.b16 %v1230, %v1226
    %v1427 = vpack.c.b16 %v1235, %v1231
    %v1428 = vpack.c.b16 %v1236, %v1232
    %v1429 = vpack.c.b16 %v1237, %v1233
    %v1430 = vpack.c.b16 %v1238, %v1234
    %v1431 = vpack.c.b16 %v1243, %v1239
    %v1432 = vpack.c.b16 %v1244, %v1240
    %v1433 = vpack.c.b16 %v1245, %v1241
    %v1434 = vpack.c.b16 %v1246, %v1242
    %v1435 = vpack.c.b16 %v1251, %v1247
    %v1436 = vpack.c.b16 %v1252, %v1248
    %v1437 = vpack.c.b16 %v1253, %v1249
    %v1438 = vpack.c.b16 %v1254, %v1250
    %v1439 = vpack.c.b16 %v1259, %v1255
    %v1440 = vpack.c.b16 %v1260, %v1256
    %v1441 = vpack.c.b16 %v1261, %v1257
    %v1442 = vpack.c.b16 %v1262, %v1258
    %v1443 = vpack.c.b16 %v1267, %v1263
    %v1444 = vpack.c.b16 %v1268, %v1264
    %v1445 = vpack.c.b16 %v1269, %v1265
    %v1446 = vpack.c.b16 %v1270, %v1266
    %v1447 = vpack.c.b16 %v1275, %v1271
    %v1448 = vpack.c.b16 %v1276, %v1272
    %v1449 = vpack.c.b16 %v1277, %v1273
    %v1450 = vpack.c.b16 %v1278, %v1274
    %v1451 = vpack.c.b16 %v1283, %v1279
    %v1452 = vpack.c.b16 %v1284, %v1280
    %v1453 = vpack.c.b16 %v1285, %v1281
    %v1454 = vpack.c.b16 %v1286, %v1282
    %v1455 = vpack.c.b16 %v1291, %v1287
    %v1456 = vpack.c.b16 %v1292, %v1288
    %v1457 = vpack.c.b16 %v1293, %v1289
    %v1458 = vpack.c.b16 %v1294, %v1290
    %v1459 = vpack.c.b16 %v1299, %v1295
    %v1460 = vpack.c.b16 %v1300, %v1296
    %v1461 = vpack.c.b16 %v1301, %v1297
    %v1462 = vpack.c.b16 %v1302, %v1298
    %1623 = vmatprep.subr.bf16.mxu0 %v1332
    %1624 = vmatpush1.bf16.msra.mxu0 %v1331
    %1625 = vmatprep.subr.bf16.mxu0 %v1328
    %1626 = vmatpush1.bf16.msra.mxu0 %v1327
    %1627 = vmatprep.subr.bf16.mxu0 %v1324
    %1628 = vmatpush1.bf16.msra.mxu0 %v1323
    %1629 = vmatprep.subr.bf16.mxu0 %v1320
    %1630 = vmatpush1.bf16.msra.mxu0 %v1319
    %1631 = vmatprep.subr.bf16.mxu0 %v1316
    %1632 = vmatpush1.bf16.msra.mxu0 %v1315
    %1633 = vmatprep.subr.bf16.mxu0 %v1312
    %1634 = vmatpush1.bf16.msra.mxu0 %v1311
    %1635 = vmatprep.subr.bf16.mxu0 %v1308
    %1636 = vmatpush1.bf16.msra.mxu0 %v1307
    %1637 = vmatprep.subr.bf16.mxu0 %v1304
    %1638 = vmatpush1.bf16.msra.mxu0 %v1303
    %1639 = vmatprep.subr.bf16.mxu0 %v1364
    %1640 = vmatpush2.bf16.msra.mxu0 %v1363
    %1641 = vmatprep.subr.bf16.mxu0 %v1360
    %1642 = vmatpush2.bf16.msra.mxu0 %v1359
    %1643 = vmatprep.subr.bf16.mxu0 %v1356
    %1644 = vmatpush2.bf16.msra.mxu0 %v1355
    %1645 = vmatprep.subr.bf16.mxu0 %v1352
    %1646 = vmatpush2.bf16.msra.mxu0 %v1351
    %1647 = vmatprep.subr.bf16.mxu0 %v1348
    %1648 = vmatpush2.bf16.msra.mxu0 %v1347
    %1649 = vmatprep.subr.bf16.mxu0 %v1344
    %1650 = vmatpush2.bf16.msra.mxu0 %v1343
    %1651 = vmatprep.subr.bf16.mxu0 %v1340
    %1652 = vmatpush2.bf16.msra.mxu0 %v1339
    %1653 = vmatprep.subr.bf16.mxu0 %v1336
    %1654 = vmatpush2.bf16.msra.mxu0 %v1335
    %1655 = vmatprep.mubr.bf16.mxu0 %v784
    %1656 = vmatmul.mubr.bf16.gmra.mxu0 %v783
    %v1657 = vpop.f32.mrf.mxu0
    %v1658 = vadd.f32 %v710, %v1657
    %v1659 = vpop.f32.mrf.mxu0
    %v1660 = vadd.f32 %v714, %v1659
    %v1661 = vpop.f32.mrf.mxu0
    %v1662 = vadd.f32 %v710, %v1661
    %v1663 = vpop.f32.mrf.mxu0
    %v1664 = vadd.f32 %v714, %v1663
    %1665 = vmatprep.mubr.bf16.mxu0 %v789
    %1666 = vmatmul.mubr.bf16.gmra.mxu0 %v788
    %v1667 = vpop.f32.mrf.mxu0
    %v1668 = vadd.f32 %v710, %v1667
    %v1669 = vpop.f32.mrf.mxu0
    %v1670 = vadd.f32 %v714, %v1669
    %v1671 = vpop.f32.mrf.mxu0
    %v1672 = vadd.f32 %v710, %v1671
    %v1673 = vpop.f32.mrf.mxu0
    %v1674 = vadd.f32 %v714, %v1673
    %1675 = vmatprep.mubr.bf16.mxu0 %v794
    %1676 = vmatmul.mubr.bf16.gmra.mxu0 %v793
    %v1677 = vpop.f32.mrf.mxu0
    %v1678 = vadd.f32 %v710, %v1677
    %v1679 = vpop.f32.mrf.mxu0
    %v1680 = vadd.f32 %v714, %v1679
    %v1681 = vpop.f32.mrf.mxu0
    %v1682 = vadd.f32 %v710, %v1681
    %v1683 = vpop.f32.mrf.mxu0
    %v1684 = vadd.f32 %v714, %v1683
    %1685 = vmatprep.mubr.bf16.mxu0 %v799
    %1686 = vmatmul.mubr.bf16.gmra.mxu0 %v798
    %v1687 = vpop.f32.mrf.mxu0
    %v1688 = vadd.f32 %v710, %v1687
    %v1689 = vpop.f32.mrf.mxu0
    %v1690 = vadd.f32 %v714, %v1689
    %v1691 = vpop.f32.mrf.mxu0
    %v1692 = vpop.f32.mrf.mxu0
    %1693 = vdwg.mxu0
    %1694 = vmatprep.subr.bf16.mxu0 %v1396
    %1695 = vmatpush1.bf16.msra.mxu0 %v1395
    %1696 = vmatprep.subr.bf16.mxu0 %v1392
    %1697 = vmatpush1.bf16.msra.mxu0 %v1391
    %1698 = vmatprep.subr.bf16.mxu0 %v1388
    %1699 = vmatpush1.bf16.msra.mxu0 %v1387
    %1700 = vmatprep.subr.bf16.mxu0 %v1384
    %1701 = vmatpush1.bf16.msra.mxu0 %v1383
    %1702 = vmatprep.subr.bf16.mxu0 %v1380
    %1703 = vmatpush1.bf16.msra.mxu0 %v1379
    %1704 = vmatprep.subr.bf16.mxu0 %v1376
    %1705 = vmatpush1.bf16.msra.mxu0 %v1375
    %1706 = vmatprep.subr.bf16.mxu0 %v1372
    %1707 = vmatpush1.bf16.msra.mxu0 %v1371
    %1708 = vmatprep.subr.bf16.mxu0 %v1368
    %1709 = vmatpush1.bf16.msra.mxu0 %v1367
    %1710 = vmatprep.subr.bf16.mxu0 %v1428
    %1711 = vmatpush2.bf16.msra.mxu0 %v1427
    %1712 = vmatprep.subr.bf16.mxu0 %v1424
    %1713 = vmatpush2.bf16.msra.mxu0 %v1423
    %1714 = vmatprep.subr.bf16.mxu0 %v1420
    %1715 = vmatpush2.bf16.msra.mxu0 %v1419
    %1716 = vmatprep.subr.bf16.mxu0 %v1416
    %1717 = vmatpush2.bf16.msra.mxu0 %v1415
    %1718 = vmatprep.subr.bf16.mxu0 %v1412
    %1719 = vmatpush2.bf16.msra.mxu0 %v1411
    %1720 = vmatprep.subr.bf16.mxu0 %v1408
    %1721 = vmatpush2.bf16.msra.mxu0 %v1407
    %1722 = vmatprep.subr.bf16.mxu0 %v1404
    %1723 = vmatpush2.bf16.msra.mxu0 %v1403
    %1724 = vmatprep.subr.bf16.mxu0 %v1400
    %1725 = vmatpush2.bf16.msra.mxu0 %v1399
    %1726 = vmatprep.mubr.bf16.mxu0 %v786
    %1727 = vmatmul.mubr.bf16.gmra.mxu0 %v785
    %v1728 = vpop.f32.mrf.mxu0
    %v1729 = vadd.f32 %v1658, %v1728
    %v1730 = vpop.f32.mrf.mxu0
    %v1731 = vadd.f32 %v1660, %v1730
    %v1732 = vpop.f32.mrf.mxu0
    %v1733 = vadd.f32 %v1662, %v1732
    %v1734 = vpop.f32.mrf.mxu0
    %v1735 = vadd.f32 %v1664, %v1734
    %1736 = vmatprep.mubr.bf16.mxu0 %v791
    %1737 = vmatmul.mubr.bf16.gmra.mxu0 %v790
    %v1738 = vpop.f32.mrf.mxu0
    %v1739 = vadd.f32 %v1668, %v1738
    %v1740 = vpop.f32.mrf.mxu0
    %v1741 = vadd.f32 %v1670, %v1740
    %v1742 = vpop.f32.mrf.mxu0
    %v1743 = vadd.f32 %v1672, %v1742
    %v1744 = vpop.f32.mrf.mxu0
    %v1745 = vadd.f32 %v1674, %v1744
    %1746 = vmatprep.mubr.bf16.mxu0 %v796
    %1747 = vmatmul.mubr.bf16.gmra.mxu0 %v795
    %v1748 = vpop.f32.mrf.mxu0
    %v1749 = vadd.f32 %v1678, %v1748
    %v1750 = vpop.f32.mrf.mxu0
    %v1751 = vadd.f32 %v1680, %v1750
    %v1752 = vpop.f32.mrf.mxu0
    %v1753 = vadd.f32 %v1682, %v1752
    %v1754 = vpop.f32.mrf.mxu0
    %v1755 = vadd.f32 %v1684, %v1754
    %1756 = vmatprep.mubr.bf16.mxu0 %v801
    %1757 = vmatmul.mubr.bf16.gmra.mxu0 %v800
    %v1758 = vpop.f32.mrf.mxu0
    %v1759 = vadd.f32 %v1688, %v1758
    %v1760 = vpop.f32.mrf.mxu0
    %v1761 = vadd.f32 %v1690, %v1760
    %v1762 = vpop.f32.mrf.mxu0
    %v1763 = vpop.f32.mrf.mxu0
    %1764 = vdwg.mxu0
    %1765 = vmatprep.subr.bf16.mxu0 %v1460
    %1766 = vmatpush1.bf16.msra.mxu0 %v1459
    %1767 = vmatprep.subr.bf16.mxu0 %v1456
    %1768 = vmatpush1.bf16.msra.mxu0 %v1455
    %1769 = vmatprep.subr.bf16.mxu0 %v1452
    %1770 = vmatpush1.bf16.msra.mxu0 %v1451
    %1771 = vmatprep.subr.bf16.mxu0 %v1448
    %1772 = vmatpush1.bf16.msra.mxu0 %v1447
    %1773 = vmatprep.subr.bf16.mxu0 %v1444
    %1774 = vmatpush1.bf16.msra.mxu0 %v1443
    %1775 = vmatprep.subr.bf16.mxu0 %v1440
    %1776 = vmatpush1.bf16.msra.mxu0 %v1439
    %1777 = vmatprep.subr.bf16.mxu0 %v1436
    %1778 = vmatpush1.bf16.msra.mxu0 %v1435
    %1779 = vmatprep.subr.bf16.mxu0 %v1432
    %1780 = vmatpush1.bf16.msra.mxu0 %v1431
    %1781 = vmatprep.subr.bf16.mxu0 0
    %1782 = vmatpush2.bf16.msra.mxu0 0
    %1783 = vmatprep.subr.bf16.mxu0 0
    %1784 = vmatpush2.bf16.msra.mxu0 0
    %1785 = vmatprep.subr.bf16.mxu0 0
    %1786 = vmatpush2.bf16.msra.mxu0 0
    %1787 = vmatprep.subr.bf16.mxu0 0
    %1788 = vmatpush2.bf16.msra.mxu0 0
    %1789 = vmatprep.subr.bf16.mxu0 0
    %1790 = vmatpush2.bf16.msra.mxu0 0
    %1791 = vmatprep.subr.bf16.mxu0 0
    %1792 = vmatpush2.bf16.msra.mxu0 0
    %1793 = vmatprep.subr.bf16.mxu0 0
    %1794 = vmatpush2.bf16.msra.mxu0 0
    %1795 = vmatprep.subr.bf16.mxu0 0
    %1796 = vmatpush2.bf16.msra.mxu0 0
    %1797 = vmatprep.mubr.bf16.mxu0 0
    %1798 = vmatmul.mubr.bf16.gmra.mxu0 %v787
    %v1799 = vpop.f32.mrf.mxu0
    %v1800 = vadd.f32 %v1729, %v1799
    %v1801 = vpop.f32.mrf.mxu0
    %v1802 = vadd.f32 %v1731, %v1801
    %v1803 = vpop.f32.mrf.mxu0
    %v1804 = vadd.f32 %v1733, %v1803
    %v1805 = vpop.f32.mrf.mxu0
    %v1806 = vadd.f32 %v1735, %v1805
    %1807 = vmatprep.mubr.bf16.mxu0 0
    %1808 = vmatmul.mubr.bf16.gmra.mxu0 %v792
    %v1809 = vpop.f32.mrf.mxu0
    %v1810 = vadd.f32 %v1739, %v1809
    %v1811 = vpop.f32.mrf.mxu0
    %v1812 = vadd.f32 %v1741, %v1811
    %v1813 = vpop.f32.mrf.mxu0
    %v1814 = vadd.f32 %v1743, %v1813
    %v1815 = vpop.f32.mrf.mxu0
    %v1816 = vadd.f32 %v1745, %v1815
    %1817 = vmatprep.mubr.bf16.mxu0 0
    %1818 = vmatmul.mubr.bf16.gmra.mxu0 %v797
    %v1819 = vpop.f32.mrf.mxu0
    %v1820 = vadd.f32 %v1749, %v1819
    %v1821 = vpop.f32.mrf.mxu0
    %v1822 = vadd.f32 %v1751, %v1821
    %v1823 = vpop.f32.mrf.mxu0
    %v1824 = vadd.f32 %v1753, %v1823
    %v1825 = vpop.f32.mrf.mxu0
    %v1826 = vadd.f32 %v1755, %v1825
    %1827 = vmatprep.mubr.bf16.mxu0 0
    %1828 = vmatmul.mubr.bf16.gmra.mxu0 %v802
    %v1829 = vpop.f32.mrf.mxu0
    %v1830 = vadd.f32 %v1759, %v1829
    %v1831 = vpop.f32.mrf.mxu0
    %v1832 = vadd.f32 %v1761, %v1831
    %v1833 = vpop.f32.mrf.mxu0
    %v1834 = vpop.f32.mrf.mxu0
    %1835 = vdwg.mxu0
    %1836 = vmatprep.subr.bf16.mxu0 %v1334
    %1837 = vmatpush1.bf16.msra.mxu0 %v1333
    %1838 = vmatprep.subr.bf16.mxu0 %v1330
    %1839 = vmatpush1.bf16.msra.mxu0 %v1329
    %1840 = vmatprep.subr.bf16.mxu0 %v1326
    %1841 = vmatpush1.bf16.msra.mxu0 %v1325
    %1842 = vmatprep.subr.bf16.mxu0 %v1322
    %1843 = vmatpush1.bf16.msra.mxu0 %v1321
    %1844 = vmatprep.subr.bf16.mxu0 %v1318
    %1845 = vmatpush1.bf16.msra.mxu0 %v1317
    %1846 = vmatprep.subr.bf16.mxu0 %v1314
    %1847 = vmatpush1.bf16.msra.mxu0 %v1313
    %1848 = vmatprep.subr.bf16.mxu0 %v1310
    %1849 = vmatpush1.bf16.msra.mxu0 %v1309
    %1850 = vmatprep.subr.bf16.mxu0 %v1306
    %1851 = vmatpush1.bf16.msra.mxu0 %v1305
    %1852 = vmatprep.subr.bf16.mxu0 %v1366
    %1853 = vmatpush2.bf16.msra.mxu0 %v1365
    %1854 = vmatprep.subr.bf16.mxu0 %v1362
    %1855 = vmatpush2.bf16.msra.mxu0 %v1361
    %1856 = vmatprep.subr.bf16.mxu0 %v1358
    %1857 = vmatpush2.bf16.msra.mxu0 %v1357
    %1858 = vmatprep.subr.bf16.mxu0 %v1354
    %1859 = vmatpush2.bf16.msra.mxu0 %v1353
    %1860 = vmatprep.subr.bf16.mxu0 %v1350
    %1861 = vmatpush2.bf16.msra.mxu0 %v1349
    %1862 = vmatprep.subr.bf16.mxu0 %v1346
    %1863 = vmatpush2.bf16.msra.mxu0 %v1345
    %1864 = vmatprep.subr.bf16.mxu0 %v1342
    %1865 = vmatpush2.bf16.msra.mxu0 %v1341
    %1866 = vmatprep.subr.bf16.mxu0 %v1338
    %1867 = vmatpush2.bf16.msra.mxu0 %v1337
    %1868 = vmatprep.mubr.bf16.mxu0 %v784
    %1869 = vmatmul.mubr.bf16.gmra.mxu0 %v783
    %v1870 = vpop.f32.mrf.mxu0
    %v1871 = vadd.f32 %v718, %v1870
    %v1872 = vpop.f32.mrf.mxu0
    %v1873 = vadd.f32 %v722, %v1872
    %v1874 = vpop.f32.mrf.mxu0
    %v1875 = vadd.f32 %v718, %v1874
    %v1876 = vpop.f32.mrf.mxu0
    %v1877 = vadd.f32 %v722, %v1876
    %1878 = vmatprep.mubr.bf16.mxu0 %v789
    %1879 = vmatmul.mubr.bf16.gmra.mxu0 %v788
    %v1880 = vpop.f32.mrf.mxu0
    %v1881 = vadd.f32 %v718, %v1880
    %v1882 = vpop.f32.mrf.mxu0
    %v1883 = vadd.f32 %v722, %v1882
    %v1884 = vpop.f32.mrf.mxu0
    %v1885 = vadd.f32 %v718, %v1884
    %v1886 = vpop.f32.mrf.mxu0
    %v1887 = vadd.f32 %v722, %v1886
    %1888 = vmatprep.mubr.bf16.mxu0 %v794
    %1889 = vmatmul.mubr.bf16.gmra.mxu0 %v793
    %v1890 = vpop.f32.mrf.mxu0
    %v1891 = vadd.f32 %v718, %v1890
    %v1892 = vpop.f32.mrf.mxu0
    %v1893 = vadd.f32 %v722, %v1892
    %v1894 = vpop.f32.mrf.mxu0
    %v1895 = vadd.f32 %v718, %v1894
    %v1896 = vpop.f32.mrf.mxu0
    %v1897 = vadd.f32 %v722, %v1896
    %1898 = vmatprep.mubr.bf16.mxu0 %v799
    %1899 = vmatmul.mubr.bf16.gmra.mxu0 %v798
    %v1900 = vpop.f32.mrf.mxu0
    %v1901 = vadd.f32 %v718, %v1900
    %v1902 = vpop.f32.mrf.mxu0
    %v1903 = vadd.f32 %v722, %v1902
    %v1904 = vpop.f32.mrf.mxu0
    %v1905 = vpop.f32.mrf.mxu0
    %1906 = vdwg.mxu0
    %1907 = vmatprep.subr.bf16.mxu0 %v1398
    %1908 = vmatpush1.bf16.msra.mxu0 %v1397
    %1909 = vmatprep.subr.bf16.mxu0 %v1394
    %1910 = vmatpush1.bf16.msra.mxu0 %v1393
    %1911 = vmatprep.subr.bf16.mxu0 %v1390
    %1912 = vmatpush1.bf16.msra.mxu0 %v1389
    %1913 = vmatprep.subr.bf16.mxu0 %v1386
    %1914 = vmatpush1.bf16.msra.mxu0 %v1385
    %1915 = vmatprep.subr.bf16.mxu0 %v1382
    %1916 = vmatpush1.bf16.msra.mxu0 %v1381
    %1917 = vmatprep.subr.bf16.mxu0 %v1378
    %1918 = vmatpush1.bf16.msra.mxu0 %v1377
    %1919 = vmatprep.subr.bf16.mxu0 %v1374
    %1920 = vmatpush1.bf16.msra.mxu0 %v1373
    %1921 = vmatprep.subr.bf16.mxu0 %v1370
    %1922 = vmatpush1.bf16.msra.mxu0 %v1369
    %1923 = vmatprep.subr.bf16.mxu0 %v1430
    %1924 = vmatpush2.bf16.msra.mxu0 %v1429
    %1925 = vmatprep.subr.bf16.mxu0 %v1426
    %1926 = vmatpush2.bf16.msra.mxu0 %v1425
    %1927 = vmatprep.subr.bf16.mxu0 %v1422
    %1928 = vmatpush2.bf16.msra.mxu0 %v1421
    %1929 = vmatprep.subr.bf16.mxu0 %v1418
    %1930 = vmatpush2.bf16.msra.mxu0 %v1417
    %1931 = vmatprep.subr.bf16.mxu0 %v1414
    %1932 = vmatpush2.bf16.msra.mxu0 %v1413
    %1933 = vmatprep.subr.bf16.mxu0 %v1410
    %1934 = vmatpush2.bf16.msra.mxu0 %v1409
    %1935 = vmatprep.subr.bf16.mxu0 %v1406
    %1936 = vmatpush2.bf16.msra.mxu0 %v1405
    %1937 = vmatprep.subr.bf16.mxu0 %v1402
    %1938 = vmatpush2.bf16.msra.mxu0 %v1401
    %1939 = vmatprep.mubr.bf16.mxu0 %v786
    %1940 = vmatmul.mubr.bf16.gmra.mxu0 %v785
    %v1941 = vpop.f32.mrf.mxu0
    %v1942 = vadd.f32 %v1871, %v1941
    %v1943 = vpop.f32.mrf.mxu0
    %v1944 = vadd.f32 %v1873, %v1943
    %v1945 = vpop.f32.mrf.mxu0
    %v1946 = vadd.f32 %v1875, %v1945
    %v1947 = vpop.f32.mrf.mxu0
    %v1948 = vadd.f32 %v1877, %v1947
    %1949 = vmatprep.mubr.bf16.mxu0 %v791
    %1950 = vmatmul.mubr.bf16.gmra.mxu0 %v790
    %v1951 = vpop.f32.mrf.mxu0
    %v1952 = vadd.f32 %v1881, %v1951
    %v1953 = vpop.f32.mrf.mxu0
    %v1954 = vadd.f32 %v1883, %v1953
    %v1955 = vpop.f32.mrf.mxu0
    %v1956 = vadd.f32 %v1885, %v1955
    %v1957 = vpop.f32.mrf.mxu0
    %v1958 = vadd.f32 %v1887, %v1957
    %1959 = vmatprep.mubr.bf16.mxu0 %v796
    %1960 = vmatmul.mubr.bf16.gmra.mxu0 %v795
    %v1961 = vpop.f32.mrf.mxu0
    %v1962 = vadd.f32 %v1891, %v1961
    %v1963 = vpop.f32.mrf.mxu0
    %v1964 = vadd.f32 %v1893, %v1963
    %v1965 = vpop.f32.mrf.mxu0
    %v1966 = vadd.f32 %v1895, %v1965
    %v1967 = vpop.f32.mrf.mxu0
    %v1968 = vadd.f32 %v1897, %v1967
    %1969 = vmatprep.mubr.bf16.mxu0 %v801
    %1970 = vmatmul.mubr.bf16.gmra.mxu0 %v800
    %v1971 = vpop.f32.mrf.mxu0
    %v1972 = vadd.f32 %v1901, %v1971
    %v1973 = vpop.f32.mrf.mxu0
    %v1974 = vadd.f32 %v1903, %v1973
    %v1975 = vpop.f32.mrf.mxu0
    %v1976 = vpop.f32.mrf.mxu0
    %1977 = vdwg.mxu0
    %1978 = vmatprep.subr.bf16.mxu0 %v1462
    %1979 = vmatpush1.bf16.msra.mxu0 %v1461
    %1980 = vmatprep.subr.bf16.mxu0 %v1458
    %1981 = vmatpush1.bf16.msra.mxu0 %v1457
    %1982 = vmatprep.subr.bf16.mxu0 %v1454
    %1983 = vmatpush1.bf16.msra.mxu0 %v1453
    %1984 = vmatprep.subr.bf16.mxu0 %v1450
    %1985 = vmatpush1.bf16.msra.mxu0 %v1449
    %1986 = vmatprep.subr.bf16.mxu0 %v1446
    %1987 = vmatpush1.bf16.msra.mxu0 %v1445
    %1988 = vmatprep.subr.bf16.mxu0 %v1442
    %1989 = vmatpush1.bf16.msra.mxu0 %v1441
    %1990 = vmatprep.subr.bf16.mxu0 %v1438
    %1991 = vmatpush1.bf16.msra.mxu0 %v1437
    %1992 = vmatprep.subr.bf16.mxu0 %v1434
    %1993 = vmatpush1.bf16.msra.mxu0 %v1433
    %1994 = vmatprep.subr.bf16.mxu0 0
    %1995 = vmatpush2.bf16.msra.mxu0 0
    %1996 = vmatprep.subr.bf16.mxu0 0
    %1997 = vmatpush2.bf16.msra.mxu0 0
    %1998 = vmatprep.subr.bf16.mxu0 0
    %1999 = vmatpush2.bf16.msra.mxu0 0
    %2000 = vmatprep.subr.bf16.mxu0 0
    %2001 = vmatpush2.bf16.msra.mxu0 0
    %2002 = vmatprep.subr.bf16.mxu0 0
    %2003 = vmatpush2.bf16.msra.mxu0 0
    %2004 = vmatprep.subr.bf16.mxu0 0
    %2005 = vmatpush2.bf16.msra.mxu0 0
    %2006 = vmatprep.subr.bf16.mxu0 0
    %2007 = vmatpush2.bf16.msra.mxu0 0
    %2008 = vmatprep.subr.bf16.mxu0 0
    %2009 = vmatpush2.bf16.msra.mxu0 0
    %2010 = vmatprep.mubr.bf16.mxu0 0
    %2011 = vmatmul.mubr.bf16.gmra.mxu0 %v787
    %v2012 = vpop.f32.mrf.mxu0
    %v2013 = vadd.f32 %v1942, %v2012
    %v2014 = vpop.f32.mrf.mxu0
    %v2015 = vadd.f32 %v1944, %v2014
    %v2016 = vpop.f32.mrf.mxu0
    %v2017 = vadd.f32 %v1946, %v2016
    %v2018 = vpop.f32.mrf.mxu0
    %v2019 = vadd.f32 %v1948, %v2018
    %2020 = vmatprep.mubr.bf16.mxu0 0
    %2021 = vmatmul.mubr.bf16.gmra.mxu0 %v792
    %v2022 = vpop.f32.mrf.mxu0
    %v2023 = vadd.f32 %v1952, %v2022
    %v2024 = vpop.f32.mrf.mxu0
    %v2025 = vadd.f32 %v1954, %v2024
    %v2026 = vpop.f32.mrf.mxu0
    %v2027 = vadd.f32 %v1956, %v2026
    %v2028 = vpop.f32.mrf.mxu0
    %v2029 = vadd.f32 %v1958, %v2028
    %2030 = vmatprep.mubr.bf16.mxu0 0
    %2031 = vmatmul.mubr.bf16.gmra.mxu0 %v797
    %v2032 = vpop.f32.mrf.mxu0
    %v2033 = vadd.f32 %v1962, %v2032
    %v2034 = vpop.f32.mrf.mxu0
    %v2035 = vadd.f32 %v1964, %v2034
    %v2036 = vpop.f32.mrf.mxu0
    %v2037 = vadd.f32 %v1966, %v2036
    %v2038 = vpop.f32.mrf.mxu0
    %v2039 = vadd.f32 %v1968, %v2038
    %2040 = vmatprep.mubr.bf16.mxu0 0
    %2041 = vmatmul.mubr.bf16.gmra.mxu0 %v802
    %v2042 = vpop.f32.mrf.mxu0
    %v2043 = vadd.f32 %v1972, %v2042
    %v2044 = vpop.f32.mrf.mxu0
    %v2045 = vadd.f32 %v1974, %v2044
    %v2046 = vpop.f32.mrf.mxu0
    %v2047 = vpop.f32.mrf.mxu0
    %2048 = vdwg.mxu0
    %v2049 = vmax.f32 %v1800, 0.0
    %v2050 = vmax.f32 %v1802, 0.0
    %v2051 = vmax.f32 %v2013, 0.0
    %v2052 = vmax.f32 %v2015, 0.0
    %v2053 = vmax.f32 %v1804, 0.0
    %v2054 = vmax.f32 %v1806, 0.0
    %v2055 = vmax.f32 %v2017, 0.0
    %v2056 = vmax.f32 %v2019, 0.0
    %v2057 = vmax.f32 %v1810, 0.0
    %v2058 = vmax.f32 %v1812, 0.0
    %v2059 = vmax.f32 %v2023, 0.0
    %v2060 = vmax.f32 %v2025, 0.0
    %v2061 = vmax.f32 %v1814, 0.0
    %v2062 = vmax.f32 %v1816, 0.0
    %v2063 = vmax.f32 %v2027, 0.0
    %v2064 = vmax.f32 %v2029, 0.0
    %v2065 = vmax.f32 %v1820, 0.0
    %v2066 = vmax.f32 %v1822, 0.0
    %v2067 = vmax.f32 %v2033, 0.0
    %v2068 = vmax.f32 %v2035, 0.0
    %v2069 = vmax.f32 %v1824, 0.0
    %v2070 = vmax.f32 %v1826, 0.0
    %v2071 = vmax.f32 %v2037, 0.0
    %v2072 = vmax.f32 %v2039, 0.0
    %v2073 = vmax.f32 %v1830, 0.0
    %v2074 = vmax.f32 %v1832, 0.0
    %v2075 = vmax.f32 %v2043, 0.0
    %v2076 = vmax.f32 %v2045, 0.0
    %v2077 = vpack.c.bf16 %v2053, %v2049
    %v2078 = vpack.c.bf16 %v2054, %v2050
    %v2079 = vpack.c.bf16 %v2055, %v2051
    %v2080 = vpack.c.bf16 %v2056, %v2052
    %v2081 = vpack.c.bf16 %v2061, %v2057
    %v2082 = vpack.c.bf16 %v2062, %v2058
    %v2083 = vpack.c.bf16 %v2063, %v2059
    %v2084 = vpack.c.bf16 %v2064, %v2060
    %v2085 = vpack.c.bf16 %v2069, %v2065
    %v2086 = vpack.c.bf16 %v2070, %v2066
    %v2087 = vpack.c.bf16 %v2071, %v2067
    %v2088 = vpack.c.bf16 %v2072, %v2068
    %v2089 = vpack.c.bf16 %v2073, %v2073
    %v2090 = vpack.c.bf16 %v2074, %v2074
    %v2091 = vpack.c.bf16 %v2075, %v2075
    %v2092 = vpack.c.bf16 %v2076, %v2076
    %v2093 = vld [vmem:[#allocation18] sm:$0xf]
    %v2094 = vld [vmem:[#allocation18 + $0x4] sm:$0xf]
    %v2095 = vld [vmem:[#allocation18 + $0x8] sm:$0xf]
    %v2096 = vld [vmem:[#allocation18 + $0xc] sm:$0x3]
    %v2101 = vunpack.c.l.b16 %v2093
    %v2102 = vunpack.c.l.b16 %v2094
    %v2103 = vunpack.c.l.b16 %v2095
    %v2104 = vunpack.c.l.b16 %v2096
    %v2105 = vpack.c.b16 %v2102, %v2101
    %v2106 = vpack.c.b16 %v2104, %v2103
    %vm2107 = vcmask 457728
    %v2109 = vsel %vm2107, %v2105, 0
    %v2112 = vsel %vm2107, %v2106, 0
    %vm2114 = vcmask 1043456
    %v2116 = vsel %vm2114, %v2089, 0
    %v2119 = vsel %vm2114, %v2090, 0
    %v2122 = vsel %vm2114, %v2091, 0
    %v2125 = vsel %vm2114, %v2092, 0
    %2127 = vmatprep.subr.bf16.mxu0 0
    %2128 = vmatpush1.bf16.msra.mxu0 0
    %2129 = vmatprep.subr.bf16.mxu0 0
    %2130 = vmatpush1.bf16.msra.mxu0 0
    %2131 = vmatprep.subr.bf16.mxu0 0
    %2132 = vmatpush1.bf16.msra.mxu0 0
    %2133 = vmatprep.subr.bf16.mxu0 0
    %2134 = vmatpush1.bf16.msra.mxu0 0
    %2135 = vmatprep.subr.bf16.mxu0 %v2119
    %2136 = vmatpush1.bf16.msra.mxu0 %v2116
    %2137 = vmatprep.subr.bf16.mxu0 %v2086
    %2138 = vmatpush1.bf16.msra.mxu0 %v2085
    %2139 = vmatprep.subr.bf16.mxu0 %v2082
    %2140 = vmatpush1.bf16.msra.mxu0 %v2081
    %2141 = vmatprep.subr.bf16.mxu0 %v2078
    %2142 = vmatpush1.bf16.msra.mxu0 %v2077
    %2143 = vmatprep.subr.bf16.mxu0 0
    %2144 = vmatpush2.bf16.msra.mxu0 0
    %2145 = vmatprep.subr.bf16.mxu0 0
    %2146 = vmatpush2.bf16.msra.mxu0 0
    %2147 = vmatprep.subr.bf16.mxu0 0
    %2148 = vmatpush2.bf16.msra.mxu0 0
    %2149 = vmatprep.subr.bf16.mxu0 0
    %2150 = vmatpush2.bf16.msra.mxu0 0
    %2151 = vmatprep.subr.bf16.mxu0 0
    %2152 = vmatpush2.bf16.msra.mxu0 0
    %2153 = vmatprep.subr.bf16.mxu0 0
    %2154 = vmatpush2.bf16.msra.mxu0 0
    %2155 = vmatprep.subr.bf16.mxu0 0
    %2156 = vmatpush2.bf16.msra.mxu0 0
    %2157 = vmatprep.subr.bf16.mxu0 0
    %2158 = vmatpush2.bf16.msra.mxu0 0
    %2159 = vmatprep.mubr.bf16.mxu0 0
    %2160 = vmatmul.mubr.bf16.gmra.mxu0 %v2109
    %v2161 = vpop.f32.mrf.mxu0
    %v2162 = vadd.f32 0.0, %v2161
    %v2163 = vpop.f32.mrf.mxu0
    %v2164 = vadd.f32 0.0, %v2163
    %v2165 = vpop.f32.mrf.mxu0
    %v2166 = vadd.f32 0.0, %v2165
    %v2167 = vpop.f32.mrf.mxu0
    %v2168 = vadd.f32 0.0, %v2167
    %2169 = vmatprep.mubr.bf16.mxu0 0
    %2170 = vmatmul.mubr.bf16.gmra.mxu0 %v2112
    %v2171 = vpop.f32.mrf.mxu0
    %v2172 = vadd.f32 0.0, %v2171
    %v2173 = vpop.f32.mrf.mxu0
    %v2174 = vadd.f32 0.0, %v2173
    %v2175 = vpop.f32.mrf.mxu0
    %v2176 = vadd.f32 0.0, %v2175
    %v2177 = vpop.f32.mrf.mxu0
    %v2178 = vadd.f32 0.0, %v2177
    %2179 = vdwg.mxu0
    %2180 = vmatprep.subr.bf16.mxu0 0
    %2181 = vmatpush1.bf16.msra.mxu0 0
    %2182 = vmatprep.subr.bf16.mxu0 0
    %2183 = vmatpush1.bf16.msra.mxu0 0
    %2184 = vmatprep.subr.bf16.mxu0 0
    %2185 = vmatpush1.bf16.msra.mxu0 0
    %2186 = vmatprep.subr.bf16.mxu0 0
    %2187 = vmatpush1.bf16.msra.mxu0 0
    %2188 = vmatprep.subr.bf16.mxu0 %v2125
    %2189 = vmatpush1.bf16.msra.mxu0 %v2122
    %2190 = vmatprep.subr.bf16.mxu0 %v2088
    %2191 = vmatpush1.bf16.msra.mxu0 %v2087
    %2192 = vmatprep.subr.bf16.mxu0 %v2084
    %2193 = vmatpush1.bf16.msra.mxu0 %v2083
    %2194 = vmatprep.subr.bf16.mxu0 %v2080
    %2195 = vmatpush1.bf16.msra.mxu0 %v2079
    %2196 = vmatprep.subr.bf16.mxu0 0
    %2197 = vmatpush2.bf16.msra.mxu0 0
    %2198 = vmatprep.subr.bf16.mxu0 0
    %2199 = vmatpush2.bf16.msra.mxu0 0
    %2200 = vmatprep.subr.bf16.mxu0 0
    %2201 = vmatpush2.bf16.msra.mxu0 0
    %2202 = vmatprep.subr.bf16.mxu0 0
    %2203 = vmatpush2.bf16.msra.mxu0 0
    %2204 = vmatprep.subr.bf16.mxu0 0
    %2205 = vmatpush2.bf16.msra.mxu0 0
    %2206 = vmatprep.subr.bf16.mxu0 0
    %2207 = vmatpush2.bf16.msra.mxu0 0
    %2208 = vmatprep.subr.bf16.mxu0 0
    %2209 = vmatpush2.bf16.msra.mxu0 0
    %2210 = vmatprep.subr.bf16.mxu0 0
    %2211 = vmatpush2.bf16.msra.mxu0 0
    %2212 = vmatprep.mubr.bf16.mxu0 0
    %2213 = vmatmul.mubr.bf16.gmra.mxu0 %v2109
    %v2214 = vpop.f32.mrf.mxu0
    %v2215 = vadd.f32 0.0, %v2214
    %v2216 = vpop.f32.mrf.mxu0
    %v2217 = vadd.f32 0.0, %v2216
    %v2218 = vpop.f32.mrf.mxu0
    %v2219 = vadd.f32 0.0, %v2218
    %v2220 = vpop.f32.mrf.mxu0
    %v2221 = vadd.f32 0.0, %v2220
    %2222 = vmatprep.mubr.bf16.mxu0 0
    %2223 = vmatmul.mubr.bf16.gmra.mxu0 %v2112
    %v2224 = vpop.f32.mrf.mxu0
    %v2225 = vadd.f32 0.0, %v2224
    %v2226 = vpop.f32.mrf.mxu0
    %v2227 = vadd.f32 0.0, %v2226
    %v2228 = vpop.f32.mrf.mxu0
    %v2229 = vadd.f32 0.0, %v2228
    %v2230 = vpop.f32.mrf.mxu0
    %v2231 = vadd.f32 0.0, %v2230
    %2232 = vdwg.mxu0
    %v2233 = vld [vmem:[#allocation19] sm:$0xf]
    %v2234 = vld [vmem:[#allocation19 + $0x4] sm:$0xf]
    %v2235 = vld [vmem:[#allocation19 + $0x8] sm:$0xf]
    %v2236 = vld [vmem:[#allocation19 + $0xc] sm:$0x3]
    %v2241 = vunpack.c.l.b16 %v2233
    %v2242 = vunpack.c.l.b16 %v2234
    %v2243 = vunpack.c.l.b16 %v2235
    %v2244 = vunpack.c.l.b16 %v2236
    %v2245 = vpack.c.b16 %v2242, %v2241
    %v2246 = vpack.c.b16 %v2244, %v2243
    %v2248 = vsel %vm2107, %v2245, 0
    %v2251 = vsel %vm2107, %v2246, 0
    %2253 = vmatprep.subr.bf16.mxu0 0
    %2254 = vmatpush1.bf16.msra.mxu0 0
    %2255 = vmatprep.subr.bf16.mxu0 0
    %2256 = vmatpush1.bf16.msra.mxu0 0
    %2257 = vmatprep.subr.bf16.mxu0 0
    %2258 = vmatpush1.bf16.msra.mxu0 0
    %2259 = vmatprep.subr.bf16.mxu0 0
    %2260 = vmatpush1.bf16.msra.mxu0 0
    %2261 = vmatprep.subr.bf16.mxu0 %v2119
    %2262 = vmatpush1.bf16.msra.mxu0 %v2116
    %2263 = vmatprep.subr.bf16.mxu0 %v2086
    %2264 = vmatpush1.bf16.msra.mxu0 %v2085
    %2265 = vmatprep.subr.bf16.mxu0 %v2082
    %2266 = vmatpush1.bf16.msra.mxu0 %v2081
    %2267 = vmatprep.subr.bf16.mxu0 %v2078
    %2268 = vmatpush1.bf16.msra.mxu0 %v2077
    %2269 = vmatprep.subr.bf16.mxu0 0
    %2270 = vmatpush2.bf16.msra.mxu0 0
    %2271 = vmatprep.subr.bf16.mxu0 0
    %2272 = vmatpush2.bf16.msra.mxu0 0
    %2273 = vmatprep.subr.bf16.mxu0 0
    %2274 = vmatpush2.bf16.msra.mxu0 0
    %2275 = vmatprep.subr.bf16.mxu0 0
    %2276 = vmatpush2.bf16.msra.mxu0 0
    %2277 = vmatprep.subr.bf16.mxu0 0
    %2278 = vmatpush2.bf16.msra.mxu0 0
    %2279 = vmatprep.subr.bf16.mxu0 0
    %2280 = vmatpush2.bf16.msra.mxu0 0
    %2281 = vmatprep.subr.bf16.mxu0 0
    %2282 = vmatpush2.bf16.msra.mxu0 0
    %2283 = vmatprep.subr.bf16.mxu0 0
    %2284 = vmatpush2.bf16.msra.mxu0 0
    %2285 = vmatprep.mubr.bf16.mxu0 0
    %2286 = vmatmul.mubr.bf16.gmra.mxu0 %v2248
    %v2287 = vpop.f32.mrf.mxu0
    %v2288 = vadd.f32 0.0, %v2287
    %v2289 = vpop.f32.mrf.mxu0
    %v2290 = vadd.f32 0.0, %v2289
    %v2291 = vpop.f32.mrf.mxu0
    %v2292 = vadd.f32 0.0, %v2291
    %v2293 = vpop.f32.mrf.mxu0
    %v2294 = vadd.f32 0.0, %v2293
    %2295 = vmatprep.mubr.bf16.mxu0 0
    %2296 = vmatmul.mubr.bf16.gmra.mxu0 %v2251
    %v2297 = vpop.f32.mrf.mxu0
    %v2298 = vadd.f32 0.0, %v2297
    %v2299 = vpop.f32.mrf.mxu0
    %v2300 = vadd.f32 0.0, %v2299
    %v2301 = vpop.f32.mrf.mxu0
    %v2302 = vadd.f32 0.0, %v2301
    %v2303 = vpop.f32.mrf.mxu0
    %v2304 = vadd.f32 0.0, %v2303
    %2305 = vdwg.mxu0
    %2306 = vmatprep.subr.bf16.mxu0 0
    %2307 = vmatpush1.bf16.msra.mxu0 0
    %2308 = vmatprep.subr.bf16.mxu0 0
    %2309 = vmatpush1.bf16.msra.mxu0 0
    %2310 = vmatprep.subr.bf16.mxu0 0
    %2311 = vmatpush1.bf16.msra.mxu0 0
    %2312 = vmatprep.subr.bf16.mxu0 0
    %2313 = vmatpush1.bf16.msra.mxu0 0
    %2314 = vmatprep.subr.bf16.mxu0 %v2125
    %2315 = vmatpush1.bf16.msra.mxu0 %v2122
    %2316 = vmatprep.subr.bf16.mxu0 %v2088
    %2317 = vmatpush1.bf16.msra.mxu0 %v2087
    %2318 = vmatprep.subr.bf16.mxu0 %v2084
    %2319 = vmatpush1.bf16.msra.mxu0 %v2083
    %2320 = vmatprep.subr.bf16.mxu0 %v2080
    %2321 = vmatpush1.bf16.msra.mxu0 %v2079
    %2322 = vmatprep.subr.bf16.mxu0 0
    %2323 = vmatpush2.bf16.msra.mxu0 0
    %2324 = vmatprep.subr.bf16.mxu0 0
    %2325 = vmatpush2.bf16.msra.mxu0 0
    %2326 = vmatprep.subr.bf16.mxu0 0
    %2327 = vmatpush2.bf16.msra.mxu0 0
    %2328 = vmatprep.subr.bf16.mxu0 0
    %2329 = vmatpush2.bf16.msra.mxu0 0
    %2330 = vmatprep.subr.bf16.mxu0 0
    %2331 = vmatpush2.bf16.msra.mxu0 0
    %2332 = vmatprep.subr.bf16.mxu0 0
    %2333 = vmatpush2.bf16.msra.mxu0 0
    %2334 = vmatprep.subr.bf16.mxu0 0
    %2335 = vmatpush2.bf16.msra.mxu0 0
    %2336 = vmatprep.subr.bf16.mxu0 0
    %2337 = vmatpush2.bf16.msra.mxu0 0
    %2338 = vmatprep.mubr.bf16.mxu0 0
    %2339 = vmatmul.mubr.bf16.gmra.mxu0 %v2248
    %v2340 = vpop.f32.mrf.mxu0
    %v2341 = vadd.f32 0.0, %v2340
    %v2342 = vpop.f32.mrf.mxu0
    %v2343 = vadd.f32 0.0, %v2342
    %v2344 = vpop.f32.mrf.mxu0
    %v2345 = vadd.f32 0.0, %v2344
    %v2346 = vpop.f32.mrf.mxu0
    %v2347 = vadd.f32 0.0, %v2346
    %2348 = vmatprep.mubr.bf16.mxu0 0
    %2349 = vmatmul.mubr.bf16.gmra.mxu0 %v2251
    %v2350 = vpop.f32.mrf.mxu0
    %v2351 = vadd.f32 0.0, %v2350
    %v2352 = vpop.f32.mrf.mxu0
    %v2353 = vadd.f32 0.0, %v2352
    %v2354 = vpop.f32.mrf.mxu0
    %v2355 = vadd.f32 0.0, %v2354
    %v2356 = vpop.f32.mrf.mxu0
    %v2357 = vadd.f32 0.0, %v2356
    %2358 = vdwg.mxu0
    %v2359 = vmax.f32 %v2162, %v2288
    %v2360 = vmax.f32 %v2164, %v2290
    %v2361 = vmax.f32 %v2215, %v2341
    %v2362 = vmax.f32 %v2217, %v2343
    %v2363 = vmax.f32 %v2166, %v2292
    %v2364 = vmax.f32 %v2168, %v2294
    %v2365 = vmax.f32 %v2219, %v2345
    %v2366 = vmax.f32 %v2221, %v2347
    %v2367 = vmax.f32 %v2172, %v2298
    %v2368 = vmax.f32 %v2174, %v2300
    %v2369 = vmax.f32 %v2225, %v2351
    %v2370 = vmax.f32 %v2227, %v2353
    %v2371 = vmax.f32 %v2176, %v2302
    %v2372 = vmax.f32 %v2178, %v2304
    %v2373 = vmax.f32 %v2229, %v2355
    %v2374 = vmax.f32 %v2231, %v2357
    %v2375 = vpack.c.bf16 %v2363, %v2359
    %v2376 = vpack.c.bf16 %v2364, %v2360
    %v2377 = vpack.c.bf16 %v2365, %v2361
    %v2378 = vpack.c.bf16 %v2366, %v2362
    %v2379 = vpack.c.bf16 %v2371, %v2367
    %v2380 = vpack.c.bf16 %v2372, %v2368
    %v2381 = vpack.c.bf16 %v2373, %v2369
    %v2382 = vpack.c.bf16 %v2374, %v2370
    %v2383 = vld [vmem:[#allocation21] sm:$0xff]
    %v2384 = vld [vmem:[#allocation21 + $0x8] sm:$0xff]
    %v2385 = vld [vmem:[#allocation21 + $0x10] sm:$0xff]
    %v2386 = vld [vmem:[#allocation21 + $0x18] sm:$0xff]
    %v2387 = vld [vmem:[#allocation21 + $0x20] sm:$0xff]
    %v2388 = vld [vmem:[#allocation21 + $0x28] sm:$0xff]
    %v2389 = vld [vmem:[#allocation21 + $0x30] sm:$0xff]
    %v2390 = vld [vmem:[#allocation21 + $0x38] sm:$0xff]
    %v2391 = vld [vmem:[#allocation21 + $0x40] sm:$0xff]
    %v2392 = vld [vmem:[#allocation21 + $0x48] sm:$0xff]
    %v2393 = vld [vmem:[#allocation21 + $0x50] sm:$0xff]
    %v2394 = vld [vmem:[#allocation21 + $0x58] sm:$0xff]
    %v2395 = vld [vmem:[#allocation21 + $0x60] sm:$0xff]
    %v2396 = vld [vmem:[#allocation21 + $0x68] sm:$0xff]
    %v2397 = vld [vmem:[#allocation21 + $0x70] sm:$0xff]
    %v2398 = vld [vmem:[#allocation21 + $0x78] sm:$0xff]
    %v2399 = vld [vmem:[#allocation21 + $0x80] sm:$0xff]
    %v2400 = vld [vmem:[#allocation21 + $0x88] sm:$0xff]
    %v2401 = vld [vmem:[#allocation21 + $0x90] sm:$0xff]
    %v2402 = vld [vmem:[#allocation21 + $0x98] sm:$0xff]
    %v2403 = vld [vmem:[#allocation21 + $0xa0] sm:$0xff]
    %v2404 = vld [vmem:[#allocation21 + $0xa8] sm:$0xff]
    %v2405 = vld [vmem:[#allocation21 + $0xb0] sm:$0xff]
    %v2406 = vld [vmem:[#allocation21 + $0xb8] sm:$0xff]
    %v2407 = vld [vmem:[#allocation21 + $0xc0] sm:$0xff]
    %v2408 = vld [vmem:[#allocation21 + $0xc8] sm:$0xff]
    %v2409 = vld [vmem:[#allocation21 + $0xd0] sm:$0xff]
    %v2410 = vld [vmem:[#allocation21 + $0xd8] sm:$0xff]
    %v2411 = vld [vmem:[#allocation21 + $0xe0] sm:$0xff]
    %v2412 = vld [vmem:[#allocation21 + $0xe8] sm:$0xff]
    %v2413 = vld [vmem:[#allocation21 + $0xf0] sm:$0xff]
    %v2414 = vld [vmem:[#allocation21 + $0xf8] sm:$0xff]
    %v2415 = vld [vmem:[#allocation21 + $0x100] sm:$0xff]
    %v2416 = vld [vmem:[#allocation21 + $0x108] sm:$0xff]
    %v2417 = vld [vmem:[#allocation21 + $0x110] sm:$0xff]
    %v2418 = vld [vmem:[#allocation21 + $0x118] sm:$0xff]
    %v2419 = vld [vmem:[#allocation21 + $0x120] sm:$0xff]
    %v2420 = vld [vmem:[#allocation21 + $0x128] sm:$0xff]
    %v2421 = vld [vmem:[#allocation21 + $0x130] sm:$0xff]
    %v2422 = vld [vmem:[#allocation21 + $0x138] sm:$0xff]
    %v2423 = vld [vmem:[#allocation21 + $0x140] sm:$0xff]
    %v2424 = vld [vmem:[#allocation21 + $0x148] sm:$0xff]
    %v2425 = vld [vmem:[#allocation21 + $0x150] sm:$0xff]
    %v2426 = vld [vmem:[#allocation21 + $0x158] sm:$0xff]
    %v2427 = vld [vmem:[#allocation21 + $0x160] sm:$0xff]
    %v2428 = vld [vmem:[#allocation21 + $0x168] sm:$0xff]
    %v2429 = vld [vmem:[#allocation21 + $0x170] sm:$0xff]
    %v2430 = vld [vmem:[#allocation21 + $0x178] sm:$0xff]
    %v2431 = vld [vmem:[#allocation21 + $0x180] sm:$0xff]
    %v2432 = vld [vmem:[#allocation21 + $0x188] sm:$0xff]
    %v2433 = vld [vmem:[#allocation21 + $0x190] sm:$0xff]
    %v2434 = vld [vmem:[#allocation21 + $0x198] sm:$0xff]
    %v2435 = vld [vmem:[#allocation21 + $0x1a0] sm:$0xff]
    %v2436 = vld [vmem:[#allocation21 + $0x1a8] sm:$0xff]
    %v2437 = vld [vmem:[#allocation21 + $0x1b0] sm:$0xff]
    %v2438 = vld [vmem:[#allocation21 + $0x1b8] sm:$0xff]
    %v2439 = vld [vmem:[#allocation21 + $0x1c0] sm:$0xff]
    %v2440 = vld [vmem:[#allocation21 + $0x1c8] sm:$0xff]
    %v2441 = vld [vmem:[#allocation21 + $0x1d0] sm:$0xff]
    %v2442 = vld [vmem:[#allocation21 + $0x1d8] sm:$0xff]
    %v2443 = vld [vmem:[#allocation21 + $0x1e0] sm:$0xff]
    %v2444 = vld [vmem:[#allocation21 + $0x1e8] sm:$0xff]
    %v2445 = vld [vmem:[#allocation21 + $0x1f0] sm:$0xff]
    %v2446 = vld [vmem:[#allocation21 + $0x1f8] sm:$0xff]
    %v2447 = vld [vmem:[#allocation21 + $0x200] sm:$0xff]
    %v2448 = vld [vmem:[#allocation21 + $0x208] sm:$0xff]
    %v2449 = vld [vmem:[#allocation21 + $0x210] sm:$0xff]
    %v2450 = vld [vmem:[#allocation21 + $0x218] sm:$0xff]
    %v2451 = vld [vmem:[#allocation21 + $0x220] sm:$0xff]
    %v2452 = vld [vmem:[#allocation21 + $0x228] sm:$0xff]
    %v2453 = vld [vmem:[#allocation21 + $0x230] sm:$0xff]
    %v2454 = vld [vmem:[#allocation21 + $0x238] sm:$0xff]
    %v2455 = vld [vmem:[#allocation21 + $0x240] sm:$0xff]
    %v2456 = vld [vmem:[#allocation21 + $0x248] sm:$0xff]
    %v2457 = vld [vmem:[#allocation21 + $0x250] sm:$0xff]
    %v2458 = vld [vmem:[#allocation21 + $0x258] sm:$0xff]
    %v2459 = vld [vmem:[#allocation21 + $0x260] sm:$0xff]
    %v2460 = vld [vmem:[#allocation21 + $0x268] sm:$0xff]
    %v2461 = vld [vmem:[#allocation21 + $0x270] sm:$0xff]
    %v2462 = vld [vmem:[#allocation21 + $0x278] sm:$0xff]
    %v2463 = vld [vmem:[#allocation21 + $0x280] sm:$0xff]
    %v2464 = vld [vmem:[#allocation21 + $0x288] sm:$0xff]
    %v2465 = vld [vmem:[#allocation21 + $0x290] sm:$0xff]
    %v2466 = vld [vmem:[#allocation21 + $0x298] sm:$0xff]
    %v2467 = vld [vmem:[#allocation21 + $0x2a0] sm:$0xff]
    %v2468 = vld [vmem:[#allocation21 + $0x2a8] sm:$0xff]
    %v2469 = vld [vmem:[#allocation21 + $0x2b0] sm:$0xff]
    %v2470 = vld [vmem:[#allocation21 + $0x2b8] sm:$0xff]
    %v2471 = vld [vmem:[#allocation21 + $0x2c0] sm:$0xff]
    %v2472 = vld [vmem:[#allocation21 + $0x2c8] sm:$0xff]
    %v2473 = vld [vmem:[#allocation21 + $0x2d0] sm:$0xff]
    %v2474 = vld [vmem:[#allocation21 + $0x2d8] sm:$0xff]
    %v2475 = vld [vmem:[#allocation21 + $0x2e0] sm:$0xff]
    %v2476 = vld [vmem:[#allocation21 + $0x2e8] sm:$0xff]
    %v2477 = vld [vmem:[#allocation21 + $0x2f0] sm:$0xff]
    %v2478 = vld [vmem:[#allocation21 + $0x2f8] sm:$0xff]
    %v2479 = vld [vmem:[#allocation21 + $0x300] sm:$0xff]
    %v2480 = vld [vmem:[#allocation21 + $0x308] sm:$0xff]
    %v2481 = vld [vmem:[#allocation21 + $0x310] sm:$0xff]
    %v2482 = vld [vmem:[#allocation21 + $0x318] sm:$0xff]
    %v2483 = vld [vmem:[#allocation21 + $0x320] sm:$0xff]
    %v2484 = vld [vmem:[#allocation21 + $0x328] sm:$0xff]
    %v2485 = vld [vmem:[#allocation21 + $0x330] sm:$0xff]
    %v2486 = vld [vmem:[#allocation21 + $0x338] sm:$0xff]
    %v2487 = vld [vmem:[#allocation21 + $0x340] sm:$0xff]
    %v2488 = vld [vmem:[#allocation21 + $0x348] sm:$0xff]
    %v2489 = vld [vmem:[#allocation21 + $0x350] sm:$0xff]
    %v2490 = vld [vmem:[#allocation21 + $0x358] sm:$0xff]
    %v2491 = vld [vmem:[#allocation21 + $0x360] sm:$0xff]
    %v2492 = vld [vmem:[#allocation21 + $0x368] sm:$0xff]
    %v2493 = vld [vmem:[#allocation21 + $0x370] sm:$0xff]
    %v2494 = vld [vmem:[#allocation21 + $0x378] sm:$0xff]
    %v2495 = vld [vmem:[#allocation21 + $0x380] sm:$0xff]
    %v2496 = vld [vmem:[#allocation21 + $0x388] sm:$0xff]
    %v2497 = vld [vmem:[#allocation21 + $0x390] sm:$0xff]
    %v2498 = vld [vmem:[#allocation21 + $0x398] sm:$0xff]
    %v2499 = vld [vmem:[#allocation21 + $0x3a0] sm:$0xff]
    %v2500 = vld [vmem:[#allocation21 + $0x3a8] sm:$0xff]
    %v2501 = vld [vmem:[#allocation21 + $0x3b0] sm:$0xff]
    %v2502 = vld [vmem:[#allocation21 + $0x3b8] sm:$0xff]
    %v2503 = vld [vmem:[#allocation21 + $0x3c0] sm:$0xff]
    %v2504 = vld [vmem:[#allocation21 + $0x3c8] sm:$0xff]
    %v2505 = vld [vmem:[#allocation21 + $0x3d0] sm:$0xff]
    %v2506 = vld [vmem:[#allocation21 + $0x3d8] sm:$0xff]
    %v2507 = vld [vmem:[#allocation21 + $0x3e0] sm:$0xff]
    %v2508 = vld [vmem:[#allocation21 + $0x3e8] sm:$0xff]
    %v2509 = vld [vmem:[#allocation21 + $0x3f0] sm:$0xff]
    %v2510 = vld [vmem:[#allocation21 + $0x3f8] sm:$0xff]
    %v2639 = vunpack.c.l.b16 %v2383
    %v2640 = vunpack.c.h.b16 %v2383
    %v2641 = vunpack.c.l.b16 %v2384
    %v2642 = vunpack.c.h.b16 %v2384
    %v2643 = vunpack.c.l.b16 %v2385
    %v2644 = vunpack.c.h.b16 %v2385
    %v2645 = vunpack.c.l.b16 %v2386
    %v2646 = vunpack.c.h.b16 %v2386
    %v2647 = vunpack.c.l.b16 %v2387
    %v2648 = vunpack.c.h.b16 %v2387
    %v2649 = vunpack.c.l.b16 %v2388
    %v2650 = vunpack.c.h.b16 %v2388
    %v2651 = vunpack.c.l.b16 %v2389
    %v2652 = vunpack.c.h.b16 %v2389
    %v2653 = vunpack.c.l.b16 %v2390
    %v2654 = vunpack.c.h.b16 %v2390
    %v2655 = vunpack.c.l.b16 %v2391
    %v2656 = vunpack.c.h.b16 %v2391
    %v2657 = vunpack.c.l.b16 %v2392
    %v2658 = vunpack.c.h.b16 %v2392
    %v2659 = vunpack.c.l.b16 %v2393
    %v2660 = vunpack.c.h.b16 %v2393
    %v2661 = vunpack.c.l.b16 %v2394
    %v2662 = vunpack.c.h.b16 %v2394
    %v2663 = vunpack.c.l.b16 %v2395
    %v2664 = vunpack.c.h.b16 %v2395
    %v2665 = vunpack.c.l.b16 %v2396
    %v2666 = vunpack.c.h.b16 %v2396
    %v2667 = vunpack.c.l.b16 %v2397
    %v2668 = vunpack.c.h.b16 %v2397
    %v2669 = vunpack.c.l.b16 %v2398
    %v2670 = vunpack.c.h.b16 %v2398
    %v2671 = vunpack.c.l.b16 %v2399
    %v2672 = vunpack.c.h.b16 %v2399
    %v2673 = vunpack.c.l.b16 %v2400
    %v2674 = vunpack.c.h.b16 %v2400
    %v2675 = vunpack.c.l.b16 %v2401
    %v2676 = vunpack.c.h.b16 %v2401
    %v2677 = vunpack.c.l.b16 %v2402
    %v2678 = vunpack.c.h.b16 %v2402
    %v2679 = vunpack.c.l.b16 %v2403
    %v2680 = vunpack.c.h.b16 %v2403
    %v2681 = vunpack.c.l.b16 %v2404
    %v2682 = vunpack.c.h.b16 %v2404
    %v2683 = vunpack.c.l.b16 %v2405
    %v2684 = vunpack.c.h.b16 %v2405
    %v2685 = vunpack.c.l.b16 %v2406
    %v2686 = vunpack.c.h.b16 %v2406
    %v2687 = vunpack.c.l.b16 %v2407
    %v2688 = vunpack.c.h.b16 %v2407
    %v2689 = vunpack.c.l.b16 %v2408
    %v2690 = vunpack.c.h.b16 %v2408
    %v2691 = vunpack.c.l.b16 %v2409
    %v2692 = vunpack.c.h.b16 %v2409
    %v2693 = vunpack.c.l.b16 %v2410
    %v2694 = vunpack.c.h.b16 %v2410
    %v2695 = vunpack.c.l.b16 %v2411
    %v2696 = vunpack.c.h.b16 %v2411
    %v2697 = vunpack.c.l.b16 %v2412
    %v2698 = vunpack.c.h.b16 %v2412
    %v2699 = vunpack.c.l.b16 %v2413
    %v2700 = vunpack.c.h.b16 %v2413
    %v2701 = vunpack.c.l.b16 %v2414
    %v2702 = vunpack.c.h.b16 %v2414
    %v2703 = vunpack.c.l.b16 %v2415
    %v2704 = vunpack.c.h.b16 %v2415
    %v2705 = vunpack.c.l.b16 %v2416
    %v2706 = vunpack.c.h.b16 %v2416
    %v2707 = vunpack.c.l.b16 %v2417
    %v2708 = vunpack.c.h.b16 %v2417
    %v2709 = vunpack.c.l.b16 %v2418
    %v2710 = vunpack.c.h.b16 %v2418
    %v2711 = vunpack.c.l.b16 %v2419
    %v2712 = vunpack.c.h.b16 %v2419
    %v2713 = vunpack.c.l.b16 %v2420
    %v2714 = vunpack.c.h.b16 %v2420
    %v2715 = vunpack.c.l.b16 %v2421
    %v2716 = vunpack.c.h.b16 %v2421
    %v2717 = vunpack.c.l.b16 %v2422
    %v2718 = vunpack.c.h.b16 %v2422
    %v2719 = vunpack.c.l.b16 %v2423
    %v2720 = vunpack.c.h.b16 %v2423
    %v2721 = vunpack.c.l.b16 %v2424
    %v2722 = vunpack.c.h.b16 %v2424
    %v2723 = vunpack.c.l.b16 %v2425
    %v2724 = vunpack.c.h.b16 %v2425
    %v2725 = vunpack.c.l.b16 %v2426
    %v2726 = vunpack.c.h.b16 %v2426
    %v2727 = vunpack.c.l.b16 %v2427
    %v2728 = vunpack.c.h.b16 %v2427
    %v2729 = vunpack.c.l.b16 %v2428
    %v2730 = vunpack.c.h.b16 %v2428
    %v2731 = vunpack.c.l.b16 %v2429
    %v2732 = vunpack.c.h.b16 %v2429
    %v2733 = vunpack.c.l.b16 %v2430
    %v2734 = vunpack.c.h.b16 %v2430
    %v2735 = vunpack.c.l.b16 %v2431
    %v2736 = vunpack.c.h.b16 %v2431
    %v2737 = vunpack.c.l.b16 %v2432
    %v2738 = vunpack.c.h.b16 %v2432
    %v2739 = vunpack.c.l.b16 %v2433
    %v2740 = vunpack.c.h.b16 %v2433
    %v2741 = vunpack.c.l.b16 %v2434
    %v2742 = vunpack.c.h.b16 %v2434
    %v2743 = vunpack.c.l.b16 %v2435
    %v2744 = vunpack.c.h.b16 %v2435
    %v2745 = vunpack.c.l.b16 %v2436
    %v2746 = vunpack.c.h.b16 %v2436
    %v2747 = vunpack.c.l.b16 %v2437
    %v2748 = vunpack.c.h.b16 %v2437
    %v2749 = vunpack.c.l.b16 %v2438
    %v2750 = vunpack.c.h.b16 %v2438
    %v2751 = vunpack.c.l.b16 %v2439
    %v2752 = vunpack.c.h.b16 %v2439
    %v2753 = vunpack.c.l.b16 %v2440
    %v2754 = vunpack.c.h.b16 %v2440
    %v2755 = vunpack.c.l.b16 %v2441
    %v2756 = vunpack.c.h.b16 %v2441
    %v2757 = vunpack.c.l.b16 %v2442
    %v2758 = vunpack.c.h.b16 %v2442
    %v2759 = vunpack.c.l.b16 %v2443
    %v2760 = vunpack.c.h.b16 %v2443
    %v2761 = vunpack.c.l.b16 %v2444
    %v2762 = vunpack.c.h.b16 %v2444
    %v2763 = vunpack.c.l.b16 %v2445
    %v2764 = vunpack.c.h.b16 %v2445
    %v2765 = vunpack.c.l.b16 %v2446
    %v2766 = vunpack.c.h.b16 %v2446
    %v2767 = vunpack.c.l.b16 %v2447
    %v2768 = vunpack.c.h.b16 %v2447
    %v2769 = vunpack.c.l.b16 %v2448
    %v2770 = vunpack.c.h.b16 %v2448
    %v2771 = vunpack.c.l.b16 %v2449
    %v2772 = vunpack.c.h.b16 %v2449
    %v2773 = vunpack.c.l.b16 %v2450
    %v2774 = vunpack.c.h.b16 %v2450
    %v2775 = vunpack.c.l.b16 %v2451
    %v2776 = vunpack.c.h.b16 %v2451
    %v2777 = vunpack.c.l.b16 %v2452
    %v2778 = vunpack.c.h.b16 %v2452
    %v2779 = vunpack.c.l.b16 %v2453
    %v2780 = vunpack.c.h.b16 %v2453
    %v2781 = vunpack.c.l.b16 %v2454
    %v2782 = vunpack.c.h.b16 %v2454
    %v2783 = vunpack.c.l.b16 %v2455
    %v2784 = vunpack.c.h.b16 %v2455
    %v2785 = vunpack.c.l.b16 %v2456
    %v2786 = vunpack.c.h.b16 %v2456
    %v2787 = vunpack.c.l.b16 %v2457
    %v2788 = vunpack.c.h.b16 %v2457
    %v2789 = vunpack.c.l.b16 %v2458
    %v2790 = vunpack.c.h.b16 %v2458
    %v2791 = vunpack.c.l.b16 %v2459
    %v2792 = vunpack.c.h.b16 %v2459
    %v2793 = vunpack.c.l.b16 %v2460
    %v2794 = vunpack.c.h.b16 %v2460
    %v2795 = vunpack.c.l.b16 %v2461
    %v2796 = vunpack.c.h.b16 %v2461
    %v2797 = vunpack.c.l.b16 %v2462
    %v2798 = vunpack.c.h.b16 %v2462
    %v2799 = vunpack.c.l.b16 %v2463
    %v2800 = vunpack.c.h.b16 %v2463
    %v2801 = vunpack.c.l.b16 %v2464
    %v2802 = vunpack.c.h.b16 %v2464
    %v2803 = vunpack.c.l.b16 %v2465
    %v2804 = vunpack.c.h.b16 %v2465
    %v2805 = vunpack.c.l.b16 %v2466
    %v2806 = vunpack.c.h.b16 %v2466
    %v2807 = vunpack.c.l.b16 %v2467
    %v2808 = vunpack.c.h.b16 %v2467
    %v2809 = vunpack.c.l.b16 %v2468
    %v2810 = vunpack.c.h.b16 %v2468
    %v2811 = vunpack.c.l.b16 %v2469
    %v2812 = vunpack.c.h.b16 %v2469
    %v2813 = vunpack.c.l.b16 %v2470
    %v2814 = vunpack.c.h.b16 %v2470
    %v2815 = vunpack.c.l.b16 %v2471
    %v2816 = vunpack.c.h.b16 %v2471
    %v2817 = vunpack.c.l.b16 %v2472
    %v2818 = vunpack.c.h.b16 %v2472
    %v2819 = vunpack.c.l.b16 %v2473
    %v2820 = vunpack.c.h.b16 %v2473
    %v2821 = vunpack.c.l.b16 %v2474
    %v2822 = vunpack.c.h.b16 %v2474
    %v2823 = vunpack.c.l.b16 %v2475
    %v2824 = vunpack.c.h.b16 %v2475
    %v2825 = vunpack.c.l.b16 %v2476
    %v2826 = vunpack.c.h.b16 %v2476
    %v2827 = vunpack.c.l.b16 %v2477
    %v2828 = vunpack.c.h.b16 %v2477
    %v2829 = vunpack.c.l.b16 %v2478
    %v2830 = vunpack.c.h.b16 %v2478
    %v2831 = vunpack.c.l.b16 %v2479
    %v2832 = vunpack.c.h.b16 %v2479
    %v2833 = vunpack.c.l.b16 %v2480
    %v2834 = vunpack.c.h.b16 %v2480
    %v2835 = vunpack.c.l.b16 %v2481
    %v2836 = vunpack.c.h.b16 %v2481
    %v2837 = vunpack.c.l.b16 %v2482
    %v2838 = vunpack.c.h.b16 %v2482
    %v2839 = vunpack.c.l.b16 %v2483
    %v2840 = vunpack.c.h.b16 %v2483
    %v2841 = vunpack.c.l.b16 %v2484
    %v2842 = vunpack.c.h.b16 %v2484
    %v2843 = vunpack.c.l.b16 %v2485
    %v2844 = vunpack.c.h.b16 %v2485
    %v2845 = vunpack.c.l.b16 %v2486
    %v2846 = vunpack.c.h.b16 %v2486
    %v2847 = vunpack.c.l.b16 %v2487
    %v2848 = vunpack.c.h.b16 %v2487
    %v2849 = vunpack.c.l.b16 %v2488
    %v2850 = vunpack.c.h.b16 %v2488
    %v2851 = vunpack.c.l.b16 %v2489
    %v2852 = vunpack.c.h.b16 %v2489
    %v2853 = vunpack.c.l.b16 %v2490
    %v2854 = vunpack.c.h.b16 %v2490
    %v2855 = vunpack.c.l.b16 %v2491
    %v2856 = vunpack.c.h.b16 %v2491
    %v2857 = vunpack.c.l.b16 %v2492
    %v2858 = vunpack.c.h.b16 %v2492
    %v2859 = vunpack.c.l.b16 %v2493
    %v2860 = vunpack.c.h.b16 %v2493
    %v2861 = vunpack.c.l.b16 %v2494
    %v2862 = vunpack.c.h.b16 %v2494
    %v2863 = vunpack.c.l.b16 %v2495
    %v2864 = vunpack.c.h.b16 %v2495
    %v2865 = vunpack.c.l.b16 %v2496
    %v2866 = vunpack.c.h.b16 %v2496
    %v2867 = vunpack.c.l.b16 %v2497
    %v2868 = vunpack.c.h.b16 %v2497
    %v2869 = vunpack.c.l.b16 %v2498
    %v2870 = vunpack.c.h.b16 %v2498
    %v2871 = vunpack.c.l.b16 %v2499
    %v2872 = vunpack.c.h.b16 %v2499
    %v2873 = vunpack.c.l.b16 %v2500
    %v2874 = vunpack.c.h.b16 %v2500
    %v2875 = vunpack.c.l.b16 %v2501
    %v2876 = vunpack.c.h.b16 %v2501
    %v2877 = vunpack.c.l.b16 %v2502
    %v2878 = vunpack.c.h.b16 %v2502
    %v2879 = vunpack.c.l.b16 %v2503
    %v2880 = vunpack.c.h.b16 %v2503
    %v2881 = vunpack.c.l.b16 %v2504
    %v2882 = vunpack.c.h.b16 %v2504
    %v2883 = vunpack.c.l.b16 %v2505
    %v2884 = vunpack.c.h.b16 %v2505
    %v2885 = vunpack.c.l.b16 %v2506
    %v2886 = vunpack.c.h.b16 %v2506
    %v2887 = vunpack.c.l.b16 %v2507
    %v2888 = vunpack.c.h.b16 %v2507
    %v2889 = vunpack.c.l.b16 %v2508
    %v2890 = vunpack.c.h.b16 %v2508
    %v2891 = vunpack.c.l.b16 %v2509
    %v2892 = vunpack.c.h.b16 %v2509
    %v2893 = vunpack.c.l.b16 %v2510
    %v2894 = vunpack.c.h.b16 %v2510
    %v2895 = vpack.c.b16 %v2643, %v2639
    %v2896 = vpack.c.b16 %v2644, %v2640
    %v2897 = vpack.c.b16 %v2645, %v2641
    %v2898 = vpack.c.b16 %v2646, %v2642
    %v2899 = vpack.c.b16 %v2651, %v2647
    %v2900 = vpack.c.b16 %v2652, %v2648
    %v2901 = vpack.c.b16 %v2653, %v2649
    %v2902 = vpack.c.b16 %v2654, %v2650
    %v2903 = vpack.c.b16 %v2659, %v2655
    %v2904 = vpack.c.b16 %v2660, %v2656
    %v2905 = vpack.c.b16 %v2661, %v2657
    %v2906 = vpack.c.b16 %v2662, %v2658
    %v2907 = vpack.c.b16 %v2667, %v2663
    %v2908 = vpack.c.b16 %v2668, %v2664
    %v2909 = vpack.c.b16 %v2669, %v2665
    %v2910 = vpack.c.b16 %v2670, %v2666
    %v2911 = vpack.c.b16 %v2675, %v2671
    %v2912 = vpack.c.b16 %v2676, %v2672
    %v2913 = vpack.c.b16 %v2677, %v2673
    %v2914 = vpack.c.b16 %v2678, %v2674
    %v2915 = vpack.c.b16 %v2683, %v2679
    %v2916 = vpack.c.b16 %v2684, %v2680
    %v2917 = vpack.c.b16 %v2685, %v2681
    %v2918 = vpack.c.b16 %v2686, %v2682
    %v2919 = vpack.c.b16 %v2691, %v2687
    %v2920 = vpack.c.b16 %v2692, %v2688
    %v2921 = vpack.c.b16 %v2693, %v2689
    %v2922 = vpack.c.b16 %v2694, %v2690
    %v2923 = vpack.c.b16 %v2699, %v2695
    %v2924 = vpack.c.b16 %v2700, %v2696
    %v2925 = vpack.c.b16 %v2701, %v2697
    %v2926 = vpack.c.b16 %v2702, %v2698
    %v2927 = vpack.c.b16 %v2707, %v2703
    %v2928 = vpack.c.b16 %v2708, %v2704
    %v2929 = vpack.c.b16 %v2709, %v2705
    %v2930 = vpack.c.b16 %v2710, %v2706
    %v2931 = vpack.c.b16 %v2715, %v2711
    %v2932 = vpack.c.b16 %v2716, %v2712
    %v2933 = vpack.c.b16 %v2717, %v2713
    %v2934 = vpack.c.b16 %v2718, %v2714
    %v2935 = vpack.c.b16 %v2723, %v2719
    %v2936 = vpack.c.b16 %v2724, %v2720
    %v2937 = vpack.c.b16 %v2725, %v2721
    %v2938 = vpack.c.b16 %v2726, %v2722
    %v2939 = vpack.c.b16 %v2731, %v2727
    %v2940 = vpack.c.b16 %v2732, %v2728
    %v2941 = vpack.c.b16 %v2733, %v2729
    %v2942 = vpack.c.b16 %v2734, %v2730
    %v2943 = vpack.c.b16 %v2739, %v2735
    %v2944 = vpack.c.b16 %v2740, %v2736
    %v2945 = vpack.c.b16 %v2741, %v2737
    %v2946 = vpack.c.b16 %v2742, %v2738
    %v2947 = vpack.c.b16 %v2747, %v2743
    %v2948 = vpack.c.b16 %v2748, %v2744
    %v2949 = vpack.c.b16 %v2749, %v2745
    %v2950 = vpack.c.b16 %v2750, %v2746
    %v2951 = vpack.c.b16 %v2755, %v2751
    %v2952 = vpack.c.b16 %v2756, %v2752
    %v2953 = vpack.c.b16 %v2757, %v2753
    %v2954 = vpack.c.b16 %v2758, %v2754
    %v2955 = vpack.c.b16 %v2763, %v2759
    %v2956 = vpack.c.b16 %v2764, %v2760
    %v2957 = vpack.c.b16 %v2765, %v2761
    %v2958 = vpack.c.b16 %v2766, %v2762
    %v2959 = vpack.c.b16 %v2771, %v2767
    %v2960 = vpack.c.b16 %v2772, %v2768
    %v2961 = vpack.c.b16 %v2773, %v2769
    %v2962 = vpack.c.b16 %v2774, %v2770
    %v2963 = vpack.c.b16 %v2779, %v2775
    %v2964 = vpack.c.b16 %v2780, %v2776
    %v2965 = vpack.c.b16 %v2781, %v2777
    %v2966 = vpack.c.b16 %v2782, %v2778
    %v2967 = vpack.c.b16 %v2787, %v2783
    %v2968 = vpack.c.b16 %v2788, %v2784
    %v2969 = vpack.c.b16 %v2789, %v2785
    %v2970 = vpack.c.b16 %v2790, %v2786
    %v2971 = vpack.c.b16 %v2795, %v2791
    %v2972 = vpack.c.b16 %v2796, %v2792
    %v2973 = vpack.c.b16 %v2797, %v2793
    %v2974 = vpack.c.b16 %v2798, %v2794
    %v2975 = vpack.c.b16 %v2803, %v2799
    %v2976 = vpack.c.b16 %v2804, %v2800
    %v2977 = vpack.c.b16 %v2805, %v2801
    %v2978 = vpack.c.b16 %v2806, %v2802
    %v2979 = vpack.c.b16 %v2811, %v2807
    %v2980 = vpack.c.b16 %v2812, %v2808
    %v2981 = vpack.c.b16 %v2813, %v2809
    %v2982 = vpack.c.b16 %v2814, %v2810
    %v2983 = vpack.c.b16 %v2819, %v2815
    %v2984 = vpack.c.b16 %v2820, %v2816
    %v2985 = vpack.c.b16 %v2821, %v2817
    %v2986 = vpack.c.b16 %v2822, %v2818
    %v2987 = vpack.c.b16 %v2827, %v2823
    %v2988 = vpack.c.b16 %v2828, %v2824
    %v2989 = vpack.c.b16 %v2829, %v2825
    %v2990 = vpack.c.b16 %v2830, %v2826
    %v2991 = vpack.c.b16 %v2835, %v2831
    %v2992 = vpack.c.b16 %v2836, %v2832
    %v2993 = vpack.c.b16 %v2837, %v2833
    %v2994 = vpack.c.b16 %v2838, %v2834
    %v2995 = vpack.c.b16 %v2843, %v2839
    %v2996 = vpack.c.b16 %v2844, %v2840
    %v2997 = vpack.c.b16 %v2845, %v2841
    %v2998 = vpack.c.b16 %v2846, %v2842
    %v2999 = vpack.c.b16 %v2851, %v2847
    %v3000 = vpack.c.b16 %v2852, %v2848
    %v3001 = vpack.c.b16 %v2853, %v2849
    %v3002 = vpack.c.b16 %v2854, %v2850
    %v3003 = vpack.c.b16 %v2859, %v2855
    %v3004 = vpack.c.b16 %v2860, %v2856
    %v3005 = vpack.c.b16 %v2861, %v2857
    %v3006 = vpack.c.b16 %v2862, %v2858
    %v3007 = vpack.c.b16 %v2867, %v2863
    %v3008 = vpack.c.b16 %v2868, %v2864
    %v3009 = vpack.c.b16 %v2869, %v2865
    %v3010 = vpack.c.b16 %v2870, %v2866
    %v3011 = vpack.c.b16 %v2875, %v2871
    %v3012 = vpack.c.b16 %v2876, %v2872
    %v3013 = vpack.c.b16 %v2877, %v2873
    %v3014 = vpack.c.b16 %v2878, %v2874
    %v3015 = vpack.c.b16 %v2883, %v2879
    %v3016 = vpack.c.b16 %v2884, %v2880
    %v3017 = vpack.c.b16 %v2885, %v2881
    %v3018 = vpack.c.b16 %v2886, %v2882
    %v3019 = vpack.c.b16 %v2891, %v2887
    %v3020 = vpack.c.b16 %v2892, %v2888
    %v3021 = vpack.c.b16 %v2893, %v2889
    %v3022 = vpack.c.b16 %v2894, %v2890
    %3151 = vmatprep.subr.bf16.mxu0 %v2924
    %3152 = vmatpush1.bf16.msra.mxu0 %v2923
    %3153 = vmatprep.subr.bf16.mxu0 %v2920
    %3154 = vmatpush1.bf16.msra.mxu0 %v2919
    %3155 = vmatprep.subr.bf16.mxu0 %v2916
    %3156 = vmatpush1.bf16.msra.mxu0 %v2915
    %3157 = vmatprep.subr.bf16.mxu0 %v2912
    %3158 = vmatpush1.bf16.msra.mxu0 %v2911
    %3159 = vmatprep.subr.bf16.mxu0 %v2908
    %3160 = vmatpush1.bf16.msra.mxu0 %v2907
    %3161 = vmatprep.subr.bf16.mxu0 %v2904
    %3162 = vmatpush1.bf16.msra.mxu0 %v2903
    %3163 = vmatprep.subr.bf16.mxu0 %v2900
    %3164 = vmatpush1.bf16.msra.mxu0 %v2899
    %3165 = vmatprep.subr.bf16.mxu0 %v2896
    %3166 = vmatpush1.bf16.msra.mxu0 %v2895
    %3167 = vmatprep.subr.bf16.mxu0 %v2956
    %3168 = vmatpush2.bf16.msra.mxu0 %v2955
    %3169 = vmatprep.subr.bf16.mxu0 %v2952
    %3170 = vmatpush2.bf16.msra.mxu0 %v2951
    %3171 = vmatprep.subr.bf16.mxu0 %v2948
    %3172 = vmatpush2.bf16.msra.mxu0 %v2947
    %3173 = vmatprep.subr.bf16.mxu0 %v2944
    %3174 = vmatpush2.bf16.msra.mxu0 %v2943
    %3175 = vmatprep.subr.bf16.mxu0 %v2940
    %3176 = vmatpush2.bf16.msra.mxu0 %v2939
    %3177 = vmatprep.subr.bf16.mxu0 %v2936
    %3178 = vmatpush2.bf16.msra.mxu0 %v2935
    %3179 = vmatprep.subr.bf16.mxu0 %v2932
    %3180 = vmatpush2.bf16.msra.mxu0 %v2931
    %3181 = vmatprep.subr.bf16.mxu0 %v2928
    %3182 = vmatpush2.bf16.msra.mxu0 %v2927
    %3183 = vmatprep.mubr.bf16.mxu0 %v2376
    %3184 = vmatmul.mubr.bf16.gmra.mxu0 %v2375
    %v3185 = vpop.f32.mrf.mxu0
    %v3186 = vadd.f32 0.0, %v3185
    %v3187 = vpop.f32.mrf.mxu0
    %v3188 = vadd.f32 0.0, %v3187
    %v3189 = vpop.f32.mrf.mxu0
    %v3190 = vadd.f32 0.0, %v3189
    %v3191 = vpop.f32.mrf.mxu0
    %v3192 = vadd.f32 0.0, %v3191
    %3193 = vmatprep.mubr.bf16.mxu0 %v2380
    %3194 = vmatmul.mubr.bf16.gmra.mxu0 %v2379
    %v3195 = vpop.f32.mrf.mxu0
    %v3196 = vadd.f32 0.0, %v3195
    %v3197 = vpop.f32.mrf.mxu0
    %v3198 = vadd.f32 0.0, %v3197
    %v3199 = vpop.f32.mrf.mxu0
    %v3200 = vadd.f32 0.0, %v3199
    %v3201 = vpop.f32.mrf.mxu0
    %v3202 = vadd.f32 0.0, %v3201
    %3203 = vdwg.mxu0
    %3204 = vmatprep.subr.bf16.mxu0 %v2988
    %3205 = vmatpush1.bf16.msra.mxu0 %v2987
    %3206 = vmatprep.subr.bf16.mxu0 %v2984
    %3207 = vmatpush1.bf16.msra.mxu0 %v2983
    %3208 = vmatprep.subr.bf16.mxu0 %v2980
    %3209 = vmatpush1.bf16.msra.mxu0 %v2979
    %3210 = vmatprep.subr.bf16.mxu0 %v2976
    %3211 = vmatpush1.bf16.msra.mxu0 %v2975
    %3212 = vmatprep.subr.bf16.mxu0 %v2972
    %3213 = vmatpush1.bf16.msra.mxu0 %v2971
    %3214 = vmatprep.subr.bf16.mxu0 %v2968
    %3215 = vmatpush1.bf16.msra.mxu0 %v2967
    %3216 = vmatprep.subr.bf16.mxu0 %v2964
    %3217 = vmatpush1.bf16.msra.mxu0 %v2963
    %3218 = vmatprep.subr.bf16.mxu0 %v2960
    %3219 = vmatpush1.bf16.msra.mxu0 %v2959
    %3220 = vmatprep.subr.bf16.mxu0 %v3020
    %3221 = vmatpush2.bf16.msra.mxu0 %v3019
    %3222 = vmatprep.subr.bf16.mxu0 %v3016
    %3223 = vmatpush2.bf16.msra.mxu0 %v3015
    %3224 = vmatprep.subr.bf16.mxu0 %v3012
    %3225 = vmatpush2.bf16.msra.mxu0 %v3011
    %3226 = vmatprep.subr.bf16.mxu0 %v3008
    %3227 = vmatpush2.bf16.msra.mxu0 %v3007
    %3228 = vmatprep.subr.bf16.mxu0 %v3004
    %3229 = vmatpush2.bf16.msra.mxu0 %v3003
    %3230 = vmatprep.subr.bf16.mxu0 %v3000
    %3231 = vmatpush2.bf16.msra.mxu0 %v2999
    %3232 = vmatprep.subr.bf16.mxu0 %v2996
    %3233 = vmatpush2.bf16.msra.mxu0 %v2995
    %3234 = vmatprep.subr.bf16.mxu0 %v2992
    %3235 = vmatpush2.bf16.msra.mxu0 %v2991
    %3236 = vmatprep.mubr.bf16.mxu0 %v2378
    %3237 = vmatmul.mubr.bf16.gmra.mxu0 %v2377
    %v3238 = vpop.f32.mrf.mxu0
    %v3239 = vadd.f32 %v3186, %v3238
    %v3240 = vpop.f32.mrf.mxu0
    %v3241 = vadd.f32 %v3188, %v3240
    %v3242 = vpop.f32.mrf.mxu0
    %v3243 = vadd.f32 %v3190, %v3242
    %v3244 = vpop.f32.mrf.mxu0
    %v3245 = vadd.f32 %v3192, %v3244
    %3246 = vmatprep.mubr.bf16.mxu0 %v2382
    %3247 = vmatmul.mubr.bf16.gmra.mxu0 %v2381
    %v3248 = vpop.f32.mrf.mxu0
    %v3249 = vadd.f32 %v3196, %v3248
    %v3250 = vpop.f32.mrf.mxu0
    %v3251 = vadd.f32 %v3198, %v3250
    %v3252 = vpop.f32.mrf.mxu0
    %v3253 = vadd.f32 %v3200, %v3252
    %v3254 = vpop.f32.mrf.mxu0
    %v3255 = vadd.f32 %v3202, %v3254
    %3256 = vdwg.mxu0
    %3257 = vmatprep.subr.bf16.mxu0 %v2926
    %3258 = vmatpush1.bf16.msra.mxu0 %v2925
    %3259 = vmatprep.subr.bf16.mxu0 %v2922
    %3260 = vmatpush1.bf16.msra.mxu0 %v2921
    %3261 = vmatprep.subr.bf16.mxu0 %v2918
    %3262 = vmatpush1.bf16.msra.mxu0 %v2917
    %3263 = vmatprep.subr.bf16.mxu0 %v2914
    %3264 = vmatpush1.bf16.msra.mxu0 %v2913
    %3265 = vmatprep.subr.bf16.mxu0 %v2910
    %3266 = vmatpush1.bf16.msra.mxu0 %v2909
    %3267 = vmatprep.subr.bf16.mxu0 %v2906
    %3268 = vmatpush1.bf16.msra.mxu0 %v2905
    %3269 = vmatprep.subr.bf16.mxu0 %v2902
    %3270 = vmatpush1.bf16.msra.mxu0 %v2901
    %3271 = vmatprep.subr.bf16.mxu0 %v2898
    %3272 = vmatpush1.bf16.msra.mxu0 %v2897
    %3273 = vmatprep.subr.bf16.mxu0 %v2958
    %3274 = vmatpush2.bf16.msra.mxu0 %v2957
    %3275 = vmatprep.subr.bf16.mxu0 %v2954
    %3276 = vmatpush2.bf16.msra.mxu0 %v2953
    %3277 = vmatprep.subr.bf16.mxu0 %v2950
    %3278 = vmatpush2.bf16.msra.mxu0 %v2949
    %3279 = vmatprep.subr.bf16.mxu0 %v2946
    %3280 = vmatpush2.bf16.msra.mxu0 %v2945
    %3281 = vmatprep.subr.bf16.mxu0 %v2942
    %3282 = vmatpush2.bf16.msra.mxu0 %v2941
    %3283 = vmatprep.subr.bf16.mxu0 %v2938
    %3284 = vmatpush2.bf16.msra.mxu0 %v2937
    %3285 = vmatprep.subr.bf16.mxu0 %v2934
    %3286 = vmatpush2.bf16.msra.mxu0 %v2933
    %3287 = vmatprep.subr.bf16.mxu0 %v2930
    %3288 = vmatpush2.bf16.msra.mxu0 %v2929
    %3289 = vmatprep.mubr.bf16.mxu0 %v2376
    %3290 = vmatmul.mubr.bf16.gmra.mxu0 %v2375
    %v3291 = vpop.f32.mrf.mxu0
    %v3292 = vadd.f32 0.0, %v3291
    %v3293 = vpop.f32.mrf.mxu0
    %v3294 = vadd.f32 0.0, %v3293
    %v3295 = vpop.f32.mrf.mxu0
    %v3296 = vadd.f32 0.0, %v3295
    %v3297 = vpop.f32.mrf.mxu0
    %v3298 = vadd.f32 0.0, %v3297
    %3299 = vmatprep.mubr.bf16.mxu0 %v2380
    %3300 = vmatmul.mubr.bf16.gmra.mxu0 %v2379
    %v3301 = vpop.f32.mrf.mxu0
    %v3302 = vadd.f32 0.0, %v3301
    %v3303 = vpop.f32.mrf.mxu0
    %v3304 = vadd.f32 0.0, %v3303
    %v3305 = vpop.f32.mrf.mxu0
    %v3306 = vadd.f32 0.0, %v3305
    %v3307 = vpop.f32.mrf.mxu0
    %v3308 = vadd.f32 0.0, %v3307
    %3309 = vdwg.mxu0
    %3310 = vmatprep.subr.bf16.mxu0 %v2990
    %3311 = vmatpush1.bf16.msra.mxu0 %v2989
    %3312 = vmatprep.subr.bf16.mxu0 %v2986
    %3313 = vmatpush1.bf16.msra.mxu0 %v2985
    %3314 = vmatprep.subr.bf16.mxu0 %v2982
    %3315 = vmatpush1.bf16.msra.mxu0 %v2981
    %3316 = vmatprep.subr.bf16.mxu0 %v2978
    %3317 = vmatpush1.bf16.msra.mxu0 %v2977
    %3318 = vmatprep.subr.bf16.mxu0 %v2974
    %3319 = vmatpush1.bf16.msra.mxu0 %v2973
    %3320 = vmatprep.subr.bf16.mxu0 %v2970
    %3321 = vmatpush1.bf16.msra.mxu0 %v2969
    %3322 = vmatprep.subr.bf16.mxu0 %v2966
    %3323 = vmatpush1.bf16.msra.mxu0 %v2965
    %3324 = vmatprep.subr.bf16.mxu0 %v2962
    %3325 = vmatpush1.bf16.msra.mxu0 %v2961
    %3326 = vmatprep.subr.bf16.mxu0 %v3022
    %3327 = vmatpush2.bf16.msra.mxu0 %v3021
    %3328 = vmatprep.subr.bf16.mxu0 %v3018
    %3329 = vmatpush2.bf16.msra.mxu0 %v3017
    %3330 = vmatprep.subr.bf16.mxu0 %v3014
    %3331 = vmatpush2.bf16.msra.mxu0 %v3013
    %3332 = vmatprep.subr.bf16.mxu0 %v3010
    %3333 = vmatpush2.bf16.msra.mxu0 %v3009
    %3334 = vmatprep.subr.bf16.mxu0 %v3006
    %3335 = vmatpush2.bf16.msra.mxu0 %v3005
    %3336 = vmatprep.subr.bf16.mxu0 %v3002
    %3337 = vmatpush2.bf16.msra.mxu0 %v3001
    %3338 = vmatprep.subr.bf16.mxu0 %v2998
    %3339 = vmatpush2.bf16.msra.mxu0 %v2997
    %3340 = vmatprep.subr.bf16.mxu0 %v2994
    %3341 = vmatpush2.bf16.msra.mxu0 %v2993
    %3342 = vmatprep.mubr.bf16.mxu0 %v2378
    %3343 = vmatmul.mubr.bf16.gmra.mxu0 %v2377
    %v3344 = vpop.f32.mrf.mxu0
    %v3345 = vadd.f32 %v3292, %v3344
    %v3346 = vpop.f32.mrf.mxu0
    %v3347 = vadd.f32 %v3294, %v3346
    %v3348 = vpop.f32.mrf.mxu0
    %v3349 = vadd.f32 %v3296, %v3348
    %v3350 = vpop.f32.mrf.mxu0
    %v3351 = vadd.f32 %v3298, %v3350
    %3352 = vmatprep.mubr.bf16.mxu0 %v2382
    %3353 = vmatmul.mubr.bf16.gmra.mxu0 %v2381
    %v3354 = vpop.f32.mrf.mxu0
    %v3355 = vadd.f32 %v3302, %v3354
    %v3356 = vpop.f32.mrf.mxu0
    %v3357 = vadd.f32 %v3304, %v3356
    %v3358 = vpop.f32.mrf.mxu0
    %v3359 = vadd.f32 %v3306, %v3358
    %v3360 = vpop.f32.mrf.mxu0
    %v3361 = vadd.f32 %v3308, %v3360
    %3362 = vdwg.mxu0
    %v3363 = vmax.f32 %v3239, %v3345
    %v3364 = vmax.f32 %v3241, %v3347
    %v3365 = vmax.f32 %v3243, %v3349
    %v3366 = vmax.f32 %v3245, %v3351
    %v3367 = vmax.f32 %v3249, %v3355
    %v3368 = vmax.f32 %v3251, %v3357
    %v3369 = vmax.f32 %v3253, %v3359
    %v3370 = vmax.f32 %v3255, %v3361
    %3371 = vst [vmem:[#allocation4] sm:$0xff] 0.0
    %3372 = vst [vmem:[#allocation4 + $0x8] sm:$0xff] 0.0
    %3373 = vst [vmem:[#allocation4 + $0x10] sm:$0xff] 0.0
    %3374 = vst [vmem:[#allocation4 + $0x18] sm:$0xff] 0.0
    %3375 = vst [vmem:[#allocation4 + $0x20] sm:$0x3] 0.0
    %3376 = vst [vmem:[#allocation4 + $0x28] sm:$0x3] 0.0
    %3377 = vst [vmem:[#allocation4 + $0x30] sm:$0xff] 0.0
    %3378 = vst [vmem:[#allocation4 + $0x38] sm:$0xff] 0.0
    %3379 = vst [vmem:[#allocation4 + $0x40] sm:$0xff] 0.0
    %3380 = vst [vmem:[#allocation4 + $0x48] sm:$0xff] 0.0
    %3381 = vst [vmem:[#allocation4 + $0x50] sm:$0x3] 0.0
    %3382 = vst [vmem:[#allocation4 + $0x58] sm:$0x3] 0.0
    %vm3387 = vcmask 1041408
    %v3388 = vrot.slane %v3363, 6
    %v3389 = vrot.slane %v3364, 6
    %v3390 = vrot.slane %v3365, 6
    %v3391 = vsel %vm3387, %v3388, %v3390
    %v3392 = vrot.slane %v3366, 6
    %v3393 = vsel %vm3387, %v3389, %v3392
    %3398 = vst [vmem:[#allocation4] sm:$0xfc] %v3388
    %3399 = vst [vmem:[#allocation4 + $0x8] sm:$0xfc] %v3389
    %3400 = vst [vmem:[#allocation4 + $0x10] sm:$0xff] %v3391
    %3401 = vst [vmem:[#allocation4 + $0x18] sm:$0xff] %v3393
    %v3406 = vrot.slane %v3365, 4
    %v3407 = vrot.slane %v3367, 4
    %v3408 = vsel %vm2114, %v3406, %v3407
    %v3409 = vrot.slane %v3366, 4
    %v3410 = vrot.slane %v3368, 4
    %v3411 = vsel %vm2114, %v3409, %v3410
    %v3412 = vrot.slane %v3369, 4
    %v3413 = vsel %vm2114, %v3407, %v3412
    %v3414 = vrot.slane %v3370, 4
    %v3415 = vsel %vm2114, %v3410, %v3414
    %s3420 = scalar_lea.vmem [#allocation4], 48
    %3421 = vst [vmem:[%s3420] sm:$0xfc] %v3408
    %3422 = vst [vmem:[%s3420 + $0x8] sm:$0xfc] %v3411
    %3423 = vst [vmem:[%s3420 + $0x10] sm:$0xff] %v3413
    %3424 = vst [vmem:[%s3420 + $0x18] sm:$0xff] %v3415
    %v3425 = vld [vmem:[#allocation4] sm:$0xff]
    %v3426 = vld [vmem:[#allocation4 + $0x8] sm:$0xff]
    %v3427 = vld [vmem:[#allocation4 + $0x10] sm:$0x3f]
    %v3428 = vld [vmem:[#allocation4 + $0x18] sm:$0x3f]
    %v3429 = vpack.c.bf16 %v3427, %v3425
    %v3430 = vpack.c.bf16 %v3428, %v3426
    %v3433 = vunpack.c.l.b16 %v3429
    %v3434 = vunpack.c.l.b16 %v3430
    %v3435 = vunpack.c.h.b16 %v3429
    %v3436 = vunpack.c.h.b16 %v3430
    %v3437 = vpack.c.b16 %v3434, %v3433
    %v3438 = vpack.c.b16 %v3436, %v3435
    %3441 = vst [vmem:[#allocation5] sm:$0xff] %v3437
    %3442 = vst [vmem:[#allocation5 + $0x28] sm:$0x77] %v3438
    %v3443 = vld [vmem:[#allocation4] sm:$0xfe]
    %v3444 = vld [vmem:[#allocation4 + $0x8] sm:$0xfe]
    %v3445 = vld [vmem:[#allocation4 + $0x10] sm:$0x7f]
    %v3446 = vld [vmem:[#allocation4 + $0x18] sm:$0x7f]
    %v3447 = vpack.c.bf16 %v3445, %v3443
    %v3448 = vpack.c.bf16 %v3446, %v3444
    %v3451 = vunpack.c.l.b16 %v3447
    %v3452 = vunpack.c.l.b16 %v3448
    %v3453 = vunpack.c.h.b16 %v3447
    %v3454 = vunpack.c.h.b16 %v3448
    %v3455 = vpack.c.b16 %v3452, %v3451
    %v3456 = vpack.c.b16 %v3454, %v3453
    %vm3457 = vsmask.f32 3328
    %vm3458 = vsmask.f32 7440
    %vm3459 = vmor %vm3457, %vm3458
    %v3461 = vshrl.u32 %v3455, 16
    %v3463 = vrot.slane %v3461, 4
    %v3464 = vshll.u32 %v3455, 16
    %v3466 = vrot.slane %v3464, 5
    %v3467 = vor.u32 %v3463, %v3466
    %v3468 = vrot.slane %v3467, 4
    %v3470 = vshll.u32 %v3456, 16
    %v3472 = vrot.slane %v3470, 5
    %v3473 = vsel %vm3459, %v3468, %v3472
    %v3474 = vshrl.u32 %v3456, 16
    %v3476 = vrot.slane %v3474, 4
    %v3477 = vor.u32 %v3476, %v3472
    %v3478 = vrot.slane %v3477, 4
    %3481 = vst [vmem:[#allocation5 + $0x8] sm:$0xff] %v3473
    %3482 = vst [vmem:[#allocation5 + $0x30] sm:$0x77] %v3478
    %v3483 = vld [vmem:[#allocation4] sm:$0xfc]
    %v3484 = vld [vmem:[#allocation4 + $0x8] sm:$0xfc]
    %v3485 = vld [vmem:[#allocation4 + $0x10] sm:$0xff]
    %v3486 = vld [vmem:[#allocation4 + $0x18] sm:$0xff]
    %v3487 = vpack.c.bf16 %v3485, %v3483
    %v3488 = vpack.c.bf16 %v3486, %v3484
    %v3491 = vunpack.c.l.b16 %v3487
    %v3492 = vunpack.c.l.b16 %v3488
    %v3493 = vunpack.c.h.b16 %v3487
    %v3494 = vunpack.c.h.b16 %v3488
    %v3495 = vpack.c.b16 %v3492, %v3491
    %v3496 = vpack.c.b16 %v3494, %v3493
    %vm3497 = vcmask 1042432
    %vm3498 = vcmask 1046532
    %vm3499 = vmor %vm3497, %vm3498
    %v3500 = vrot.slane %v3495, 5
    %v3501 = vrot.slane %v3500, 4
    %v3502 = vrot.slane %v3496, 5
    %v3503 = vsel %vm3499, %v3501, %v3502
    %v3504 = vrot.slane %v3502, 4
    %3507 = vst [vmem:[#allocation5 + $0x10] sm:$0xff] %v3503
    %3508 = vst [vmem:[#allocation5 + $0x38] sm:$0x77] %v3504
    %v3509 = vld [vmem:[#allocation4] sm:$0xf8]
    %v3510 = vld [vmem:[#allocation4 + $0x8] sm:$0xf8]
    %v3511 = vld [vmem:[#allocation4 + $0x10] sm:$0xff]
    %v3512 = vld [vmem:[#allocation4 + $0x18] sm:$0xff]
    %v3513 = vld [vmem:[#allocation4 + $0x20] sm:$0x1]
    %v3514 = vld [vmem:[#allocation4 + $0x28] sm:$0x1]
    %v3515 = vpack.c.bf16 %v3511, %v3509
    %v3516 = vpack.c.bf16 %v3512, %v3510
    %v3517 = vpack.c.bf16 %v3513, %v3513
    %v3518 = vpack.c.bf16 %v3514, %v3514
    %v3523 = vunpack.c.l.b16 %v3515
    %v3524 = vunpack.c.l.b16 %v3516
    %v3525 = vunpack.c.h.b16 %v3515
    %v3526 = vunpack.c.h.b16 %v3516
    %v3527 = vunpack.c.l.b16 %v3517
    %v3528 = vunpack.c.l.b16 %v3518
    %v3529 = vpack.c.b16 %v3524, %v3523
    %v3530 = vpack.c.b16 %v3526, %v3525
    %v3531 = vpack.c.b16 %v3528, %v3527
    %vm3532 = vsmask.f32 2304
    %vm3533 = vsmask.f32 6416
    %vm3534 = vmor %vm3532, %vm3533
    %v3536 = vshrl.u32 %v3529, 16
    %v3538 = vrot.slane %v3536, 5
    %v3539 = vshll.u32 %v3529, 16
    %v3541 = vrot.slane %v3539, 6
    %v3542 = vor.u32 %v3538, %v3541
    %v3543 = vrot.slane %v3542, 4
    %v3545 = vshrl.u32 %v3530, 16
    %v3547 = vrot.slane %v3545, 5
    %v3548 = vshll.u32 %v3530, 16
    %v3550 = vrot.slane %v3548, 6
    %v3551 = vor.u32 %v3547, %v3550
    %v3552 = vsel %vm3534, %v3543, %v3551
    %v3553 = vrot.slane %v3551, 4
    %v3555 = vshll.u32 %v3531, 16
    %v3557 = vrot.slane %v3555, 6
    %v3558 = vsel %vm3534, %v3553, %v3557
    %3561 = vst [vmem:[#allocation5 + $0x18] sm:$0xff] %v3552
    %3562 = vst [vmem:[#allocation5 + $0x40] sm:$0x77] %v3558
    %v3563 = vld [vmem:[#allocation4] sm:$0xf0]
    %v3564 = vld [vmem:[#allocation4 + $0x8] sm:$0xf0]
    %v3565 = vld [vmem:[#allocation4 + $0x10] sm:$0xff]
    %v3566 = vld [vmem:[#allocation4 + $0x18] sm:$0xff]
    %v3567 = vld [vmem:[#allocation4 + $0x20] sm:$0x3]
    %v3568 = vld [vmem:[#allocation4 + $0x28] sm:$0x3]
    %v3569 = vpack.c.bf16 %v3565, %v3563
    %v3570 = vpack.c.bf16 %v3566, %v3564
    %v3571 = vpack.c.bf16 %v3567, %v3567
    %v3572 = vpack.c.bf16 %v3568, %v3568
    %v3577 = vunpack.c.l.b16 %v3569
    %v3578 = vunpack.c.l.b16 %v3570
    %v3579 = vunpack.c.h.b16 %v3569
    %v3580 = vunpack.c.h.b16 %v3570
    %v3581 = vunpack.c.l.b16 %v3571
    %v3582 = vunpack.c.l.b16 %v3572
    %v3583 = vpack.c.b16 %v3578, %v3577
    %v3584 = vpack.c.b16 %v3580, %v3579
    %v3585 = vpack.c.b16 %v3582, %v3581
    %v3586 = vrot.slane %v3583, 6
    %v3587 = vrot.slane %v3586, 4
    %v3588 = vrot.slane %v3584, 6
    %v3589 = vsel %vm369, %v3587, %v3588
    %v3590 = vrot.slane %v3588, 4
    %v3591 = vrot.slane %v3585, 6
    %v3592 = vsel %vm369, %v3590, %v3591
    %3595 = vst [vmem:[#allocation5 + $0x20] sm:$0xff] %v3589
    %3596 = vst [vmem:[#allocation5 + $0x48] sm:$0x77] %v3592
    %v3597 = vld [vmem:[%s3420] sm:$0xff]
    %v3598 = vld [vmem:[%s3420 + $0x8] sm:$0xff]
    %v3599 = vld [vmem:[%s3420 + $0x10] sm:$0x3f]
    %v3600 = vld [vmem:[%s3420 + $0x18] sm:$0x3f]
    %v3601 = vpack.c.bf16 %v3599, %v3597
    %v3602 = vpack.c.bf16 %v3600, %v3598
    %v3605 = vunpack.c.l.b16 %v3601
    %v3606 = vunpack.c.l.b16 %v3602
    %v3607 = vunpack.c.h.b16 %v3601
    %v3608 = vunpack.c.h.b16 %v3602
    %v3609 = vpack.c.b16 %v3606, %v3605
    %v3610 = vpack.c.b16 %v3608, %v3607
    %v3611 = vrot.slane %v3609, 5
    %v3612 = vrot.slane %v3611, 4
    %v3613 = vrot.slane %v3610, 5
    %v3614 = vsel %vm3499, %v3612, %v3613
    %v3615 = vrot.slane %v3613, 4
    %3619 = vst [vmem:[#allocation5 + $0x28] sm:$0x88] %v3611
    %3620 = vst [vmem:[#allocation5 + $0x50] sm:$0xff] %v3614
    %3621 = vst [vmem:[#allocation5 + $0x78] sm:$0x33] %v3615
    %v3622 = vld [vmem:[%s3420] sm:$0xfe]
    %v3623 = vld [vmem:[%s3420 + $0x8] sm:$0xfe]
    %v3624 = vld [vmem:[%s3420 + $0x10] sm:$0x7f]
    %v3625 = vld [vmem:[%s3420 + $0x18] sm:$0x7f]
    %v3626 = vpack.c.bf16 %v3624, %v3622
    %v3627 = vpack.c.bf16 %v3625, %v3623
    %v3630 = vunpack.c.l.b16 %v3626
    %v3631 = vunpack.c.l.b16 %v3627
    %v3632 = vunpack.c.h.b16 %v3626
    %v3633 = vunpack.c.h.b16 %v3627
    %v3634 = vpack.c.b16 %v3631, %v3630
    %v3635 = vpack.c.b16 %v3633, %v3632
    %v3637 = vshrl.u32 %v3634, 16
    %v3639 = vrot.slane %v3637, 5
    %v3640 = vshll.u32 %v3634, 16
    %v3642 = vrot.slane %v3640, 6
    %v3643 = vor.u32 %v3639, %v3642
    %v3644 = vrot.slane %v3643, 4
    %v3646 = vshrl.u32 %v3635, 16
    %v3648 = vrot.slane %v3646, 5
    %v3649 = vshll.u32 %v3635, 16
    %v3651 = vrot.slane %v3649, 6
    %v3652 = vor.u32 %v3648, %v3651
    %v3653 = vsel %vm3534, %v3644, %v3652
    %v3654 = vrot.slane %v3652, 4
    %3658 = vst [vmem:[#allocation5 + $0x30] sm:$0x88] %v3643
    %3659 = vst [vmem:[#allocation5 + $0x58] sm:$0xff] %v3653
    %3660 = vst [vmem:[#allocation5 + $0x80] sm:$0x33] %v3654
    %v3661 = vld [vmem:[%s3420] sm:$0xfc]
    %v3662 = vld [vmem:[%s3420 + $0x8] sm:$0xfc]
    %v3663 = vld [vmem:[%s3420 + $0x10] sm:$0xff]
    %v3664 = vld [vmem:[%s3420 + $0x18] sm:$0xff]
    %v3665 = vpack.c.bf16 %v3663, %v3661
    %v3666 = vpack.c.bf16 %v3664, %v3662
    %v3669 = vunpack.c.l.b16 %v3665
    %v3670 = vunpack.c.l.b16 %v3666
    %v3671 = vunpack.c.h.b16 %v3665
    %v3672 = vunpack.c.h.b16 %v3666
    %v3673 = vpack.c.b16 %v3670, %v3669
    %v3674 = vpack.c.b16 %v3672, %v3671
    %v3675 = vrot.slane %v3673, 6
    %v3676 = vrot.slane %v3675, 4
    %v3677 = vrot.slane %v3674, 6
    %v3678 = vsel %vm369, %v3676, %v3677
    %v3679 = vrot.slane %v3677, 4
    %3683 = vst [vmem:[#allocation5 + $0x38] sm:$0x88] %v3675
    %3684 = vst [vmem:[#allocation5 + $0x60] sm:$0xff] %v3678
    %3685 = vst [vmem:[#allocation5 + $0x88] sm:$0x33] %v3679
    %v3686 = vld [vmem:[%s3420] sm:$0xf8]
    %v3687 = vld [vmem:[%s3420 + $0x8] sm:$0xf8]
    %v3688 = vld [vmem:[%s3420 + $0x10] sm:$0xff]
    %v3689 = vld [vmem:[%s3420 + $0x18] sm:$0xff]
    %v3690 = vld [vmem:[%s3420 + $0x20] sm:$0x1]
    %v3691 = vld [vmem:[%s3420 + $0x28] sm:$0x1]
    %v3692 = vpack.c.bf16 %v3688, %v3686
    %v3693 = vpack.c.bf16 %v3689, %v3687
    %v3694 = vpack.c.bf16 %v3690, %v3690
    %v3695 = vpack.c.bf16 %v3691, %v3691
    %v3700 = vunpack.c.l.b16 %v3692
    %v3701 = vunpack.c.l.b16 %v3693
    %v3702 = vunpack.c.h.b16 %v3692
    %v3703 = vunpack.c.h.b16 %v3693
    %v3704 = vunpack.c.l.b16 %v3694
    %v3705 = vunpack.c.l.b16 %v3695
    %v3706 = vpack.c.b16 %v3701, %v3700
    %v3707 = vpack.c.b16 %v3703, %v3702
    %v3708 = vpack.c.b16 %v3705, %v3704
    %vm3709 = vsmask.f32 1280
    %vm3710 = vsmask.f32 5392
    %vm3711 = vmor %vm3709, %vm3710
    %v3713 = vshrl.u32 %v3706, 16
    %v3715 = vrot.slane %v3713, 6
    %v3716 = vshll.u32 %v3706, 16
    %v3718 = vrot.slane %v3716, 7
    %v3719 = vor.u32 %v3715, %v3718
    %v3720 = vrot.slane %v3719, 4
    %v3722 = vshrl.u32 %v3707, 16
    %v3724 = vrot.slane %v3722, 6
    %v3725 = vshll.u32 %v3707, 16
    %v3727 = vrot.slane %v3725, 7
    %v3728 = vor.u32 %v3724, %v3727
    %v3729 = vsel %vm3711, %v3720, %v3728
    %v3730 = vrot.slane %v3728, 4
    %v3732 = vshll.u32 %v3708, 16
    %v3734 = vrot.slane %v3732, 7
    %v3735 = vsel %vm3711, %v3730, %v3734
    %3739 = vst [vmem:[#allocation5 + $0x40] sm:$0x88] %v3719
    %3740 = vst [vmem:[#allocation5 + $0x68] sm:$0xff] %v3729
    %3741 = vst [vmem:[#allocation5 + $0x90] sm:$0x33] %v3735
    %v3742 = vld [vmem:[%s3420] sm:$0xf0]
    %v3743 = vld [vmem:[%s3420 + $0x8] sm:$0xf0]
    %v3744 = vld [vmem:[%s3420 + $0x10] sm:$0xff]
    %v3745 = vld [vmem:[%s3420 + $0x18] sm:$0xff]
    %v3746 = vld [vmem:[%s3420 + $0x20] sm:$0x3]
    %v3747 = vld [vmem:[%s3420 + $0x28] sm:$0x3]
    %v3748 = vpack.c.bf16 %v3744, %v3742
    %v3749 = vpack.c.bf16 %v3745, %v3743
    %v3750 = vpack.c.bf16 %v3746, %v3746
    %v3751 = vpack.c.bf16 %v3747, %v3747
    %v3756 = vunpack.c.l.b16 %v3748
    %v3757 = vunpack.c.l.b16 %v3749
    %v3758 = vunpack.c.h.b16 %v3748
    %v3759 = vunpack.c.h.b16 %v3749
    %v3760 = vunpack.c.l.b16 %v3750
    %v3761 = vunpack.c.l.b16 %v3751
    %v3762 = vpack.c.b16 %v3757, %v3756
    %v3763 = vpack.c.b16 %v3759, %v3758
    %v3764 = vpack.c.b16 %v3761, %v3760
    %vm3765 = vcmask 1040384
    %vm3766 = vcmask 1044484
    %vm3767 = vmor %vm3765, %vm3766
    %v3768 = vrot.slane %v3762, 7
    %v3769 = vrot.slane %v3768, 4
    %v3770 = vrot.slane %v3763, 7
    %v3771 = vsel %vm3767, %v3769, %v3770
    %v3772 = vrot.slane %v3770, 4
    %v3773 = vrot.slane %v3764, 7
    %v3774 = vsel %vm3767, %v3772, %v3773
    %3778 = vst [vmem:[#allocation5 + $0x48] sm:$0x88] %v3768
    %3779 = vst [vmem:[#allocation5 + $0x70] sm:$0xff] %v3771
    %3780 = vst [vmem:[#allocation5 + $0x98] sm:$0x33] %v3774
    %v3781 = vld [vmem:[#allocation5] sm:$0xff]
    %v3782 = vld [vmem:[#allocation5 + $0x8] sm:$0xff]
    %v3783 = vld [vmem:[#allocation5 + $0x10] sm:$0xff]
    %v3784 = vld [vmem:[#allocation5 + $0x18] sm:$0xff]
    %v3785 = vld [vmem:[#allocation5 + $0x20] sm:$0xff]
    %v3786 = vld [vmem:[#allocation5 + $0x28] sm:$0xff]
    %v3787 = vld [vmem:[#allocation5 + $0x30] sm:$0xff]
    %v3788 = vld [vmem:[#allocation5 + $0x38] sm:$0xff]
    %v3789 = vld [vmem:[#allocation5 + $0x40] sm:$0xff]
    %v3790 = vld [vmem:[#allocation5 + $0x48] sm:$0xff]
    %v3791 = vld [vmem:[#allocation5 + $0x50] sm:$0xff]
    %v3792 = vld [vmem:[#allocation5 + $0x58] sm:$0xff]
    %v3793 = vld [vmem:[#allocation5 + $0x60] sm:$0xff]
    %v3794 = vld [vmem:[#allocation5 + $0x68] sm:$0xff]
    %v3795 = vld [vmem:[#allocation5 + $0x70] sm:$0xff]
    %v3796 = vld [vmem:[#allocation5 + $0x78] sm:$0x33]
    %v3797 = vld [vmem:[#allocation5 + $0x80] sm:$0x33]
    %v3798 = vld [vmem:[#allocation5 + $0x88] sm:$0x33]
    %v3799 = vld [vmem:[#allocation5 + $0x90] sm:$0x33]
    %v3800 = vld [vmem:[#allocation5 + $0x98] sm:$0x33]
    %v3801 = vld [vmem:[#allocation12] sm:$0xff]
    %v3802 = vld [vmem:[#allocation12 + $0x8] sm:$0xff]
    %v3803 = vld [vmem:[#allocation12 + $0x10] sm:$0xff]
    %v3804 = vld [vmem:[#allocation12 + $0x18] sm:$0xff]
    %v3805 = vld [vmem:[#allocation12 + $0x20] sm:$0xff]
    %v3806 = vld [vmem:[#allocation12 + $0x28] sm:$0xff]
    %v3807 = vld [vmem:[#allocation12 + $0x30] sm:$0xff]
    %v3808 = vld [vmem:[#allocation12 + $0x38] sm:$0xff]
    %v3809 = vld [vmem:[#allocation12 + $0x40] sm:$0xff]
    %v3810 = vld [vmem:[#allocation12 + $0x48] sm:$0xff]
    %v3811 = vld [vmem:[#allocation12 + $0x50] sm:$0xff]
    %v3812 = vld [vmem:[#allocation12 + $0x58] sm:$0xff]
    %v3813 = vld [vmem:[#allocation12 + $0x60] sm:$0xff]
    %v3814 = vld [vmem:[#allocation12 + $0x68] sm:$0xff]
    %v3815 = vld [vmem:[#allocation12 + $0x70] sm:$0xff]
    %v3816 = vld [vmem:[#allocation12 + $0x78] sm:$0xff]
    %v3817 = vld [vmem:[#allocation12 + $0x80] sm:$0xff]
    %v3818 = vld [vmem:[#allocation12 + $0x88] sm:$0xff]
    %v3819 = vld [vmem:[#allocation12 + $0x90] sm:$0xff]
    %v3820 = vld [vmem:[#allocation12 + $0x98] sm:$0xff]
    %v3821 = vld [vmem:[#allocation12 + $0xa0] sm:$0xff]
    %v3822 = vld [vmem:[#allocation12 + $0xa8] sm:$0xff]
    %v3823 = vld [vmem:[#allocation12 + $0xb0] sm:$0xff]
    %v3824 = vld [vmem:[#allocation12 + $0xb8] sm:$0xff]
    %v3825 = vld [vmem:[#allocation12 + $0xc0] sm:$0xff]
    %v3826 = vld [vmem:[#allocation12 + $0xc8] sm:$0xff]
    %v3827 = vld [vmem:[#allocation12 + $0xd0] sm:$0xff]
    %v3828 = vld [vmem:[#allocation12 + $0xd8] sm:$0xff]
    %v3829 = vld [vmem:[#allocation12 + $0xe0] sm:$0xff]
    %v3830 = vld [vmem:[#allocation12 + $0xe8] sm:$0xff]
    %v3831 = vld [vmem:[#allocation12 + $0xf0] sm:$0xff]
    %v3832 = vld [vmem:[#allocation12 + $0xf8] sm:$0xff]
    %v3833 = vld [vmem:[#allocation12 + $0x100] sm:$0xff]
    %v3834 = vld [vmem:[#allocation12 + $0x108] sm:$0xff]
    %v3835 = vld [vmem:[#allocation12 + $0x110] sm:$0xff]
    %v3836 = vld [vmem:[#allocation12 + $0x118] sm:$0xff]
    %v3837 = vld [vmem:[#allocation12 + $0x120] sm:$0xff]
    %v3838 = vld [vmem:[#allocation12 + $0x128] sm:$0xff]
    %v3839 = vld [vmem:[#allocation12 + $0x130] sm:$0xff]
    %v3840 = vld [vmem:[#allocation12 + $0x138] sm:$0xff]
    %v3841 = vld [vmem:[#allocation12 + $0x140] sm:$0xff]
    %v3842 = vld [vmem:[#allocation12 + $0x148] sm:$0xff]
    %v3843 = vld [vmem:[#allocation12 + $0x150] sm:$0xff]
    %v3844 = vld [vmem:[#allocation12 + $0x158] sm:$0xff]
    %v3845 = vld [vmem:[#allocation12 + $0x160] sm:$0xff]
    %v3846 = vld [vmem:[#allocation12 + $0x168] sm:$0xff]
    %v3847 = vld [vmem:[#allocation12 + $0x170] sm:$0xff]
    %v3848 = vld [vmem:[#allocation12 + $0x178] sm:$0xff]
    %v3849 = vld [vmem:[#allocation12 + $0x180] sm:$0xff]
    %v3850 = vld [vmem:[#allocation12 + $0x188] sm:$0xff]
    %v3851 = vld [vmem:[#allocation12 + $0x190] sm:$0xff]
    %v3852 = vld [vmem:[#allocation12 + $0x198] sm:$0xff]
    %v3853 = vld [vmem:[#allocation12 + $0x1a0] sm:$0xff]
    %v3854 = vld [vmem:[#allocation12 + $0x1a8] sm:$0xff]
    %v3855 = vld [vmem:[#allocation12 + $0x1b0] sm:$0xff]
    %v3856 = vld [vmem:[#allocation12 + $0x1b8] sm:$0xff]
    %v3857 = vld [vmem:[#allocation12 + $0x1c0] sm:$0xff]
    %v3858 = vld [vmem:[#allocation12 + $0x1c8] sm:$0xff]
    %v3859 = vld [vmem:[#allocation12 + $0x1d0] sm:$0xff]
    %v3860 = vld [vmem:[#allocation12 + $0x1d8] sm:$0xff]
    %v3861 = vld [vmem:[#allocation12 + $0x1e0] sm:$0xff]
    %v3862 = vld [vmem:[#allocation12 + $0x1e8] sm:$0xff]
    %v3863 = vld [vmem:[#allocation12 + $0x1f0] sm:$0xff]
    %v3864 = vld [vmem:[#allocation12 + $0x1f8] sm:$0xff]
    %v3865 = vld [vmem:[#allocation12 + $0x200] sm:$0xff]
    %v3866 = vld [vmem:[#allocation12 + $0x208] sm:$0xff]
    %v3867 = vld [vmem:[#allocation12 + $0x210] sm:$0xff]
    %v3868 = vld [vmem:[#allocation12 + $0x218] sm:$0xff]
    %v3869 = vld [vmem:[#allocation12 + $0x220] sm:$0xff]
    %v3870 = vld [vmem:[#allocation12 + $0x228] sm:$0xff]
    %v3871 = vld [vmem:[#allocation12 + $0x230] sm:$0xff]
    %v3872 = vld [vmem:[#allocation12 + $0x238] sm:$0xff]
    %v3873 = vld [vmem:[#allocation12 + $0x240] sm:$0xff]
    %v3874 = vld [vmem:[#allocation12 + $0x248] sm:$0xff]
    %v3875 = vld [vmem:[#allocation12 + $0x250] sm:$0xff]
    %v3876 = vld [vmem:[#allocation12 + $0x258] sm:$0xff]
    %v3877 = vld [vmem:[#allocation12 + $0x260] sm:$0xff]
    %v3878 = vld [vmem:[#allocation12 + $0x268] sm:$0xff]
    %v3879 = vld [vmem:[#allocation12 + $0x270] sm:$0xff]
    %v3880 = vld [vmem:[#allocation12 + $0x278] sm:$0xff]
    %v3881 = vld [vmem:[#allocation12 + $0x280] sm:$0xff]
    %v3882 = vld [vmem:[#allocation12 + $0x288] sm:$0xff]
    %v3883 = vld [vmem:[#allocation12 + $0x290] sm:$0xff]
    %v3884 = vld [vmem:[#allocation12 + $0x298] sm:$0xff]
    %v3885 = vld [vmem:[#allocation12 + $0x2a0] sm:$0xff]
    %v3886 = vld [vmem:[#allocation12 + $0x2a8] sm:$0xff]
    %v3887 = vld [vmem:[#allocation12 + $0x2b0] sm:$0xff]
    %v3888 = vld [vmem:[#allocation12 + $0x2b8] sm:$0xff]
    %v3889 = vld [vmem:[#allocation12 + $0x2c0] sm:$0xff]
    %v3890 = vld [vmem:[#allocation12 + $0x2c8] sm:$0xff]
    %v3891 = vld [vmem:[#allocation12 + $0x2d0] sm:$0xff]
    %v3892 = vld [vmem:[#allocation12 + $0x2d8] sm:$0xff]
    %v3893 = vld [vmem:[#allocation12 + $0x2e0] sm:$0xff]
    %v3894 = vld [vmem:[#allocation12 + $0x2e8] sm:$0xff]
    %v3895 = vld [vmem:[#allocation12 + $0x2f0] sm:$0xff]
    %v3896 = vld [vmem:[#allocation12 + $0x2f8] sm:$0xff]
    %v3897 = vld [vmem:[#allocation12 + $0x300] sm:$0xff]
    %v3898 = vld [vmem:[#allocation12 + $0x308] sm:$0xff]
    %v3899 = vld [vmem:[#allocation12 + $0x310] sm:$0xff]
    %v3900 = vld [vmem:[#allocation12 + $0x318] sm:$0xff]
    %v3901 = vld [vmem:[#allocation12 + $0x320] sm:$0xff]
    %v3902 = vld [vmem:[#allocation12 + $0x328] sm:$0xff]
    %v3903 = vld [vmem:[#allocation12 + $0x330] sm:$0xff]
    %v3904 = vld [vmem:[#allocation12 + $0x338] sm:$0xff]
    %v3905 = vld [vmem:[#allocation12 + $0x340] sm:$0xff]
    %v3906 = vld [vmem:[#allocation12 + $0x348] sm:$0xff]
    %v3907 = vld [vmem:[#allocation12 + $0x350] sm:$0xff]
    %v3908 = vld [vmem:[#allocation12 + $0x358] sm:$0xff]
    %v3909 = vld [vmem:[#allocation12 + $0x360] sm:$0xff]
    %v3910 = vld [vmem:[#allocation12 + $0x368] sm:$0xff]
    %v3911 = vld [vmem:[#allocation12 + $0x370] sm:$0xff]
    %v3912 = vld [vmem:[#allocation12 + $0x378] sm:$0xff]
    %v3913 = vld [vmem:[#allocation12 + $0x380] sm:$0xff]
    %v3914 = vld [vmem:[#allocation12 + $0x388] sm:$0xff]
    %v3915 = vld [vmem:[#allocation12 + $0x390] sm:$0xff]
    %v3916 = vld [vmem:[#allocation12 + $0x398] sm:$0xff]
    %v3917 = vld [vmem:[#allocation12 + $0x3a0] sm:$0xff]
    %v3918 = vld [vmem:[#allocation12 + $0x3a8] sm:$0xff]
    %v3919 = vld [vmem:[#allocation12 + $0x3b0] sm:$0xff]
    %v3920 = vld [vmem:[#allocation12 + $0x3b8] sm:$0xff]
    %v3921 = vld [vmem:[#allocation12 + $0x3c0] sm:$0xff]
    %v3922 = vld [vmem:[#allocation12 + $0x3c8] sm:$0xff]
    %v3923 = vld [vmem:[#allocation12 + $0x3d0] sm:$0xff]
    %v3924 = vld [vmem:[#allocation12 + $0x3d8] sm:$0xff]
    %v3925 = vld [vmem:[#allocation12 + $0x3e0] sm:$0xff]
    %v3926 = vld [vmem:[#allocation12 + $0x3e8] sm:$0xff]
    %v3927 = vld [vmem:[#allocation12 + $0x3f0] sm:$0xff]
    %v3928 = vld [vmem:[#allocation12 + $0x3f8] sm:$0xff]
    %v3929 = vld [vmem:[#allocation12 + $0x400] sm:$0xff]
    %v3930 = vld [vmem:[#allocation12 + $0x408] sm:$0xff]
    %v3931 = vld [vmem:[#allocation12 + $0x410] sm:$0xff]
    %v3932 = vld [vmem:[#allocation12 + $0x418] sm:$0xff]
    %v3933 = vld [vmem:[#allocation12 + $0x420] sm:$0xff]
    %v3934 = vld [vmem:[#allocation12 + $0x428] sm:$0xff]
    %v3935 = vld [vmem:[#allocation12 + $0x430] sm:$0xff]
    %v3936 = vld [vmem:[#allocation12 + $0x438] sm:$0xff]
    %v3937 = vld [vmem:[#allocation12 + $0x440] sm:$0xff]
    %v3938 = vld [vmem:[#allocation12 + $0x448] sm:$0xff]
    %v3939 = vld [vmem:[#allocation12 + $0x450] sm:$0xff]
    %v3940 = vld [vmem:[#allocation12 + $0x458] sm:$0xff]
    %v3941 = vld [vmem:[#allocation12 + $0x460] sm:$0xff]
    %v3942 = vld [vmem:[#allocation12 + $0x468] sm:$0xff]
    %v3943 = vld [vmem:[#allocation12 + $0x470] sm:$0xff]
    %v3944 = vld [vmem:[#allocation12 + $0x478] sm:$0xff]
    %v3945 = vld [vmem:[#allocation12 + $0x480] sm:$0xff]
    %v3946 = vld [vmem:[#allocation12 + $0x488] sm:$0xff]
    %v3947 = vld [vmem:[#allocation12 + $0x490] sm:$0xff]
    %v3948 = vld [vmem:[#allocation12 + $0x498] sm:$0xff]
    %v3949 = vld [vmem:[#allocation12 + $0x4a0] sm:$0xff]
    %v3950 = vld [vmem:[#allocation12 + $0x4a8] sm:$0xff]
    %v3951 = vld [vmem:[#allocation12 + $0x4b0] sm:$0xff]
    %v3952 = vld [vmem:[#allocation12 + $0x4b8] sm:$0xff]
    %v3953 = vld [vmem:[#allocation12 + $0x4c0] sm:$0xff]
    %v3954 = vld [vmem:[#allocation12 + $0x4c8] sm:$0xff]
    %v3955 = vld [vmem:[#allocation12 + $0x4d0] sm:$0xff]
    %v3956 = vld [vmem:[#allocation12 + $0x4d8] sm:$0xff]
    %v3957 = vld [vmem:[#allocation12 + $0x4e0] sm:$0xff]
    %v3958 = vld [vmem:[#allocation12 + $0x4e8] sm:$0xff]
    %v3959 = vld [vmem:[#allocation12 + $0x4f0] sm:$0xff]
    %v3960 = vld [vmem:[#allocation12 + $0x4f8] sm:$0xff]
    %v3961 = vld [vmem:[#allocation12 + $0x500] sm:$0xff]
    %v3962 = vld [vmem:[#allocation12 + $0x508] sm:$0xff]
    %v3963 = vld [vmem:[#allocation12 + $0x510] sm:$0xff]
    %v3964 = vld [vmem:[#allocation12 + $0x518] sm:$0xff]
    %v3965 = vld [vmem:[#allocation12 + $0x520] sm:$0xff]
    %v3966 = vld [vmem:[#allocation12 + $0x528] sm:$0xff]
    %v3967 = vld [vmem:[#allocation12 + $0x530] sm:$0xff]
    %v3968 = vld [vmem:[#allocation12 + $0x538] sm:$0xff]
    %v3969 = vld [vmem:[#allocation12 + $0x540] sm:$0xff]
    %v3970 = vld [vmem:[#allocation12 + $0x548] sm:$0xff]
    %v3971 = vld [vmem:[#allocation12 + $0x550] sm:$0xff]
    %v3972 = vld [vmem:[#allocation12 + $0x558] sm:$0xff]
    %v3973 = vld [vmem:[#allocation12 + $0x560] sm:$0xff]
    %v3974 = vld [vmem:[#allocation12 + $0x568] sm:$0xff]
    %v3975 = vld [vmem:[#allocation12 + $0x570] sm:$0xff]
    %v3976 = vld [vmem:[#allocation12 + $0x578] sm:$0xff]
    %v3977 = vld [vmem:[#allocation12 + $0x580] sm:$0xff]
    %v3978 = vld [vmem:[#allocation12 + $0x588] sm:$0xff]
    %v3979 = vld [vmem:[#allocation12 + $0x590] sm:$0xff]
    %v3980 = vld [vmem:[#allocation12 + $0x598] sm:$0xff]
    %v3981 = vld [vmem:[#allocation12 + $0x5a0] sm:$0xff]
    %v3982 = vld [vmem:[#allocation12 + $0x5a8] sm:$0xff]
    %v3983 = vld [vmem:[#allocation12 + $0x5b0] sm:$0xff]
    %v3984 = vld [vmem:[#allocation12 + $0x5b8] sm:$0xff]
    %v3985 = vld [vmem:[#allocation12 + $0x5c0] sm:$0xff]
    %v3986 = vld [vmem:[#allocation12 + $0x5c8] sm:$0xff]
    %v3987 = vld [vmem:[#allocation12 + $0x5d0] sm:$0xff]
    %v3988 = vld [vmem:[#allocation12 + $0x5d8] sm:$0xff]
    %v3989 = vld [vmem:[#allocation12 + $0x5e0] sm:$0xff]
    %v3990 = vld [vmem:[#allocation12 + $0x5e8] sm:$0xff]
    %v3991 = vld [vmem:[#allocation12 + $0x5f0] sm:$0xff]
    %v3992 = vld [vmem:[#allocation12 + $0x5f8] sm:$0xff]
    %v3993 = vld [vmem:[#allocation12 + $0x600] sm:$0xff]
    %v3994 = vld [vmem:[#allocation12 + $0x608] sm:$0xff]
    %v3995 = vld [vmem:[#allocation12 + $0x610] sm:$0xff]
    %v3996 = vld [vmem:[#allocation12 + $0x618] sm:$0xff]
    %v3997 = vld [vmem:[#allocation12 + $0x620] sm:$0xff]
    %v3998 = vld [vmem:[#allocation12 + $0x628] sm:$0xff]
    %v3999 = vld [vmem:[#allocation12 + $0x630] sm:$0xff]
    %v4000 = vld [vmem:[#allocation12 + $0x638] sm:$0xff]
    %v4001 = vld [vmem:[#allocation12 + $0x640] sm:$0xff]
    %v4002 = vld [vmem:[#allocation12 + $0x648] sm:$0xff]
    %v4003 = vld [vmem:[#allocation12 + $0x650] sm:$0xff]
    %v4004 = vld [vmem:[#allocation12 + $0x658] sm:$0xff]
    %v4005 = vld [vmem:[#allocation12 + $0x660] sm:$0xff]
    %v4006 = vld [vmem:[#allocation12 + $0x668] sm:$0xff]
    %v4007 = vld [vmem:[#allocation12 + $0x670] sm:$0xff]
    %v4008 = vld [vmem:[#allocation12 + $0x678] sm:$0xff]
    %v4009 = vld [vmem:[#allocation12 + $0x680] sm:$0xff]
    %v4010 = vld [vmem:[#allocation12 + $0x688] sm:$0xff]
    %v4011 = vld [vmem:[#allocation12 + $0x690] sm:$0xff]
    %v4012 = vld [vmem:[#allocation12 + $0x698] sm:$0xff]
    %v4013 = vld [vmem:[#allocation12 + $0x6a0] sm:$0xff]
    %v4014 = vld [vmem:[#allocation12 + $0x6a8] sm:$0xff]
    %v4015 = vld [vmem:[#allocation12 + $0x6b0] sm:$0xff]
    %v4016 = vld [vmem:[#allocation12 + $0x6b8] sm:$0xff]
    %v4017 = vld [vmem:[#allocation12 + $0x6c0] sm:$0xff]
    %v4018 = vld [vmem:[#allocation12 + $0x6c8] sm:$0xff]
    %v4019 = vld [vmem:[#allocation12 + $0x6d0] sm:$0xff]
    %v4020 = vld [vmem:[#allocation12 + $0x6d8] sm:$0xff]
    %v4021 = vld [vmem:[#allocation12 + $0x6e0] sm:$0xff]
    %v4022 = vld [vmem:[#allocation12 + $0x6e8] sm:$0xff]
    %v4023 = vld [vmem:[#allocation12 + $0x6f0] sm:$0xff]
    %v4024 = vld [vmem:[#allocation12 + $0x6f8] sm:$0xff]
    %v4025 = vld [vmem:[#allocation12 + $0x700] sm:$0xff]
    %v4026 = vld [vmem:[#allocation12 + $0x708] sm:$0xff]
    %v4027 = vld [vmem:[#allocation12 + $0x710] sm:$0xff]
    %v4028 = vld [vmem:[#allocation12 + $0x718] sm:$0xff]
    %v4029 = vld [vmem:[#allocation12 + $0x720] sm:$0xff]
    %v4030 = vld [vmem:[#allocation12 + $0x728] sm:$0xff]
    %v4031 = vld [vmem:[#allocation12 + $0x730] sm:$0xff]
    %v4032 = vld [vmem:[#allocation12 + $0x738] sm:$0xff]
    %v4033 = vld [vmem:[#allocation12 + $0x740] sm:$0xff]
    %v4034 = vld [vmem:[#allocation12 + $0x748] sm:$0xff]
    %v4035 = vld [vmem:[#allocation12 + $0x750] sm:$0xff]
    %v4036 = vld [vmem:[#allocation12 + $0x758] sm:$0xff]
    %v4037 = vld [vmem:[#allocation12 + $0x760] sm:$0xff]
    %v4038 = vld [vmem:[#allocation12 + $0x768] sm:$0xff]
    %v4039 = vld [vmem:[#allocation12 + $0x770] sm:$0xff]
    %v4040 = vld [vmem:[#allocation12 + $0x778] sm:$0xff]
    %v4041 = vld [vmem:[#allocation12 + $0x780] sm:$0xff]
    %v4042 = vld [vmem:[#allocation12 + $0x788] sm:$0xff]
    %v4043 = vld [vmem:[#allocation12 + $0x790] sm:$0xff]
    %v4044 = vld [vmem:[#allocation12 + $0x798] sm:$0xff]
    %v4045 = vld [vmem:[#allocation12 + $0x7a0] sm:$0xff]
    %v4046 = vld [vmem:[#allocation12 + $0x7a8] sm:$0xff]
    %v4047 = vld [vmem:[#allocation12 + $0x7b0] sm:$0xff]
    %v4048 = vld [vmem:[#allocation12 + $0x7b8] sm:$0xff]
    %v4049 = vld [vmem:[#allocation12 + $0x7c0] sm:$0xff]
    %v4050 = vld [vmem:[#allocation12 + $0x7c8] sm:$0xff]
    %v4051 = vld [vmem:[#allocation12 + $0x7d0] sm:$0xff]
    %v4052 = vld [vmem:[#allocation12 + $0x7d8] sm:$0xff]
    %v4053 = vld [vmem:[#allocation12 + $0x7e0] sm:$0xff]
    %v4054 = vld [vmem:[#allocation12 + $0x7e8] sm:$0xff]
    %v4055 = vld [vmem:[#allocation12 + $0x7f0] sm:$0xff]
    %v4056 = vld [vmem:[#allocation12 + $0x7f8] sm:$0xff]
    %v4057 = vld [vmem:[#allocation12 + $0x800] sm:$0xff]
    %v4058 = vld [vmem:[#allocation12 + $0x808] sm:$0xff]
    %v4059 = vld [vmem:[#allocation12 + $0x810] sm:$0xff]
    %v4060 = vld [vmem:[#allocation12 + $0x818] sm:$0xff]
    %v4061 = vld [vmem:[#allocation12 + $0x820] sm:$0xff]
    %v4062 = vld [vmem:[#allocation12 + $0x828] sm:$0xff]
    %v4063 = vld [vmem:[#allocation12 + $0x830] sm:$0xff]
    %v4064 = vld [vmem:[#allocation12 + $0x838] sm:$0xff]
    %v4065 = vld [vmem:[#allocation12 + $0x840] sm:$0xff]
    %v4066 = vld [vmem:[#allocation12 + $0x848] sm:$0xff]
    %v4067 = vld [vmem:[#allocation12 + $0x850] sm:$0xff]
    %v4068 = vld [vmem:[#allocation12 + $0x858] sm:$0xff]
    %v4069 = vld [vmem:[#allocation12 + $0x860] sm:$0xff]
    %v4070 = vld [vmem:[#allocation12 + $0x868] sm:$0xff]
    %v4071 = vld [vmem:[#allocation12 + $0x870] sm:$0xff]
    %v4072 = vld [vmem:[#allocation12 + $0x878] sm:$0xff]
    %v4073 = vld [vmem:[#allocation12 + $0x880] sm:$0xff]
    %v4074 = vld [vmem:[#allocation12 + $0x888] sm:$0xff]
    %v4075 = vld [vmem:[#allocation12 + $0x890] sm:$0xff]
    %v4076 = vld [vmem:[#allocation12 + $0x898] sm:$0xff]
    %v4077 = vld [vmem:[#allocation12 + $0x8a0] sm:$0xff]
    %v4078 = vld [vmem:[#allocation12 + $0x8a8] sm:$0xff]
    %v4079 = vld [vmem:[#allocation12 + $0x8b0] sm:$0xff]
    %v4080 = vld [vmem:[#allocation12 + $0x8b8] sm:$0xff]
    %v4081 = vld [vmem:[#allocation12 + $0x8c0] sm:$0xff]
    %v4082 = vld [vmem:[#allocation12 + $0x8c8] sm:$0xff]
    %v4083 = vld [vmem:[#allocation12 + $0x8d0] sm:$0xff]
    %v4084 = vld [vmem:[#allocation12 + $0x8d8] sm:$0xff]
    %v4085 = vld [vmem:[#allocation12 + $0x8e0] sm:$0xff]
    %v4086 = vld [vmem:[#allocation12 + $0x8e8] sm:$0xff]
    %v4087 = vld [vmem:[#allocation12 + $0x8f0] sm:$0xff]
    %v4088 = vld [vmem:[#allocation12 + $0x8f8] sm:$0xff]
    %v4089 = vld [vmem:[#allocation12 + $0x900] sm:$0xff]
    %v4090 = vld [vmem:[#allocation12 + $0x908] sm:$0xff]
    %v4091 = vld [vmem:[#allocation12 + $0x910] sm:$0xff]
    %v4092 = vld [vmem:[#allocation12 + $0x918] sm:$0xff]
    %v4093 = vld [vmem:[#allocation12 + $0x920] sm:$0xff]
    %v4094 = vld [vmem:[#allocation12 + $0x928] sm:$0xff]
    %v4095 = vld [vmem:[#allocation12 + $0x930] sm:$0xff]
    %v4096 = vld [vmem:[#allocation12 + $0x938] sm:$0xff]
    %v4097 = vld [vmem:[#allocation12 + $0x940] sm:$0xff]
    %v4098 = vld [vmem:[#allocation12 + $0x948] sm:$0xff]
    %v4099 = vld [vmem:[#allocation12 + $0x950] sm:$0xff]
    %v4100 = vld [vmem:[#allocation12 + $0x958] sm:$0xff]
    %v4101 = vld [vmem:[#allocation12 + $0x960] sm:$0xff]
    %v4102 = vld [vmem:[#allocation12 + $0x968] sm:$0xff]
    %v4103 = vld [vmem:[#allocation12 + $0x970] sm:$0xff]
    %v4104 = vld [vmem:[#allocation12 + $0x978] sm:$0xff]
    %v4105 = vld [vmem:[#allocation12 + $0x980] sm:$0xff]
    %v4106 = vld [vmem:[#allocation12 + $0x988] sm:$0xff]
    %v4107 = vld [vmem:[#allocation12 + $0x990] sm:$0xff]
    %v4108 = vld [vmem:[#allocation12 + $0x998] sm:$0xff]
    %v4109 = vld [vmem:[#allocation12 + $0x9a0] sm:$0xff]
    %v4110 = vld [vmem:[#allocation12 + $0x9a8] sm:$0xff]
    %v4111 = vld [vmem:[#allocation12 + $0x9b0] sm:$0xff]
    %v4112 = vld [vmem:[#allocation12 + $0x9b8] sm:$0xff]
    %v4113 = vld [vmem:[#allocation12 + $0x9c0] sm:$0xff]
    %v4114 = vld [vmem:[#allocation12 + $0x9c8] sm:$0xff]
    %v4115 = vld [vmem:[#allocation12 + $0x9d0] sm:$0xff]
    %v4116 = vld [vmem:[#allocation12 + $0x9d8] sm:$0xff]
    %v4117 = vld [vmem:[#allocation12 + $0x9e0] sm:$0xff]
    %v4118 = vld [vmem:[#allocation12 + $0x9e8] sm:$0xff]
    %v4119 = vld [vmem:[#allocation12 + $0x9f0] sm:$0xff]
    %v4120 = vld [vmem:[#allocation12 + $0x9f8] sm:$0xff]
    %v4121 = vld [vmem:[#allocation13] sm:$0xf]
    %v4123 = vlaneseq
    %v4124 = vshrl.u32 %v4123, 7
    %v4125 = vsub.s32 0, %v4124
    %v4126 = vrot.slane %v4121, %v4125
    %v4127 = vlaneseq
    %v4128 = vshrl.u32 %v4127, 7
    %v4129 = vsub.s32 1, %v4128
    %v4130 = vrot.slane %v4121, %v4129
    %v4131 = vlaneseq
    %v4132 = vshrl.u32 %v4131, 7
    %v4133 = vsub.s32 2, %v4132
    %v4134 = vrot.slane %v4121, %v4133
    %v4135 = vlaneseq
    %v4136 = vshrl.u32 %v4135, 7
    %v4137 = vsub.s32 3, %v4136
    %v4138 = vrot.slane %v4121, %v4137
    %v4163 = vunpack.c.l.b16 %v3781
    %v4164 = vunpack.c.h.b16 %v3781
    %v4165 = vunpack.c.l.b16 %v3782
    %v4166 = vunpack.c.h.b16 %v3782
    %v4167 = vunpack.c.l.b16 %v3783
    %v4168 = vunpack.c.h.b16 %v3783
    %v4169 = vunpack.c.l.b16 %v3784
    %v4170 = vunpack.c.h.b16 %v3784
    %v4171 = vunpack.c.l.b16 %v3785
    %v4172 = vunpack.c.h.b16 %v3785
    %v4173 = vunpack.c.l.b16 %v3786
    %v4174 = vunpack.c.h.b16 %v3786
    %v4175 = vunpack.c.l.b16 %v3787
    %v4176 = vunpack.c.h.b16 %v3787
    %v4177 = vunpack.c.l.b16 %v3788
    %v4178 = vunpack.c.h.b16 %v3788
    %v4179 = vunpack.c.l.b16 %v3789
    %v4180 = vunpack.c.h.b16 %v3789
    %v4181 = vunpack.c.l.b16 %v3790
    %v4182 = vunpack.c.h.b16 %v3790
    %v4183 = vunpack.c.l.b16 %v3791
    %v4184 = vunpack.c.h.b16 %v3791
    %v4185 = vunpack.c.l.b16 %v3792
    %v4186 = vunpack.c.h.b16 %v3792
    %v4187 = vunpack.c.l.b16 %v3793
    %v4188 = vunpack.c.h.b16 %v3793
    %v4189 = vunpack.c.l.b16 %v3794
    %v4190 = vunpack.c.h.b16 %v3794
    %v4191 = vunpack.c.l.b16 %v3795
    %v4192 = vunpack.c.h.b16 %v3795
    %v4193 = vunpack.c.l.b16 %v3796
    %v4194 = vunpack.c.h.b16 %v3796
    %v4195 = vunpack.c.l.b16 %v3797
    %v4196 = vunpack.c.h.b16 %v3797
    %v4197 = vunpack.c.l.b16 %v3798
    %v4198 = vunpack.c.h.b16 %v3798
    %v4199 = vunpack.c.l.b16 %v3799
    %v4200 = vunpack.c.h.b16 %v3799
    %v4201 = vunpack.c.l.b16 %v3800
    %v4202 = vunpack.c.h.b16 %v3800
    %v4203 = vpack.c.b16 %v4173, %v4163
    %v4204 = vpack.c.b16 %v4174, %v4164
    %v4205 = vpack.c.b16 %v4175, %v4165
    %v4206 = vpack.c.b16 %v4176, %v4166
    %v4207 = vpack.c.b16 %v4177, %v4167
    %v4208 = vpack.c.b16 %v4178, %v4168
    %v4209 = vpack.c.b16 %v4179, %v4169
    %v4210 = vpack.c.b16 %v4180, %v4170
    %v4211 = vpack.c.b16 %v4181, %v4171
    %v4212 = vpack.c.b16 %v4182, %v4172
    %v4213 = vpack.c.b16 %v4193, %v4183
    %v4214 = vpack.c.b16 %v4194, %v4184
    %v4215 = vpack.c.b16 %v4195, %v4185
    %v4216 = vpack.c.b16 %v4196, %v4186
    %v4217 = vpack.c.b16 %v4197, %v4187
    %v4218 = vpack.c.b16 %v4198, %v4188
    %v4219 = vpack.c.b16 %v4199, %v4189
    %v4220 = vpack.c.b16 %v4200, %v4190
    %v4221 = vpack.c.b16 %v4201, %v4191
    %v4222 = vpack.c.b16 %v4202, %v4192
    %v4563 = vunpack.c.l.b16 %v3801
    %v4564 = vunpack.c.h.b16 %v3801
    %v4565 = vunpack.c.l.b16 %v3802
    %v4566 = vunpack.c.h.b16 %v3802
    %v4567 = vunpack.c.l.b16 %v3803
    %v4568 = vunpack.c.h.b16 %v3803
    %v4569 = vunpack.c.l.b16 %v3804
    %v4570 = vunpack.c.h.b16 %v3804
    %v4571 = vunpack.c.l.b16 %v3805
    %v4572 = vunpack.c.h.b16 %v3805
    %v4573 = vunpack.c.l.b16 %v3806
    %v4574 = vunpack.c.h.b16 %v3806
    %v4575 = vunpack.c.l.b16 %v3807
    %v4576 = vunpack.c.h.b16 %v3807
    %v4577 = vunpack.c.l.b16 %v3808
    %v4578 = vunpack.c.h.b16 %v3808
    %v4579 = vunpack.c.l.b16 %v3809
    %v4580 = vunpack.c.h.b16 %v3809
    %v4581 = vunpack.c.l.b16 %v3810
    %v4582 = vunpack.c.h.b16 %v3810
    %v4583 = vunpack.c.l.b16 %v3811
    %v4584 = vunpack.c.h.b16 %v3811
    %v4585 = vunpack.c.l.b16 %v3812
    %v4586 = vunpack.c.h.b16 %v3812
    %v4587 = vunpack.c.l.b16 %v3813
    %v4588 = vunpack.c.h.b16 %v3813
    %v4589 = vunpack.c.l.b16 %v3814
    %v4590 = vunpack.c.h.b16 %v3814
    %v4591 = vunpack.c.l.b16 %v3815
    %v4592 = vunpack.c.h.b16 %v3815
    %v4593 = vunpack.c.l.b16 %v3816
    %v4594 = vunpack.c.h.b16 %v3816
    %v4595 = vunpack.c.l.b16 %v3817
    %v4596 = vunpack.c.h.b16 %v3817
    %v4597 = vunpack.c.l.b16 %v3818
    %v4598 = vunpack.c.h.b16 %v3818
    %v4599 = vunpack.c.l.b16 %v3819
    %v4600 = vunpack.c.h.b16 %v3819
    %v4601 = vunpack.c.l.b16 %v3820
    %v4602 = vunpack.c.h.b16 %v3820
    %v4603 = vunpack.c.l.b16 %v3821
    %v4604 = vunpack.c.h.b16 %v3821
    %v4605 = vunpack.c.l.b16 %v3822
    %v4606 = vunpack.c.h.b16 %v3822
    %v4607 = vunpack.c.l.b16 %v3823
    %v4608 = vunpack.c.h.b16 %v3823
    %v4609 = vunpack.c.l.b16 %v3824
    %v4610 = vunpack.c.h.b16 %v3824
    %v4611 = vunpack.c.l.b16 %v3825
    %v4612 = vunpack.c.h.b16 %v3825
    %v4613 = vunpack.c.l.b16 %v3826
    %v4614 = vunpack.c.h.b16 %v3826
    %v4615 = vunpack.c.l.b16 %v3827
    %v4616 = vunpack.c.h.b16 %v3827
    %v4617 = vunpack.c.l.b16 %v3828
    %v4618 = vunpack.c.h.b16 %v3828
    %v4619 = vunpack.c.l.b16 %v3829
    %v4620 = vunpack.c.h.b16 %v3829
    %v4621 = vunpack.c.l.b16 %v3830
    %v4622 = vunpack.c.h.b16 %v3830
    %v4623 = vunpack.c.l.b16 %v3831
    %v4624 = vunpack.c.h.b16 %v3831
    %v4625 = vunpack.c.l.b16 %v3832
    %v4626 = vunpack.c.h.b16 %v3832
    %v4627 = vunpack.c.l.b16 %v3833
    %v4628 = vunpack.c.h.b16 %v3833
    %v4629 = vunpack.c.l.b16 %v3834
    %v4630 = vunpack.c.h.b16 %v3834
    %v4631 = vunpack.c.l.b16 %v3835
    %v4632 = vunpack.c.h.b16 %v3835
    %v4633 = vunpack.c.l.b16 %v3836
    %v4634 = vunpack.c.h.b16 %v3836
    %v4635 = vunpack.c.l.b16 %v3837
    %v4636 = vunpack.c.h.b16 %v3837
    %v4637 = vunpack.c.l.b16 %v3838
    %v4638 = vunpack.c.h.b16 %v3838
    %v4639 = vunpack.c.l.b16 %v3839
    %v4640 = vunpack.c.h.b16 %v3839
    %v4641 = vunpack.c.l.b16 %v3840
    %v4642 = vunpack.c.h.b16 %v3840
    %v4643 = vunpack.c.l.b16 %v3841
    %v4644 = vunpack.c.h.b16 %v3841
    %v4645 = vunpack.c.l.b16 %v3842
    %v4646 = vunpack.c.h.b16 %v3842
    %v4647 = vunpack.c.l.b16 %v3843
    %v4648 = vunpack.c.h.b16 %v3843
    %v4649 = vunpack.c.l.b16 %v3844
    %v4650 = vunpack.c.h.b16 %v3844
    %v4651 = vunpack.c.l.b16 %v3845
    %v4652 = vunpack.c.h.b16 %v3845
    %v4653 = vunpack.c.l.b16 %v3846
    %v4654 = vunpack.c.h.b16 %v3846
    %v4655 = vunpack.c.l.b16 %v3847
    %v4656 = vunpack.c.h.b16 %v3847
    %v4657 = vunpack.c.l.b16 %v3848
    %v4658 = vunpack.c.h.b16 %v3848
    %v4659 = vunpack.c.l.b16 %v3849
    %v4660 = vunpack.c.h.b16 %v3849
    %v4661 = vunpack.c.l.b16 %v3850
    %v4662 = vunpack.c.h.b16 %v3850
    %v4663 = vunpack.c.l.b16 %v3851
    %v4664 = vunpack.c.h.b16 %v3851
    %v4665 = vunpack.c.l.b16 %v3852
    %v4666 = vunpack.c.h.b16 %v3852
    %v4667 = vunpack.c.l.b16 %v3853
    %v4668 = vunpack.c.h.b16 %v3853
    %v4669 = vunpack.c.l.b16 %v3854
    %v4670 = vunpack.c.h.b16 %v3854
    %v4671 = vunpack.c.l.b16 %v3855
    %v4672 = vunpack.c.h.b16 %v3855
    %v4673 = vunpack.c.l.b16 %v3856
    %v4674 = vunpack.c.h.b16 %v3856
    %v4675 = vunpack.c.l.b16 %v3857
    %v4676 = vunpack.c.h.b16 %v3857
    %v4677 = vunpack.c.l.b16 %v3858
    %v4678 = vunpack.c.h.b16 %v3858
    %v4679 = vunpack.c.l.b16 %v3859
    %v4680 = vunpack.c.h.b16 %v3859
    %v4681 = vunpack.c.l.b16 %v3860
    %v4682 = vunpack.c.h.b16 %v3860
    %v4683 = vunpack.c.l.b16 %v3861
    %v4684 = vunpack.c.h.b16 %v3861
    %v4685 = vunpack.c.l.b16 %v3862
    %v4686 = vunpack.c.h.b16 %v3862
    %v4687 = vunpack.c.l.b16 %v3863
    %v4688 = vunpack.c.h.b16 %v3863
    %v4689 = vunpack.c.l.b16 %v3864
    %v4690 = vunpack.c.h.b16 %v3864
    %v4691 = vunpack.c.l.b16 %v3865
    %v4692 = vunpack.c.h.b16 %v3865
    %v4693 = vunpack.c.l.b16 %v3866
    %v4694 = vunpack.c.h.b16 %v3866
    %v4695 = vunpack.c.l.b16 %v3867
    %v4696 = vunpack.c.h.b16 %v3867
    %v4697 = vunpack.c.l.b16 %v3868
    %v4698 = vunpack.c.h.b16 %v3868
    %v4699 = vunpack.c.l.b16 %v3869
    %v4700 = vunpack.c.h.b16 %v3869
    %v4701 = vunpack.c.l.b16 %v3870
    %v4702 = vunpack.c.h.b16 %v3870
    %v4703 = vunpack.c.l.b16 %v3871
    %v4704 = vunpack.c.h.b16 %v3871
    %v4705 = vunpack.c.l.b16 %v3872
    %v4706 = vunpack.c.h.b16 %v3872
    %v4707 = vunpack.c.l.b16 %v3873
    %v4708 = vunpack.c.h.b16 %v3873
    %v4709 = vunpack.c.l.b16 %v3874
    %v4710 = vunpack.c.h.b16 %v3874
    %v4711 = vunpack.c.l.b16 %v3875
    %v4712 = vunpack.c.h.b16 %v3875
    %v4713 = vunpack.c.l.b16 %v3876
    %v4714 = vunpack.c.h.b16 %v3876
    %v4715 = vunpack.c.l.b16 %v3877
    %v4716 = vunpack.c.h.b16 %v3877
    %v4717 = vunpack.c.l.b16 %v3878
    %v4718 = vunpack.c.h.b16 %v3878
    %v4719 = vunpack.c.l.b16 %v3879
    %v4720 = vunpack.c.h.b16 %v3879
    %v4721 = vunpack.c.l.b16 %v3880
    %v4722 = vunpack.c.h.b16 %v3880
    %v4723 = vunpack.c.l.b16 %v3881
    %v4724 = vunpack.c.h.b16 %v3881
    %v4725 = vunpack.c.l.b16 %v3882
    %v4726 = vunpack.c.h.b16 %v3882
    %v4727 = vunpack.c.l.b16 %v3883
    %v4728 = vunpack.c.h.b16 %v3883
    %v4729 = vunpack.c.l.b16 %v3884
    %v4730 = vunpack.c.h.b16 %v3884
    %v4731 = vunpack.c.l.b16 %v3885
    %v4732 = vunpack.c.h.b16 %v3885
    %v4733 = vunpack.c.l.b16 %v3886
    %v4734 = vunpack.c.h.b16 %v3886
    %v4735 = vunpack.c.l.b16 %v3887
    %v4736 = vunpack.c.h.b16 %v3887
    %v4737 = vunpack.c.l.b16 %v3888
    %v4738 = vunpack.c.h.b16 %v3888
    %v4739 = vunpack.c.l.b16 %v3889
    %v4740 = vunpack.c.h.b16 %v3889
    %v4741 = vunpack.c.l.b16 %v3890
    %v4742 = vunpack.c.h.b16 %v3890
    %v4743 = vunpack.c.l.b16 %v3891
    %v4744 = vunpack.c.h.b16 %v3891
    %v4745 = vunpack.c.l.b16 %v3892
    %v4746 = vunpack.c.h.b16 %v3892
    %v4747 = vunpack.c.l.b16 %v3893
    %v4748 = vunpack.c.h.b16 %v3893
    %v4749 = vunpack.c.l.b16 %v3894
    %v4750 = vunpack.c.h.b16 %v3894
    %v4751 = vunpack.c.l.b16 %v3895
    %v4752 = vunpack.c.h.b16 %v3895
    %v4753 = vunpack.c.l.b16 %v3896
    %v4754 = vunpack.c.h.b16 %v3896
    %v4755 = vunpack.c.l.b16 %v3897
    %v4756 = vunpack.c.h.b16 %v3897
    %v4757 = vunpack.c.l.b16 %v3898
    %v4758 = vunpack.c.h.b16 %v3898
    %v4759 = vunpack.c.l.b16 %v3899
    %v4760 = vunpack.c.h.b16 %v3899
    %v4761 = vunpack.c.l.b16 %v3900
    %v4762 = vunpack.c.h.b16 %v3900
    %v4763 = vunpack.c.l.b16 %v3901
    %v4764 = vunpack.c.h.b16 %v3901
    %v4765 = vunpack.c.l.b16 %v3902
    %v4766 = vunpack.c.h.b16 %v3902
    %v4767 = vunpack.c.l.b16 %v3903
    %v4768 = vunpack.c.h.b16 %v3903
    %v4769 = vunpack.c.l.b16 %v3904
    %v4770 = vunpack.c.h.b16 %v3904
    %v4771 = vunpack.c.l.b16 %v3905
    %v4772 = vunpack.c.h.b16 %v3905
    %v4773 = vunpack.c.l.b16 %v3906
    %v4774 = vunpack.c.h.b16 %v3906
    %v4775 = vunpack.c.l.b16 %v3907
    %v4776 = vunpack.c.h.b16 %v3907
    %v4777 = vunpack.c.l.b16 %v3908
    %v4778 = vunpack.c.h.b16 %v3908
    %v4779 = vunpack.c.l.b16 %v3909
    %v4780 = vunpack.c.h.b16 %v3909
    %v4781 = vunpack.c.l.b16 %v3910
    %v4782 = vunpack.c.h.b16 %v3910
    %v4783 = vunpack.c.l.b16 %v3911
    %v4784 = vunpack.c.h.b16 %v3911
    %v4785 = vunpack.c.l.b16 %v3912
    %v4786 = vunpack.c.h.b16 %v3912
    %v4787 = vunpack.c.l.b16 %v3913
    %v4788 = vunpack.c.h.b16 %v3913
    %v4789 = vunpack.c.l.b16 %v3914
    %v4790 = vunpack.c.h.b16 %v3914
    %v4791 = vunpack.c.l.b16 %v3915
    %v4792 = vunpack.c.h.b16 %v3915
    %v4793 = vunpack.c.l.b16 %v3916
    %v4794 = vunpack.c.h.b16 %v3916
    %v4795 = vunpack.c.l.b16 %v3917
    %v4796 = vunpack.c.h.b16 %v3917
    %v4797 = vunpack.c.l.b16 %v3918
    %v4798 = vunpack.c.h.b16 %v3918
    %v4799 = vunpack.c.l.b16 %v3919
    %v4800 = vunpack.c.h.b16 %v3919
    %v4801 = vunpack.c.l.b16 %v3920
    %v4802 = vunpack.c.h.b16 %v3920
    %v4803 = vunpack.c.l.b16 %v3921
    %v4804 = vunpack.c.h.b16 %v3921
    %v4805 = vunpack.c.l.b16 %v3922
    %v4806 = vunpack.c.h.b16 %v3922
    %v4807 = vunpack.c.l.b16 %v3923
    %v4808 = vunpack.c.h.b16 %v3923
    %v4809 = vunpack.c.l.b16 %v3924
    %v4810 = vunpack.c.h.b16 %v3924
    %v4811 = vunpack.c.l.b16 %v3925
    %v4812 = vunpack.c.h.b16 %v3925
    %v4813 = vunpack.c.l.b16 %v3926
    %v4814 = vunpack.c.h.b16 %v3926
    %v4815 = vunpack.c.l.b16 %v3927
    %v4816 = vunpack.c.h.b16 %v3927
    %v4817 = vunpack.c.l.b16 %v3928
    %v4818 = vunpack.c.h.b16 %v3928
    %v4819 = vunpack.c.l.b16 %v3929
    %v4820 = vunpack.c.h.b16 %v3929
    %v4821 = vunpack.c.l.b16 %v3930
    %v4822 = vunpack.c.h.b16 %v3930
    %v4823 = vunpack.c.l.b16 %v3931
    %v4824 = vunpack.c.h.b16 %v3931
    %v4825 = vunpack.c.l.b16 %v3932
    %v4826 = vunpack.c.h.b16 %v3932
    %v4827 = vunpack.c.l.b16 %v3933
    %v4828 = vunpack.c.h.b16 %v3933
    %v4829 = vunpack.c.l.b16 %v3934
    %v4830 = vunpack.c.h.b16 %v3934
    %v4831 = vunpack.c.l.b16 %v3935
    %v4832 = vunpack.c.h.b16 %v3935
    %v4833 = vunpack.c.l.b16 %v3936
    %v4834 = vunpack.c.h.b16 %v3936
    %v4835 = vunpack.c.l.b16 %v3937
    %v4836 = vunpack.c.h.b16 %v3937
    %v4837 = vunpack.c.l.b16 %v3938
    %v4838 = vunpack.c.h.b16 %v3938
    %v4839 = vunpack.c.l.b16 %v3939
    %v4840 = vunpack.c.h.b16 %v3939
    %v4841 = vunpack.c.l.b16 %v3940
    %v4842 = vunpack.c.h.b16 %v3940
    %v4843 = vunpack.c.l.b16 %v3941
    %v4844 = vunpack.c.h.b16 %v3941
    %v4845 = vunpack.c.l.b16 %v3942
    %v4846 = vunpack.c.h.b16 %v3942
    %v4847 = vunpack.c.l.b16 %v3943
    %v4848 = vunpack.c.h.b16 %v3943
    %v4849 = vunpack.c.l.b16 %v3944
    %v4850 = vunpack.c.h.b16 %v3944
    %v4851 = vunpack.c.l.b16 %v3945
    %v4852 = vunpack.c.h.b16 %v3945
    %v4853 = vunpack.c.l.b16 %v3946
    %v4854 = vunpack.c.h.b16 %v3946
    %v4855 = vunpack.c.l.b16 %v3947
    %v4856 = vunpack.c.h.b16 %v3947
    %v4857 = vunpack.c.l.b16 %v3948
    %v4858 = vunpack.c.h.b16 %v3948
    %v4859 = vunpack.c.l.b16 %v3949
    %v4860 = vunpack.c.h.b16 %v3949
    %v4861 = vunpack.c.l.b16 %v3950
    %v4862 = vunpack.c.h.b16 %v3950
    %v4863 = vunpack.c.l.b16 %v3951
    %v4864 = vunpack.c.h.b16 %v3951
    %v4865 = vunpack.c.l.b16 %v3952
    %v4866 = vunpack.c.h.b16 %v3952
    %v4867 = vunpack.c.l.b16 %v3953
    %v4868 = vunpack.c.h.b16 %v3953
    %v4869 = vunpack.c.l.b16 %v3954
    %v4870 = vunpack.c.h.b16 %v3954
    %v4871 = vunpack.c.l.b16 %v3955
    %v4872 = vunpack.c.h.b16 %v3955
    %v4873 = vunpack.c.l.b16 %v3956
    %v4874 = vunpack.c.h.b16 %v3956
    %v4875 = vunpack.c.l.b16 %v3957
    %v4876 = vunpack.c.h.b16 %v3957
    %v4877 = vunpack.c.l.b16 %v3958
    %v4878 = vunpack.c.h.b16 %v3958
    %v4879 = vunpack.c.l.b16 %v3959
    %v4880 = vunpack.c.h.b16 %v3959
    %v4881 = vunpack.c.l.b16 %v3960
    %v4882 = vunpack.c.h.b16 %v3960
    %v4883 = vunpack.c.l.b16 %v3961
    %v4884 = vunpack.c.h.b16 %v3961
    %v4885 = vunpack.c.l.b16 %v3962
    %v4886 = vunpack.c.h.b16 %v3962
    %v4887 = vunpack.c.l.b16 %v3963
    %v4888 = vunpack.c.h.b16 %v3963
    %v4889 = vunpack.c.l.b16 %v3964
    %v4890 = vunpack.c.h.b16 %v3964
    %v4891 = vunpack.c.l.b16 %v3965
    %v4892 = vunpack.c.h.b16 %v3965
    %v4893 = vunpack.c.l.b16 %v3966
    %v4894 = vunpack.c.h.b16 %v3966
    %v4895 = vunpack.c.l.b16 %v3967
    %v4896 = vunpack.c.h.b16 %v3967
    %v4897 = vunpack.c.l.b16 %v3968
    %v4898 = vunpack.c.h.b16 %v3968
    %v4899 = vunpack.c.l.b16 %v3969
    %v4900 = vunpack.c.h.b16 %v3969
    %v4901 = vunpack.c.l.b16 %v3970
    %v4902 = vunpack.c.h.b16 %v3970
    %v4903 = vunpack.c.l.b16 %v3971
    %v4904 = vunpack.c.h.b16 %v3971
    %v4905 = vunpack.c.l.b16 %v3972
    %v4906 = vunpack.c.h.b16 %v3972
    %v4907 = vunpack.c.l.b16 %v3973
    %v4908 = vunpack.c.h.b16 %v3973
    %v4909 = vunpack.c.l.b16 %v3974
    %v4910 = vunpack.c.h.b16 %v3974
    %v4911 = vunpack.c.l.b16 %v3975
    %v4912 = vunpack.c.h.b16 %v3975
    %v4913 = vunpack.c.l.b16 %v3976
    %v4914 = vunpack.c.h.b16 %v3976
    %v4915 = vunpack.c.l.b16 %v3977
    %v4916 = vunpack.c.h.b16 %v3977
    %v4917 = vunpack.c.l.b16 %v3978
    %v4918 = vunpack.c.h.b16 %v3978
    %v4919 = vunpack.c.l.b16 %v3979
    %v4920 = vunpack.c.h.b16 %v3979
    %v4921 = vunpack.c.l.b16 %v3980
    %v4922 = vunpack.c.h.b16 %v3980
    %v4923 = vunpack.c.l.b16 %v3981
    %v4924 = vunpack.c.h.b16 %v3981
    %v4925 = vunpack.c.l.b16 %v3982
    %v4926 = vunpack.c.h.b16 %v3982
    %v4927 = vunpack.c.l.b16 %v3983
    %v4928 = vunpack.c.h.b16 %v3983
    %v4929 = vunpack.c.l.b16 %v3984
    %v4930 = vunpack.c.h.b16 %v3984
    %v4931 = vunpack.c.l.b16 %v3985
    %v4932 = vunpack.c.h.b16 %v3985
    %v4933 = vunpack.c.l.b16 %v3986
    %v4934 = vunpack.c.h.b16 %v3986
    %v4935 = vunpack.c.l.b16 %v3987
    %v4936 = vunpack.c.h.b16 %v3987
    %v4937 = vunpack.c.l.b16 %v3988
    %v4938 = vunpack.c.h.b16 %v3988
    %v4939 = vunpack.c.l.b16 %v3989
    %v4940 = vunpack.c.h.b16 %v3989
    %v4941 = vunpack.c.l.b16 %v3990
    %v4942 = vunpack.c.h.b16 %v3990
    %v4943 = vunpack.c.l.b16 %v3991
    %v4944 = vunpack.c.h.b16 %v3991
    %v4945 = vunpack.c.l.b16 %v3992
    %v4946 = vunpack.c.h.b16 %v3992
    %v4947 = vunpack.c.l.b16 %v3993
    %v4948 = vunpack.c.h.b16 %v3993
    %v4949 = vunpack.c.l.b16 %v3994
    %v4950 = vunpack.c.h.b16 %v3994
    %v4951 = vunpack.c.l.b16 %v3995
    %v4952 = vunpack.c.h.b16 %v3995
    %v4953 = vunpack.c.l.b16 %v3996
    %v4954 = vunpack.c.h.b16 %v3996
    %v4955 = vunpack.c.l.b16 %v3997
    %v4956 = vunpack.c.h.b16 %v3997
    %v4957 = vunpack.c.l.b16 %v3998
    %v4958 = vunpack.c.h.b16 %v3998
    %v4959 = vunpack.c.l.b16 %v3999
    %v4960 = vunpack.c.h.b16 %v3999
    %v4961 = vunpack.c.l.b16 %v4000
    %v4962 = vunpack.c.h.b16 %v4000
    %v4963 = vunpack.c.l.b16 %v4001
    %v4964 = vunpack.c.h.b16 %v4001
    %v4965 = vunpack.c.l.b16 %v4002
    %v4966 = vunpack.c.h.b16 %v4002
    %v4967 = vunpack.c.l.b16 %v4003
    %v4968 = vunpack.c.h.b16 %v4003
    %v4969 = vunpack.c.l.b16 %v4004
    %v4970 = vunpack.c.h.b16 %v4004
    %v4971 = vunpack.c.l.b16 %v4005
    %v4972 = vunpack.c.h.b16 %v4005
    %v4973 = vunpack.c.l.b16 %v4006
    %v4974 = vunpack.c.h.b16 %v4006
    %v4975 = vunpack.c.l.b16 %v4007
    %v4976 = vunpack.c.h.b16 %v4007
    %v4977 = vunpack.c.l.b16 %v4008
    %v4978 = vunpack.c.h.b16 %v4008
    %v4979 = vunpack.c.l.b16 %v4009
    %v4980 = vunpack.c.h.b16 %v4009
    %v4981 = vunpack.c.l.b16 %v4010
    %v4982 = vunpack.c.h.b16 %v4010
    %v4983 = vunpack.c.l.b16 %v4011
    %v4984 = vunpack.c.h.b16 %v4011
    %v4985 = vunpack.c.l.b16 %v4012
    %v4986 = vunpack.c.h.b16 %v4012
    %v4987 = vunpack.c.l.b16 %v4013
    %v4988 = vunpack.c.h.b16 %v4013
    %v4989 = vunpack.c.l.b16 %v4014
    %v4990 = vunpack.c.h.b16 %v4014
    %v4991 = vunpack.c.l.b16 %v4015
    %v4992 = vunpack.c.h.b16 %v4015
    %v4993 = vunpack.c.l.b16 %v4016
    %v4994 = vunpack.c.h.b16 %v4016
    %v4995 = vunpack.c.l.b16 %v4017
    %v4996 = vunpack.c.h.b16 %v4017
    %v4997 = vunpack.c.l.b16 %v4018
    %v4998 = vunpack.c.h.b16 %v4018
    %v4999 = vunpack.c.l.b16 %v4019
    %v5000 = vunpack.c.h.b16 %v4019
    %v5001 = vunpack.c.l.b16 %v4020
    %v5002 = vunpack.c.h.b16 %v4020
    %v5003 = vunpack.c.l.b16 %v4021
    %v5004 = vunpack.c.h.b16 %v4021
    %v5005 = vunpack.c.l.b16 %v4022
    %v5006 = vunpack.c.h.b16 %v4022
    %v5007 = vunpack.c.l.b16 %v4023
    %v5008 = vunpack.c.h.b16 %v4023
    %v5009 = vunpack.c.l.b16 %v4024
    %v5010 = vunpack.c.h.b16 %v4024
    %v5011 = vunpack.c.l.b16 %v4025
    %v5012 = vunpack.c.h.b16 %v4025
    %v5013 = vunpack.c.l.b16 %v4026
    %v5014 = vunpack.c.h.b16 %v4026
    %v5015 = vunpack.c.l.b16 %v4027
    %v5016 = vunpack.c.h.b16 %v4027
    %v5017 = vunpack.c.l.b16 %v4028
    %v5018 = vunpack.c.h.b16 %v4028
    %v5019 = vunpack.c.l.b16 %v4029
    %v5020 = vunpack.c.h.b16 %v4029
    %v5021 = vunpack.c.l.b16 %v4030
    %v5022 = vunpack.c.h.b16 %v4030
    %v5023 = vunpack.c.l.b16 %v4031
    %v5024 = vunpack.c.h.b16 %v4031
    %v5025 = vunpack.c.l.b16 %v4032
    %v5026 = vunpack.c.h.b16 %v4032
    %v5027 = vunpack.c.l.b16 %v4033
    %v5028 = vunpack.c.h.b16 %v4033
    %v5029 = vunpack.c.l.b16 %v4034
    %v5030 = vunpack.c.h.b16 %v4034
    %v5031 = vunpack.c.l.b16 %v4035
    %v5032 = vunpack.c.h.b16 %v4035
    %v5033 = vunpack.c.l.b16 %v4036
    %v5034 = vunpack.c.h.b16 %v4036
    %v5035 = vunpack.c.l.b16 %v4037
    %v5036 = vunpack.c.h.b16 %v4037
    %v5037 = vunpack.c.l.b16 %v4038
    %v5038 = vunpack.c.h.b16 %v4038
    %v5039 = vunpack.c.l.b16 %v4039
    %v5040 = vunpack.c.h.b16 %v4039
    %v5041 = vunpack.c.l.b16 %v4040
    %v5042 = vunpack.c.h.b16 %v4040
    %v5043 = vunpack.c.l.b16 %v4041
    %v5044 = vunpack.c.h.b16 %v4041
    %v5045 = vunpack.c.l.b16 %v4042
    %v5046 = vunpack.c.h.b16 %v4042
    %v5047 = vunpack.c.l.b16 %v4043
    %v5048 = vunpack.c.h.b16 %v4043
    %v5049 = vunpack.c.l.b16 %v4044
    %v5050 = vunpack.c.h.b16 %v4044
    %v5051 = vunpack.c.l.b16 %v4045
    %v5052 = vunpack.c.h.b16 %v4045
    %v5053 = vunpack.c.l.b16 %v4046
    %v5054 = vunpack.c.h.b16 %v4046
    %v5055 = vunpack.c.l.b16 %v4047
    %v5056 = vunpack.c.h.b16 %v4047
    %v5057 = vunpack.c.l.b16 %v4048
    %v5058 = vunpack.c.h.b16 %v4048
    %v5059 = vunpack.c.l.b16 %v4049
    %v5060 = vunpack.c.h.b16 %v4049
    %v5061 = vunpack.c.l.b16 %v4050
    %v5062 = vunpack.c.h.b16 %v4050
    %v5063 = vunpack.c.l.b16 %v4051
    %v5064 = vunpack.c.h.b16 %v4051
    %v5065 = vunpack.c.l.b16 %v4052
    %v5066 = vunpack.c.h.b16 %v4052
    %v5067 = vunpack.c.l.b16 %v4053
    %v5068 = vunpack.c.h.b16 %v4053
    %v5069 = vunpack.c.l.b16 %v4054
    %v5070 = vunpack.c.h.b16 %v4054
    %v5071 = vunpack.c.l.b16 %v4055
    %v5072 = vunpack.c.h.b16 %v4055
    %v5073 = vunpack.c.l.b16 %v4056
    %v5074 = vunpack.c.h.b16 %v4056
    %v5075 = vunpack.c.l.b16 %v4057
    %v5076 = vunpack.c.h.b16 %v4057
    %v5077 = vunpack.c.l.b16 %v4058
    %v5078 = vunpack.c.h.b16 %v4058
    %v5079 = vunpack.c.l.b16 %v4059
    %v5080 = vunpack.c.h.b16 %v4059
    %v5081 = vunpack.c.l.b16 %v4060
    %v5082 = vunpack.c.h.b16 %v4060
    %v5083 = vunpack.c.l.b16 %v4061
    %v5084 = vunpack.c.h.b16 %v4061
    %v5085 = vunpack.c.l.b16 %v4062
    %v5086 = vunpack.c.h.b16 %v4062
    %v5087 = vunpack.c.l.b16 %v4063
    %v5088 = vunpack.c.h.b16 %v4063
    %v5089 = vunpack.c.l.b16 %v4064
    %v5090 = vunpack.c.h.b16 %v4064
    %v5091 = vunpack.c.l.b16 %v4065
    %v5092 = vunpack.c.h.b16 %v4065
    %v5093 = vunpack.c.l.b16 %v4066
    %v5094 = vunpack.c.h.b16 %v4066
    %v5095 = vunpack.c.l.b16 %v4067
    %v5096 = vunpack.c.h.b16 %v4067
    %v5097 = vunpack.c.l.b16 %v4068
    %v5098 = vunpack.c.h.b16 %v4068
    %v5099 = vunpack.c.l.b16 %v4069
    %v5100 = vunpack.c.h.b16 %v4069
    %v5101 = vunpack.c.l.b16 %v4070
    %v5102 = vunpack.c.h.b16 %v4070
    %v5103 = vunpack.c.l.b16 %v4071
    %v5104 = vunpack.c.h.b16 %v4071
    %v5105 = vunpack.c.l.b16 %v4072
    %v5106 = vunpack.c.h.b16 %v4072
    %v5107 = vunpack.c.l.b16 %v4073
    %v5108 = vunpack.c.h.b16 %v4073
    %v5109 = vunpack.c.l.b16 %v4074
    %v5110 = vunpack.c.h.b16 %v4074
    %v5111 = vunpack.c.l.b16 %v4075
    %v5112 = vunpack.c.h.b16 %v4075
    %v5113 = vunpack.c.l.b16 %v4076
    %v5114 = vunpack.c.h.b16 %v4076
    %v5115 = vunpack.c.l.b16 %v4077
    %v5116 = vunpack.c.h.b16 %v4077
    %v5117 = vunpack.c.l.b16 %v4078
    %v5118 = vunpack.c.h.b16 %v4078
    %v5119 = vunpack.c.l.b16 %v4079
    %v5120 = vunpack.c.h.b16 %v4079
    %v5121 = vunpack.c.l.b16 %v4080
    %v5122 = vunpack.c.h.b16 %v4080
    %v5123 = vunpack.c.l.b16 %v4081
    %v5124 = vunpack.c.h.b16 %v4081
    %v5125 = vunpack.c.l.b16 %v4082
    %v5126 = vunpack.c.h.b16 %v4082
    %v5127 = vunpack.c.l.b16 %v4083
    %v5128 = vunpack.c.h.b16 %v4083
    %v5129 = vunpack.c.l.b16 %v4084
    %v5130 = vunpack.c.h.b16 %v4084
    %v5131 = vunpack.c.l.b16 %v4085
    %v5132 = vunpack.c.h.b16 %v4085
    %v5133 = vunpack.c.l.b16 %v4086
    %v5134 = vunpack.c.h.b16 %v4086
    %v5135 = vunpack.c.l.b16 %v4087
    %v5136 = vunpack.c.h.b16 %v4087
    %v5137 = vunpack.c.l.b16 %v4088
    %v5138 = vunpack.c.h.b16 %v4088
    %v5139 = vunpack.c.l.b16 %v4089
    %v5140 = vunpack.c.h.b16 %v4089
    %v5141 = vunpack.c.l.b16 %v4090
    %v5142 = vunpack.c.h.b16 %v4090
    %v5143 = vunpack.c.l.b16 %v4091
    %v5144 = vunpack.c.h.b16 %v4091
    %v5145 = vunpack.c.l.b16 %v4092
    %v5146 = vunpack.c.h.b16 %v4092
    %v5147 = vunpack.c.l.b16 %v4093
    %v5148 = vunpack.c.h.b16 %v4093
    %v5149 = vunpack.c.l.b16 %v4094
    %v5150 = vunpack.c.h.b16 %v4094
    %v5151 = vunpack.c.l.b16 %v4095
    %v5152 = vunpack.c.h.b16 %v4095
    %v5153 = vunpack.c.l.b16 %v4096
    %v5154 = vunpack.c.h.b16 %v4096
    %v5155 = vunpack.c.l.b16 %v4097
    %v5156 = vunpack.c.h.b16 %v4097
    %v5157 = vunpack.c.l.b16 %v4098
    %v5158 = vunpack.c.h.b16 %v4098
    %v5159 = vunpack.c.l.b16 %v4099
    %v5160 = vunpack.c.h.b16 %v4099
    %v5161 = vunpack.c.l.b16 %v4100
    %v5162 = vunpack.c.h.b16 %v4100
    %v5163 = vunpack.c.l.b16 %v4101
    %v5164 = vunpack.c.h.b16 %v4101
    %v5165 = vunpack.c.l.b16 %v4102
    %v5166 = vunpack.c.h.b16 %v4102
    %v5167 = vunpack.c.l.b16 %v4103
    %v5168 = vunpack.c.h.b16 %v4103
    %v5169 = vunpack.c.l.b16 %v4104
    %v5170 = vunpack.c.h.b16 %v4104
    %v5171 = vunpack.c.l.b16 %v4105
    %v5172 = vunpack.c.h.b16 %v4105
    %v5173 = vunpack.c.l.b16 %v4106
    %v5174 = vunpack.c.h.b16 %v4106
    %v5175 = vunpack.c.l.b16 %v4107
    %v5176 = vunpack.c.h.b16 %v4107
    %v5177 = vunpack.c.l.b16 %v4108
    %v5178 = vunpack.c.h.b16 %v4108
    %v5179 = vunpack.c.l.b16 %v4109
    %v5180 = vunpack.c.h.b16 %v4109
    %v5181 = vunpack.c.l.b16 %v4110
    %v5182 = vunpack.c.h.b16 %v4110
    %v5183 = vunpack.c.l.b16 %v4111
    %v5184 = vunpack.c.h.b16 %v4111
    %v5185 = vunpack.c.l.b16 %v4112
    %v5186 = vunpack.c.h.b16 %v4112
    %v5187 = vunpack.c.l.b16 %v4113
    %v5188 = vunpack.c.h.b16 %v4113
    %v5189 = vunpack.c.l.b16 %v4114
    %v5190 = vunpack.c.h.b16 %v4114
    %v5191 = vunpack.c.l.b16 %v4115
    %v5192 = vunpack.c.h.b16 %v4115
    %v5193 = vunpack.c.l.b16 %v4116
    %v5194 = vunpack.c.h.b16 %v4116
    %v5195 = vunpack.c.l.b16 %v4117
    %v5196 = vunpack.c.h.b16 %v4117
    %v5197 = vunpack.c.l.b16 %v4118
    %v5198 = vunpack.c.h.b16 %v4118
    %v5199 = vunpack.c.l.b16 %v4119
    %v5200 = vunpack.c.h.b16 %v4119
    %v5201 = vunpack.c.l.b16 %v4120
    %v5202 = vunpack.c.h.b16 %v4120
    %v5203 = vpack.c.b16 %v4567, %v4563
    %v5204 = vpack.c.b16 %v4568, %v4564
    %v5205 = vpack.c.b16 %v4569, %v4565
    %v5206 = vpack.c.b16 %v4570, %v4566
    %v5207 = vpack.c.b16 %v4575, %v4571
    %v5208 = vpack.c.b16 %v4576, %v4572
    %v5209 = vpack.c.b16 %v4577, %v4573
    %v5210 = vpack.c.b16 %v4578, %v4574
    %v5211 = vpack.c.b16 %v4583, %v4579
    %v5212 = vpack.c.b16 %v4584, %v4580
    %v5213 = vpack.c.b16 %v4585, %v4581
    %v5214 = vpack.c.b16 %v4586, %v4582
    %v5215 = vpack.c.b16 %v4591, %v4587
    %v5216 = vpack.c.b16 %v4592, %v4588
    %v5217 = vpack.c.b16 %v4593, %v4589
    %v5218 = vpack.c.b16 %v4594, %v4590
    %v5219 = vpack.c.b16 %v4599, %v4595
    %v5220 = vpack.c.b16 %v4600, %v4596
    %v5221 = vpack.c.b16 %v4601, %v4597
    %v5222 = vpack.c.b16 %v4602, %v4598
    %v5223 = vpack.c.b16 %v4607, %v4603
    %v5224 = vpack.c.b16 %v4608, %v4604
    %v5225 = vpack.c.b16 %v4609, %v4605
    %v5226 = vpack.c.b16 %v4610, %v4606
    %v5227 = vpack.c.b16 %v4615, %v4611
    %v5228 = vpack.c.b16 %v4616, %v4612
    %v5229 = vpack.c.b16 %v4617, %v4613
    %v5230 = vpack.c.b16 %v4618, %v4614
    %v5231 = vpack.c.b16 %v4623, %v4619
    %v5232 = vpack.c.b16 %v4624, %v4620
    %v5233 = vpack.c.b16 %v4625, %v4621
    %v5234 = vpack.c.b16 %v4626, %v4622
    %v5235 = vpack.c.b16 %v4631, %v4627
    %v5236 = vpack.c.b16 %v4632, %v4628
    %v5237 = vpack.c.b16 %v4633, %v4629
    %v5238 = vpack.c.b16 %v4634, %v4630
    %v5239 = vpack.c.b16 %v4639, %v4635
    %v5240 = vpack.c.b16 %v4640, %v4636
    %v5241 = vpack.c.b16 %v4641, %v4637
    %v5242 = vpack.c.b16 %v4642, %v4638
    %v5243 = vpack.c.b16 %v4647, %v4643
    %v5244 = vpack.c.b16 %v4648, %v4644
    %v5245 = vpack.c.b16 %v4649, %v4645
    %v5246 = vpack.c.b16 %v4650, %v4646
    %v5247 = vpack.c.b16 %v4655, %v4651
    %v5248 = vpack.c.b16 %v4656, %v4652
    %v5249 = vpack.c.b16 %v4657, %v4653
    %v5250 = vpack.c.b16 %v4658, %v4654
    %v5251 = vpack.c.b16 %v4663, %v4659
    %v5252 = vpack.c.b16 %v4664, %v4660
    %v5253 = vpack.c.b16 %v4665, %v4661
    %v5254 = vpack.c.b16 %v4666, %v4662
    %v5255 = vpack.c.b16 %v4671, %v4667
    %v5256 = vpack.c.b16 %v4672, %v4668
    %v5257 = vpack.c.b16 %v4673, %v4669
    %v5258 = vpack.c.b16 %v4674, %v4670
    %v5259 = vpack.c.b16 %v4679, %v4675
    %v5260 = vpack.c.b16 %v4680, %v4676
    %v5261 = vpack.c.b16 %v4681, %v4677
    %v5262 = vpack.c.b16 %v4682, %v4678
    %v5263 = vpack.c.b16 %v4687, %v4683
    %v5264 = vpack.c.b16 %v4688, %v4684
    %v5265 = vpack.c.b16 %v4689, %v4685
    %v5266 = vpack.c.b16 %v4690, %v4686
    %v5267 = vpack.c.b16 %v4695, %v4691
    %v5268 = vpack.c.b16 %v4696, %v4692
    %v5269 = vpack.c.b16 %v4697, %v4693
    %v5270 = vpack.c.b16 %v4698, %v4694
    %v5271 = vpack.c.b16 %v4703, %v4699
    %v5272 = vpack.c.b16 %v4704, %v4700
    %v5273 = vpack.c.b16 %v4705, %v4701
    %v5274 = vpack.c.b16 %v4706, %v4702
    %v5275 = vpack.c.b16 %v4711, %v4707
    %v5276 = vpack.c.b16 %v4712, %v4708
    %v5277 = vpack.c.b16 %v4713, %v4709
    %v5278 = vpack.c.b16 %v4714, %v4710
    %v5279 = vpack.c.b16 %v4719, %v4715
    %v5280 = vpack.c.b16 %v4720, %v4716
    %v5281 = vpack.c.b16 %v4721, %v4717
    %v5282 = vpack.c.b16 %v4722, %v4718
    %v5283 = vpack.c.b16 %v4727, %v4723
    %v5284 = vpack.c.b16 %v4728, %v4724
    %v5285 = vpack.c.b16 %v4729, %v4725
    %v5286 = vpack.c.b16 %v4730, %v4726
    %v5287 = vpack.c.b16 %v4735, %v4731
    %v5288 = vpack.c.b16 %v4736, %v4732
    %v5289 = vpack.c.b16 %v4737, %v4733
    %v5290 = vpack.c.b16 %v4738, %v4734
    %v5291 = vpack.c.b16 %v4743, %v4739
    %v5292 = vpack.c.b16 %v4744, %v4740
    %v5293 = vpack.c.b16 %v4745, %v4741
    %v5294 = vpack.c.b16 %v4746, %v4742
    %v5295 = vpack.c.b16 %v4751, %v4747
    %v5296 = vpack.c.b16 %v4752, %v4748
    %v5297 = vpack.c.b16 %v4753, %v4749
    %v5298 = vpack.c.b16 %v4754, %v4750
    %v5299 = vpack.c.b16 %v4759, %v4755
    %v5300 = vpack.c.b16 %v4760, %v4756
    %v5301 = vpack.c.b16 %v4761, %v4757
    %v5302 = vpack.c.b16 %v4762, %v4758
    %v5303 = vpack.c.b16 %v4767, %v4763
    %v5304 = vpack.c.b16 %v4768, %v4764
    %v5305 = vpack.c.b16 %v4769, %v4765
    %v5306 = vpack.c.b16 %v4770, %v4766
    %v5307 = vpack.c.b16 %v4775, %v4771
    %v5308 = vpack.c.b16 %v4776, %v4772
    %v5309 = vpack.c.b16 %v4777, %v4773
    %v5310 = vpack.c.b16 %v4778, %v4774
    %v5311 = vpack.c.b16 %v4783, %v4779
    %v5312 = vpack.c.b16 %v4784, %v4780
    %v5313 = vpack.c.b16 %v4785, %v4781
    %v5314 = vpack.c.b16 %v4786, %v4782
    %v5315 = vpack.c.b16 %v4791, %v4787
    %v5316 = vpack.c.b16 %v4792, %v4788
    %v5317 = vpack.c.b16 %v4793, %v4789
    %v5318 = vpack.c.b16 %v4794, %v4790
    %v5319 = vpack.c.b16 %v4799, %v4795
    %v5320 = vpack.c.b16 %v4800, %v4796
    %v5321 = vpack.c.b16 %v4801, %v4797
    %v5322 = vpack.c.b16 %v4802, %v4798
    %v5323 = vpack.c.b16 %v4807, %v4803
    %v5324 = vpack.c.b16 %v4808, %v4804
    %v5325 = vpack.c.b16 %v4809, %v4805
    %v5326 = vpack.c.b16 %v4810, %v4806
    %v5327 = vpack.c.b16 %v4815, %v4811
    %v5328 = vpack.c.b16 %v4816, %v4812
    %v5329 = vpack.c.b16 %v4817, %v4813
    %v5330 = vpack.c.b16 %v4818, %v4814
    %v5331 = vpack.c.b16 %v4823, %v4819
    %v5332 = vpack.c.b16 %v4824, %v4820
    %v5333 = vpack.c.b16 %v4825, %v4821
    %v5334 = vpack.c.b16 %v4826, %v4822
    %v5335 = vpack.c.b16 %v4831, %v4827
    %v5336 = vpack.c.b16 %v4832, %v4828
    %v5337 = vpack.c.b16 %v4833, %v4829
    %v5338 = vpack.c.b16 %v4834, %v4830
    %v5339 = vpack.c.b16 %v4839, %v4835
    %v5340 = vpack.c.b16 %v4840, %v4836
    %v5341 = vpack.c.b16 %v4841, %v4837
    %v5342 = vpack.c.b16 %v4842, %v4838
    %v5343 = vpack.c.b16 %v4847, %v4843
    %v5344 = vpack.c.b16 %v4848, %v4844
    %v5345 = vpack.c.b16 %v4849, %v4845
    %v5346 = vpack.c.b16 %v4850, %v4846
    %v5347 = vpack.c.b16 %v4855, %v4851
    %v5348 = vpack.c.b16 %v4856, %v4852
    %v5349 = vpack.c.b16 %v4857, %v4853
    %v5350 = vpack.c.b16 %v4858, %v4854
    %v5351 = vpack.c.b16 %v4863, %v4859
    %v5352 = vpack.c.b16 %v4864, %v4860
    %v5353 = vpack.c.b16 %v4865, %v4861
    %v5354 = vpack.c.b16 %v4866, %v4862
    %v5355 = vpack.c.b16 %v4871, %v4867
    %v5356 = vpack.c.b16 %v4872, %v4868
    %v5357 = vpack.c.b16 %v4873, %v4869
    %v5358 = vpack.c.b16 %v4874, %v4870
    %v5359 = vpack.c.b16 %v4879, %v4875
    %v5360 = vpack.c.b16 %v4880, %v4876
    %v5361 = vpack.c.b16 %v4881, %v4877
    %v5362 = vpack.c.b16 %v4882, %v4878
    %v5363 = vpack.c.b16 %v4887, %v4883
    %v5364 = vpack.c.b16 %v4888, %v4884
    %v5365 = vpack.c.b16 %v4889, %v4885
    %v5366 = vpack.c.b16 %v4890, %v4886
    %v5367 = vpack.c.b16 %v4895, %v4891
    %v5368 = vpack.c.b16 %v4896, %v4892
    %v5369 = vpack.c.b16 %v4897, %v4893
    %v5370 = vpack.c.b16 %v4898, %v4894
    %v5371 = vpack.c.b16 %v4903, %v4899
    %v5372 = vpack.c.b16 %v4904, %v4900
    %v5373 = vpack.c.b16 %v4905, %v4901
    %v5374 = vpack.c.b16 %v4906, %v4902
    %v5375 = vpack.c.b16 %v4911, %v4907
    %v5376 = vpack.c.b16 %v4912, %v4908
    %v5377 = vpack.c.b16 %v4913, %v4909
    %v5378 = vpack.c.b16 %v4914, %v4910
    %v5379 = vpack.c.b16 %v4919, %v4915
    %v5380 = vpack.c.b16 %v4920, %v4916
    %v5381 = vpack.c.b16 %v4921, %v4917
    %v5382 = vpack.c.b16 %v4922, %v4918
    %v5383 = vpack.c.b16 %v4927, %v4923
    %v5384 = vpack.c.b16 %v4928, %v4924
    %v5385 = vpack.c.b16 %v4929, %v4925
    %v5386 = vpack.c.b16 %v4930, %v4926
    %v5387 = vpack.c.b16 %v4935, %v4931
    %v5388 = vpack.c.b16 %v4936, %v4932
    %v5389 = vpack.c.b16 %v4937, %v4933
    %v5390 = vpack.c.b16 %v4938, %v4934
    %v5391 = vpack.c.b16 %v4943, %v4939
    %v5392 = vpack.c.b16 %v4944, %v4940
    %v5393 = vpack.c.b16 %v4945, %v4941
    %v5394 = vpack.c.b16 %v4946, %v4942
    %v5395 = vpack.c.b16 %v4951, %v4947
    %v5396 = vpack.c.b16 %v4952, %v4948
    %v5397 = vpack.c.b16 %v4953, %v4949
    %v5398 = vpack.c.b16 %v4954, %v4950
    %v5399 = vpack.c.b16 %v4959, %v4955
    %v5400 = vpack.c.b16 %v4960, %v4956
    %v5401 = vpack.c.b16 %v4961, %v4957
    %v5402 = vpack.c.b16 %v4962, %v4958
    %v5403 = vpack.c.b16 %v4967, %v4963
    %v5404 = vpack.c.b16 %v4968, %v4964
    %v5405 = vpack.c.b16 %v4969, %v4965
    %v5406 = vpack.c.b16 %v4970, %v4966
    %v5407 = vpack.c.b16 %v4975, %v4971
    %v5408 = vpack.c.b16 %v4976, %v4972
    %v5409 = vpack.c.b16 %v4977, %v4973
    %v5410 = vpack.c.b16 %v4978, %v4974
    %v5411 = vpack.c.b16 %v4983, %v4979
    %v5412 = vpack.c.b16 %v4984, %v4980
    %v5413 = vpack.c.b16 %v4985, %v4981
    %v5414 = vpack.c.b16 %v4986, %v4982
    %v5415 = vpack.c.b16 %v4991, %v4987
    %v5416 = vpack.c.b16 %v4992, %v4988
    %v5417 = vpack.c.b16 %v4993, %v4989
    %v5418 = vpack.c.b16 %v4994, %v4990
    %v5419 = vpack.c.b16 %v4999, %v4995
    %v5420 = vpack.c.b16 %v5000, %v4996
    %v5421 = vpack.c.b16 %v5001, %v4997
    %v5422 = vpack.c.b16 %v5002, %v4998
    %v5423 = vpack.c.b16 %v5007, %v5003
    %v5424 = vpack.c.b16 %v5008, %v5004
    %v5425 = vpack.c.b16 %v5009, %v5005
    %v5426 = vpack.c.b16 %v5010, %v5006
    %v5427 = vpack.c.b16 %v5015, %v5011
    %v5428 = vpack.c.b16 %v5016, %v5012
    %v5429 = vpack.c.b16 %v5017, %v5013
    %v5430 = vpack.c.b16 %v5018, %v5014
    %v5431 = vpack.c.b16 %v5023, %v5019
    %v5432 = vpack.c.b16 %v5024, %v5020
    %v5433 = vpack.c.b16 %v5025, %v5021
    %v5434 = vpack.c.b16 %v5026, %v5022
    %v5435 = vpack.c.b16 %v5031, %v5027
    %v5436 = vpack.c.b16 %v5032, %v5028
    %v5437 = vpack.c.b16 %v5033, %v5029
    %v5438 = vpack.c.b16 %v5034, %v5030
    %v5439 = vpack.c.b16 %v5039, %v5035
    %v5440 = vpack.c.b16 %v5040, %v5036
    %v5441 = vpack.c.b16 %v5041, %v5037
    %v5442 = vpack.c.b16 %v5042, %v5038
    %v5443 = vpack.c.b16 %v5047, %v5043
    %v5444 = vpack.c.b16 %v5048, %v5044
    %v5445 = vpack.c.b16 %v5049, %v5045
    %v5446 = vpack.c.b16 %v5050, %v5046
    %v5447 = vpack.c.b16 %v5055, %v5051
    %v5448 = vpack.c.b16 %v5056, %v5052
    %v5449 = vpack.c.b16 %v5057, %v5053
    %v5450 = vpack.c.b16 %v5058, %v5054
    %v5451 = vpack.c.b16 %v5063, %v5059
    %v5452 = vpack.c.b16 %v5064, %v5060
    %v5453 = vpack.c.b16 %v5065, %v5061
    %v5454 = vpack.c.b16 %v5066, %v5062
    %v5455 = vpack.c.b16 %v5071, %v5067
    %v5456 = vpack.c.b16 %v5072, %v5068
    %v5457 = vpack.c.b16 %v5073, %v5069
    %v5458 = vpack.c.b16 %v5074, %v5070
    %v5459 = vpack.c.b16 %v5079, %v5075
    %v5460 = vpack.c.b16 %v5080, %v5076
    %v5461 = vpack.c.b16 %v5081, %v5077
    %v5462 = vpack.c.b16 %v5082, %v5078
    %v5463 = vpack.c.b16 %v5087, %v5083
    %v5464 = vpack.c.b16 %v5088, %v5084
    %v5465 = vpack.c.b16 %v5089, %v5085
    %v5466 = vpack.c.b16 %v5090, %v5086
    %v5467 = vpack.c.b16 %v5095, %v5091
    %v5468 = vpack.c.b16 %v5096, %v5092
    %v5469 = vpack.c.b16 %v5097, %v5093
    %v5470 = vpack.c.b16 %v5098, %v5094
    %v5471 = vpack.c.b16 %v5103, %v5099
    %v5472 = vpack.c.b16 %v5104, %v5100
    %v5473 = vpack.c.b16 %v5105, %v5101
    %v5474 = vpack.c.b16 %v5106, %v5102
    %v5475 = vpack.c.b16 %v5111, %v5107
    %v5476 = vpack.c.b16 %v5112, %v5108
    %v5477 = vpack.c.b16 %v5113, %v5109
    %v5478 = vpack.c.b16 %v5114, %v5110
    %v5479 = vpack.c.b16 %v5119, %v5115
    %v5480 = vpack.c.b16 %v5120, %v5116
    %v5481 = vpack.c.b16 %v5121, %v5117
    %v5482 = vpack.c.b16 %v5122, %v5118
    %v5483 = vpack.c.b16 %v5127, %v5123
    %v5484 = vpack.c.b16 %v5128, %v5124
    %v5485 = vpack.c.b16 %v5129, %v5125
    %v5486 = vpack.c.b16 %v5130, %v5126
    %v5487 = vpack.c.b16 %v5135, %v5131
    %v5488 = vpack.c.b16 %v5136, %v5132
    %v5489 = vpack.c.b16 %v5137, %v5133
    %v5490 = vpack.c.b16 %v5138, %v5134
    %v5491 = vpack.c.b16 %v5143, %v5139
    %v5492 = vpack.c.b16 %v5144, %v5140
    %v5493 = vpack.c.b16 %v5145, %v5141
    %v5494 = vpack.c.b16 %v5146, %v5142
    %v5495 = vpack.c.b16 %v5151, %v5147
    %v5496 = vpack.c.b16 %v5152, %v5148
    %v5497 = vpack.c.b16 %v5153, %v5149
    %v5498 = vpack.c.b16 %v5154, %v5150
    %v5499 = vpack.c.b16 %v5159, %v5155
    %v5500 = vpack.c.b16 %v5160, %v5156
    %v5501 = vpack.c.b16 %v5161, %v5157
    %v5502 = vpack.c.b16 %v5162, %v5158
    %v5503 = vpack.c.b16 %v5167, %v5163
    %v5504 = vpack.c.b16 %v5168, %v5164
    %v5505 = vpack.c.b16 %v5169, %v5165
    %v5506 = vpack.c.b16 %v5170, %v5166
    %v5507 = vpack.c.b16 %v5175, %v5171
    %v5508 = vpack.c.b16 %v5176, %v5172
    %v5509 = vpack.c.b16 %v5177, %v5173
    %v5510 = vpack.c.b16 %v5178, %v5174
    %v5511 = vpack.c.b16 %v5183, %v5179
    %v5512 = vpack.c.b16 %v5184, %v5180
    %v5513 = vpack.c.b16 %v5185, %v5181
    %v5514 = vpack.c.b16 %v5186, %v5182
    %v5515 = vpack.c.b16 %v5191, %v5187
    %v5516 = vpack.c.b16 %v5192, %v5188
    %v5517 = vpack.c.b16 %v5193, %v5189
    %v5518 = vpack.c.b16 %v5194, %v5190
    %v5519 = vpack.c.b16 %v5199, %v5195
    %v5520 = vpack.c.b16 %v5200, %v5196
    %v5521 = vpack.c.b16 %v5201, %v5197
    %v5522 = vpack.c.b16 %v5202, %v5198
    %5843 = vmatprep.subr.bf16.mxu0 %v5232
    %5844 = vmatpush1.bf16.msra.mxu0 %v5231
    %5845 = vmatprep.subr.bf16.mxu0 %v5228
    %5846 = vmatpush1.bf16.msra.mxu0 %v5227
    %5847 = vmatprep.subr.bf16.mxu0 %v5224
    %5848 = vmatpush1.bf16.msra.mxu0 %v5223
    %5849 = vmatprep.subr.bf16.mxu0 %v5220
    %5850 = vmatpush1.bf16.msra.mxu0 %v5219
    %5851 = vmatprep.subr.bf16.mxu0 %v5216
    %5852 = vmatpush1.bf16.msra.mxu0 %v5215
    %5853 = vmatprep.subr.bf16.mxu0 %v5212
    %5854 = vmatpush1.bf16.msra.mxu0 %v5211
    %5855 = vmatprep.subr.bf16.mxu0 %v5208
    %5856 = vmatpush1.bf16.msra.mxu0 %v5207
    %5857 = vmatprep.subr.bf16.mxu0 %v5204
    %5858 = vmatpush1.bf16.msra.mxu0 %v5203
    %5859 = vmatprep.subr.bf16.mxu0 %v5264
    %5860 = vmatpush2.bf16.msra.mxu0 %v5263
    %5861 = vmatprep.subr.bf16.mxu0 %v5260
    %5862 = vmatpush2.bf16.msra.mxu0 %v5259
    %5863 = vmatprep.subr.bf16.mxu0 %v5256
    %5864 = vmatpush2.bf16.msra.mxu0 %v5255
    %5865 = vmatprep.subr.bf16.mxu0 %v5252
    %5866 = vmatpush2.bf16.msra.mxu0 %v5251
    %5867 = vmatprep.subr.bf16.mxu0 %v5248
    %5868 = vmatpush2.bf16.msra.mxu0 %v5247
    %5869 = vmatprep.subr.bf16.mxu0 %v5244
    %5870 = vmatpush2.bf16.msra.mxu0 %v5243
    %5871 = vmatprep.subr.bf16.mxu0 %v5240
    %5872 = vmatpush2.bf16.msra.mxu0 %v5239
    %5873 = vmatprep.subr.bf16.mxu0 %v5236
    %5874 = vmatpush2.bf16.msra.mxu0 %v5235
    %5875 = vmatprep.mubr.bf16.mxu0 %v4204
    %5876 = vmatmul.mubr.bf16.gmra.mxu0 %v4203
    %v5877 = vpop.f32.mrf.mxu0
    %v5878 = vadd.f32 %v4126, %v5877
    %v5879 = vpop.f32.mrf.mxu0
    %v5880 = vadd.f32 %v4130, %v5879
    %v5881 = vpop.f32.mrf.mxu0
    %v5882 = vadd.f32 %v4126, %v5881
    %v5883 = vpop.f32.mrf.mxu0
    %v5884 = vadd.f32 %v4130, %v5883
    %5885 = vmatprep.mubr.bf16.mxu0 %v4214
    %5886 = vmatmul.mubr.bf16.gmra.mxu0 %v4213
    %v5887 = vpop.f32.mrf.mxu0
    %v5888 = vadd.f32 %v4126, %v5887
    %v5889 = vpop.f32.mrf.mxu0
    %v5890 = vadd.f32 %v4130, %v5889
    %v5891 = vpop.f32.mrf.mxu0
    %v5892 = vadd.f32 %v4126, %v5891
    %v5893 = vpop.f32.mrf.mxu0
    %v5894 = vadd.f32 %v4130, %v5893
    %5895 = vdwg.mxu0
    %5896 = vmatprep.subr.bf16.mxu0 %v5296
    %5897 = vmatpush1.bf16.msra.mxu0 %v5295
    %5898 = vmatprep.subr.bf16.mxu0 %v5292
    %5899 = vmatpush1.bf16.msra.mxu0 %v5291
    %5900 = vmatprep.subr.bf16.mxu0 %v5288
    %5901 = vmatpush1.bf16.msra.mxu0 %v5287
    %5902 = vmatprep.subr.bf16.mxu0 %v5284
    %5903 = vmatpush1.bf16.msra.mxu0 %v5283
    %5904 = vmatprep.subr.bf16.mxu0 %v5280
    %5905 = vmatpush1.bf16.msra.mxu0 %v5279
    %5906 = vmatprep.subr.bf16.mxu0 %v5276
    %5907 = vmatpush1.bf16.msra.mxu0 %v5275
    %5908 = vmatprep.subr.bf16.mxu0 %v5272
    %5909 = vmatpush1.bf16.msra.mxu0 %v5271
    %5910 = vmatprep.subr.bf16.mxu0 %v5268
    %5911 = vmatpush1.bf16.msra.mxu0 %v5267
    %5912 = vmatprep.subr.bf16.mxu0 %v5328
    %5913 = vmatpush2.bf16.msra.mxu0 %v5327
    %5914 = vmatprep.subr.bf16.mxu0 %v5324
    %5915 = vmatpush2.bf16.msra.mxu0 %v5323
    %5916 = vmatprep.subr.bf16.mxu0 %v5320
    %5917 = vmatpush2.bf16.msra.mxu0 %v5319
    %5918 = vmatprep.subr.bf16.mxu0 %v5316
    %5919 = vmatpush2.bf16.msra.mxu0 %v5315
    %5920 = vmatprep.subr.bf16.mxu0 %v5312
    %5921 = vmatpush2.bf16.msra.mxu0 %v5311
    %5922 = vmatprep.subr.bf16.mxu0 %v5308
    %5923 = vmatpush2.bf16.msra.mxu0 %v5307
    %5924 = vmatprep.subr.bf16.mxu0 %v5304
    %5925 = vmatpush2.bf16.msra.mxu0 %v5303
    %5926 = vmatprep.subr.bf16.mxu0 %v5300
    %5927 = vmatpush2.bf16.msra.mxu0 %v5299
    %5928 = vmatprep.mubr.bf16.mxu0 %v4206
    %5929 = vmatmul.mubr.bf16.gmra.mxu0 %v4205
    %v5930 = vpop.f32.mrf.mxu0
    %v5931 = vadd.f32 %v5878, %v5930
    %v5932 = vpop.f32.mrf.mxu0
    %v5933 = vadd.f32 %v5880, %v5932
    %v5934 = vpop.f32.mrf.mxu0
    %v5935 = vadd.f32 %v5882, %v5934
    %v5936 = vpop.f32.mrf.mxu0
    %v5937 = vadd.f32 %v5884, %v5936
    %5938 = vmatprep.mubr.bf16.mxu0 %v4216
    %5939 = vmatmul.mubr.bf16.gmra.mxu0 %v4215
    %v5940 = vpop.f32.mrf.mxu0
    %v5941 = vadd.f32 %v5888, %v5940
    %v5942 = vpop.f32.mrf.mxu0
    %v5943 = vadd.f32 %v5890, %v5942
    %v5944 = vpop.f32.mrf.mxu0
    %v5945 = vadd.f32 %v5892, %v5944
    %v5946 = vpop.f32.mrf.mxu0
    %v5947 = vadd.f32 %v5894, %v5946
    %5948 = vdwg.mxu0
    %5949 = vmatprep.subr.bf16.mxu0 %v5360
    %5950 = vmatpush1.bf16.msra.mxu0 %v5359
    %5951 = vmatprep.subr.bf16.mxu0 %v5356
    %5952 = vmatpush1.bf16.msra.mxu0 %v5355
    %5953 = vmatprep.subr.bf16.mxu0 %v5352
    %5954 = vmatpush1.bf16.msra.mxu0 %v5351
    %5955 = vmatprep.subr.bf16.mxu0 %v5348
    %5956 = vmatpush1.bf16.msra.mxu0 %v5347
    %5957 = vmatprep.subr.bf16.mxu0 %v5344
    %5958 = vmatpush1.bf16.msra.mxu0 %v5343
    %5959 = vmatprep.subr.bf16.mxu0 %v5340
    %5960 = vmatpush1.bf16.msra.mxu0 %v5339
    %5961 = vmatprep.subr.bf16.mxu0 %v5336
    %5962 = vmatpush1.bf16.msra.mxu0 %v5335
    %5963 = vmatprep.subr.bf16.mxu0 %v5332
    %5964 = vmatpush1.bf16.msra.mxu0 %v5331
    %5965 = vmatprep.subr.bf16.mxu0 %v5392
    %5966 = vmatpush2.bf16.msra.mxu0 %v5391
    %5967 = vmatprep.subr.bf16.mxu0 %v5388
    %5968 = vmatpush2.bf16.msra.mxu0 %v5387
    %5969 = vmatprep.subr.bf16.mxu0 %v5384
    %5970 = vmatpush2.bf16.msra.mxu0 %v5383
    %5971 = vmatprep.subr.bf16.mxu0 %v5380
    %5972 = vmatpush2.bf16.msra.mxu0 %v5379
    %5973 = vmatprep.subr.bf16.mxu0 %v5376
    %5974 = vmatpush2.bf16.msra.mxu0 %v5375
    %5975 = vmatprep.subr.bf16.mxu0 %v5372
    %5976 = vmatpush2.bf16.msra.mxu0 %v5371
    %5977 = vmatprep.subr.bf16.mxu0 %v5368
    %5978 = vmatpush2.bf16.msra.mxu0 %v5367
    %5979 = vmatprep.subr.bf16.mxu0 %v5364
    %5980 = vmatpush2.bf16.msra.mxu0 %v5363
    %5981 = vmatprep.mubr.bf16.mxu0 %v4208
    %5982 = vmatmul.mubr.bf16.gmra.mxu0 %v4207
    %v5983 = vpop.f32.mrf.mxu0
    %v5984 = vadd.f32 %v5931, %v5983
    %v5985 = vpop.f32.mrf.mxu0
    %v5986 = vadd.f32 %v5933, %v5985
    %v5987 = vpop.f32.mrf.mxu0
    %v5988 = vadd.f32 %v5935, %v5987
    %v5989 = vpop.f32.mrf.mxu0
    %v5990 = vadd.f32 %v5937, %v5989
    %5991 = vmatprep.mubr.bf16.mxu0 %v4218
    %5992 = vmatmul.mubr.bf16.gmra.mxu0 %v4217
    %v5993 = vpop.f32.mrf.mxu0
    %v5994 = vadd.f32 %v5941, %v5993
    %v5995 = vpop.f32.mrf.mxu0
    %v5996 = vadd.f32 %v5943, %v5995
    %v5997 = vpop.f32.mrf.mxu0
    %v5998 = vadd.f32 %v5945, %v5997
    %v5999 = vpop.f32.mrf.mxu0
    %v6000 = vadd.f32 %v5947, %v5999
    %6001 = vdwg.mxu0
    %6002 = vmatprep.subr.bf16.mxu0 %v5424
    %6003 = vmatpush1.bf16.msra.mxu0 %v5423
    %6004 = vmatprep.subr.bf16.mxu0 %v5420
    %6005 = vmatpush1.bf16.msra.mxu0 %v5419
    %6006 = vmatprep.subr.bf16.mxu0 %v5416
    %6007 = vmatpush1.bf16.msra.mxu0 %v5415
    %6008 = vmatprep.subr.bf16.mxu0 %v5412
    %6009 = vmatpush1.bf16.msra.mxu0 %v5411
    %6010 = vmatprep.subr.bf16.mxu0 %v5408
    %6011 = vmatpush1.bf16.msra.mxu0 %v5407
    %6012 = vmatprep.subr.bf16.mxu0 %v5404
    %6013 = vmatpush1.bf16.msra.mxu0 %v5403
    %6014 = vmatprep.subr.bf16.mxu0 %v5400
    %6015 = vmatpush1.bf16.msra.mxu0 %v5399
    %6016 = vmatprep.subr.bf16.mxu0 %v5396
    %6017 = vmatpush1.bf16.msra.mxu0 %v5395
    %6018 = vmatprep.subr.bf16.mxu0 %v5456
    %6019 = vmatpush2.bf16.msra.mxu0 %v5455
    %6020 = vmatprep.subr.bf16.mxu0 %v5452
    %6021 = vmatpush2.bf16.msra.mxu0 %v5451
    %6022 = vmatprep.subr.bf16.mxu0 %v5448
    %6023 = vmatpush2.bf16.msra.mxu0 %v5447
    %6024 = vmatprep.subr.bf16.mxu0 %v5444
    %6025 = vmatpush2.bf16.msra.mxu0 %v5443
    %6026 = vmatprep.subr.bf16.mxu0 %v5440
    %6027 = vmatpush2.bf16.msra.mxu0 %v5439
    %6028 = vmatprep.subr.bf16.mxu0 %v5436
    %6029 = vmatpush2.bf16.msra.mxu0 %v5435
    %6030 = vmatprep.subr.bf16.mxu0 %v5432
    %6031 = vmatpush2.bf16.msra.mxu0 %v5431
    %6032 = vmatprep.subr.bf16.mxu0 %v5428
    %6033 = vmatpush2.bf16.msra.mxu0 %v5427
    %6034 = vmatprep.mubr.bf16.mxu0 %v4210
    %6035 = vmatmul.mubr.bf16.gmra.mxu0 %v4209
    %v6036 = vpop.f32.mrf.mxu0
    %v6037 = vadd.f32 %v5984, %v6036
    %v6038 = vpop.f32.mrf.mxu0
    %v6039 = vadd.f32 %v5986, %v6038
    %v6040 = vpop.f32.mrf.mxu0
    %v6041 = vadd.f32 %v5988, %v6040
    %v6042 = vpop.f32.mrf.mxu0
    %v6043 = vadd.f32 %v5990, %v6042
    %6044 = vmatprep.mubr.bf16.mxu0 %v4220
    %6045 = vmatmul.mubr.bf16.gmra.mxu0 %v4219
    %v6046 = vpop.f32.mrf.mxu0
    %v6047 = vadd.f32 %v5994, %v6046
    %v6048 = vpop.f32.mrf.mxu0
    %v6049 = vadd.f32 %v5996, %v6048
    %v6050 = vpop.f32.mrf.mxu0
    %v6051 = vadd.f32 %v5998, %v6050
    %v6052 = vpop.f32.mrf.mxu0
    %v6053 = vadd.f32 %v6000, %v6052
    %6054 = vdwg.mxu0
    %6055 = vmatprep.subr.bf16.mxu0 %v5488
    %6056 = vmatpush1.bf16.msra.mxu0 %v5487
    %6057 = vmatprep.subr.bf16.mxu0 %v5484
    %6058 = vmatpush1.bf16.msra.mxu0 %v5483
    %6059 = vmatprep.subr.bf16.mxu0 %v5480
    %6060 = vmatpush1.bf16.msra.mxu0 %v5479
    %6061 = vmatprep.subr.bf16.mxu0 %v5476
    %6062 = vmatpush1.bf16.msra.mxu0 %v5475
    %6063 = vmatprep.subr.bf16.mxu0 %v5472
    %6064 = vmatpush1.bf16.msra.mxu0 %v5471
    %6065 = vmatprep.subr.bf16.mxu0 %v5468
    %6066 = vmatpush1.bf16.msra.mxu0 %v5467
    %6067 = vmatprep.subr.bf16.mxu0 %v5464
    %6068 = vmatpush1.bf16.msra.mxu0 %v5463
    %6069 = vmatprep.subr.bf16.mxu0 %v5460
    %6070 = vmatpush1.bf16.msra.mxu0 %v5459
    %6071 = vmatprep.subr.bf16.mxu0 %v5520
    %6072 = vmatpush2.bf16.msra.mxu0 %v5519
    %6073 = vmatprep.subr.bf16.mxu0 %v5516
    %6074 = vmatpush2.bf16.msra.mxu0 %v5515
    %6075 = vmatprep.subr.bf16.mxu0 %v5512
    %6076 = vmatpush2.bf16.msra.mxu0 %v5511
    %6077 = vmatprep.subr.bf16.mxu0 %v5508
    %6078 = vmatpush2.bf16.msra.mxu0 %v5507
    %6079 = vmatprep.subr.bf16.mxu0 %v5504
    %6080 = vmatpush2.bf16.msra.mxu0 %v5503
    %6081 = vmatprep.subr.bf16.mxu0 %v5500
    %6082 = vmatpush2.bf16.msra.mxu0 %v5499
    %6083 = vmatprep.subr.bf16.mxu0 %v5496
    %6084 = vmatpush2.bf16.msra.mxu0 %v5495
    %6085 = vmatprep.subr.bf16.mxu0 %v5492
    %6086 = vmatpush2.bf16.msra.mxu0 %v5491
    %6087 = vmatprep.mubr.bf16.mxu0 %v4212
    %6088 = vmatmul.mubr.bf16.gmra.mxu0 %v4211
    %v6089 = vpop.f32.mrf.mxu0
    %v6090 = vadd.f32 %v6037, %v6089
    %v6091 = vpop.f32.mrf.mxu0
    %v6092 = vadd.f32 %v6039, %v6091
    %v6093 = vpop.f32.mrf.mxu0
    %v6094 = vadd.f32 %v6041, %v6093
    %v6095 = vpop.f32.mrf.mxu0
    %v6096 = vadd.f32 %v6043, %v6095
    %6097 = vmatprep.mubr.bf16.mxu0 %v4222
    %6098 = vmatmul.mubr.bf16.gmra.mxu0 %v4221
    %v6099 = vpop.f32.mrf.mxu0
    %v6100 = vadd.f32 %v6047, %v6099
    %v6101 = vpop.f32.mrf.mxu0
    %v6102 = vadd.f32 %v6049, %v6101
    %v6103 = vpop.f32.mrf.mxu0
    %v6104 = vadd.f32 %v6051, %v6103
    %v6105 = vpop.f32.mrf.mxu0
    %v6106 = vadd.f32 %v6053, %v6105
    %6107 = vdwg.mxu0
    %6108 = vmatprep.subr.bf16.mxu0 %v5234
    %6109 = vmatpush1.bf16.msra.mxu0 %v5233
    %6110 = vmatprep.subr.bf16.mxu0 %v5230
    %6111 = vmatpush1.bf16.msra.mxu0 %v5229
    %6112 = vmatprep.subr.bf16.mxu0 %v5226
    %6113 = vmatpush1.bf16.msra.mxu0 %v5225
    %6114 = vmatprep.subr.bf16.mxu0 %v5222
    %6115 = vmatpush1.bf16.msra.mxu0 %v5221
    %6116 = vmatprep.subr.bf16.mxu0 %v5218
    %6117 = vmatpush1.bf16.msra.mxu0 %v5217
    %6118 = vmatprep.subr.bf16.mxu0 %v5214
    %6119 = vmatpush1.bf16.msra.mxu0 %v5213
    %6120 = vmatprep.subr.bf16.mxu0 %v5210
    %6121 = vmatpush1.bf16.msra.mxu0 %v5209
    %6122 = vmatprep.subr.bf16.mxu0 %v5206
    %6123 = vmatpush1.bf16.msra.mxu0 %v5205
    %6124 = vmatprep.subr.bf16.mxu0 %v5266
    %6125 = vmatpush2.bf16.msra.mxu0 %v5265
    %6126 = vmatprep.subr.bf16.mxu0 %v5262
    %6127 = vmatpush2.bf16.msra.mxu0 %v5261
    %6128 = vmatprep.subr.bf16.mxu0 %v5258
    %6129 = vmatpush2.bf16.msra.mxu0 %v5257
    %6130 = vmatprep.subr.bf16.mxu0 %v5254
    %6131 = vmatpush2.bf16.msra.mxu0 %v5253
    %6132 = vmatprep.subr.bf16.mxu0 %v5250
    %6133 = vmatpush2.bf16.msra.mxu0 %v5249
    %6134 = vmatprep.subr.bf16.mxu0 %v5246
    %6135 = vmatpush2.bf16.msra.mxu0 %v5245
    %6136 = vmatprep.subr.bf16.mxu0 %v5242
    %6137 = vmatpush2.bf16.msra.mxu0 %v5241
    %6138 = vmatprep.subr.bf16.mxu0 %v5238
    %6139 = vmatpush2.bf16.msra.mxu0 %v5237
    %6140 = vmatprep.mubr.bf16.mxu0 %v4204
    %6141 = vmatmul.mubr.bf16.gmra.mxu0 %v4203
    %v6142 = vpop.f32.mrf.mxu0
    %v6143 = vadd.f32 %v4134, %v6142
    %v6144 = vpop.f32.mrf.mxu0
    %v6145 = vadd.f32 %v4138, %v6144
    %v6146 = vpop.f32.mrf.mxu0
    %v6147 = vadd.f32 %v4134, %v6146
    %v6148 = vpop.f32.mrf.mxu0
    %v6149 = vadd.f32 %v4138, %v6148
    %6150 = vmatprep.mubr.bf16.mxu0 %v4214
    %6151 = vmatmul.mubr.bf16.gmra.mxu0 %v4213
    %v6152 = vpop.f32.mrf.mxu0
    %v6153 = vadd.f32 %v4134, %v6152
    %v6154 = vpop.f32.mrf.mxu0
    %v6155 = vadd.f32 %v4138, %v6154
    %v6156 = vpop.f32.mrf.mxu0
    %v6157 = vadd.f32 %v4134, %v6156
    %v6158 = vpop.f32.mrf.mxu0
    %v6159 = vadd.f32 %v4138, %v6158
    %6160 = vdwg.mxu0
    %6161 = vmatprep.subr.bf16.mxu0 %v5298
    %6162 = vmatpush1.bf16.msra.mxu0 %v5297
    %6163 = vmatprep.subr.bf16.mxu0 %v5294
    %6164 = vmatpush1.bf16.msra.mxu0 %v5293
    %6165 = vmatprep.subr.bf16.mxu0 %v5290
    %6166 = vmatpush1.bf16.msra.mxu0 %v5289
    %6167 = vmatprep.subr.bf16.mxu0 %v5286
    %6168 = vmatpush1.bf16.msra.mxu0 %v5285
    %6169 = vmatprep.subr.bf16.mxu0 %v5282
    %6170 = vmatpush1.bf16.msra.mxu0 %v5281
    %6171 = vmatprep.subr.bf16.mxu0 %v5278
    %6172 = vmatpush1.bf16.msra.mxu0 %v5277
    %6173 = vmatprep.subr.bf16.mxu0 %v5274
    %6174 = vmatpush1.bf16.msra.mxu0 %v5273
    %6175 = vmatprep.subr.bf16.mxu0 %v5270
    %6176 = vmatpush1.bf16.msra.mxu0 %v5269
    %6177 = vmatprep.subr.bf16.mxu0 %v5330
    %6178 = vmatpush2.bf16.msra.mxu0 %v5329
    %6179 = vmatprep.subr.bf16.mxu0 %v5326
    %6180 = vmatpush2.bf16.msra.mxu0 %v5325
    %6181 = vmatprep.subr.bf16.mxu0 %v5322
    %6182 = vmatpush2.bf16.msra.mxu0 %v5321
    %6183 = vmatprep.subr.bf16.mxu0 %v5318
    %6184 = vmatpush2.bf16.msra.mxu0 %v5317
    %6185 = vmatprep.subr.bf16.mxu0 %v5314
    %6186 = vmatpush2.bf16.msra.mxu0 %v5313
    %6187 = vmatprep.subr.bf16.mxu0 %v5310
    %6188 = vmatpush2.bf16.msra.mxu0 %v5309
    %6189 = vmatprep.subr.bf16.mxu0 %v5306
    %6190 = vmatpush2.bf16.msra.mxu0 %v5305
    %6191 = vmatprep.subr.bf16.mxu0 %v5302
    %6192 = vmatpush2.bf16.msra.mxu0 %v5301
    %6193 = vmatprep.mubr.bf16.mxu0 %v4206
    %6194 = vmatmul.mubr.bf16.gmra.mxu0 %v4205
    %v6195 = vpop.f32.mrf.mxu0
    %v6196 = vadd.f32 %v6143, %v6195
    %v6197 = vpop.f32.mrf.mxu0
    %v6198 = vadd.f32 %v6145, %v6197
    %v6199 = vpop.f32.mrf.mxu0
    %v6200 = vadd.f32 %v6147, %v6199
    %v6201 = vpop.f32.mrf.mxu0
    %v6202 = vadd.f32 %v6149, %v6201
    %6203 = vmatprep.mubr.bf16.mxu0 %v4216
    %6204 = vmatmul.mubr.bf16.gmra.mxu0 %v4215
    %v6205 = vpop.f32.mrf.mxu0
    %v6206 = vadd.f32 %v6153, %v6205
    %v6207 = vpop.f32.mrf.mxu0
    %v6208 = vadd.f32 %v6155, %v6207
    %v6209 = vpop.f32.mrf.mxu0
    %v6210 = vadd.f32 %v6157, %v6209
    %v6211 = vpop.f32.mrf.mxu0
    %v6212 = vadd.f32 %v6159, %v6211
    %6213 = vdwg.mxu0
    %6214 = vmatprep.subr.bf16.mxu0 %v5362
    %6215 = vmatpush1.bf16.msra.mxu0 %v5361
    %6216 = vmatprep.subr.bf16.mxu0 %v5358
    %6217 = vmatpush1.bf16.msra.mxu0 %v5357
    %6218 = vmatprep.subr.bf16.mxu0 %v5354
    %6219 = vmatpush1.bf16.msra.mxu0 %v5353
    %6220 = vmatprep.subr.bf16.mxu0 %v5350
    %6221 = vmatpush1.bf16.msra.mxu0 %v5349
    %6222 = vmatprep.subr.bf16.mxu0 %v5346
    %6223 = vmatpush1.bf16.msra.mxu0 %v5345
    %6224 = vmatprep.subr.bf16.mxu0 %v5342
    %6225 = vmatpush1.bf16.msra.mxu0 %v5341
    %6226 = vmatprep.subr.bf16.mxu0 %v5338
    %6227 = vmatpush1.bf16.msra.mxu0 %v5337
    %6228 = vmatprep.subr.bf16.mxu0 %v5334
    %6229 = vmatpush1.bf16.msra.mxu0 %v5333
    %6230 = vmatprep.subr.bf16.mxu0 %v5394
    %6231 = vmatpush2.bf16.msra.mxu0 %v5393
    %6232 = vmatprep.subr.bf16.mxu0 %v5390
    %6233 = vmatpush2.bf16.msra.mxu0 %v5389
    %6234 = vmatprep.subr.bf16.mxu0 %v5386
    %6235 = vmatpush2.bf16.msra.mxu0 %v5385
    %6236 = vmatprep.subr.bf16.mxu0 %v5382
    %6237 = vmatpush2.bf16.msra.mxu0 %v5381
    %6238 = vmatprep.subr.bf16.mxu0 %v5378
    %6239 = vmatpush2.bf16.msra.mxu0 %v5377
    %6240 = vmatprep.subr.bf16.mxu0 %v5374
    %6241 = vmatpush2.bf16.msra.mxu0 %v5373
    %6242 = vmatprep.subr.bf16.mxu0 %v5370
    %6243 = vmatpush2.bf16.msra.mxu0 %v5369
    %6244 = vmatprep.subr.bf16.mxu0 %v5366
    %6245 = vmatpush2.bf16.msra.mxu0 %v5365
    %6246 = vmatprep.mubr.bf16.mxu0 %v4208
    %6247 = vmatmul.mubr.bf16.gmra.mxu0 %v4207
    %v6248 = vpop.f32.mrf.mxu0
    %v6249 = vadd.f32 %v6196, %v6248
    %v6250 = vpop.f32.mrf.mxu0
    %v6251 = vadd.f32 %v6198, %v6250
    %v6252 = vpop.f32.mrf.mxu0
    %v6253 = vadd.f32 %v6200, %v6252
    %v6254 = vpop.f32.mrf.mxu0
    %v6255 = vadd.f32 %v6202, %v6254
    %6256 = vmatprep.mubr.bf16.mxu0 %v4218
    %6257 = vmatmul.mubr.bf16.gmra.mxu0 %v4217
    %v6258 = vpop.f32.mrf.mxu0
    %v6259 = vadd.f32 %v6206, %v6258
    %v6260 = vpop.f32.mrf.mxu0
    %v6261 = vadd.f32 %v6208, %v6260
    %v6262 = vpop.f32.mrf.mxu0
    %v6263 = vadd.f32 %v6210, %v6262
    %v6264 = vpop.f32.mrf.mxu0
    %v6265 = vadd.f32 %v6212, %v6264
    %6266 = vdwg.mxu0
    %6267 = vmatprep.subr.bf16.mxu0 %v5426
    %6268 = vmatpush1.bf16.msra.mxu0 %v5425
    %6269 = vmatprep.subr.bf16.mxu0 %v5422
    %6270 = vmatpush1.bf16.msra.mxu0 %v5421
    %6271 = vmatprep.subr.bf16.mxu0 %v5418
    %6272 = vmatpush1.bf16.msra.mxu0 %v5417
    %6273 = vmatprep.subr.bf16.mxu0 %v5414
    %6274 = vmatpush1.bf16.msra.mxu0 %v5413
    %6275 = vmatprep.subr.bf16.mxu0 %v5410
    %6276 = vmatpush1.bf16.msra.mxu0 %v5409
    %6277 = vmatprep.subr.bf16.mxu0 %v5406
    %6278 = vmatpush1.bf16.msra.mxu0 %v5405
    %6279 = vmatprep.subr.bf16.mxu0 %v5402
    %6280 = vmatpush1.bf16.msra.mxu0 %v5401
    %6281 = vmatprep.subr.bf16.mxu0 %v5398
    %6282 = vmatpush1.bf16.msra.mxu0 %v5397
    %6283 = vmatprep.subr.bf16.mxu0 %v5458
    %6284 = vmatpush2.bf16.msra.mxu0 %v5457
    %6285 = vmatprep.subr.bf16.mxu0 %v5454
    %6286 = vmatpush2.bf16.msra.mxu0 %v5453
    %6287 = vmatprep.subr.bf16.mxu0 %v5450
    %6288 = vmatpush2.bf16.msra.mxu0 %v5449
    %6289 = vmatprep.subr.bf16.mxu0 %v5446
    %6290 = vmatpush2.bf16.msra.mxu0 %v5445
    %6291 = vmatprep.subr.bf16.mxu0 %v5442
    %6292 = vmatpush2.bf16.msra.mxu0 %v5441
    %6293 = vmatprep.subr.bf16.mxu0 %v5438
    %6294 = vmatpush2.bf16.msra.mxu0 %v5437
    %6295 = vmatprep.subr.bf16.mxu0 %v5434
    %6296 = vmatpush2.bf16.msra.mxu0 %v5433
    %6297 = vmatprep.subr.bf16.mxu0 %v5430
    %6298 = vmatpush2.bf16.msra.mxu0 %v5429
    %6299 = vmatprep.mubr.bf16.mxu0 %v4210
    %6300 = vmatmul.mubr.bf16.gmra.mxu0 %v4209
    %v6301 = vpop.f32.mrf.mxu0
    %v6302 = vadd.f32 %v6249, %v6301
    %v6303 = vpop.f32.mrf.mxu0
    %v6304 = vadd.f32 %v6251, %v6303
    %v6305 = vpop.f32.mrf.mxu0
    %v6306 = vadd.f32 %v6253, %v6305
    %v6307 = vpop.f32.mrf.mxu0
    %v6308 = vadd.f32 %v6255, %v6307
    %6309 = vmatprep.mubr.bf16.mxu0 %v4220
    %6310 = vmatmul.mubr.bf16.gmra.mxu0 %v4219
    %v6311 = vpop.f32.mrf.mxu0
    %v6312 = vadd.f32 %v6259, %v6311
    %v6313 = vpop.f32.mrf.mxu0
    %v6314 = vadd.f32 %v6261, %v6313
    %v6315 = vpop.f32.mrf.mxu0
    %v6316 = vadd.f32 %v6263, %v6315
    %v6317 = vpop.f32.mrf.mxu0
    %v6318 = vadd.f32 %v6265, %v6317
    %6319 = vdwg.mxu0
    %6320 = vmatprep.subr.bf16.mxu0 %v5490
    %6321 = vmatpush1.bf16.msra.mxu0 %v5489
    %6322 = vmatprep.subr.bf16.mxu0 %v5486
    %6323 = vmatpush1.bf16.msra.mxu0 %v5485
    %6324 = vmatprep.subr.bf16.mxu0 %v5482
    %6325 = vmatpush1.bf16.msra.mxu0 %v5481
    %6326 = vmatprep.subr.bf16.mxu0 %v5478
    %6327 = vmatpush1.bf16.msra.mxu0 %v5477
    %6328 = vmatprep.subr.bf16.mxu0 %v5474
    %6329 = vmatpush1.bf16.msra.mxu0 %v5473
    %6330 = vmatprep.subr.bf16.mxu0 %v5470
    %6331 = vmatpush1.bf16.msra.mxu0 %v5469
    %6332 = vmatprep.subr.bf16.mxu0 %v5466
    %6333 = vmatpush1.bf16.msra.mxu0 %v5465
    %6334 = vmatprep.subr.bf16.mxu0 %v5462
    %6335 = vmatpush1.bf16.msra.mxu0 %v5461
    %6336 = vmatprep.subr.bf16.mxu0 %v5522
    %6337 = vmatpush2.bf16.msra.mxu0 %v5521
    %6338 = vmatprep.subr.bf16.mxu0 %v5518
    %6339 = vmatpush2.bf16.msra.mxu0 %v5517
    %6340 = vmatprep.subr.bf16.mxu0 %v5514
    %6341 = vmatpush2.bf16.msra.mxu0 %v5513
    %6342 = vmatprep.subr.bf16.mxu0 %v5510
    %6343 = vmatpush2.bf16.msra.mxu0 %v5509
    %6344 = vmatprep.subr.bf16.mxu0 %v5506
    %6345 = vmatpush2.bf16.msra.mxu0 %v5505
    %6346 = vmatprep.subr.bf16.mxu0 %v5502
    %6347 = vmatpush2.bf16.msra.mxu0 %v5501
    %6348 = vmatprep.subr.bf16.mxu0 %v5498
    %6349 = vmatpush2.bf16.msra.mxu0 %v5497
    %6350 = vmatprep.subr.bf16.mxu0 %v5494
    %6351 = vmatpush2.bf16.msra.mxu0 %v5493
    %6352 = vmatprep.mubr.bf16.mxu0 %v4212
    %6353 = vmatmul.mubr.bf16.gmra.mxu0 %v4211
    %v6354 = vpop.f32.mrf.mxu0
    %v6355 = vadd.f32 %v6302, %v6354
    %v6356 = vpop.f32.mrf.mxu0
    %v6357 = vadd.f32 %v6304, %v6356
    %v6358 = vpop.f32.mrf.mxu0
    %v6359 = vadd.f32 %v6306, %v6358
    %v6360 = vpop.f32.mrf.mxu0
    %v6361 = vadd.f32 %v6308, %v6360
    %6362 = vmatprep.mubr.bf16.mxu0 %v4222
    %6363 = vmatmul.mubr.bf16.gmra.mxu0 %v4221
    %v6364 = vpop.f32.mrf.mxu0
    %v6365 = vadd.f32 %v6312, %v6364
    %v6366 = vpop.f32.mrf.mxu0
    %v6367 = vadd.f32 %v6314, %v6366
    %v6368 = vpop.f32.mrf.mxu0
    %v6369 = vadd.f32 %v6316, %v6368
    %v6370 = vpop.f32.mrf.mxu0
    %v6371 = vadd.f32 %v6318, %v6370
    %6372 = vdwg.mxu0
    %v6373 = vmax.f32 %v6090, 0.0
    %v6374 = vmax.f32 %v6092, 0.0
    %v6375 = vmax.f32 %v6355, 0.0
    %v6376 = vmax.f32 %v6357, 0.0
    %v6377 = vmax.f32 %v6094, 0.0
    %v6378 = vmax.f32 %v6096, 0.0
    %v6379 = vmax.f32 %v6359, 0.0
    %v6380 = vmax.f32 %v6361, 0.0
    %v6381 = vmax.f32 %v6100, 0.0
    %v6382 = vmax.f32 %v6102, 0.0
    %v6383 = vmax.f32 %v6365, 0.0
    %v6384 = vmax.f32 %v6367, 0.0
    %v6385 = vmax.f32 %v6104, 0.0
    %v6386 = vmax.f32 %v6106, 0.0
    %v6387 = vmax.f32 %v6369, 0.0
    %v6388 = vmax.f32 %v6371, 0.0
    %v6389 = vpack.c.bf16 %v6377, %v6373
    %v6390 = vpack.c.bf16 %v6378, %v6374
    %v6391 = vpack.c.bf16 %v6379, %v6375
    %v6392 = vpack.c.bf16 %v6380, %v6376
    %v6393 = vpack.c.bf16 %v6385, %v6381
    %v6394 = vpack.c.bf16 %v6386, %v6382
    %v6395 = vpack.c.bf16 %v6387, %v6383
    %v6396 = vpack.c.bf16 %v6388, %v6384
    %v6397 = vld [vmem:[#allocation22] sm:$0xf]
    %v6398 = vld [vmem:[#allocation22 + $0x4] sm:$0x7]
    %v6401 = vunpack.c.l.b16 %v6397
    %v6402 = vunpack.c.l.b16 %v6398
    %v6403 = vpack.c.b16 %v6402, %v6401
    %v6405 = vsel %vm215, %v6403, 0
    %vm6407 = vcmask 1045504
    %v6409 = vsel %vm6407, %v6393, 0
    %v6412 = vsel %vm6407, %v6394, 0
    %v6415 = vsel %vm6407, %v6395, 0
    %v6418 = vsel %vm6407, %v6396, 0
    %6420 = vmatprep.subr.bf16.mxu0 0
    %6421 = vmatpush1.bf16.msra.mxu0 0
    %6422 = vmatprep.subr.bf16.mxu0 0
    %6423 = vmatpush1.bf16.msra.mxu0 0
    %6424 = vmatprep.subr.bf16.mxu0 0
    %6425 = vmatpush1.bf16.msra.mxu0 0
    %6426 = vmatprep.subr.bf16.mxu0 0
    %6427 = vmatpush1.bf16.msra.mxu0 0
    %6428 = vmatprep.subr.bf16.mxu0 0
    %6429 = vmatpush1.bf16.msra.mxu0 0
    %6430 = vmatprep.subr.bf16.mxu0 0
    %6431 = vmatpush1.bf16.msra.mxu0 0
    %6432 = vmatprep.subr.bf16.mxu0 %v6412
    %6433 = vmatpush1.bf16.msra.mxu0 %v6409
    %6434 = vmatprep.subr.bf16.mxu0 %v6390
    %6435 = vmatpush1.bf16.msra.mxu0 %v6389
    %6436 = vmatprep.subr.bf16.mxu0 0
    %6437 = vmatpush2.bf16.msra.mxu0 0
    %6438 = vmatprep.subr.bf16.mxu0 0
    %6439 = vmatpush2.bf16.msra.mxu0 0
    %6440 = vmatprep.subr.bf16.mxu0 0
    %6441 = vmatpush2.bf16.msra.mxu0 0
    %6442 = vmatprep.subr.bf16.mxu0 0
    %6443 = vmatpush2.bf16.msra.mxu0 0
    %6444 = vmatprep.subr.bf16.mxu0 0
    %6445 = vmatpush2.bf16.msra.mxu0 0
    %6446 = vmatprep.subr.bf16.mxu0 0
    %6447 = vmatpush2.bf16.msra.mxu0 0
    %6448 = vmatprep.subr.bf16.mxu0 0
    %6449 = vmatpush2.bf16.msra.mxu0 0
    %6450 = vmatprep.subr.bf16.mxu0 0
    %6451 = vmatpush2.bf16.msra.mxu0 0
    %6452 = vmatprep.mubr.bf16.mxu0 0
    %6453 = vmatmul.mubr.bf16.gmra.mxu0 %v6405
    %v6454 = vpop.f32.mrf.mxu0
    %v6455 = vadd.f32 0.0, %v6454
    %v6456 = vpop.f32.mrf.mxu0
    %v6457 = vadd.f32 0.0, %v6456
    %v6458 = vpop.f32.mrf.mxu0
    %v6459 = vadd.f32 0.0, %v6458
    %v6460 = vpop.f32.mrf.mxu0
    %v6461 = vadd.f32 0.0, %v6460
    %6462 = vdwg.mxu0
    %6463 = vmatprep.subr.bf16.mxu0 0
    %6464 = vmatpush1.bf16.msra.mxu0 0
    %6465 = vmatprep.subr.bf16.mxu0 0
    %6466 = vmatpush1.bf16.msra.mxu0 0
    %6467 = vmatprep.subr.bf16.mxu0 0
    %6468 = vmatpush1.bf16.msra.mxu0 0
    %6469 = vmatprep.subr.bf16.mxu0 0
    %6470 = vmatpush1.bf16.msra.mxu0 0
    %6471 = vmatprep.subr.bf16.mxu0 0
    %6472 = vmatpush1.bf16.msra.mxu0 0
    %6473 = vmatprep.subr.bf16.mxu0 0
    %6474 = vmatpush1.bf16.msra.mxu0 0
    %6475 = vmatprep.subr.bf16.mxu0 %v6418
    %6476 = vmatpush1.bf16.msra.mxu0 %v6415
    %6477 = vmatprep.subr.bf16.mxu0 %v6392
    %6478 = vmatpush1.bf16.msra.mxu0 %v6391
    %6479 = vmatprep.subr.bf16.mxu0 0
    %6480 = vmatpush2.bf16.msra.mxu0 0
    %6481 = vmatprep.subr.bf16.mxu0 0
    %6482 = vmatpush2.bf16.msra.mxu0 0
    %6483 = vmatprep.subr.bf16.mxu0 0
    %6484 = vmatpush2.bf16.msra.mxu0 0
    %6485 = vmatprep.subr.bf16.mxu0 0
    %6486 = vmatpush2.bf16.msra.mxu0 0
    %6487 = vmatprep.subr.bf16.mxu0 0
    %6488 = vmatpush2.bf16.msra.mxu0 0
    %6489 = vmatprep.subr.bf16.mxu0 0
    %6490 = vmatpush2.bf16.msra.mxu0 0
    %6491 = vmatprep.subr.bf16.mxu0 0
    %6492 = vmatpush2.bf16.msra.mxu0 0
    %6493 = vmatprep.subr.bf16.mxu0 0
    %6494 = vmatpush2.bf16.msra.mxu0 0
    %6495 = vmatprep.mubr.bf16.mxu0 0
    %6496 = vmatmul.mubr.bf16.gmra.mxu0 %v6405
    %v6497 = vpop.f32.mrf.mxu0
    %v6498 = vadd.f32 0.0, %v6497
    %v6499 = vpop.f32.mrf.mxu0
    %v6500 = vadd.f32 0.0, %v6499
    %v6501 = vpop.f32.mrf.mxu0
    %v6502 = vadd.f32 0.0, %v6501
    %v6503 = vpop.f32.mrf.mxu0
    %v6504 = vadd.f32 0.0, %v6503
    %6505 = vdwg.mxu0
    %v6506 = vld [vmem:[#allocation24] sm:$0xf]
    %v6507 = vld [vmem:[#allocation24 + $0x4] sm:$0x7]
    %v6510 = vunpack.c.l.b16 %v6506
    %v6511 = vunpack.c.l.b16 %v6507
    %v6512 = vpack.c.b16 %v6511, %v6510
    %v6514 = vsel %vm215, %v6512, 0
    %6516 = vmatprep.subr.bf16.mxu0 0
    %6517 = vmatpush1.bf16.msra.mxu0 0
    %6518 = vmatprep.subr.bf16.mxu0 0
    %6519 = vmatpush1.bf16.msra.mxu0 0
    %6520 = vmatprep.subr.bf16.mxu0 0
    %6521 = vmatpush1.bf16.msra.mxu0 0
    %6522 = vmatprep.subr.bf16.mxu0 0
    %6523 = vmatpush1.bf16.msra.mxu0 0
    %6524 = vmatprep.subr.bf16.mxu0 0
    %6525 = vmatpush1.bf16.msra.mxu0 0
    %6526 = vmatprep.subr.bf16.mxu0 0
    %6527 = vmatpush1.bf16.msra.mxu0 0
    %6528 = vmatprep.subr.bf16.mxu0 %v6412
    %6529 = vmatpush1.bf16.msra.mxu0 %v6409
    %6530 = vmatprep.subr.bf16.mxu0 %v6390
    %6531 = vmatpush1.bf16.msra.mxu0 %v6389
    %6532 = vmatprep.subr.bf16.mxu0 0
    %6533 = vmatpush2.bf16.msra.mxu0 0
    %6534 = vmatprep.subr.bf16.mxu0 0
    %6535 = vmatpush2.bf16.msra.mxu0 0
    %6536 = vmatprep.subr.bf16.mxu0 0
    %6537 = vmatpush2.bf16.msra.mxu0 0
    %6538 = vmatprep.subr.bf16.mxu0 0
    %6539 = vmatpush2.bf16.msra.mxu0 0
    %6540 = vmatprep.subr.bf16.mxu0 0
    %6541 = vmatpush2.bf16.msra.mxu0 0
    %6542 = vmatprep.subr.bf16.mxu0 0
    %6543 = vmatpush2.bf16.msra.mxu0 0
    %6544 = vmatprep.subr.bf16.mxu0 0
    %6545 = vmatpush2.bf16.msra.mxu0 0
    %6546 = vmatprep.subr.bf16.mxu0 0
    %6547 = vmatpush2.bf16.msra.mxu0 0
    %6548 = vmatprep.mubr.bf16.mxu0 0
    %6549 = vmatmul.mubr.bf16.gmra.mxu0 %v6514
    %v6550 = vpop.f32.mrf.mxu0
    %v6551 = vadd.f32 0.0, %v6550
    %v6552 = vpop.f32.mrf.mxu0
    %v6553 = vadd.f32 0.0, %v6552
    %v6554 = vpop.f32.mrf.mxu0
    %v6555 = vadd.f32 0.0, %v6554
    %v6556 = vpop.f32.mrf.mxu0
    %v6557 = vadd.f32 0.0, %v6556
    %6558 = vdwg.mxu0
    %6559 = vmatprep.subr.bf16.mxu0 0
    %6560 = vmatpush1.bf16.msra.mxu0 0
    %6561 = vmatprep.subr.bf16.mxu0 0
    %6562 = vmatpush1.bf16.msra.mxu0 0
    %6563 = vmatprep.subr.bf16.mxu0 0
    %6564 = vmatpush1.bf16.msra.mxu0 0
    %6565 = vmatprep.subr.bf16.mxu0 0
    %6566 = vmatpush1.bf16.msra.mxu0 0
    %6567 = vmatprep.subr.bf16.mxu0 0
    %6568 = vmatpush1.bf16.msra.mxu0 0
    %6569 = vmatprep.subr.bf16.mxu0 0
    %6570 = vmatpush1.bf16.msra.mxu0 0
    %6571 = vmatprep.subr.bf16.mxu0 %v6418
    %6572 = vmatpush1.bf16.msra.mxu0 %v6415
    %6573 = vmatprep.subr.bf16.mxu0 %v6392
    %6574 = vmatpush1.bf16.msra.mxu0 %v6391
    %6575 = vmatprep.subr.bf16.mxu0 0
    %6576 = vmatpush2.bf16.msra.mxu0 0
    %6577 = vmatprep.subr.bf16.mxu0 0
    %6578 = vmatpush2.bf16.msra.mxu0 0
    %6579 = vmatprep.subr.bf16.mxu0 0
    %6580 = vmatpush2.bf16.msra.mxu0 0
    %6581 = vmatprep.subr.bf16.mxu0 0
    %6582 = vmatpush2.bf16.msra.mxu0 0
    %6583 = vmatprep.subr.bf16.mxu0 0
    %6584 = vmatpush2.bf16.msra.mxu0 0
    %6585 = vmatprep.subr.bf16.mxu0 0
    %6586 = vmatpush2.bf16.msra.mxu0 0
    %6587 = vmatprep.subr.bf16.mxu0 0
    %6588 = vmatpush2.bf16.msra.mxu0 0
    %6589 = vmatprep.subr.bf16.mxu0 0
    %6590 = vmatpush2.bf16.msra.mxu0 0
    %6591 = vmatprep.mubr.bf16.mxu0 0
    %6592 = vmatmul.mubr.bf16.gmra.mxu0 %v6514
    %v6593 = vpop.f32.mrf.mxu0
    %v6594 = vadd.f32 0.0, %v6593
    %v6595 = vpop.f32.mrf.mxu0
    %v6596 = vadd.f32 0.0, %v6595
    %v6597 = vpop.f32.mrf.mxu0
    %v6598 = vadd.f32 0.0, %v6597
    %v6599 = vpop.f32.mrf.mxu0
    %v6600 = vadd.f32 0.0, %v6599
    %6601 = vdwg.mxu0
    %v6602 = vmax.f32 %v6455, %v6551
    %v6603 = vmax.f32 %v6457, %v6553
    %v6604 = vmax.f32 %v6498, %v6594
    %v6605 = vmax.f32 %v6500, %v6596
    %v6606 = vmax.f32 %v6459, %v6555
    %v6607 = vmax.f32 %v6461, %v6557
    %v6608 = vmax.f32 %v6502, %v6598
    %v6609 = vmax.f32 %v6504, %v6600
    %v6610 = vpack.c.bf16 %v6606, %v6602
    %v6611 = vpack.c.bf16 %v6607, %v6603
    %v6612 = vpack.c.bf16 %v6608, %v6604
    %v6613 = vpack.c.bf16 %v6609, %v6605
    %v6614 = vld [vmem:[#allocation25] sm:$0xff]
    %v6615 = vld [vmem:[#allocation25 + $0x8] sm:$0xff]
    %v6616 = vld [vmem:[#allocation25 + $0x10] sm:$0xff]
    %v6617 = vld [vmem:[#allocation25 + $0x18] sm:$0xff]
    %v6618 = vld [vmem:[#allocation25 + $0x20] sm:$0xff]
    %v6619 = vld [vmem:[#allocation25 + $0x28] sm:$0xff]
    %v6620 = vld [vmem:[#allocation25 + $0x30] sm:$0xff]
    %v6621 = vld [vmem:[#allocation25 + $0x38] sm:$0xff]
    %v6622 = vld [vmem:[#allocation25 + $0x40] sm:$0xff]
    %v6623 = vld [vmem:[#allocation25 + $0x48] sm:$0xff]
    %v6624 = vld [vmem:[#allocation25 + $0x50] sm:$0xff]
    %v6625 = vld [vmem:[#allocation25 + $0x58] sm:$0xff]
    %v6626 = vld [vmem:[#allocation25 + $0x60] sm:$0xff]
    %v6627 = vld [vmem:[#allocation25 + $0x68] sm:$0xff]
    %v6628 = vld [vmem:[#allocation25 + $0x70] sm:$0xff]
    %v6629 = vld [vmem:[#allocation25 + $0x78] sm:$0xff]
    %v6630 = vld [vmem:[#allocation25 + $0x80] sm:$0xff]
    %v6631 = vld [vmem:[#allocation25 + $0x88] sm:$0xff]
    %v6632 = vld [vmem:[#allocation25 + $0x90] sm:$0xff]
    %v6633 = vld [vmem:[#allocation25 + $0x98] sm:$0xff]
    %v6634 = vld [vmem:[#allocation25 + $0xa0] sm:$0xff]
    %v6635 = vld [vmem:[#allocation25 + $0xa8] sm:$0xff]
    %v6636 = vld [vmem:[#allocation25 + $0xb0] sm:$0xff]
    %v6637 = vld [vmem:[#allocation25 + $0xb8] sm:$0xff]
    %v6638 = vld [vmem:[#allocation25 + $0xc0] sm:$0xff]
    %v6639 = vld [vmem:[#allocation25 + $0xc8] sm:$0xff]
    %v6640 = vld [vmem:[#allocation25 + $0xd0] sm:$0xff]
    %v6641 = vld [vmem:[#allocation25 + $0xd8] sm:$0xff]
    %v6642 = vld [vmem:[#allocation25 + $0xe0] sm:$0xff]
    %v6643 = vld [vmem:[#allocation25 + $0xe8] sm:$0xff]
    %v6644 = vld [vmem:[#allocation25 + $0xf0] sm:$0xff]
    %v6645 = vld [vmem:[#allocation25 + $0xf8] sm:$0xff]
    %v6646 = vld [vmem:[#allocation25 + $0x100] sm:$0xff]
    %v6647 = vld [vmem:[#allocation25 + $0x108] sm:$0xff]
    %v6648 = vld [vmem:[#allocation25 + $0x110] sm:$0xff]
    %v6649 = vld [vmem:[#allocation25 + $0x118] sm:$0xff]
    %v6650 = vld [vmem:[#allocation25 + $0x120] sm:$0xff]
    %v6651 = vld [vmem:[#allocation25 + $0x128] sm:$0xff]
    %v6652 = vld [vmem:[#allocation25 + $0x130] sm:$0xff]
    %v6653 = vld [vmem:[#allocation25 + $0x138] sm:$0xff]
    %v6654 = vld [vmem:[#allocation25 + $0x140] sm:$0xff]
    %v6655 = vld [vmem:[#allocation25 + $0x148] sm:$0xff]
    %v6656 = vld [vmem:[#allocation25 + $0x150] sm:$0xff]
    %v6657 = vld [vmem:[#allocation25 + $0x158] sm:$0xff]
    %v6658 = vld [vmem:[#allocation25 + $0x160] sm:$0xff]
    %v6659 = vld [vmem:[#allocation25 + $0x168] sm:$0xff]
    %v6660 = vld [vmem:[#allocation25 + $0x170] sm:$0xff]
    %v6661 = vld [vmem:[#allocation25 + $0x178] sm:$0xff]
    %v6662 = vld [vmem:[#allocation25 + $0x180] sm:$0xff]
    %v6663 = vld [vmem:[#allocation25 + $0x188] sm:$0xff]
    %v6664 = vld [vmem:[#allocation25 + $0x190] sm:$0xff]
    %v6665 = vld [vmem:[#allocation25 + $0x198] sm:$0xff]
    %v6666 = vld [vmem:[#allocation25 + $0x1a0] sm:$0xff]
    %v6667 = vld [vmem:[#allocation25 + $0x1a8] sm:$0xff]
    %v6668 = vld [vmem:[#allocation25 + $0x1b0] sm:$0xff]
    %v6669 = vld [vmem:[#allocation25 + $0x1b8] sm:$0xff]
    %v6670 = vld [vmem:[#allocation25 + $0x1c0] sm:$0xff]
    %v6671 = vld [vmem:[#allocation25 + $0x1c8] sm:$0xff]
    %v6672 = vld [vmem:[#allocation25 + $0x1d0] sm:$0xff]
    %v6673 = vld [vmem:[#allocation25 + $0x1d8] sm:$0xff]
    %v6674 = vld [vmem:[#allocation25 + $0x1e0] sm:$0xff]
    %v6675 = vld [vmem:[#allocation25 + $0x1e8] sm:$0xff]
    %v6676 = vld [vmem:[#allocation25 + $0x1f0] sm:$0xff]
    %v6677 = vld [vmem:[#allocation25 + $0x1f8] sm:$0xff]
    %v6678 = vld [vmem:[#allocation25 + $0x200] sm:$0xff]
    %v6679 = vld [vmem:[#allocation25 + $0x208] sm:$0xff]
    %v6680 = vld [vmem:[#allocation25 + $0x210] sm:$0xff]
    %v6681 = vld [vmem:[#allocation25 + $0x218] sm:$0xff]
    %v6682 = vld [vmem:[#allocation25 + $0x220] sm:$0xff]
    %v6683 = vld [vmem:[#allocation25 + $0x228] sm:$0xff]
    %v6684 = vld [vmem:[#allocation25 + $0x230] sm:$0xff]
    %v6685 = vld [vmem:[#allocation25 + $0x238] sm:$0xff]
    %v6686 = vld [vmem:[#allocation25 + $0x240] sm:$0xff]
    %v6687 = vld [vmem:[#allocation25 + $0x248] sm:$0xff]
    %v6688 = vld [vmem:[#allocation25 + $0x250] sm:$0xff]
    %v6689 = vld [vmem:[#allocation25 + $0x258] sm:$0xff]
    %v6690 = vld [vmem:[#allocation25 + $0x260] sm:$0xff]
    %v6691 = vld [vmem:[#allocation25 + $0x268] sm:$0xff]
    %v6692 = vld [vmem:[#allocation25 + $0x270] sm:$0xff]
    %v6693 = vld [vmem:[#allocation25 + $0x278] sm:$0xff]
    %v6694 = vld [vmem:[#allocation25 + $0x280] sm:$0xff]
    %v6695 = vld [vmem:[#allocation25 + $0x288] sm:$0xff]
    %v6696 = vld [vmem:[#allocation25 + $0x290] sm:$0xff]
    %v6697 = vld [vmem:[#allocation25 + $0x298] sm:$0xff]
    %v6698 = vld [vmem:[#allocation25 + $0x2a0] sm:$0xff]
    %v6699 = vld [vmem:[#allocation25 + $0x2a8] sm:$0xff]
    %v6700 = vld [vmem:[#allocation25 + $0x2b0] sm:$0xff]
    %v6701 = vld [vmem:[#allocation25 + $0x2b8] sm:$0xff]
    %v6702 = vld [vmem:[#allocation25 + $0x2c0] sm:$0xff]
    %v6703 = vld [vmem:[#allocation25 + $0x2c8] sm:$0xff]
    %v6704 = vld [vmem:[#allocation25 + $0x2d0] sm:$0xff]
    %v6705 = vld [vmem:[#allocation25 + $0x2d8] sm:$0xff]
    %v6706 = vld [vmem:[#allocation25 + $0x2e0] sm:$0xff]
    %v6707 = vld [vmem:[#allocation25 + $0x2e8] sm:$0xff]
    %v6708 = vld [vmem:[#allocation25 + $0x2f0] sm:$0xff]
    %v6709 = vld [vmem:[#allocation25 + $0x2f8] sm:$0xff]
    %v6710 = vld [vmem:[#allocation25 + $0x300] sm:$0xff]
    %v6711 = vld [vmem:[#allocation25 + $0x308] sm:$0xff]
    %v6712 = vld [vmem:[#allocation25 + $0x310] sm:$0xff]
    %v6713 = vld [vmem:[#allocation25 + $0x318] sm:$0xff]
    %v6714 = vld [vmem:[#allocation25 + $0x320] sm:$0xff]
    %v6715 = vld [vmem:[#allocation25 + $0x328] sm:$0xff]
    %v6716 = vld [vmem:[#allocation25 + $0x330] sm:$0xff]
    %v6717 = vld [vmem:[#allocation25 + $0x338] sm:$0xff]
    %v6718 = vld [vmem:[#allocation25 + $0x340] sm:$0xff]
    %v6719 = vld [vmem:[#allocation25 + $0x348] sm:$0xff]
    %v6720 = vld [vmem:[#allocation25 + $0x350] sm:$0xff]
    %v6721 = vld [vmem:[#allocation25 + $0x358] sm:$0xff]
    %v6722 = vld [vmem:[#allocation25 + $0x360] sm:$0xff]
    %v6723 = vld [vmem:[#allocation25 + $0x368] sm:$0xff]
    %v6724 = vld [vmem:[#allocation25 + $0x370] sm:$0xff]
    %v6725 = vld [vmem:[#allocation25 + $0x378] sm:$0xff]
    %v6726 = vld [vmem:[#allocation25 + $0x380] sm:$0xff]
    %v6727 = vld [vmem:[#allocation25 + $0x388] sm:$0xff]
    %v6728 = vld [vmem:[#allocation25 + $0x390] sm:$0xff]
    %v6729 = vld [vmem:[#allocation25 + $0x398] sm:$0xff]
    %v6730 = vld [vmem:[#allocation25 + $0x3a0] sm:$0xff]
    %v6731 = vld [vmem:[#allocation25 + $0x3a8] sm:$0xff]
    %v6732 = vld [vmem:[#allocation25 + $0x3b0] sm:$0xff]
    %v6733 = vld [vmem:[#allocation25 + $0x3b8] sm:$0xff]
    %v6734 = vld [vmem:[#allocation25 + $0x3c0] sm:$0xff]
    %v6735 = vld [vmem:[#allocation25 + $0x3c8] sm:$0xff]
    %v6736 = vld [vmem:[#allocation25 + $0x3d0] sm:$0xff]
    %v6737 = vld [vmem:[#allocation25 + $0x3d8] sm:$0xff]
    %v6738 = vld [vmem:[#allocation25 + $0x3e0] sm:$0xff]
    %v6739 = vld [vmem:[#allocation25 + $0x3e8] sm:$0xff]
    %v6740 = vld [vmem:[#allocation25 + $0x3f0] sm:$0xff]
    %v6741 = vld [vmem:[#allocation25 + $0x3f8] sm:$0xff]
    %v6870 = vunpack.c.l.b16 %v6614
    %v6871 = vunpack.c.h.b16 %v6614
    %v6872 = vunpack.c.l.b16 %v6615
    %v6873 = vunpack.c.h.b16 %v6615
    %v6874 = vunpack.c.l.b16 %v6616
    %v6875 = vunpack.c.h.b16 %v6616
    %v6876 = vunpack.c.l.b16 %v6617
    %v6877 = vunpack.c.h.b16 %v6617
    %v6878 = vunpack.c.l.b16 %v6618
    %v6879 = vunpack.c.h.b16 %v6618
    %v6880 = vunpack.c.l.b16 %v6619
    %v6881 = vunpack.c.h.b16 %v6619
    %v6882 = vunpack.c.l.b16 %v6620
    %v6883 = vunpack.c.h.b16 %v6620
    %v6884 = vunpack.c.l.b16 %v6621
    %v6885 = vunpack.c.h.b16 %v6621
    %v6886 = vunpack.c.l.b16 %v6622
    %v6887 = vunpack.c.h.b16 %v6622
    %v6888 = vunpack.c.l.b16 %v6623
    %v6889 = vunpack.c.h.b16 %v6623
    %v6890 = vunpack.c.l.b16 %v6624
    %v6891 = vunpack.c.h.b16 %v6624
    %v6892 = vunpack.c.l.b16 %v6625
    %v6893 = vunpack.c.h.b16 %v6625
    %v6894 = vunpack.c.l.b16 %v6626
    %v6895 = vunpack.c.h.b16 %v6626
    %v6896 = vunpack.c.l.b16 %v6627
    %v6897 = vunpack.c.h.b16 %v6627
    %v6898 = vunpack.c.l.b16 %v6628
    %v6899 = vunpack.c.h.b16 %v6628
    %v6900 = vunpack.c.l.b16 %v6629
    %v6901 = vunpack.c.h.b16 %v6629
    %v6902 = vunpack.c.l.b16 %v6630
    %v6903 = vunpack.c.h.b16 %v6630
    %v6904 = vunpack.c.l.b16 %v6631
    %v6905 = vunpack.c.h.b16 %v6631
    %v6906 = vunpack.c.l.b16 %v6632
    %v6907 = vunpack.c.h.b16 %v6632
    %v6908 = vunpack.c.l.b16 %v6633
    %v6909 = vunpack.c.h.b16 %v6633
    %v6910 = vunpack.c.l.b16 %v6634
    %v6911 = vunpack.c.h.b16 %v6634
    %v6912 = vunpack.c.l.b16 %v6635
    %v6913 = vunpack.c.h.b16 %v6635
    %v6914 = vunpack.c.l.b16 %v6636
    %v6915 = vunpack.c.h.b16 %v6636
    %v6916 = vunpack.c.l.b16 %v6637
    %v6917 = vunpack.c.h.b16 %v6637
    %v6918 = vunpack.c.l.b16 %v6638
    %v6919 = vunpack.c.h.b16 %v6638
    %v6920 = vunpack.c.l.b16 %v6639
    %v6921 = vunpack.c.h.b16 %v6639
    %v6922 = vunpack.c.l.b16 %v6640
    %v6923 = vunpack.c.h.b16 %v6640
    %v6924 = vunpack.c.l.b16 %v6641
    %v6925 = vunpack.c.h.b16 %v6641
    %v6926 = vunpack.c.l.b16 %v6642
    %v6927 = vunpack.c.h.b16 %v6642
    %v6928 = vunpack.c.l.b16 %v6643
    %v6929 = vunpack.c.h.b16 %v6643
    %v6930 = vunpack.c.l.b16 %v6644
    %v6931 = vunpack.c.h.b16 %v6644
    %v6932 = vunpack.c.l.b16 %v6645
    %v6933 = vunpack.c.h.b16 %v6645
    %v6934 = vunpack.c.l.b16 %v6646
    %v6935 = vunpack.c.h.b16 %v6646
    %v6936 = vunpack.c.l.b16 %v6647
    %v6937 = vunpack.c.h.b16 %v6647
    %v6938 = vunpack.c.l.b16 %v6648
    %v6939 = vunpack.c.h.b16 %v6648
    %v6940 = vunpack.c.l.b16 %v6649
    %v6941 = vunpack.c.h.b16 %v6649
    %v6942 = vunpack.c.l.b16 %v6650
    %v6943 = vunpack.c.h.b16 %v6650
    %v6944 = vunpack.c.l.b16 %v6651
    %v6945 = vunpack.c.h.b16 %v6651
    %v6946 = vunpack.c.l.b16 %v6652
    %v6947 = vunpack.c.h.b16 %v6652
    %v6948 = vunpack.c.l.b16 %v6653
    %v6949 = vunpack.c.h.b16 %v6653
    %v6950 = vunpack.c.l.b16 %v6654
    %v6951 = vunpack.c.h.b16 %v6654
    %v6952 = vunpack.c.l.b16 %v6655
    %v6953 = vunpack.c.h.b16 %v6655
    %v6954 = vunpack.c.l.b16 %v6656
    %v6955 = vunpack.c.h.b16 %v6656
    %v6956 = vunpack.c.l.b16 %v6657
    %v6957 = vunpack.c.h.b16 %v6657
    %v6958 = vunpack.c.l.b16 %v6658
    %v6959 = vunpack.c.h.b16 %v6658
    %v6960 = vunpack.c.l.b16 %v6659
    %v6961 = vunpack.c.h.b16 %v6659
    %v6962 = vunpack.c.l.b16 %v6660
    %v6963 = vunpack.c.h.b16 %v6660
    %v6964 = vunpack.c.l.b16 %v6661
    %v6965 = vunpack.c.h.b16 %v6661
    %v6966 = vunpack.c.l.b16 %v6662
    %v6967 = vunpack.c.h.b16 %v6662
    %v6968 = vunpack.c.l.b16 %v6663
    %v6969 = vunpack.c.h.b16 %v6663
    %v6970 = vunpack.c.l.b16 %v6664
    %v6971 = vunpack.c.h.b16 %v6664
    %v6972 = vunpack.c.l.b16 %v6665
    %v6973 = vunpack.c.h.b16 %v6665
    %v6974 = vunpack.c.l.b16 %v6666
    %v6975 = vunpack.c.h.b16 %v6666
    %v6976 = vunpack.c.l.b16 %v6667
    %v6977 = vunpack.c.h.b16 %v6667
    %v6978 = vunpack.c.l.b16 %v6668
    %v6979 = vunpack.c.h.b16 %v6668
    %v6980 = vunpack.c.l.b16 %v6669
    %v6981 = vunpack.c.h.b16 %v6669
    %v6982 = vunpack.c.l.b16 %v6670
    %v6983 = vunpack.c.h.b16 %v6670
    %v6984 = vunpack.c.l.b16 %v6671
    %v6985 = vunpack.c.h.b16 %v6671
    %v6986 = vunpack.c.l.b16 %v6672
    %v6987 = vunpack.c.h.b16 %v6672
    %v6988 = vunpack.c.l.b16 %v6673
    %v6989 = vunpack.c.h.b16 %v6673
    %v6990 = vunpack.c.l.b16 %v6674
    %v6991 = vunpack.c.h.b16 %v6674
    %v6992 = vunpack.c.l.b16 %v6675
    %v6993 = vunpack.c.h.b16 %v6675
    %v6994 = vunpack.c.l.b16 %v6676
    %v6995 = vunpack.c.h.b16 %v6676
    %v6996 = vunpack.c.l.b16 %v6677
    %v6997 = vunpack.c.h.b16 %v6677
    %v6998 = vunpack.c.l.b16 %v6678
    %v6999 = vunpack.c.h.b16 %v6678
    %v7000 = vunpack.c.l.b16 %v6679
    %v7001 = vunpack.c.h.b16 %v6679
    %v7002 = vunpack.c.l.b16 %v6680
    %v7003 = vunpack.c.h.b16 %v6680
    %v7004 = vunpack.c.l.b16 %v6681
    %v7005 = vunpack.c.h.b16 %v6681
    %v7006 = vunpack.c.l.b16 %v6682
    %v7007 = vunpack.c.h.b16 %v6682
    %v7008 = vunpack.c.l.b16 %v6683
    %v7009 = vunpack.c.h.b16 %v6683
    %v7010 = vunpack.c.l.b16 %v6684
    %v7011 = vunpack.c.h.b16 %v6684
    %v7012 = vunpack.c.l.b16 %v6685
    %v7013 = vunpack.c.h.b16 %v6685
    %v7014 = vunpack.c.l.b16 %v6686
    %v7015 = vunpack.c.h.b16 %v6686
    %v7016 = vunpack.c.l.b16 %v6687
    %v7017 = vunpack.c.h.b16 %v6687
    %v7018 = vunpack.c.l.b16 %v6688
    %v7019 = vunpack.c.h.b16 %v6688
    %v7020 = vunpack.c.l.b16 %v6689
    %v7021 = vunpack.c.h.b16 %v6689
    %v7022 = vunpack.c.l.b16 %v6690
    %v7023 = vunpack.c.h.b16 %v6690
    %v7024 = vunpack.c.l.b16 %v6691
    %v7025 = vunpack.c.h.b16 %v6691
    %v7026 = vunpack.c.l.b16 %v6692
    %v7027 = vunpack.c.h.b16 %v6692
    %v7028 = vunpack.c.l.b16 %v6693
    %v7029 = vunpack.c.h.b16 %v6693
    %v7030 = vunpack.c.l.b16 %v6694
    %v7031 = vunpack.c.h.b16 %v6694
    %v7032 = vunpack.c.l.b16 %v6695
    %v7033 = vunpack.c.h.b16 %v6695
    %v7034 = vunpack.c.l.b16 %v6696
    %v7035 = vunpack.c.h.b16 %v6696
    %v7036 = vunpack.c.l.b16 %v6697
    %v7037 = vunpack.c.h.b16 %v6697
    %v7038 = vunpack.c.l.b16 %v6698
    %v7039 = vunpack.c.h.b16 %v6698
    %v7040 = vunpack.c.l.b16 %v6699
    %v7041 = vunpack.c.h.b16 %v6699
    %v7042 = vunpack.c.l.b16 %v6700
    %v7043 = vunpack.c.h.b16 %v6700
    %v7044 = vunpack.c.l.b16 %v6701
    %v7045 = vunpack.c.h.b16 %v6701
    %v7046 = vunpack.c.l.b16 %v6702
    %v7047 = vunpack.c.h.b16 %v6702
    %v7048 = vunpack.c.l.b16 %v6703
    %v7049 = vunpack.c.h.b16 %v6703
    %v7050 = vunpack.c.l.b16 %v6704
    %v7051 = vunpack.c.h.b16 %v6704
    %v7052 = vunpack.c.l.b16 %v6705
    %v7053 = vunpack.c.h.b16 %v6705
    %v7054 = vunpack.c.l.b16 %v6706
    %v7055 = vunpack.c.h.b16 %v6706
    %v7056 = vunpack.c.l.b16 %v6707
    %v7057 = vunpack.c.h.b16 %v6707
    %v7058 = vunpack.c.l.b16 %v6708
    %v7059 = vunpack.c.h.b16 %v6708
    %v7060 = vunpack.c.l.b16 %v6709
    %v7061 = vunpack.c.h.b16 %v6709
    %v7062 = vunpack.c.l.b16 %v6710
    %v7063 = vunpack.c.h.b16 %v6710
    %v7064 = vunpack.c.l.b16 %v6711
    %v7065 = vunpack.c.h.b16 %v6711
    %v7066 = vunpack.c.l.b16 %v6712
    %v7067 = vunpack.c.h.b16 %v6712
    %v7068 = vunpack.c.l.b16 %v6713
    %v7069 = vunpack.c.h.b16 %v6713
    %v7070 = vunpack.c.l.b16 %v6714
    %v7071 = vunpack.c.h.b16 %v6714
    %v7072 = vunpack.c.l.b16 %v6715
    %v7073 = vunpack.c.h.b16 %v6715
    %v7074 = vunpack.c.l.b16 %v6716
    %v7075 = vunpack.c.h.b16 %v6716
    %v7076 = vunpack.c.l.b16 %v6717
    %v7077 = vunpack.c.h.b16 %v6717
    %v7078 = vunpack.c.l.b16 %v6718
    %v7079 = vunpack.c.h.b16 %v6718
    %v7080 = vunpack.c.l.b16 %v6719
    %v7081 = vunpack.c.h.b16 %v6719
    %v7082 = vunpack.c.l.b16 %v6720
    %v7083 = vunpack.c.h.b16 %v6720
    %v7084 = vunpack.c.l.b16 %v6721
    %v7085 = vunpack.c.h.b16 %v6721
    %v7086 = vunpack.c.l.b16 %v6722
    %v7087 = vunpack.c.h.b16 %v6722
    %v7088 = vunpack.c.l.b16 %v6723
    %v7089 = vunpack.c.h.b16 %v6723
    %v7090 = vunpack.c.l.b16 %v6724
    %v7091 = vunpack.c.h.b16 %v6724
    %v7092 = vunpack.c.l.b16 %v6725
    %v7093 = vunpack.c.h.b16 %v6725
    %v7094 = vunpack.c.l.b16 %v6726
    %v7095 = vunpack.c.h.b16 %v6726
    %v7096 = vunpack.c.l.b16 %v6727
    %v7097 = vunpack.c.h.b16 %v6727
    %v7098 = vunpack.c.l.b16 %v6728
    %v7099 = vunpack.c.h.b16 %v6728
    %v7100 = vunpack.c.l.b16 %v6729
    %v7101 = vunpack.c.h.b16 %v6729
    %v7102 = vunpack.c.l.b16 %v6730
    %v7103 = vunpack.c.h.b16 %v6730
    %v7104 = vunpack.c.l.b16 %v6731
    %v7105 = vunpack.c.h.b16 %v6731
    %v7106 = vunpack.c.l.b16 %v6732
    %v7107 = vunpack.c.h.b16 %v6732
    %v7108 = vunpack.c.l.b16 %v6733
    %v7109 = vunpack.c.h.b16 %v6733
    %v7110 = vunpack.c.l.b16 %v6734
    %v7111 = vunpack.c.h.b16 %v6734
    %v7112 = vunpack.c.l.b16 %v6735
    %v7113 = vunpack.c.h.b16 %v6735
    %v7114 = vunpack.c.l.b16 %v6736
    %v7115 = vunpack.c.h.b16 %v6736
    %v7116 = vunpack.c.l.b16 %v6737
    %v7117 = vunpack.c.h.b16 %v6737
    %v7118 = vunpack.c.l.b16 %v6738
    %v7119 = vunpack.c.h.b16 %v6738
    %v7120 = vunpack.c.l.b16 %v6739
    %v7121 = vunpack.c.h.b16 %v6739
    %v7122 = vunpack.c.l.b16 %v6740
    %v7123 = vunpack.c.h.b16 %v6740
    %v7124 = vunpack.c.l.b16 %v6741
    %v7125 = vunpack.c.h.b16 %v6741
    %v7126 = vpack.c.b16 %v6874, %v6870
    %v7127 = vpack.c.b16 %v6875, %v6871
    %v7128 = vpack.c.b16 %v6876, %v6872
    %v7129 = vpack.c.b16 %v6877, %v6873
    %v7130 = vpack.c.b16 %v6882, %v6878
    %v7131 = vpack.c.b16 %v6883, %v6879
    %v7132 = vpack.c.b16 %v6884, %v6880
    %v7133 = vpack.c.b16 %v6885, %v6881
    %v7134 = vpack.c.b16 %v6890, %v6886
    %v7135 = vpack.c.b16 %v6891, %v6887
    %v7136 = vpack.c.b16 %v6892, %v6888
    %v7137 = vpack.c.b16 %v6893, %v6889
    %v7138 = vpack.c.b16 %v6898, %v6894
    %v7139 = vpack.c.b16 %v6899, %v6895
    %v7140 = vpack.c.b16 %v6900, %v6896
    %v7141 = vpack.c.b16 %v6901, %v6897
    %v7142 = vpack.c.b16 %v6906, %v6902
    %v7143 = vpack.c.b16 %v6907, %v6903
    %v7144 = vpack.c.b16 %v6908, %v6904
    %v7145 = vpack.c.b16 %v6909, %v6905
    %v7146 = vpack.c.b16 %v6914, %v6910
    %v7147 = vpack.c.b16 %v6915, %v6911
    %v7148 = vpack.c.b16 %v6916, %v6912
    %v7149 = vpack.c.b16 %v6917, %v6913
    %v7150 = vpack.c.b16 %v6922, %v6918
    %v7151 = vpack.c.b16 %v6923, %v6919
    %v7152 = vpack.c.b16 %v6924, %v6920
    %v7153 = vpack.c.b16 %v6925, %v6921
    %v7154 = vpack.c.b16 %v6930, %v6926
    %v7155 = vpack.c.b16 %v6931, %v6927
    %v7156 = vpack.c.b16 %v6932, %v6928
    %v7157 = vpack.c.b16 %v6933, %v6929
    %v7158 = vpack.c.b16 %v6938, %v6934
    %v7159 = vpack.c.b16 %v6939, %v6935
    %v7160 = vpack.c.b16 %v6940, %v6936
    %v7161 = vpack.c.b16 %v6941, %v6937
    %v7162 = vpack.c.b16 %v6946, %v6942
    %v7163 = vpack.c.b16 %v6947, %v6943
    %v7164 = vpack.c.b16 %v6948, %v6944
    %v7165 = vpack.c.b16 %v6949, %v6945
    %v7166 = vpack.c.b16 %v6954, %v6950
    %v7167 = vpack.c.b16 %v6955, %v6951
    %v7168 = vpack.c.b16 %v6956, %v6952
    %v7169 = vpack.c.b16 %v6957, %v6953
    %v7170 = vpack.c.b16 %v6962, %v6958
    %v7171 = vpack.c.b16 %v6963, %v6959
    %v7172 = vpack.c.b16 %v6964, %v6960
    %v7173 = vpack.c.b16 %v6965, %v6961
    %v7174 = vpack.c.b16 %v6970, %v6966
    %v7175 = vpack.c.b16 %v6971, %v6967
    %v7176 = vpack.c.b16 %v6972, %v6968
    %v7177 = vpack.c.b16 %v6973, %v6969
    %v7178 = vpack.c.b16 %v6978, %v6974
    %v7179 = vpack.c.b16 %v6979, %v6975
    %v7180 = vpack.c.b16 %v6980, %v6976
    %v7181 = vpack.c.b16 %v6981, %v6977
    %v7182 = vpack.c.b16 %v6986, %v6982
    %v7183 = vpack.c.b16 %v6987, %v6983
    %v7184 = vpack.c.b16 %v6988, %v6984
    %v7185 = vpack.c.b16 %v6989, %v6985
    %v7186 = vpack.c.b16 %v6994, %v6990
    %v7187 = vpack.c.b16 %v6995, %v6991
    %v7188 = vpack.c.b16 %v6996, %v6992
    %v7189 = vpack.c.b16 %v6997, %v6993
    %v7190 = vpack.c.b16 %v7002, %v6998
    %v7191 = vpack.c.b16 %v7003, %v6999
    %v7192 = vpack.c.b16 %v7004, %v7000
    %v7193 = vpack.c.b16 %v7005, %v7001
    %v7194 = vpack.c.b16 %v7010, %v7006
    %v7195 = vpack.c.b16 %v7011, %v7007
    %v7196 = vpack.c.b16 %v7012, %v7008
    %v7197 = vpack.c.b16 %v7013, %v7009
    %v7198 = vpack.c.b16 %v7018, %v7014
    %v7199 = vpack.c.b16 %v7019, %v7015
    %v7200 = vpack.c.b16 %v7020, %v7016
    %v7201 = vpack.c.b16 %v7021, %v7017
    %v7202 = vpack.c.b16 %v7026, %v7022
    %v7203 = vpack.c.b16 %v7027, %v7023
    %v7204 = vpack.c.b16 %v7028, %v7024
    %v7205 = vpack.c.b16 %v7029, %v7025
    %v7206 = vpack.c.b16 %v7034, %v7030
    %v7207 = vpack.c.b16 %v7035, %v7031
    %v7208 = vpack.c.b16 %v7036, %v7032
    %v7209 = vpack.c.b16 %v7037, %v7033
    %v7210 = vpack.c.b16 %v7042, %v7038
    %v7211 = vpack.c.b16 %v7043, %v7039
    %v7212 = vpack.c.b16 %v7044, %v7040
    %v7213 = vpack.c.b16 %v7045, %v7041
    %v7214 = vpack.c.b16 %v7050, %v7046
    %v7215 = vpack.c.b16 %v7051, %v7047
    %v7216 = vpack.c.b16 %v7052, %v7048
    %v7217 = vpack.c.b16 %v7053, %v7049
    %v7218 = vpack.c.b16 %v7058, %v7054
    %v7219 = vpack.c.b16 %v7059, %v7055
    %v7220 = vpack.c.b16 %v7060, %v7056
    %v7221 = vpack.c.b16 %v7061, %v7057
    %v7222 = vpack.c.b16 %v7066, %v7062
    %v7223 = vpack.c.b16 %v7067, %v7063
    %v7224 = vpack.c.b16 %v7068, %v7064
    %v7225 = vpack.c.b16 %v7069, %v7065
    %v7226 = vpack.c.b16 %v7074, %v7070
    %v7227 = vpack.c.b16 %v7075, %v7071
    %v7228 = vpack.c.b16 %v7076, %v7072
    %v7229 = vpack.c.b16 %v7077, %v7073
    %v7230 = vpack.c.b16 %v7082, %v7078
    %v7231 = vpack.c.b16 %v7083, %v7079
    %v7232 = vpack.c.b16 %v7084, %v7080
    %v7233 = vpack.c.b16 %v7085, %v7081
    %v7234 = vpack.c.b16 %v7090, %v7086
    %v7235 = vpack.c.b16 %v7091, %v7087
    %v7236 = vpack.c.b16 %v7092, %v7088
    %v7237 = vpack.c.b16 %v7093, %v7089
    %v7238 = vpack.c.b16 %v7098, %v7094
    %v7239 = vpack.c.b16 %v7099, %v7095
    %v7240 = vpack.c.b16 %v7100, %v7096
    %v7241 = vpack.c.b16 %v7101, %v7097
    %v7242 = vpack.c.b16 %v7106, %v7102
    %v7243 = vpack.c.b16 %v7107, %v7103
    %v7244 = vpack.c.b16 %v7108, %v7104
    %v7245 = vpack.c.b16 %v7109, %v7105
    %v7246 = vpack.c.b16 %v7114, %v7110
    %v7247 = vpack.c.b16 %v7115, %v7111
    %v7248 = vpack.c.b16 %v7116, %v7112
    %v7249 = vpack.c.b16 %v7117, %v7113
    %v7250 = vpack.c.b16 %v7122, %v7118
    %v7251 = vpack.c.b16 %v7123, %v7119
    %v7252 = vpack.c.b16 %v7124, %v7120
    %v7253 = vpack.c.b16 %v7125, %v7121
    %7382 = vmatprep.subr.bf16.mxu0 %v7155
    %7383 = vmatpush1.bf16.msra.mxu0 %v7154
    %7384 = vmatprep.subr.bf16.mxu0 %v7151
    %7385 = vmatpush1.bf16.msra.mxu0 %v7150
    %7386 = vmatprep.subr.bf16.mxu0 %v7147
    %7387 = vmatpush1.bf16.msra.mxu0 %v7146
    %7388 = vmatprep.subr.bf16.mxu0 %v7143
    %7389 = vmatpush1.bf16.msra.mxu0 %v7142
    %7390 = vmatprep.subr.bf16.mxu0 %v7139
    %7391 = vmatpush1.bf16.msra.mxu0 %v7138
    %7392 = vmatprep.subr.bf16.mxu0 %v7135
    %7393 = vmatpush1.bf16.msra.mxu0 %v7134
    %7394 = vmatprep.subr.bf16.mxu0 %v7131
    %7395 = vmatpush1.bf16.msra.mxu0 %v7130
    %7396 = vmatprep.subr.bf16.mxu0 %v7127
    %7397 = vmatpush1.bf16.msra.mxu0 %v7126
    %7398 = vmatprep.subr.bf16.mxu0 %v7187
    %7399 = vmatpush2.bf16.msra.mxu0 %v7186
    %7400 = vmatprep.subr.bf16.mxu0 %v7183
    %7401 = vmatpush2.bf16.msra.mxu0 %v7182
    %7402 = vmatprep.subr.bf16.mxu0 %v7179
    %7403 = vmatpush2.bf16.msra.mxu0 %v7178
    %7404 = vmatprep.subr.bf16.mxu0 %v7175
    %7405 = vmatpush2.bf16.msra.mxu0 %v7174
    %7406 = vmatprep.subr.bf16.mxu0 %v7171
    %7407 = vmatpush2.bf16.msra.mxu0 %v7170
    %7408 = vmatprep.subr.bf16.mxu0 %v7167
    %7409 = vmatpush2.bf16.msra.mxu0 %v7166
    %7410 = vmatprep.subr.bf16.mxu0 %v7163
    %7411 = vmatpush2.bf16.msra.mxu0 %v7162
    %7412 = vmatprep.subr.bf16.mxu0 %v7159
    %7413 = vmatpush2.bf16.msra.mxu0 %v7158
    %7414 = vmatprep.mubr.bf16.mxu0 %v6611
    %7415 = vmatmul.mubr.bf16.gmra.mxu0 %v6610
    %v7416 = vpop.f32.mrf.mxu0
    %v7417 = vadd.f32 0.0, %v7416
    %v7418 = vpop.f32.mrf.mxu0
    %v7419 = vadd.f32 0.0, %v7418
    %v7420 = vpop.f32.mrf.mxu0
    %v7421 = vadd.f32 0.0, %v7420
    %v7422 = vpop.f32.mrf.mxu0
    %v7423 = vadd.f32 0.0, %v7422
    %7424 = vdwg.mxu0
    %7425 = vmatprep.subr.bf16.mxu0 %v7219
    %7426 = vmatpush1.bf16.msra.mxu0 %v7218
    %7427 = vmatprep.subr.bf16.mxu0 %v7215
    %7428 = vmatpush1.bf16.msra.mxu0 %v7214
    %7429 = vmatprep.subr.bf16.mxu0 %v7211
    %7430 = vmatpush1.bf16.msra.mxu0 %v7210
    %7431 = vmatprep.subr.bf16.mxu0 %v7207
    %7432 = vmatpush1.bf16.msra.mxu0 %v7206
    %7433 = vmatprep.subr.bf16.mxu0 %v7203
    %7434 = vmatpush1.bf16.msra.mxu0 %v7202
    %7435 = vmatprep.subr.bf16.mxu0 %v7199
    %7436 = vmatpush1.bf16.msra.mxu0 %v7198
    %7437 = vmatprep.subr.bf16.mxu0 %v7195
    %7438 = vmatpush1.bf16.msra.mxu0 %v7194
    %7439 = vmatprep.subr.bf16.mxu0 %v7191
    %7440 = vmatpush1.bf16.msra.mxu0 %v7190
    %7441 = vmatprep.subr.bf16.mxu0 %v7251
    %7442 = vmatpush2.bf16.msra.mxu0 %v7250
    %7443 = vmatprep.subr.bf16.mxu0 %v7247
    %7444 = vmatpush2.bf16.msra.mxu0 %v7246
    %7445 = vmatprep.subr.bf16.mxu0 %v7243
    %7446 = vmatpush2.bf16.msra.mxu0 %v7242
    %7447 = vmatprep.subr.bf16.mxu0 %v7239
    %7448 = vmatpush2.bf16.msra.mxu0 %v7238
    %7449 = vmatprep.subr.bf16.mxu0 %v7235
    %7450 = vmatpush2.bf16.msra.mxu0 %v7234
    %7451 = vmatprep.subr.bf16.mxu0 %v7231
    %7452 = vmatpush2.bf16.msra.mxu0 %v7230
    %7453 = vmatprep.subr.bf16.mxu0 %v7227
    %7454 = vmatpush2.bf16.msra.mxu0 %v7226
    %7455 = vmatprep.subr.bf16.mxu0 %v7223
    %7456 = vmatpush2.bf16.msra.mxu0 %v7222
    %7457 = vmatprep.mubr.bf16.mxu0 %v6613
    %7458 = vmatmul.mubr.bf16.gmra.mxu0 %v6612
    %v7459 = vpop.f32.mrf.mxu0
    %v7460 = vadd.f32 %v7417, %v7459
    %v7461 = vpop.f32.mrf.mxu0
    %v7462 = vadd.f32 %v7419, %v7461
    %v7463 = vpop.f32.mrf.mxu0
    %v7464 = vadd.f32 %v7421, %v7463
    %v7465 = vpop.f32.mrf.mxu0
    %v7466 = vadd.f32 %v7423, %v7465
    %7467 = vdwg.mxu0
    %7468 = vmatprep.subr.bf16.mxu0 %v7157
    %7469 = vmatpush1.bf16.msra.mxu0 %v7156
    %7470 = vmatprep.subr.bf16.mxu0 %v7153
    %7471 = vmatpush1.bf16.msra.mxu0 %v7152
    %7472 = vmatprep.subr.bf16.mxu0 %v7149
    %7473 = vmatpush1.bf16.msra.mxu0 %v7148
    %7474 = vmatprep.subr.bf16.mxu0 %v7145
    %7475 = vmatpush1.bf16.msra.mxu0 %v7144
    %7476 = vmatprep.subr.bf16.mxu0 %v7141
    %7477 = vmatpush1.bf16.msra.mxu0 %v7140
    %7478 = vmatprep.subr.bf16.mxu0 %v7137
    %7479 = vmatpush1.bf16.msra.mxu0 %v7136
    %7480 = vmatprep.subr.bf16.mxu0 %v7133
    %7481 = vmatpush1.bf16.msra.mxu0 %v7132
    %7482 = vmatprep.subr.bf16.mxu0 %v7129
    %7483 = vmatpush1.bf16.msra.mxu0 %v7128
    %7484 = vmatprep.subr.bf16.mxu0 %v7189
    %7485 = vmatpush2.bf16.msra.mxu0 %v7188
    %7486 = vmatprep.subr.bf16.mxu0 %v7185
    %7487 = vmatpush2.bf16.msra.mxu0 %v7184
    %7488 = vmatprep.subr.bf16.mxu0 %v7181
    %7489 = vmatpush2.bf16.msra.mxu0 %v7180
    %7490 = vmatprep.subr.bf16.mxu0 %v7177
    %7491 = vmatpush2.bf16.msra.mxu0 %v7176
    %7492 = vmatprep.subr.bf16.mxu0 %v7173
    %7493 = vmatpush2.bf16.msra.mxu0 %v7172
    %7494 = vmatprep.subr.bf16.mxu0 %v7169
    %7495 = vmatpush2.bf16.msra.mxu0 %v7168
    %7496 = vmatprep.subr.bf16.mxu0 %v7165
    %7497 = vmatpush2.bf16.msra.mxu0 %v7164
    %7498 = vmatprep.subr.bf16.mxu0 %v7161
    %7499 = vmatpush2.bf16.msra.mxu0 %v7160
    %7500 = vmatprep.mubr.bf16.mxu0 %v6611
    %7501 = vmatmul.mubr.bf16.gmra.mxu0 %v6610
    %v7502 = vpop.f32.mrf.mxu0
    %v7503 = vadd.f32 0.0, %v7502
    %v7504 = vpop.f32.mrf.mxu0
    %v7505 = vadd.f32 0.0, %v7504
    %v7506 = vpop.f32.mrf.mxu0
    %v7507 = vadd.f32 0.0, %v7506
    %v7508 = vpop.f32.mrf.mxu0
    %v7509 = vadd.f32 0.0, %v7508
    %7510 = vdwg.mxu0
    %7511 = vmatprep.subr.bf16.mxu0 %v7221
    %7512 = vmatpush1.bf16.msra.mxu0 %v7220
    %7513 = vmatprep.subr.bf16.mxu0 %v7217
    %7514 = vmatpush1.bf16.msra.mxu0 %v7216
    %7515 = vmatprep.subr.bf16.mxu0 %v7213
    %7516 = vmatpush1.bf16.msra.mxu0 %v7212
    %7517 = vmatprep.subr.bf16.mxu0 %v7209
    %7518 = vmatpush1.bf16.msra.mxu0 %v7208
    %7519 = vmatprep.subr.bf16.mxu0 %v7205
    %7520 = vmatpush1.bf16.msra.mxu0 %v7204
    %7521 = vmatprep.subr.bf16.mxu0 %v7201
    %7522 = vmatpush1.bf16.msra.mxu0 %v7200
    %7523 = vmatprep.subr.bf16.mxu0 %v7197
    %7524 = vmatpush1.bf16.msra.mxu0 %v7196
    %7525 = vmatprep.subr.bf16.mxu0 %v7193
    %7526 = vmatpush1.bf16.msra.mxu0 %v7192
    %7527 = vmatprep.subr.bf16.mxu0 %v7253
    %7528 = vmatpush2.bf16.msra.mxu0 %v7252
    %7529 = vmatprep.subr.bf16.mxu0 %v7249
    %7530 = vmatpush2.bf16.msra.mxu0 %v7248
    %7531 = vmatprep.subr.bf16.mxu0 %v7245
    %7532 = vmatpush2.bf16.msra.mxu0 %v7244
    %7533 = vmatprep.subr.bf16.mxu0 %v7241
    %7534 = vmatpush2.bf16.msra.mxu0 %v7240
    %7535 = vmatprep.subr.bf16.mxu0 %v7237
    %7536 = vmatpush2.bf16.msra.mxu0 %v7236
    %7537 = vmatprep.subr.bf16.mxu0 %v7233
    %7538 = vmatpush2.bf16.msra.mxu0 %v7232
    %7539 = vmatprep.subr.bf16.mxu0 %v7229
    %7540 = vmatpush2.bf16.msra.mxu0 %v7228
    %7541 = vmatprep.subr.bf16.mxu0 %v7225
    %7542 = vmatpush2.bf16.msra.mxu0 %v7224
    %7543 = vmatprep.mubr.bf16.mxu0 %v6613
    %7544 = vmatmul.mubr.bf16.gmra.mxu0 %v6612
    %v7545 = vpop.f32.mrf.mxu0
    %v7546 = vadd.f32 %v7503, %v7545
    %v7547 = vpop.f32.mrf.mxu0
    %v7548 = vadd.f32 %v7505, %v7547
    %v7549 = vpop.f32.mrf.mxu0
    %v7550 = vadd.f32 %v7507, %v7549
    %v7551 = vpop.f32.mrf.mxu0
    %v7552 = vadd.f32 %v7509, %v7551
    %7553 = vdwg.mxu0
    %v7554 = vmax.f32 %v7460, %v7546
    %v7555 = vmax.f32 %v7462, %v7548
    %v7556 = vmax.f32 %v7464, %v7550
    %v7557 = vmax.f32 %v7466, %v7552
    %v7558 = vpack.c.bf16 %v7554, %v7554
    %v7559 = vpack.c.bf16 %v7555, %v7555
    %v7562 = vcombine.low %v7558, %v7559
    %v7564 = vunpack.c.l.s4 1966171168
    %v7565 = vunpack.c.0.s8 %v7564
    %v7566 = vlaneseq
    %v7567 = vshrl.u32 %v7566, 7
    %v7568 = vsub.s32 %v7565, %v7567
    %v7569 = vrot.slane %v7562, %v7568
    %v7571 = vunpack.c.l.s4 1966171168
    %v7572 = vunpack.c.0.s8 %v7571
    %v7573 = vlaneseq
    %v7574 = vshrl.u32 %v7573, 7
    %v7575 = vsub.s32 %v7572, %v7574
    %v7576 = vrot.slane %v7569, %v7575
    %7578 = vst [vmem:[#allocation6] sm:$0x3] %v7576
    %v7579 = vcombine.high %v7569, %v7569
    %v7581 = vunpack.c.l.s4 1966171168
    %v7582 = vunpack.c.0.s8 %v7581
    %v7583 = vlaneseq
    %v7584 = vshrl.u32 %v7583, 7
    %v7585 = vsub.s32 %v7582, %v7584
    %v7586 = vrot.slane %v7579, %v7585
    %7588 = vst [vmem:[#allocation6 + $0x2] sm:$0x3] %v7586
    %v7589 = vcombine.high %v7576, %v7576
    %7591 = vst [vmem:[#allocation6 + $0x4] sm:$0x3] %v7589
    %v7592 = vcombine.high %v7586, %v7586
    %7594 = vst [vmem:[#allocation6 + $0x6] sm:$0x3] %v7592
    %v7595 = vpack.c.bf16 %v7556, %v7556
    %v7596 = vpack.c.bf16 %v7557, %v7557
    %v7599 = vcombine.low %v7595, %v7596
    %v7601 = vunpack.c.l.s4 1966171168
    %v7602 = vunpack.c.0.s8 %v7601
    %v7603 = vlaneseq
    %v7604 = vshrl.u32 %v7603, 7
    %v7605 = vsub.s32 %v7602, %v7604
    %v7606 = vrot.slane %v7599, %v7605
    %v7608 = vunpack.c.l.s4 1966171168
    %v7609 = vunpack.c.0.s8 %v7608
    %v7610 = vlaneseq
    %v7611 = vshrl.u32 %v7610, 7
    %v7612 = vsub.s32 %v7609, %v7611
    %v7613 = vrot.slane %v7606, %v7612
    %7615 = vst [vmem:[#allocation6 + $0x8] sm:$0x3] %v7613
    %v7616 = vcombine.high %v7606, %v7606
    %v7618 = vunpack.c.l.s4 1966171168
    %v7619 = vunpack.c.0.s8 %v7618
    %v7620 = vlaneseq
    %v7621 = vshrl.u32 %v7620, 7
    %v7622 = vsub.s32 %v7619, %v7621
    %v7623 = vrot.slane %v7616, %v7622
    %7625 = vst [vmem:[#allocation6 + $0xa] sm:$0x3] %v7623
    %v7626 = vcombine.high %v7613, %v7613
    %7628 = vst [vmem:[#allocation6 + $0xc] sm:$0x3] %v7626
    %v7629 = vld [vmem:[#allocation6] sm:$0xff]
    %v7630 = vld [vmem:[#allocation6 + $0x8] sm:$0x3f]
    %v7631 = vld [vmem:[#allocation15] sm:$0xf]
    %v7632 = vld [vmem:[#allocation15 + $0x4] sm:$0xf]
    %v7633 = vld [vmem:[#allocation15 + $0x8] sm:$0xf]
    %v7634 = vld [vmem:[#allocation15 + $0xc] sm:$0xf]
    %v7635 = vld [vmem:[#allocation15 + $0x10] sm:$0xf]
    %v7636 = vld [vmem:[#allocation15 + $0x14] sm:$0xf]
    %v7637 = vld [vmem:[#allocation15 + $0x18] sm:$0xf]
    %v7638 = vld [vmem:[#allocation15 + $0x1c] sm:$0xf]
    %v7639 = vld [vmem:[#allocation15 + $0x20] sm:$0xf]
    %v7640 = vld [vmem:[#allocation15 + $0x24] sm:$0xf]
    %v7641 = vld [vmem:[#allocation15 + $0x28] sm:$0xf]
    %v7642 = vld [vmem:[#allocation15 + $0x2c] sm:$0xf]
    %v7643 = vld [vmem:[#allocation15 + $0x30] sm:$0xf]
    %v7644 = vld [vmem:[#allocation15 + $0x34] sm:$0xf]
    %v7645 = vld [vmem:[#allocation15 + $0x38] sm:$0xf]
    %v7646 = vld [vmem:[#allocation15 + $0x3c] sm:$0xf]
    %v7647 = vld [vmem:[#allocation15 + $0x40] sm:$0xf]
    %v7648 = vld [vmem:[#allocation15 + $0x44] sm:$0xf]
    %v7649 = vld [vmem:[#allocation15 + $0x48] sm:$0xf]
    %v7650 = vld [vmem:[#allocation15 + $0x4c] sm:$0xf]
    %v7651 = vld [vmem:[#allocation15 + $0x50] sm:$0xf]
    %v7652 = vld [vmem:[#allocation15 + $0x54] sm:$0xf]
    %v7653 = vld [vmem:[#allocation15 + $0x58] sm:$0xf]
    %v7654 = vld [vmem:[#allocation15 + $0x5c] sm:$0xf]
    %v7655 = vld [vmem:[#allocation15 + $0x60] sm:$0xf]
    %v7656 = vld [vmem:[#allocation15 + $0x64] sm:$0xf]
    %v7657 = vld [vmem:[#allocation15 + $0x68] sm:$0xf]
    %v7658 = vld [vmem:[#allocation15 + $0x6c] sm:$0xf]
    %v7659 = vld [vmem:[#allocation15 + $0x70] sm:$0xf]
    %v7660 = vld [vmem:[#allocation15 + $0x74] sm:$0xf]
    %v7661 = vld [vmem:[#allocation15 + $0x78] sm:$0xf]
    %v7662 = vld [vmem:[#allocation15 + $0x7c] sm:$0xf]
    %v7663 = vld [vmem:[#allocation15 + $0x80] sm:$0xf]
    %v7664 = vld [vmem:[#allocation15 + $0x84] sm:$0xf]
    %v7665 = vld [vmem:[#allocation15 + $0x88] sm:$0xf]
    %v7666 = vld [vmem:[#allocation15 + $0x8c] sm:$0xf]
    %v7667 = vld [vmem:[#allocation15 + $0x90] sm:$0xf]
    %v7668 = vld [vmem:[#allocation15 + $0x94] sm:$0xf]
    %v7669 = vld [vmem:[#allocation15 + $0x98] sm:$0xf]
    %v7670 = vld [vmem:[#allocation15 + $0x9c] sm:$0xf]
    %v7671 = vld [vmem:[#allocation15 + $0xa0] sm:$0xf]
    %v7672 = vld [vmem:[#allocation15 + $0xa4] sm:$0xf]
    %v7673 = vld [vmem:[#allocation15 + $0xa8] sm:$0xf]
    %v7674 = vld [vmem:[#allocation15 + $0xac] sm:$0xf]
    %v7675 = vld [vmem:[#allocation15 + $0xb0] sm:$0xf]
    %v7676 = vld [vmem:[#allocation15 + $0xb4] sm:$0xf]
    %v7677 = vld [vmem:[#allocation15 + $0xb8] sm:$0xf]
    %v7678 = vld [vmem:[#allocation15 + $0xbc] sm:$0xf]
    %v7679 = vld [vmem:[#allocation15 + $0xc0] sm:$0xf]
    %v7680 = vld [vmem:[#allocation15 + $0xc4] sm:$0xf]
    %v7681 = vld [vmem:[#allocation15 + $0xc8] sm:$0xf]
    %v7682 = vld [vmem:[#allocation15 + $0xcc] sm:$0xf]
    %v7683 = vld [vmem:[#allocation15 + $0xd0] sm:$0xf]
    %v7684 = vld [vmem:[#allocation15 + $0xd4] sm:$0xf]
    %v7685 = vld [vmem:[#allocation15 + $0xd8] sm:$0xf]
    %v7686 = vld [vmem:[#allocation15 + $0xdc] sm:$0xf]
    %v7687 = vld [vmem:[#allocation15 + $0xe0] sm:$0xf]
    %v7688 = vld [vmem:[#allocation15 + $0xe4] sm:$0xf]
    %v7689 = vld [vmem:[#allocation15 + $0xe8] sm:$0xf]
    %v7690 = vld [vmem:[#allocation15 + $0xec] sm:$0xf]
    %v7691 = vld [vmem:[#allocation15 + $0xf0] sm:$0xf]
    %v7692 = vld [vmem:[#allocation15 + $0xf4] sm:$0xf]
    %v7693 = vld [vmem:[#allocation15 + $0xf8] sm:$0xf]
    %v7694 = vld [vmem:[#allocation15 + $0xfc] sm:$0xf]
    %v7695 = vld [vmem:[#allocation15 + $0x100] sm:$0xf]
    %v7696 = vld [vmem:[#allocation15 + $0x104] sm:$0xf]
    %v7697 = vld [vmem:[#allocation15 + $0x108] sm:$0xf]
    %v7698 = vld [vmem:[#allocation15 + $0x10c] sm:$0xf]
    %v7699 = vld [vmem:[#allocation15 + $0x110] sm:$0xf]
    %v7700 = vld [vmem:[#allocation15 + $0x114] sm:$0xf]
    %v7701 = vld [vmem:[#allocation15 + $0x118] sm:$0xf]
    %v7702 = vld [vmem:[#allocation15 + $0x11c] sm:$0xf]
    %v7703 = vld [vmem:[#allocation15 + $0x120] sm:$0xf]
    %v7704 = vld [vmem:[#allocation15 + $0x124] sm:$0xf]
    %v7705 = vld [vmem:[#allocation15 + $0x128] sm:$0xf]
    %v7706 = vld [vmem:[#allocation15 + $0x12c] sm:$0xf]
    %v7707 = vld [vmem:[#allocation15 + $0x130] sm:$0xf]
    %v7708 = vld [vmem:[#allocation15 + $0x134] sm:$0xf]
    %v7709 = vld [vmem:[#allocation15 + $0x138] sm:$0xf]
    %v7710 = vld [vmem:[#allocation15 + $0x13c] sm:$0xf]
    %v7711 = vld [vmem:[#allocation15 + $0x140] sm:$0xf]
    %v7712 = vld [vmem:[#allocation15 + $0x144] sm:$0xf]
    %v7713 = vld [vmem:[#allocation15 + $0x148] sm:$0xf]
    %v7714 = vld [vmem:[#allocation15 + $0x14c] sm:$0xf]
    %v7715 = vld [vmem:[#allocation15 + $0x150] sm:$0xf]
    %v7716 = vld [vmem:[#allocation15 + $0x154] sm:$0xf]
    %v7717 = vld [vmem:[#allocation15 + $0x158] sm:$0xf]
    %v7718 = vld [vmem:[#allocation15 + $0x15c] sm:$0xf]
    %v7719 = vld [vmem:[#allocation15 + $0x160] sm:$0xf]
    %v7720 = vld [vmem:[#allocation15 + $0x164] sm:$0xf]
    %v7721 = vld [vmem:[#allocation15 + $0x168] sm:$0xf]
    %v7722 = vld [vmem:[#allocation15 + $0x16c] sm:$0xf]
    %v7723 = vld [vmem:[#allocation15 + $0x170] sm:$0xf]
    %v7724 = vld [vmem:[#allocation15 + $0x174] sm:$0xf]
    %v7725 = vld [vmem:[#allocation15 + $0x178] sm:$0xf]
    %v7726 = vld [vmem:[#allocation15 + $0x17c] sm:$0xf]
    %v7727 = vld [vmem:[#allocation15 + $0x180] sm:$0xf]
    %v7728 = vld [vmem:[#allocation15 + $0x184] sm:$0xf]
    %v7729 = vld [vmem:[#allocation15 + $0x188] sm:$0xf]
    %v7730 = vld [vmem:[#allocation15 + $0x18c] sm:$0xf]
    %v7731 = vld [vmem:[#allocation15 + $0x190] sm:$0xf]
    %v7732 = vld [vmem:[#allocation15 + $0x194] sm:$0xf]
    %v7733 = vld [vmem:[#allocation15 + $0x198] sm:$0xf]
    %v7734 = vld [vmem:[#allocation15 + $0x19c] sm:$0xf]
    %v7735 = vld [vmem:[#allocation15 + $0x1a0] sm:$0xf]
    %v7736 = vld [vmem:[#allocation15 + $0x1a4] sm:$0xf]
    %v7737 = vld [vmem:[#allocation15 + $0x1a8] sm:$0xf]
    %v7738 = vld [vmem:[#allocation15 + $0x1ac] sm:$0xf]
    %v7739 = vld [vmem:[#allocation15 + $0x1b0] sm:$0xf]
    %v7740 = vld [vmem:[#allocation15 + $0x1b4] sm:$0xf]
    %v7741 = vld [vmem:[#allocation15 + $0x1b8] sm:$0xf]
    %v7742 = vld [vmem:[#allocation15 + $0x1bc] sm:$0xf]
    %v7743 = vld [vmem:[#allocation15 + $0x1c0] sm:$0xf]
    %v7744 = vld [vmem:[#allocation15 + $0x1c4] sm:$0xf]
    %v7745 = vld [vmem:[#allocation15 + $0x1c8] sm:$0xf]
    %v7746 = vld [vmem:[#allocation15 + $0x1cc] sm:$0xf]
    %v7747 = vld [vmem:[#allocation15 + $0x1d0] sm:$0xf]
    %v7748 = vld [vmem:[#allocation15 + $0x1d4] sm:$0xf]
    %v7749 = vld [vmem:[#allocation15 + $0x1d8] sm:$0xf]
    %v7750 = vld [vmem:[#allocation15 + $0x1dc] sm:$0xf]
    %v7751 = vld [vmem:[#allocation15 + $0x1e0] sm:$0xf]
    %v7752 = vld [vmem:[#allocation15 + $0x1e4] sm:$0xf]
    %v7753 = vld [vmem:[#allocation15 + $0x1e8] sm:$0xf]
    %v7754 = vld [vmem:[#allocation15 + $0x1ec] sm:$0xf]
    %v7755 = vld [vmem:[#allocation15 + $0x1f0] sm:$0xf]
    %v7756 = vld [vmem:[#allocation15 + $0x1f4] sm:$0xf]
    %v7757 = vld [vmem:[#allocation15 + $0x1f8] sm:$0xf]
    %v7758 = vld [vmem:[#allocation15 + $0x1fc] sm:$0xf]
    %v7759 = vld [vmem:[#allocation15 + $0x200] sm:$0xf]
    %v7760 = vld [vmem:[#allocation15 + $0x204] sm:$0xf]
    %v7761 = vld [vmem:[#allocation15 + $0x208] sm:$0xf]
    %v7762 = vld [vmem:[#allocation15 + $0x20c] sm:$0xf]
    %v7763 = vld [vmem:[#allocation15 + $0x210] sm:$0xf]
    %v7764 = vld [vmem:[#allocation15 + $0x214] sm:$0xf]
    %v7765 = vld [vmem:[#allocation15 + $0x218] sm:$0xf]
    %v7766 = vld [vmem:[#allocation15 + $0x21c] sm:$0xf]
    %v7767 = vld [vmem:[#allocation15 + $0x220] sm:$0xf]
    %v7768 = vld [vmem:[#allocation15 + $0x224] sm:$0xf]
    %v7769 = vld [vmem:[#allocation15 + $0x228] sm:$0xf]
    %v7770 = vld [vmem:[#allocation15 + $0x22c] sm:$0xf]
    %v7771 = vld [vmem:[#allocation15 + $0x230] sm:$0xf]
    %v7772 = vld [vmem:[#allocation15 + $0x234] sm:$0xf]
    %v7773 = vld [vmem:[#allocation15 + $0x238] sm:$0xf]
    %v7774 = vld [vmem:[#allocation15 + $0x23c] sm:$0xf]
    %v7775 = vld [vmem:[#allocation15 + $0x240] sm:$0xf]
    %v7776 = vld [vmem:[#allocation15 + $0x244] sm:$0xf]
    %v7777 = vld [vmem:[#allocation15 + $0x248] sm:$0xf]
    %v7778 = vld [vmem:[#allocation15 + $0x24c] sm:$0xf]
    %v7779 = vld [vmem:[#allocation15 + $0x250] sm:$0xf]
    %v7780 = vld [vmem:[#allocation15 + $0x254] sm:$0xf]
    %v7781 = vld [vmem:[#allocation15 + $0x258] sm:$0xf]
    %v7782 = vld [vmem:[#allocation15 + $0x25c] sm:$0xf]
    %v7783 = vld [vmem:[#allocation15 + $0x260] sm:$0xf]
    %v7784 = vld [vmem:[#allocation15 + $0x264] sm:$0xf]
    %v7785 = vld [vmem:[#allocation15 + $0x268] sm:$0xf]
    %v7786 = vld [vmem:[#allocation15 + $0x26c] sm:$0xf]
    %v7787 = vld [vmem:[#allocation15 + $0x270] sm:$0xf]
    %v7788 = vld [vmem:[#allocation15 + $0x274] sm:$0xf]
    %v7789 = vld [vmem:[#allocation15 + $0x278] sm:$0xf]
    %v7790 = vld [vmem:[#allocation15 + $0x27c] sm:$0xf]
    %v7791 = vld [vmem:[#allocation15 + $0x280] sm:$0xf]
    %v7792 = vld [vmem:[#allocation15 + $0x284] sm:$0xf]
    %v7793 = vld [vmem:[#allocation15 + $0x288] sm:$0xf]
    %v7794 = vld [vmem:[#allocation15 + $0x28c] sm:$0xf]
    %v7795 = vld [vmem:[#allocation15 + $0x290] sm:$0xf]
    %v7796 = vld [vmem:[#allocation15 + $0x294] sm:$0xf]
    %v7797 = vld [vmem:[#allocation15 + $0x298] sm:$0xf]
    %v7798 = vld [vmem:[#allocation15 + $0x29c] sm:$0xf]
    %v7799 = vld [vmem:[#allocation15 + $0x2a0] sm:$0xf]
    %v7800 = vld [vmem:[#allocation15 + $0x2a4] sm:$0xf]
    %v7801 = vld [vmem:[#allocation15 + $0x2a8] sm:$0xf]
    %v7802 = vld [vmem:[#allocation15 + $0x2ac] sm:$0xf]
    %v7803 = vld [vmem:[#allocation15 + $0x2b0] sm:$0xf]
    %v7804 = vld [vmem:[#allocation15 + $0x2b4] sm:$0xf]
    %v7805 = vld [vmem:[#allocation15 + $0x2b8] sm:$0xf]
    %v7806 = vld [vmem:[#allocation15 + $0x2bc] sm:$0xf]
    %v7807 = vld [vmem:[#allocation15 + $0x2c0] sm:$0xf]
    %v7808 = vld [vmem:[#allocation15 + $0x2c4] sm:$0xf]
    %v7809 = vld [vmem:[#allocation15 + $0x2c8] sm:$0xf]
    %v7810 = vld [vmem:[#allocation15 + $0x2cc] sm:$0xf]
    %v7811 = vld [vmem:[#allocation15 + $0x2d0] sm:$0xf]
    %v7812 = vld [vmem:[#allocation15 + $0x2d4] sm:$0xf]
    %v7813 = vld [vmem:[#allocation15 + $0x2d8] sm:$0xf]
    %v7814 = vld [vmem:[#allocation15 + $0x2dc] sm:$0xf]
    %v7815 = vld [vmem:[#allocation15 + $0x2e0] sm:$0xf]
    %v7816 = vld [vmem:[#allocation15 + $0x2e4] sm:$0xf]
    %v7817 = vld [vmem:[#allocation15 + $0x2e8] sm:$0xf]
    %v7818 = vld [vmem:[#allocation15 + $0x2ec] sm:$0xf]
    %v7819 = vld [vmem:[#allocation15 + $0x2f0] sm:$0xf]
    %v7820 = vld [vmem:[#allocation15 + $0x2f4] sm:$0xf]
    %v7821 = vld [vmem:[#allocation15 + $0x2f8] sm:$0xf]
    %v7822 = vld [vmem:[#allocation15 + $0x2fc] sm:$0xf]
    %v7823 = vld [vmem:[#allocation15 + $0x300] sm:$0xf]
    %v7824 = vld [vmem:[#allocation15 + $0x304] sm:$0xf]
    %v7825 = vld [vmem:[#allocation15 + $0x308] sm:$0xf]
    %v7826 = vld [vmem:[#allocation15 + $0x30c] sm:$0xf]
    %v7827 = vld [vmem:[#allocation15 + $0x310] sm:$0xf]
    %v7828 = vld [vmem:[#allocation15 + $0x314] sm:$0xf]
    %v7829 = vld [vmem:[#allocation15 + $0x318] sm:$0xf]
    %v7830 = vld [vmem:[#allocation15 + $0x31c] sm:$0xf]
    %v7831 = vld [vmem:[#allocation15 + $0x320] sm:$0xf]
    %v7832 = vld [vmem:[#allocation15 + $0x324] sm:$0xf]
    %v7833 = vld [vmem:[#allocation15 + $0x328] sm:$0xf]
    %v7834 = vld [vmem:[#allocation15 + $0x32c] sm:$0xf]
    %v7835 = vld [vmem:[#allocation15 + $0x330] sm:$0xf]
    %v7836 = vld [vmem:[#allocation15 + $0x334] sm:$0xf]
    %v7837 = vld [vmem:[#allocation15 + $0x338] sm:$0xf]
    %v7838 = vld [vmem:[#allocation15 + $0x33c] sm:$0xf]
    %v7839 = vld [vmem:[#allocation15 + $0x340] sm:$0xf]
    %v7840 = vld [vmem:[#allocation15 + $0x344] sm:$0xf]
    %v7841 = vld [vmem:[#allocation15 + $0x348] sm:$0xf]
    %v7842 = vld [vmem:[#allocation15 + $0x34c] sm:$0xf]
    %v7843 = vld [vmem:[#allocation15 + $0x350] sm:$0xf]
    %v7844 = vld [vmem:[#allocation15 + $0x354] sm:$0xf]
    %v7845 = vld [vmem:[#allocation15 + $0x358] sm:$0xf]
    %v7846 = vld [vmem:[#allocation15 + $0x35c] sm:$0xf]
    %v7847 = vld [vmem:[#allocation15 + $0x360] sm:$0xf]
    %v7848 = vld [vmem:[#allocation15 + $0x364] sm:$0xf]
    %v7849 = vld [vmem:[#allocation15 + $0x368] sm:$0xf]
    %v7850 = vld [vmem:[#allocation15 + $0x36c] sm:$0xf]
    %v7851 = vld [vmem:[#allocation15 + $0x370] sm:$0xf]
    %v7852 = vld [vmem:[#allocation15 + $0x374] sm:$0xf]
    %v7853 = vld [vmem:[#allocation15 + $0x378] sm:$0xf]
    %v7854 = vld [vmem:[#allocation15 + $0x37c] sm:$0xf]
    %v7855 = vld [vmem:[#allocation16] sm:$0x1]
    %v7857 = vlaneseq
    %v7858 = vshrl.u32 %v7857, 7
    %v7859 = vsub.s32 0, %v7858
    %v7860 = vrot.slane %v7855, %v7859
    %v7864 = vcombine.high %v7629, %v7629
    %v7866 = vunpack.c.l.s4 1966171168
    %v7867 = vunpack.c.0.s8 %v7866
    %v7868 = vlaneseq
    %v7869 = vshrl.u32 %v7868, 7
    %v7870 = vsub.s32 %v7867, %v7869
    %v7871 = vrot.slane %v7629, %v7870
    %v7873 = vunpack.c.l.s4 1966171168
    %v7874 = vunpack.c.0.s8 %v7873
    %v7875 = vlaneseq
    %v7876 = vshrl.u32 %v7875, 7
    %v7877 = vsub.s32 %v7874, %v7876
    %v7878 = vrot.slane %v7864, %v7877
    %v7879 = vcombine.high %v7871, %v7871
    %v7880 = vcombine.high %v7878, %v7878
    %v7882 = vunpack.c.l.s4 1966171168
    %v7883 = vunpack.c.0.s8 %v7882
    %v7884 = vlaneseq
    %v7885 = vshrl.u32 %v7884, 7
    %v7886 = vsub.s32 %v7883, %v7885
    %v7887 = vrot.slane %v7871, %v7886
    %v7889 = vunpack.c.l.s4 1966171168
    %v7890 = vunpack.c.0.s8 %v7889
    %v7891 = vlaneseq
    %v7892 = vshrl.u32 %v7891, 7
    %v7893 = vsub.s32 %v7890, %v7892
    %v7894 = vrot.slane %v7878, %v7893
    %v7896 = vunpack.c.l.s4 1966171168
    %v7897 = vunpack.c.0.s8 %v7896
    %v7898 = vlaneseq
    %v7899 = vshrl.u32 %v7898, 7
    %v7900 = vsub.s32 %v7897, %v7899
    %v7901 = vrot.slane %v7879, %v7900
    %v7903 = vunpack.c.l.s4 1966171168
    %v7904 = vunpack.c.0.s8 %v7903
    %v7905 = vlaneseq
    %v7906 = vshrl.u32 %v7905, 7
    %v7907 = vsub.s32 %v7904, %v7906
    %v7908 = vrot.slane %v7880, %v7907
    %v7909 = vcombine.high %v7887, %v7887
    %v7910 = vcombine.high %v7894, %v7894
    %v7911 = vcombine.high %v7901, %v7901
    %v7912 = vcombine.high %v7908, %v7908
    %v7913 = vcombine.high %v7630, %v7630
    %v7915 = vunpack.c.l.s4 1966171168
    %v7916 = vunpack.c.0.s8 %v7915
    %v7917 = vlaneseq
    %v7918 = vshrl.u32 %v7917, 7
    %v7919 = vsub.s32 %v7916, %v7918
    %v7920 = vrot.slane %v7630, %v7919
    %v7922 = vunpack.c.l.s4 1966171168
    %v7923 = vunpack.c.0.s8 %v7922
    %v7924 = vlaneseq
    %v7925 = vshrl.u32 %v7924, 7
    %v7926 = vsub.s32 %v7923, %v7925
    %v7927 = vrot.slane %v7913, %v7926
    %v7928 = vcombine.high %v7920, %v7920
    %v7929 = vcombine.high %v7927, %v7927
    %v7931 = vunpack.c.l.s4 1966171168
    %v7932 = vunpack.c.0.s8 %v7931
    %v7933 = vlaneseq
    %v7934 = vshrl.u32 %v7933, 7
    %v7935 = vsub.s32 %v7932, %v7934
    %v7936 = vrot.slane %v7920, %v7935
    %v7938 = vunpack.c.l.s4 1966171168
    %v7939 = vunpack.c.0.s8 %v7938
    %v7940 = vlaneseq
    %v7941 = vshrl.u32 %v7940, 7
    %v7942 = vsub.s32 %v7939, %v7941
    %v7943 = vrot.slane %v7927, %v7942
    %v7945 = vunpack.c.l.s4 1966171168
    %v7946 = vunpack.c.0.s8 %v7945
    %v7947 = vlaneseq
    %v7948 = vshrl.u32 %v7947, 7
    %v7949 = vsub.s32 %v7946, %v7948
    %v7950 = vrot.slane %v7928, %v7949
    %v7952 = vunpack.c.l.s4 1966171168
    %v7953 = vunpack.c.0.s8 %v7952
    %v7954 = vlaneseq
    %v7955 = vshrl.u32 %v7954, 7
    %v7956 = vsub.s32 %v7953, %v7955
    %v7957 = vrot.slane %v7929, %v7956
    %v7958 = vcombine.high %v7936, %v7936
    %v7959 = vcombine.high %v7950, %v7950
    %v8198 = vunpack.c.l.b16 %v7631
    %v8199 = vunpack.c.l.b16 %v7632
    %v8200 = vunpack.c.l.b16 %v7633
    %v8201 = vunpack.c.l.b16 %v7634
    %v8202 = vunpack.c.l.b16 %v7635
    %v8203 = vunpack.c.l.b16 %v7636
    %v8204 = vunpack.c.l.b16 %v7637
    %v8205 = vunpack.c.l.b16 %v7638
    %v8206 = vunpack.c.l.b16 %v7639
    %v8207 = vunpack.c.l.b16 %v7640
    %v8208 = vunpack.c.l.b16 %v7641
    %v8209 = vunpack.c.l.b16 %v7642
    %v8210 = vunpack.c.l.b16 %v7643
    %v8211 = vunpack.c.l.b16 %v7644
    %v8212 = vunpack.c.l.b16 %v7645
    %v8213 = vunpack.c.l.b16 %v7646
    %v8214 = vunpack.c.l.b16 %v7647
    %v8215 = vunpack.c.l.b16 %v7648
    %v8216 = vunpack.c.l.b16 %v7649
    %v8217 = vunpack.c.l.b16 %v7650
    %v8218 = vunpack.c.l.b16 %v7651
    %v8219 = vunpack.c.l.b16 %v7652
    %v8220 = vunpack.c.l.b16 %v7653
    %v8221 = vunpack.c.l.b16 %v7654
    %v8222 = vunpack.c.l.b16 %v7655
    %v8223 = vunpack.c.l.b16 %v7656
    %v8224 = vunpack.c.l.b16 %v7657
    %v8225 = vunpack.c.l.b16 %v7658
    %v8226 = vunpack.c.l.b16 %v7659
    %v8227 = vunpack.c.l.b16 %v7660
    %v8228 = vunpack.c.l.b16 %v7661
    %v8229 = vunpack.c.l.b16 %v7662
    %v8230 = vunpack.c.l.b16 %v7663
    %v8231 = vunpack.c.l.b16 %v7664
    %v8232 = vunpack.c.l.b16 %v7665
    %v8233 = vunpack.c.l.b16 %v7666
    %v8234 = vunpack.c.l.b16 %v7667
    %v8235 = vunpack.c.l.b16 %v7668
    %v8236 = vunpack.c.l.b16 %v7669
    %v8237 = vunpack.c.l.b16 %v7670
    %v8238 = vunpack.c.l.b16 %v7671
    %v8239 = vunpack.c.l.b16 %v7672
    %v8240 = vunpack.c.l.b16 %v7673
    %v8241 = vunpack.c.l.b16 %v7674
    %v8242 = vunpack.c.l.b16 %v7675
    %v8243 = vunpack.c.l.b16 %v7676
    %v8244 = vunpack.c.l.b16 %v7677
    %v8245 = vunpack.c.l.b16 %v7678
    %v8246 = vunpack.c.l.b16 %v7679
    %v8247 = vunpack.c.l.b16 %v7680
    %v8248 = vunpack.c.l.b16 %v7681
    %v8249 = vunpack.c.l.b16 %v7682
    %v8250 = vunpack.c.l.b16 %v7683
    %v8251 = vunpack.c.l.b16 %v7684
    %v8252 = vunpack.c.l.b16 %v7685
    %v8253 = vunpack.c.l.b16 %v7686
    %v8254 = vunpack.c.l.b16 %v7687
    %v8255 = vunpack.c.l.b16 %v7688
    %v8256 = vunpack.c.l.b16 %v7689
    %v8257 = vunpack.c.l.b16 %v7690
    %v8258 = vunpack.c.l.b16 %v7691
    %v8259 = vunpack.c.l.b16 %v7692
    %v8260 = vunpack.c.l.b16 %v7693
    %v8261 = vunpack.c.l.b16 %v7694
    %v8262 = vunpack.c.l.b16 %v7695
    %v8263 = vunpack.c.l.b16 %v7696
    %v8264 = vunpack.c.l.b16 %v7697
    %v8265 = vunpack.c.l.b16 %v7698
    %v8266 = vunpack.c.l.b16 %v7699
    %v8267 = vunpack.c.l.b16 %v7700
    %v8268 = vunpack.c.l.b16 %v7701
    %v8269 = vunpack.c.l.b16 %v7702
    %v8270 = vunpack.c.l.b16 %v7703
    %v8271 = vunpack.c.l.b16 %v7704
    %v8272 = vunpack.c.l.b16 %v7705
    %v8273 = vunpack.c.l.b16 %v7706
    %v8274 = vunpack.c.l.b16 %v7707
    %v8275 = vunpack.c.l.b16 %v7708
    %v8276 = vunpack.c.l.b16 %v7709
    %v8277 = vunpack.c.l.b16 %v7710
    %v8278 = vunpack.c.l.b16 %v7711
    %v8279 = vunpack.c.l.b16 %v7712
    %v8280 = vunpack.c.l.b16 %v7713
    %v8281 = vunpack.c.l.b16 %v7714
    %v8282 = vunpack.c.l.b16 %v7715
    %v8283 = vunpack.c.l.b16 %v7716
    %v8284 = vunpack.c.l.b16 %v7717
    %v8285 = vunpack.c.l.b16 %v7718
    %v8286 = vunpack.c.l.b16 %v7719
    %v8287 = vunpack.c.l.b16 %v7720
    %v8288 = vunpack.c.l.b16 %v7721
    %v8289 = vunpack.c.l.b16 %v7722
    %v8290 = vunpack.c.l.b16 %v7723
    %v8291 = vunpack.c.l.b16 %v7724
    %v8292 = vunpack.c.l.b16 %v7725
    %v8293 = vunpack.c.l.b16 %v7726
    %v8294 = vunpack.c.l.b16 %v7727
    %v8295 = vunpack.c.l.b16 %v7728
    %v8296 = vunpack.c.l.b16 %v7729
    %v8297 = vunpack.c.l.b16 %v7730
    %v8298 = vunpack.c.l.b16 %v7731
    %v8299 = vunpack.c.l.b16 %v7732
    %v8300 = vunpack.c.l.b16 %v7733
    %v8301 = vunpack.c.l.b16 %v7734
    %v8302 = vunpack.c.l.b16 %v7735
    %v8303 = vunpack.c.l.b16 %v7736
    %v8304 = vunpack.c.l.b16 %v7737
    %v8305 = vunpack.c.l.b16 %v7738
    %v8306 = vunpack.c.l.b16 %v7739
    %v8307 = vunpack.c.l.b16 %v7740
    %v8308 = vunpack.c.l.b16 %v7741
    %v8309 = vunpack.c.l.b16 %v7742
    %v8310 = vunpack.c.l.b16 %v7743
    %v8311 = vunpack.c.l.b16 %v7744
    %v8312 = vunpack.c.l.b16 %v7745
    %v8313 = vunpack.c.l.b16 %v7746
    %v8314 = vunpack.c.l.b16 %v7747
    %v8315 = vunpack.c.l.b16 %v7748
    %v8316 = vunpack.c.l.b16 %v7749
    %v8317 = vunpack.c.l.b16 %v7750
    %v8318 = vunpack.c.l.b16 %v7751
    %v8319 = vunpack.c.l.b16 %v7752
    %v8320 = vunpack.c.l.b16 %v7753
    %v8321 = vunpack.c.l.b16 %v7754
    %v8322 = vunpack.c.l.b16 %v7755
    %v8323 = vunpack.c.l.b16 %v7756
    %v8324 = vunpack.c.l.b16 %v7757
    %v8325 = vunpack.c.l.b16 %v7758
    %v8326 = vunpack.c.l.b16 %v7759
    %v8327 = vunpack.c.l.b16 %v7760
    %v8328 = vunpack.c.l.b16 %v7761
    %v8329 = vunpack.c.l.b16 %v7762
    %v8330 = vunpack.c.l.b16 %v7763
    %v8331 = vunpack.c.l.b16 %v7764
    %v8332 = vunpack.c.l.b16 %v7765
    %v8333 = vunpack.c.l.b16 %v7766
    %v8334 = vunpack.c.l.b16 %v7767
    %v8335 = vunpack.c.l.b16 %v7768
    %v8336 = vunpack.c.l.b16 %v7769
    %v8337 = vunpack.c.l.b16 %v7770
    %v8338 = vunpack.c.l.b16 %v7771
    %v8339 = vunpack.c.l.b16 %v7772
    %v8340 = vunpack.c.l.b16 %v7773
    %v8341 = vunpack.c.l.b16 %v7774
    %v8342 = vunpack.c.l.b16 %v7775
    %v8343 = vunpack.c.l.b16 %v7776
    %v8344 = vunpack.c.l.b16 %v7777
    %v8345 = vunpack.c.l.b16 %v7778
    %v8346 = vunpack.c.l.b16 %v7779
    %v8347 = vunpack.c.l.b16 %v7780
    %v8348 = vunpack.c.l.b16 %v7781
    %v8349 = vunpack.c.l.b16 %v7782
    %v8350 = vunpack.c.l.b16 %v7783
    %v8351 = vunpack.c.l.b16 %v7784
    %v8352 = vunpack.c.l.b16 %v7785
    %v8353 = vunpack.c.l.b16 %v7786
    %v8354 = vunpack.c.l.b16 %v7787
    %v8355 = vunpack.c.l.b16 %v7788
    %v8356 = vunpack.c.l.b16 %v7789
    %v8357 = vunpack.c.l.b16 %v7790
    %v8358 = vunpack.c.l.b16 %v7791
    %v8359 = vunpack.c.l.b16 %v7792
    %v8360 = vunpack.c.l.b16 %v7793
    %v8361 = vunpack.c.l.b16 %v7794
    %v8362 = vunpack.c.l.b16 %v7795
    %v8363 = vunpack.c.l.b16 %v7796
    %v8364 = vunpack.c.l.b16 %v7797
    %v8365 = vunpack.c.l.b16 %v7798
    %v8366 = vunpack.c.l.b16 %v7799
    %v8367 = vunpack.c.l.b16 %v7800
    %v8368 = vunpack.c.l.b16 %v7801
    %v8369 = vunpack.c.l.b16 %v7802
    %v8370 = vunpack.c.l.b16 %v7803
    %v8371 = vunpack.c.l.b16 %v7804
    %v8372 = vunpack.c.l.b16 %v7805
    %v8373 = vunpack.c.l.b16 %v7806
    %v8374 = vunpack.c.l.b16 %v7807
    %v8375 = vunpack.c.l.b16 %v7808
    %v8376 = vunpack.c.l.b16 %v7809
    %v8377 = vunpack.c.l.b16 %v7810
    %v8378 = vunpack.c.l.b16 %v7811
    %v8379 = vunpack.c.l.b16 %v7812
    %v8380 = vunpack.c.l.b16 %v7813
    %v8381 = vunpack.c.l.b16 %v7814
    %v8382 = vunpack.c.l.b16 %v7815
    %v8383 = vunpack.c.l.b16 %v7816
    %v8384 = vunpack.c.l.b16 %v7817
    %v8385 = vunpack.c.l.b16 %v7818
    %v8386 = vunpack.c.l.b16 %v7819
    %v8387 = vunpack.c.l.b16 %v7820
    %v8388 = vunpack.c.l.b16 %v7821
    %v8389 = vunpack.c.l.b16 %v7822
    %v8390 = vunpack.c.l.b16 %v7823
    %v8391 = vunpack.c.l.b16 %v7824
    %v8392 = vunpack.c.l.b16 %v7825
    %v8393 = vunpack.c.l.b16 %v7826
    %v8394 = vunpack.c.l.b16 %v7827
    %v8395 = vunpack.c.l.b16 %v7828
    %v8396 = vunpack.c.l.b16 %v7829
    %v8397 = vunpack.c.l.b16 %v7830
    %v8398 = vunpack.c.l.b16 %v7831
    %v8399 = vunpack.c.l.b16 %v7832
    %v8400 = vunpack.c.l.b16 %v7833
    %v8401 = vunpack.c.l.b16 %v7834
    %v8402 = vunpack.c.l.b16 %v7835
    %v8403 = vunpack.c.l.b16 %v7836
    %v8404 = vunpack.c.l.b16 %v7837
    %v8405 = vunpack.c.l.b16 %v7838
    %v8406 = vunpack.c.l.b16 %v7839
    %v8407 = vunpack.c.l.b16 %v7840
    %v8408 = vunpack.c.l.b16 %v7841
    %v8409 = vunpack.c.l.b16 %v7842
    %v8410 = vunpack.c.l.b16 %v7843
    %v8411 = vunpack.c.l.b16 %v7844
    %v8412 = vunpack.c.l.b16 %v7845
    %v8413 = vunpack.c.l.b16 %v7846
    %v8414 = vunpack.c.l.b16 %v7847
    %v8415 = vunpack.c.l.b16 %v7848
    %v8416 = vunpack.c.l.b16 %v7849
    %v8417 = vunpack.c.l.b16 %v7850
    %v8418 = vunpack.c.l.b16 %v7851
    %v8419 = vunpack.c.l.b16 %v7852
    %v8420 = vunpack.c.l.b16 %v7853
    %v8421 = vunpack.c.l.b16 %v7854
    %v8422 = vpack.c.b16 %v8199, %v8198
    %v8423 = vpack.c.b16 %v8201, %v8200
    %v8424 = vpack.c.b16 %v8203, %v8202
    %v8425 = vpack.c.b16 %v8205, %v8204
    %v8426 = vpack.c.b16 %v8207, %v8206
    %v8427 = vpack.c.b16 %v8209, %v8208
    %v8428 = vpack.c.b16 %v8211, %v8210
    %v8429 = vpack.c.b16 %v8213, %v8212
    %v8430 = vpack.c.b16 %v8215, %v8214
    %v8431 = vpack.c.b16 %v8217, %v8216
    %v8432 = vpack.c.b16 %v8219, %v8218
    %v8433 = vpack.c.b16 %v8221, %v8220
    %v8434 = vpack.c.b16 %v8223, %v8222
    %v8435 = vpack.c.b16 %v8225, %v8224
    %v8436 = vpack.c.b16 %v8227, %v8226
    %v8437 = vpack.c.b16 %v8229, %v8228
    %v8438 = vpack.c.b16 %v8231, %v8230
    %v8439 = vpack.c.b16 %v8233, %v8232
    %v8440 = vpack.c.b16 %v8235, %v8234
    %v8441 = vpack.c.b16 %v8237, %v8236
    %v8442 = vpack.c.b16 %v8239, %v8238
    %v8443 = vpack.c.b16 %v8241, %v8240
    %v8444 = vpack.c.b16 %v8243, %v8242
    %v8445 = vpack.c.b16 %v8245, %v8244
    %v8446 = vpack.c.b16 %v8247, %v8246
    %v8447 = vpack.c.b16 %v8249, %v8248
    %v8448 = vpack.c.b16 %v8251, %v8250
    %v8449 = vpack.c.b16 %v8253, %v8252
    %v8450 = vpack.c.b16 %v8255, %v8254
    %v8451 = vpack.c.b16 %v8257, %v8256
    %v8452 = vpack.c.b16 %v8259, %v8258
    %v8453 = vpack.c.b16 %v8261, %v8260
    %v8454 = vpack.c.b16 %v8263, %v8262
    %v8455 = vpack.c.b16 %v8265, %v8264
    %v8456 = vpack.c.b16 %v8267, %v8266
    %v8457 = vpack.c.b16 %v8269, %v8268
    %v8458 = vpack.c.b16 %v8271, %v8270
    %v8459 = vpack.c.b16 %v8273, %v8272
    %v8460 = vpack.c.b16 %v8275, %v8274
    %v8461 = vpack.c.b16 %v8277, %v8276
    %v8462 = vpack.c.b16 %v8279, %v8278
    %v8463 = vpack.c.b16 %v8281, %v8280
    %v8464 = vpack.c.b16 %v8283, %v8282
    %v8465 = vpack.c.b16 %v8285, %v8284
    %v8466 = vpack.c.b16 %v8287, %v8286
    %v8467 = vpack.c.b16 %v8289, %v8288
    %v8468 = vpack.c.b16 %v8291, %v8290
    %v8469 = vpack.c.b16 %v8293, %v8292
    %v8470 = vpack.c.b16 %v8295, %v8294
    %v8471 = vpack.c.b16 %v8297, %v8296
    %v8472 = vpack.c.b16 %v8299, %v8298
    %v8473 = vpack.c.b16 %v8301, %v8300
    %v8474 = vpack.c.b16 %v8303, %v8302
    %v8475 = vpack.c.b16 %v8305, %v8304
    %v8476 = vpack.c.b16 %v8307, %v8306
    %v8477 = vpack.c.b16 %v8309, %v8308
    %v8478 = vpack.c.b16 %v8311, %v8310
    %v8479 = vpack.c.b16 %v8313, %v8312
    %v8480 = vpack.c.b16 %v8315, %v8314
    %v8481 = vpack.c.b16 %v8317, %v8316
    %v8482 = vpack.c.b16 %v8319, %v8318
    %v8483 = vpack.c.b16 %v8321, %v8320
    %v8484 = vpack.c.b16 %v8323, %v8322
    %v8485 = vpack.c.b16 %v8325, %v8324
    %v8486 = vpack.c.b16 %v8327, %v8326
    %v8487 = vpack.c.b16 %v8329, %v8328
    %v8488 = vpack.c.b16 %v8331, %v8330
    %v8489 = vpack.c.b16 %v8333, %v8332
    %v8490 = vpack.c.b16 %v8335, %v8334
    %v8491 = vpack.c.b16 %v8337, %v8336
    %v8492 = vpack.c.b16 %v8339, %v8338
    %v8493 = vpack.c.b16 %v8341, %v8340
    %v8494 = vpack.c.b16 %v8343, %v8342
    %v8495 = vpack.c.b16 %v8345, %v8344
    %v8496 = vpack.c.b16 %v8347, %v8346
    %v8497 = vpack.c.b16 %v8349, %v8348
    %v8498 = vpack.c.b16 %v8351, %v8350
    %v8499 = vpack.c.b16 %v8353, %v8352
    %v8500 = vpack.c.b16 %v8355, %v8354
    %v8501 = vpack.c.b16 %v8357, %v8356
    %v8502 = vpack.c.b16 %v8359, %v8358
    %v8503 = vpack.c.b16 %v8361, %v8360
    %v8504 = vpack.c.b16 %v8363, %v8362
    %v8505 = vpack.c.b16 %v8365, %v8364
    %v8506 = vpack.c.b16 %v8367, %v8366
    %v8507 = vpack.c.b16 %v8369, %v8368
    %v8508 = vpack.c.b16 %v8371, %v8370
    %v8509 = vpack.c.b16 %v8373, %v8372
    %v8510 = vpack.c.b16 %v8375, %v8374
    %v8511 = vpack.c.b16 %v8377, %v8376
    %v8512 = vpack.c.b16 %v8379, %v8378
    %v8513 = vpack.c.b16 %v8381, %v8380
    %v8514 = vpack.c.b16 %v8383, %v8382
    %v8515 = vpack.c.b16 %v8385, %v8384
    %v8516 = vpack.c.b16 %v8387, %v8386
    %v8517 = vpack.c.b16 %v8389, %v8388
    %v8518 = vpack.c.b16 %v8391, %v8390
    %v8519 = vpack.c.b16 %v8393, %v8392
    %v8520 = vpack.c.b16 %v8395, %v8394
    %v8521 = vpack.c.b16 %v8397, %v8396
    %v8522 = vpack.c.b16 %v8399, %v8398
    %v8523 = vpack.c.b16 %v8401, %v8400
    %v8524 = vpack.c.b16 %v8403, %v8402
    %v8525 = vpack.c.b16 %v8405, %v8404
    %v8526 = vpack.c.b16 %v8407, %v8406
    %v8527 = vpack.c.b16 %v8409, %v8408
    %v8528 = vpack.c.b16 %v8411, %v8410
    %v8529 = vpack.c.b16 %v8413, %v8412
    %v8530 = vpack.c.b16 %v8415, %v8414
    %v8531 = vpack.c.b16 %v8417, %v8416
    %v8532 = vpack.c.b16 %v8419, %v8418
    %v8533 = vpack.c.b16 %v8421, %v8420
    %8646 = vmatprep.subr.bf16.mxu0 0
    %8647 = vmatpush1.bf16.msra.mxu0 %v8429
    %8648 = vmatprep.subr.bf16.mxu0 0
    %8649 = vmatpush1.bf16.msra.mxu0 %v8428
    %8650 = vmatprep.subr.bf16.mxu0 0
    %8651 = vmatpush1.bf16.msra.mxu0 %v8427
    %8652 = vmatprep.subr.bf16.mxu0 0
    %8653 = vmatpush1.bf16.msra.mxu0 %v8426
    %8654 = vmatprep.subr.bf16.mxu0 0
    %8655 = vmatpush1.bf16.msra.mxu0 %v8425
    %8656 = vmatprep.subr.bf16.mxu0 0
    %8657 = vmatpush1.bf16.msra.mxu0 %v8424
    %8658 = vmatprep.subr.bf16.mxu0 0
    %8659 = vmatpush1.bf16.msra.mxu0 %v8423
    %8660 = vmatprep.subr.bf16.mxu0 0
    %8661 = vmatpush1.bf16.msra.mxu0 %v8422
    %8662 = vmatprep.subr.bf16.mxu0 0
    %8663 = vmatpush2.bf16.msra.mxu0 %v8437
    %8664 = vmatprep.subr.bf16.mxu0 0
    %8665 = vmatpush2.bf16.msra.mxu0 %v8436
    %8666 = vmatprep.subr.bf16.mxu0 0
    %8667 = vmatpush2.bf16.msra.mxu0 %v8435
    %8668 = vmatprep.subr.bf16.mxu0 0
    %8669 = vmatpush2.bf16.msra.mxu0 %v8434
    %8670 = vmatprep.subr.bf16.mxu0 0
    %8671 = vmatpush2.bf16.msra.mxu0 %v8433
    %8672 = vmatprep.subr.bf16.mxu0 0
    %8673 = vmatpush2.bf16.msra.mxu0 %v8432
    %8674 = vmatprep.subr.bf16.mxu0 0
    %8675 = vmatpush2.bf16.msra.mxu0 %v8431
    %8676 = vmatprep.subr.bf16.mxu0 0
    %8677 = vmatpush2.bf16.msra.mxu0 %v8430
    %8678 = vmatprep.mubr.bf16.mxu0 %v7901
    %8679 = vmatmul.mubr.bf16.gmra.mxu0 %v7887
    %v8680 = vpop.f32.mrf.mxu0
    %v8681 = vadd.f32 %v7860, %v8680
    %v8682 = vpop.f32.mrf.mxu0
    %v8683 = vpop.f32.mrf.mxu0
    %v8684 = vpop.f32.mrf.mxu0
    %8685 = vdwg.mxu0
    %8686 = vmatprep.subr.bf16.mxu0 0
    %8687 = vmatpush1.bf16.msra.mxu0 %v8445
    %8688 = vmatprep.subr.bf16.mxu0 0
    %8689 = vmatpush1.bf16.msra.mxu0 %v8444
    %8690 = vmatprep.subr.bf16.mxu0 0
    %8691 = vmatpush1.bf16.msra.mxu0 %v8443
    %8692 = vmatprep.subr.bf16.mxu0 0
    %8693 = vmatpush1.bf16.msra.mxu0 %v8442
    %8694 = vmatprep.subr.bf16.mxu0 0
    %8695 = vmatpush1.bf16.msra.mxu0 %v8441
    %8696 = vmatprep.subr.bf16.mxu0 0
    %8697 = vmatpush1.bf16.msra.mxu0 %v8440
    %8698 = vmatprep.subr.bf16.mxu0 0
    %8699 = vmatpush1.bf16.msra.mxu0 %v8439
    %8700 = vmatprep.subr.bf16.mxu0 0
    %8701 = vmatpush1.bf16.msra.mxu0 %v8438
    %8702 = vmatprep.subr.bf16.mxu0 0
    %8703 = vmatpush2.bf16.msra.mxu0 %v8453
    %8704 = vmatprep.subr.bf16.mxu0 0
    %8705 = vmatpush2.bf16.msra.mxu0 %v8452
    %8706 = vmatprep.subr.bf16.mxu0 0
    %8707 = vmatpush2.bf16.msra.mxu0 %v8451
    %8708 = vmatprep.subr.bf16.mxu0 0
    %8709 = vmatpush2.bf16.msra.mxu0 %v8450
    %8710 = vmatprep.subr.bf16.mxu0 0
    %8711 = vmatpush2.bf16.msra.mxu0 %v8449
    %8712 = vmatprep.subr.bf16.mxu0 0
    %8713 = vmatpush2.bf16.msra.mxu0 %v8448
    %8714 = vmatprep.subr.bf16.mxu0 0
    %8715 = vmatpush2.bf16.msra.mxu0 %v8447
    %8716 = vmatprep.subr.bf16.mxu0 0
    %8717 = vmatpush2.bf16.msra.mxu0 %v8446
    %8718 = vmatprep.mubr.bf16.mxu0 %v7911
    %8719 = vmatmul.mubr.bf16.gmra.mxu0 %v7909
    %v8720 = vpop.f32.mrf.mxu0
    %v8721 = vadd.f32 %v8681, %v8720
    %v8722 = vpop.f32.mrf.mxu0
    %v8723 = vpop.f32.mrf.mxu0
    %v8724 = vpop.f32.mrf.mxu0
    %8725 = vdwg.mxu0
    %8726 = vmatprep.subr.bf16.mxu0 0
    %8727 = vmatpush1.bf16.msra.mxu0 %v8461
    %8728 = vmatprep.subr.bf16.mxu0 0
    %8729 = vmatpush1.bf16.msra.mxu0 %v8460
    %8730 = vmatprep.subr.bf16.mxu0 0
    %8731 = vmatpush1.bf16.msra.mxu0 %v8459
    %8732 = vmatprep.subr.bf16.mxu0 0
    %8733 = vmatpush1.bf16.msra.mxu0 %v8458
    %8734 = vmatprep.subr.bf16.mxu0 0
    %8735 = vmatpush1.bf16.msra.mxu0 %v8457
    %8736 = vmatprep.subr.bf16.mxu0 0
    %8737 = vmatpush1.bf16.msra.mxu0 %v8456
    %8738 = vmatprep.subr.bf16.mxu0 0
    %8739 = vmatpush1.bf16.msra.mxu0 %v8455
    %8740 = vmatprep.subr.bf16.mxu0 0
    %8741 = vmatpush1.bf16.msra.mxu0 %v8454
    %8742 = vmatprep.subr.bf16.mxu0 0
    %8743 = vmatpush2.bf16.msra.mxu0 %v8469
    %8744 = vmatprep.subr.bf16.mxu0 0
    %8745 = vmatpush2.bf16.msra.mxu0 %v8468
    %8746 = vmatprep.subr.bf16.mxu0 0
    %8747 = vmatpush2.bf16.msra.mxu0 %v8467
    %8748 = vmatprep.subr.bf16.mxu0 0
    %8749 = vmatpush2.bf16.msra.mxu0 %v8466
    %8750 = vmatprep.subr.bf16.mxu0 0
    %8751 = vmatpush2.bf16.msra.mxu0 %v8465
    %8752 = vmatprep.subr.bf16.mxu0 0
    %8753 = vmatpush2.bf16.msra.mxu0 %v8464
    %8754 = vmatprep.subr.bf16.mxu0 0
    %8755 = vmatpush2.bf16.msra.mxu0 %v8463
    %8756 = vmatprep.subr.bf16.mxu0 0
    %8757 = vmatpush2.bf16.msra.mxu0 %v8462
    %8758 = vmatprep.mubr.bf16.mxu0 %v7908
    %8759 = vmatmul.mubr.bf16.gmra.mxu0 %v7894
    %v8760 = vpop.f32.mrf.mxu0
    %v8761 = vadd.f32 %v8721, %v8760
    %v8762 = vpop.f32.mrf.mxu0
    %v8763 = vpop.f32.mrf.mxu0
    %v8764 = vpop.f32.mrf.mxu0
    %8765 = vdwg.mxu0
    %8766 = vmatprep.subr.bf16.mxu0 0
    %8767 = vmatpush1.bf16.msra.mxu0 %v8477
    %8768 = vmatprep.subr.bf16.mxu0 0
    %8769 = vmatpush1.bf16.msra.mxu0 %v8476
    %8770 = vmatprep.subr.bf16.mxu0 0
    %8771 = vmatpush1.bf16.msra.mxu0 %v8475
    %8772 = vmatprep.subr.bf16.mxu0 0
    %8773 = vmatpush1.bf16.msra.mxu0 %v8474
    %8774 = vmatprep.subr.bf16.mxu0 0
    %8775 = vmatpush1.bf16.msra.mxu0 %v8473
    %8776 = vmatprep.subr.bf16.mxu0 0
    %8777 = vmatpush1.bf16.msra.mxu0 %v8472
    %8778 = vmatprep.subr.bf16.mxu0 0
    %8779 = vmatpush1.bf16.msra.mxu0 %v8471
    %8780 = vmatprep.subr.bf16.mxu0 0
    %8781 = vmatpush1.bf16.msra.mxu0 %v8470
    %8782 = vmatprep.subr.bf16.mxu0 0
    %8783 = vmatpush2.bf16.msra.mxu0 %v8485
    %8784 = vmatprep.subr.bf16.mxu0 0
    %8785 = vmatpush2.bf16.msra.mxu0 %v8484
    %8786 = vmatprep.subr.bf16.mxu0 0
    %8787 = vmatpush2.bf16.msra.mxu0 %v8483
    %8788 = vmatprep.subr.bf16.mxu0 0
    %8789 = vmatpush2.bf16.msra.mxu0 %v8482
    %8790 = vmatprep.subr.bf16.mxu0 0
    %8791 = vmatpush2.bf16.msra.mxu0 %v8481
    %8792 = vmatprep.subr.bf16.mxu0 0
    %8793 = vmatpush2.bf16.msra.mxu0 %v8480
    %8794 = vmatprep.subr.bf16.mxu0 0
    %8795 = vmatpush2.bf16.msra.mxu0 %v8479
    %8796 = vmatprep.subr.bf16.mxu0 0
    %8797 = vmatpush2.bf16.msra.mxu0 %v8478
    %8798 = vmatprep.mubr.bf16.mxu0 %v7912
    %8799 = vmatmul.mubr.bf16.gmra.mxu0 %v7910
    %v8800 = vpop.f32.mrf.mxu0
    %v8801 = vadd.f32 %v8761, %v8800
    %v8802 = vpop.f32.mrf.mxu0
    %v8803 = vpop.f32.mrf.mxu0
    %v8804 = vpop.f32.mrf.mxu0
    %8805 = vdwg.mxu0
    %8806 = vmatprep.subr.bf16.mxu0 0
    %8807 = vmatpush1.bf16.msra.mxu0 %v8493
    %8808 = vmatprep.subr.bf16.mxu0 0
    %8809 = vmatpush1.bf16.msra.mxu0 %v8492
    %8810 = vmatprep.subr.bf16.mxu0 0
    %8811 = vmatpush1.bf16.msra.mxu0 %v8491
    %8812 = vmatprep.subr.bf16.mxu0 0
    %8813 = vmatpush1.bf16.msra.mxu0 %v8490
    %8814 = vmatprep.subr.bf16.mxu0 0
    %8815 = vmatpush1.bf16.msra.mxu0 %v8489
    %8816 = vmatprep.subr.bf16.mxu0 0
    %8817 = vmatpush1.bf16.msra.mxu0 %v8488
    %8818 = vmatprep.subr.bf16.mxu0 0
    %8819 = vmatpush1.bf16.msra.mxu0 %v8487
    %8820 = vmatprep.subr.bf16.mxu0 0
    %8821 = vmatpush1.bf16.msra.mxu0 %v8486
    %8822 = vmatprep.subr.bf16.mxu0 0
    %8823 = vmatpush2.bf16.msra.mxu0 %v8501
    %8824 = vmatprep.subr.bf16.mxu0 0
    %8825 = vmatpush2.bf16.msra.mxu0 %v8500
    %8826 = vmatprep.subr.bf16.mxu0 0
    %8827 = vmatpush2.bf16.msra.mxu0 %v8499
    %8828 = vmatprep.subr.bf16.mxu0 0
    %8829 = vmatpush2.bf16.msra.mxu0 %v8498
    %8830 = vmatprep.subr.bf16.mxu0 0
    %8831 = vmatpush2.bf16.msra.mxu0 %v8497
    %8832 = vmatprep.subr.bf16.mxu0 0
    %8833 = vmatpush2.bf16.msra.mxu0 %v8496
    %8834 = vmatprep.subr.bf16.mxu0 0
    %8835 = vmatpush2.bf16.msra.mxu0 %v8495
    %8836 = vmatprep.subr.bf16.mxu0 0
    %8837 = vmatpush2.bf16.msra.mxu0 %v8494
    %8838 = vmatprep.mubr.bf16.mxu0 %v7950
    %8839 = vmatmul.mubr.bf16.gmra.mxu0 %v7936
    %v8840 = vpop.f32.mrf.mxu0
    %v8841 = vadd.f32 %v8801, %v8840
    %v8842 = vpop.f32.mrf.mxu0
    %v8843 = vpop.f32.mrf.mxu0
    %v8844 = vpop.f32.mrf.mxu0
    %8845 = vdwg.mxu0
    %8846 = vmatprep.subr.bf16.mxu0 0
    %8847 = vmatpush1.bf16.msra.mxu0 %v8509
    %8848 = vmatprep.subr.bf16.mxu0 0
    %8849 = vmatpush1.bf16.msra.mxu0 %v8508
    %8850 = vmatprep.subr.bf16.mxu0 0
    %8851 = vmatpush1.bf16.msra.mxu0 %v8507
    %8852 = vmatprep.subr.bf16.mxu0 0
    %8853 = vmatpush1.bf16.msra.mxu0 %v8506
    %8854 = vmatprep.subr.bf16.mxu0 0
    %8855 = vmatpush1.bf16.msra.mxu0 %v8505
    %8856 = vmatprep.subr.bf16.mxu0 0
    %8857 = vmatpush1.bf16.msra.mxu0 %v8504
    %8858 = vmatprep.subr.bf16.mxu0 0
    %8859 = vmatpush1.bf16.msra.mxu0 %v8503
    %8860 = vmatprep.subr.bf16.mxu0 0
    %8861 = vmatpush1.bf16.msra.mxu0 %v8502
    %8862 = vmatprep.subr.bf16.mxu0 0
    %8863 = vmatpush2.bf16.msra.mxu0 %v8517
    %8864 = vmatprep.subr.bf16.mxu0 0
    %8865 = vmatpush2.bf16.msra.mxu0 %v8516
    %8866 = vmatprep.subr.bf16.mxu0 0
    %8867 = vmatpush2.bf16.msra.mxu0 %v8515
    %8868 = vmatprep.subr.bf16.mxu0 0
    %8869 = vmatpush2.bf16.msra.mxu0 %v8514
    %8870 = vmatprep.subr.bf16.mxu0 0
    %8871 = vmatpush2.bf16.msra.mxu0 %v8513
    %8872 = vmatprep.subr.bf16.mxu0 0
    %8873 = vmatpush2.bf16.msra.mxu0 %v8512
    %8874 = vmatprep.subr.bf16.mxu0 0
    %8875 = vmatpush2.bf16.msra.mxu0 %v8511
    %8876 = vmatprep.subr.bf16.mxu0 0
    %8877 = vmatpush2.bf16.msra.mxu0 %v8510
    %8878 = vmatprep.mubr.bf16.mxu0 %v7959
    %8879 = vmatmul.mubr.bf16.gmra.mxu0 %v7958
    %v8880 = vpop.f32.mrf.mxu0
    %v8881 = vadd.f32 %v8841, %v8880
    %v8882 = vpop.f32.mrf.mxu0
    %v8883 = vpop.f32.mrf.mxu0
    %v8884 = vpop.f32.mrf.mxu0
    %8885 = vdwg.mxu0
    %8886 = vmatprep.subr.bf16.mxu0 0
    %8887 = vmatpush1.bf16.msra.mxu0 %v8525
    %8888 = vmatprep.subr.bf16.mxu0 0
    %8889 = vmatpush1.bf16.msra.mxu0 %v8524
    %8890 = vmatprep.subr.bf16.mxu0 0
    %8891 = vmatpush1.bf16.msra.mxu0 %v8523
    %8892 = vmatprep.subr.bf16.mxu0 0
    %8893 = vmatpush1.bf16.msra.mxu0 %v8522
    %8894 = vmatprep.subr.bf16.mxu0 0
    %8895 = vmatpush1.bf16.msra.mxu0 %v8521
    %8896 = vmatprep.subr.bf16.mxu0 0
    %8897 = vmatpush1.bf16.msra.mxu0 %v8520
    %8898 = vmatprep.subr.bf16.mxu0 0
    %8899 = vmatpush1.bf16.msra.mxu0 %v8519
    %8900 = vmatprep.subr.bf16.mxu0 0
    %8901 = vmatpush1.bf16.msra.mxu0 %v8518
    %8902 = vmatprep.subr.bf16.mxu0 0
    %8903 = vmatpush2.bf16.msra.mxu0 %v8533
    %8904 = vmatprep.subr.bf16.mxu0 0
    %8905 = vmatpush2.bf16.msra.mxu0 %v8532
    %8906 = vmatprep.subr.bf16.mxu0 0
    %8907 = vmatpush2.bf16.msra.mxu0 %v8531
    %8908 = vmatprep.subr.bf16.mxu0 0
    %8909 = vmatpush2.bf16.msra.mxu0 %v8530
    %8910 = vmatprep.subr.bf16.mxu0 0
    %8911 = vmatpush2.bf16.msra.mxu0 %v8529
    %8912 = vmatprep.subr.bf16.mxu0 0
    %8913 = vmatpush2.bf16.msra.mxu0 %v8528
    %8914 = vmatprep.subr.bf16.mxu0 0
    %8915 = vmatpush2.bf16.msra.mxu0 %v8527
    %8916 = vmatprep.subr.bf16.mxu0 0
    %8917 = vmatpush2.bf16.msra.mxu0 %v8526
    %8918 = vmatprep.mubr.bf16.mxu0 %v7957
    %8919 = vmatmul.mubr.bf16.gmra.mxu0 %v7943
    %v8920 = vpop.f32.mrf.mxu0
    %v8921 = vadd.f32 %v8881, %v8920
    %v8922 = vpop.f32.mrf.mxu0
    %v8923 = vpop.f32.mrf.mxu0
    %v8924 = vpop.f32.mrf.mxu0
    %8925 = vdwg.mxu0
    %v8926 = vsel %vm3387, %v8921, -inf
    %v8927 = vrot.slane %v8926, 4
    %v8928 = vmax.f32 %v8926, %v8927
    %v8929 = vrot.slane %v8928, 2
    %v8930 = vmax.f32 %v8928, %v8929
    %v8931 = vrot.slane %v8930, 1
    %v8932 = vmax.f32 %v8930, %v8931
    %v8933 = vsub.f32 %v8921, %v8932
    %v8934 = vmul.f32 %v8933, 1.442695
    %v8935 = vpow.pop %v8934
    %v8936 = vsel %vm3387, %v8935, 0.0
    %v8937 = vrot.slane %v8936, 4
    %v8938 = vadd.f32 %v8936, %v8937
    %v8939 = vrot.slane %v8938, 2
    %v8940 = vadd.f32 %v8938, %v8939
    %v8941 = vrot.slane %v8940, 1
    %v8942 = vadd.f32 %v8940, %v8941
    %v8943 = vlog2.pop %v8942
    %v8944 = vmul.f32 %v8943, 0.6931472
    %v8945 = vsub.f32 %v8933, %v8944
    %8946 = vst [vmem:[#allocation27] sm:$0x3] %v8945
    // Predicated region
    $region102: #{_lambda_.1} parent=1 // pred_check
      _
    $region103: #{_lambda_.1} parent=1 // pred_check_branch
      %8948 = sbr.rel (0) target = $region105
    $region104: #{_lambda_.1} parent=1 // pred_region
      %s8950 = ssub.s32 32, 32
      %8951 = vsyncadd [#allocation9], %s8950
      %s8953 = sshll.u32 [#allocation27], 4
      %s8954 = int_to_ptr.vmem [resolvable:$true] %s8953
      %8956 = dma.vmem_to_hbm [thread:$0]  %s8954, 32, %s13, [#allocation9]
    $region105: #{_lambda_.1} parent=1 // pred_fallthru
      _
    // Predicated region
    $region106: #{_lambda_.1} parent=1 // pred_check
      _
    $region107: #{_lambda_.1} parent=1 // pred_check_branch
      %8958 = sbr.rel (0) target = $region109
    $region108: #{_lambda_.1} parent=1 // pred_region
      %8959 = dma.done [#allocation9], 32
    $region109: #{_lambda_.1} parent=1 // pred_fallthru
      _
    %8960 = vsyncpa [#allocation8], 1
    %8961 = vsyncpa [#allocation11], 1
    %8962 = vsyncpa [#allocation14], 1
    %8963 = vsyncpa [#allocation17], 1
    %8964 = vsyncpa [#allocation20], 1
    %8965 = vsyncpa [#allocation23], 1
    %8966 = vsyncpa [#allocation26], 1
    %8967 = vsyncpa [#allocation9], 1

</llo_original>
